<compile_context>
chip_gen: v7x
topology: tpu7x:2x2x1
jax: 0.10.0
libtpu: 0.0.40
codegen_flags: <defaults>
</compile_context>

<pallas_src>
import functools

import numpy as np
import jax
import jax.numpy as jnp
from jax import lax
from jax.experimental import pallas as pl
from jax.experimental.pallas import tpu as pltpu

_LN_EPS = 1e-6
_NEG_INF = -1e9


# ----------------------------- in-kernel helpers -----------------------------

def _layer_norm(x, g, b, eps=_LN_EPS):
    """f32 LayerNorm over the last dim; g/b are [1, D]."""
    mean = jnp.mean(x, axis=-1, keepdims=True)
    var = jnp.mean(jnp.square(x - mean), axis=-1, keepdims=True)
    return (x - mean) * lax.rsqrt(var + eps) * g + b


def _softmax_rows(s):
    """Numerically-stable softmax over the last dim (f32)."""
    s = s - jnp.max(s, axis=-1, keepdims=True)
    p = jnp.exp(s)
    return p * pl.reciprocal(jnp.sum(p, axis=-1, keepdims=True), approx=True)


def _attention(q, k, v, bias, n_head, d_k, d_v):
    """q [Lq, H*dk], k [Lk, H*dk], v [Lk, H*dv] (f32); bias [Lq, Lk] (f32).
    The 1/sqrt(d_k) scale is already folded into the Q projection weights."""
    qb = q.astype(jnp.bfloat16)
    kb = k.astype(jnp.bfloat16)
    vb = v.astype(jnp.bfloat16)
    outs = []
    for h in range(n_head):                       # static per-head lane slices
        q_h = qb[:, h * d_k:(h + 1) * d_k]
        k_h = kb[:, h * d_k:(h + 1) * d_k]
        v_h = vb[:, h * d_v:(h + 1) * d_v]
        s = jnp.einsum("qd,kd->qk", q_h, k_h,
                       preferred_element_type=jnp.float32) + bias
        p = _softmax_rows(s)
        outs.append(jnp.dot(p.astype(jnp.bfloat16), v_h,
                            preferred_element_type=jnp.float32))
    return jnp.concatenate(outs, axis=-1)         # [Lq, H*dv] f32


def _self_attn_sublayer(x, qkv_w, fc_w, ln_g, ln_b, bias, n_head, d_k, d_v):
    """Fused-QKV self-attention sublayer, post-LN with residual."""
    nq = n_head * d_k
    qkv = jnp.dot(x.astype(jnp.bfloat16), qkv_w,
                  preferred_element_type=jnp.float32)   # [L, 2*H*dk + H*dv]
    q = qkv[:, :nq]
    k = qkv[:, nq:2 * nq]
    v = qkv[:, 2 * nq:]
    a = _attention(q, k, v, bias, n_head, d_k, d_v)
    y = jnp.dot(a.astype(jnp.bfloat16), fc_w, preferred_element_type=jnp.float32)
    return _layer_norm(y + x, ln_g, ln_b)


def _cross_attn_sublayer(x, enc_b16, q_w, kv_w, fc_w, ln_g, ln_b, bias,
                         n_head, d_k, d_v):
    """Decoder-encoder attention; enc_b16 is the bf16 encoder output (VMEM)."""
    nq = n_head * d_k
    q = jnp.dot(x.astype(jnp.bfloat16), q_w, preferred_element_type=jnp.float32)
    kv = jnp.dot(enc_b16, kv_w, preferred_element_type=jnp.float32)
    a = _attention(q, kv[:, :nq], kv[:, nq:], bias, n_head, d_k, d_v)
    y = jnp.dot(a.astype(jnp.bfloat16), fc_w, preferred_element_type=jnp.float32)
    return _layer_norm(y + x, ln_g, ln_b)


def _ffn_sublayer(x, w1, b1, w2, b2, ln_g, ln_b):
    """Position-wise FFN with ReLU, post-LN with residual."""
    h = jnp.dot(x.astype(jnp.bfloat16), w1, preferred_element_type=jnp.float32) + b1
    h = jnp.maximum(h, 0.0)
    y = jnp.dot(h.astype(jnp.bfloat16), w2, preferred_element_type=jnp.float32) + b2
    return _layer_norm(y + x, ln_g, ln_b)


# --------------------------- fused full-forward kernel ------------------------

def _transformer_kernel(
        # per-batch activations (batch dim squeezed by BlockSpec)
        src_x_ref, enc_bias_ref, trg_word_ref, trg_exp_ref, exp_mask_ref,
        pos_trg_ref, slf_bias_ref, crs_bias_ref,
        # encoder weights (stacked over layers, VMEM-resident)
        enc_ln0_ref, e_qkv_ref, e_fc_ref, e_w1_ref, e_b1_ref, e_w2_ref, e_vec_ref,
        # decoder weights
        dec_ln0_ref, exp_w_ref, exp_b_ref,
        d_s_qkv_ref, d_s_fc_ref, d_c_q_ref, d_c_kv_ref, d_c_fc_ref,
        d_w1_ref, d_b1_ref, d_w2_ref, d_vec_ref, prj_w_ref,
        # output
        out_ref,
        *, n_layers_e, n_layers, n_head, d_k, d_v):
    # ------------------------------ encoder ---------------------------------
    x = _layer_norm(src_x_ref[...], enc_ln0_ref[0:1, :], enc_ln0_ref[1:2, :])
    enc_bias = enc_bias_ref[...]
    for l in range(n_layers_e):                      # unrolled, static weights
        vec = e_vec_ref[l]                           # [5, D]: a_g, a_b, b2, f_g, f_b
        x = _self_attn_sublayer(x, e_qkv_ref[l], e_fc_ref[l],
                                vec[0:1, :], vec[1:2, :], enc_bias,
                                n_head, d_k, d_v)
        x = _ffn_sublayer(x, e_w1_ref[l], e_b1_ref[l], e_w2_ref[l],
                          vec[2:3, :], vec[3:4, :], vec[4:5, :])
    enc_b16 = x.astype(jnp.bfloat16)                 # stays on-chip

    # -------------------------- decoder embedding ----------------------------
    m = exp_mask_ref[...]                            # [Lt, 1] f32 in {0,1}
    dec_exp = jnp.dot(trg_exp_ref[...].astype(jnp.bfloat16), exp_w_ref[...],
                      preferred_element_type=jnp.float32) + exp_b_ref[...]
    dec = trg_word_ref[...] * (1.0 - m) + dec_exp * m   # dec[exp_mask] = dec_exp[...]
    dec = dec + pos_trg_ref[...]
    dec = _layer_norm(dec, dec_ln0_ref[0:1, :], dec_ln0_ref[1:2, :])

    # ----------------------------- decoder stack -----------------------------
    slf_bias = slf_bias_ref[...]
    crs_bias = crs_bias_ref[...]
    for l in range(n_layers):
        vec = d_vec_ref[l]           # [7, D]: s_g, s_b, c_g, c_b, b2, f_g, f_b
        dec = _self_attn_sublayer(dec, d_s_qkv_ref[l], d_s_fc_ref[l],
                                  vec[0:1, :], vec[1:2, :], slf_bias,
                                  n_head, d_k, d_v)
        dec = _cross_attn_sublayer(dec, enc_b16, d_c_q_ref[l], d_c_kv_ref[l],
                                   d_c_fc_ref[l], vec[2:3, :], vec[3:4, :],
                                   crs_bias, n_head, d_k, d_v)
        dec = _ffn_sublayer(dec, d_w1_ref[l], d_b1_ref[l], d_w2_ref[l],
                            vec[4:5, :], vec[5:6, :], vec[6:7, :])

    # ------------- fused shared-weight final projection (no extra call) ------
    logit = jnp.dot(dec.astype(jnp.bfloat16), prj_w_ref[...],
                    preferred_element_type=jnp.float32)
    out_ref[...] = logit.astype(out_ref.dtype)
    # TODO(synk): dropout layers are identity here (eval-mode forward semantics).


# ------------------------------- host wrapper --------------------------------

def _make_bias(mask, B, Lq, Lk):
    """int mask (0 = masked) -> additive f32 bias, computed once per forward."""
    if mask is None:
        return jnp.zeros((B, Lq, Lk), jnp.float32)
    m = jnp.broadcast_to(mask, (B, Lq, Lk))
    return jnp.where(m == 0, _NEG_INF, 0.0).astype(jnp.float32)


def transformer_forward(params, src_seq, src_mask, trg_seq, trg_mask,
                        trg_exp, exp_mask, *, cfg):
    enc_p = params["encoder"]
    dec_p = params["decoder"]
    prj_w = params["prj_w"]

    B, Ls = src_seq.shape
    Lt = trg_seq.shape[1]
    D = cfg["d_model"]
    H, dk, dv = cfg["n_head"], cfg["d_k"], cfg["d_v"]
    n_trg_dim = prj_w.shape[1]
    Ne = enc_p["qkv_w"].shape[0]
    Nd = dec_p["s_qkv_w"].shape[0]

    # ---- XLA glue (fused inside the same jit): gathers, pos-add, mask biases ----
    src_x = enc_p["emb"][src_seq] + enc_p["pos_table"][:Ls][None]      # [B, Ls, D]
    trg_word = dec_p["emb"][trg_seq]                                   # [B, Lt, D]
    pos_trg = dec_p["pos_table"][:Lt]                                  # [Lt, D]
    enc_bias = _make_bias(src_mask, B, Ls, Ls)
    slf_bias = _make_bias(trg_mask, B, Lt, Lt)
    crs_bias = _make_bias(src_mask, B, Lt, Ls)
    exp_mask_f = exp_mask.astype(jnp.float32)[..., None]               # [B, Lt, 1]
    trg_exp = trg_exp.astype(jnp.float32)

    kernel = functools.partial(_transformer_kernel, n_layers_e=Ne, n_layers=Nd,
                               n_head=H, d_k=dk, d_v=dv)

    def bspec(*dims):       # per-batch-element block, batch dim squeezed
        return pl.BlockSpec((None,) + dims,
                            lambda b, _n=len(dims): (b,) + (0,) * _n)

    def wspec(arr):         # grid-invariant whole array, resident in VMEM
        return pl.BlockSpec(arr.shape, lambda b, _n=arr.ndim: (0,) * _n)

    args = (
        src_x, enc_bias, trg_word, trg_exp, exp_mask_f, pos_trg, slf_bias, crs_bias,
        enc_p["ln0"], enc_p["qkv_w"], enc_p["fc_w"], enc_p["w1"], enc_p["b1"],
        enc_p["w2"], enc_p["vec"],
        dec_p["ln0"], dec_p["exp_w"], dec_p["exp_b"],
        dec_p["s_qkv_w"], dec_p["s_fc_w"], dec_p["c_q_w"], dec_p["c_kv_w"],
        dec_p["c_fc_w"], dec_p["w1"], dec_p["b1"], dec_p["w2"], dec_p["vec"],
        prj_w,
    )
    in_specs = [
        bspec(Ls, D), bspec(Ls, Ls), bspec(Lt, D), bspec(Lt, n_trg_dim),
        bspec(Lt, 1), wspec(pos_trg), bspec(Lt, Lt), bspec(Lt, Ls),
    ] + [wspec(a) for a in args[8:]]

    return pl.pallas_call(
        kernel,
        out_shape=jax.ShapeDtypeStruct((B, Lt, n_trg_dim), jnp.float32),
        grid=(B,),
        in_specs=in_specs,
        out_specs=pl.BlockSpec((None, Lt, n_trg_dim), lambda b: (b, 0, 0)),
        compiler_params=pltpu.CompilerParams(
            dimension_semantics=("parallel",),
            vmem_limit_bytes=32 * 1024 * 1024),     # safe on v5e/v6e/v7x
    )(*args)


# ------------------------------ parameter init -------------------------------

def sinusoid_table(n_position, d_hid):
    pos = np.arange(n_position)[:, None].astype(np.float64)
    hid = np.arange(d_hid)[None, :]
    angle = pos / np.power(10000, 2 * (hid // 2) / d_hid)
    table = np.zeros((n_position, d_hid))
    table[:, 0::2] = np.sin(angle[:, 0::2])
    table[:, 1::2] = np.cos(angle[:, 1::2])
    return jnp.asarray(table, jnp.float32)


class KeyGen:
    def __init__(self, key):
        self._key = key

    def __call__(self):
        self._key, sub = jax.random.split(self._key)
        return sub


def xavier_uniform(key, shape):
    limit = float(np.sqrt(6.0 / (shape[0] + shape[1])))
    return jax.random.uniform(key, shape, jnp.float32, -limit, limit)


def init_params(key, *, n_src_vocab, n_trg_dim, d_model, d_inner, n_head, d_k, d_v,
                n_layers, n_layers_e, src_len, trg_len):
    kg = KeyGen(key)
    q_scale = 1.0 / float(d_k) ** 0.5
    ones_d = jnp.ones((d_model,), jnp.float32)
    zeros_d = jnp.zeros((d_model,), jnp.float32)

    def mha_self_weights():
        # 1/sqrt(d_k) attention scale folded into the Q projection columns.
        w_q = xavier_uniform(kg(), (d_model, n_head * d_k)) * q_scale
        w_k = xavier_uniform(kg(), (d_model, n_head * d_k))
        w_v = xavier_uniform(kg(), (d_model, n_head * d_v))
        qkv = jnp.concatenate([w_q, w_k, w_v], axis=1).astype(jnp.bfloat16)
        fc = xavier_uniform(kg(), (n_head * d_v, d_model)).astype(jnp.bfloat16)
        return qkv, fc, ones_d, zeros_d

    def mha_cross_weights():
        w_q = (xavier_uniform(kg(), (d_model, n_head * d_k)) * q_scale).astype(jnp.bfloat16)
        w_k = xavier_uniform(kg(), (d_model, n_head * d_k))
        w_v = xavier_uniform(kg(), (d_model, n_head * d_v))
        kv = jnp.concatenate([w_k, w_v], axis=1).astype(jnp.bfloat16)
        fc = xavier_uniform(kg(), (n_head * d_v, d_model)).astype(jnp.bfloat16)
        return w_q, kv, fc, ones_d, zeros_d

    def ffn_weights():
        w1 = xavier_uniform(kg(), (d_model, d_inner)).astype(jnp.bfloat16)
        b1 = jnp.zeros((1, d_inner), jnp.float32)
        w2 = xavier_uniform(kg(), (d_inner, d_model)).astype(jnp.bfloat16)
        return w1, b1, w2, zeros_d, ones_d, zeros_d

    # -------- encoder --------
    e_qkv, e_fc, e_w1, e_b1, e_w2, e_vec = [], [], [], [], [], []
    for _ in range(n_layers_e):
        qkv, fc, a_g, a_b = mha_self_weights()
        w1, b1, w2, b2, f_g, f_b = ffn_weights()
        e_qkv.append(qkv); e_fc.append(fc); e_w1.append(w1); e_b1.append(b1); e_w2.append(w2)
        e_vec.append(jnp.stack([a_g, a_b, b2, f_g, f_b], axis=0))
    encoder = {
        "emb": xavier_uniform(kg(), (n_src_vocab, d_model)),
        "pos_table": sinusoid_table(src_len, d_model),
        "ln0": jnp.stack([ones_d, zeros_d], axis=0),
        "qkv_w": jnp.stack(e_qkv), "fc_w": jnp.stack(e_fc),
        "w1": jnp.stack(e_w1), "b1": jnp.stack(e_b1), "w2": jnp.stack(e_w2),
        "vec": jnp.stack(e_vec),
    }

    # -------- decoder --------
    d_sq, d_sf, d_cq, d_ckv, d_cf, d_w1, d_b1, d_w2, d_vec = ([] for _ in range(9))
    for _ in range(n_layers):
        s_qkv, s_fc, s_g, s_b = mha_self_weights()
        c_q, c_kv, c_fc, c_g, c_b = mha_cross_weights()
        w1, b1, w2, b2, f_g, f_b = ffn_weights()
        d_sq.append(s_qkv); d_sf.append(s_fc)
        d_cq.append(c_q); d_ckv.append(c_kv); d_cf.append(c_fc)
        d_w1.append(w1); d_b1.append(b1); d_w2.append(w2)
        d_vec.append(jnp.stack([s_g, s_b, c_g, c_b, b2, f_g, f_b], axis=0))

    exp_w_f32 = xavier_uniform(kg(), (n_trg_dim, d_model))   # exp_emb (in, out) layout
    decoder = {
        "emb": xavier_uniform(kg(), (n_src_vocab, d_model)),
        "pos_table": sinusoid_table(trg_len, d_model),
        "ln0": jnp.stack([ones_d, zeros_d], axis=0),
        "exp_w": exp_w_f32.astype(jnp.bfloat16),
        "exp_b": jnp.zeros((1, d_model), jnp.float32),
        "s_qkv_w": jnp.stack(d_sq), "s_fc_w": jnp.stack(d_sf),
        "c_q_w": jnp.stack(d_cq), "c_kv_w": jnp.stack(d_ckv), "c_fc_w": jnp.stack(d_cf),
        "w1": jnp.stack(d_w1), "b1": jnp.stack(d_b1), "w2": jnp.stack(d_w2),
        "vec": jnp.stack(d_vec),
    }
    # trg_emb_prj_weight_sharing=True: projection weight == exp_emb.weight^T,
    # pre-transposed and pre-cast once at init (no per-forward transpose).
    prj_w = exp_w_f32.T.astype(jnp.bfloat16)                  # [d_model, n_trg_dim]
    # TODO(synk): cvae / feature_attention / one_step_loss branches (DecoderLayer
    # internals not provided) are not exercised with the default config and are
    # intentionally not implemented.
    return {"encoder": encoder, "decoder": decoder, "prj_w": prj_w}


# ----------------------------------- main ------------------------------------

if __name__ == "__main__":
    key = jax.random.PRNGKey(0)
    B, Ls, Lt = 2, 8, 8
    n_src_vocab, n_trg_dim = 16, 10
    d_model, d_inner = 32, 64
    n_head, d_k, d_v = 4, 8, 8
    n_layers, n_layers_e = 2, 2
    pad_idx = 0

    cfg = {"n_head": n_head, "d_k": d_k, "d_v": d_v, "d_model": d_model}

    kp, k1, k2, k3, k4 = jax.random.split(key, 5)
    params = init_params(kp, n_src_vocab=n_src_vocab, n_trg_dim=n_trg_dim,
                         d_model=d_model, d_inner=d_inner, n_head=n_head,
                         d_k=d_k, d_v=d_v, n_layers=n_layers,
                         n_layers_e=n_layers_e, src_len=Ls, trg_len=Lt + 1)

    src_seq = jax.random.randint(k1, (B, Ls), 1, n_src_vocab, dtype=jnp.int32)
    trg_seq = jax.random.randint(k2, (B, Lt), 1, n_src_vocab, dtype=jnp.int32)
    trg_exp = jax.random.normal(k3, (B, Lt, n_trg_dim), jnp.float32)
    exp_mask = jax.random.bernoulli(k4, 0.5, (B, Lt))

    src_mask = (src_seq != pad_idx)[:, None, :].astype(jnp.int32)       # [B, 1, Ls]
    causal = jnp.tril(jnp.ones((Lt, Lt), jnp.int32))
    trg_pad = (trg_seq != pad_idx)[:, None, :].astype(jnp.int32)        # [B, 1, Lt]
    trg_mask = trg_pad * causal[None]                                   # [B, Lt, Lt]

    fwd = jax.jit(functools.partial(transformer_forward, cfg=cfg))
    seq_logit = fwd(params, src_seq, src_mask, trg_seq, trg_mask, trg_exp, exp_mask)
    jax.block_until_ready(seq_logit)
    assert seq_logit.shape == (B, Lt, n_trg_dim)
    assert bool(jnp.all(jnp.isfinite(seq_logit)))
    print("KERNEL_OK")
</pallas_src>

<mosaic_0001>
module attributes {stable_mosaic.version = 11 : i64} {
  func.func @_transformer_kernel(%arg0: i32, %arg1: memref<1x8x32xf32, #tpu.memory_space<vmem>>, %arg2: memref<1x8x8xf32, #tpu.memory_space<vmem>>, %arg3: memref<1x8x32xf32, #tpu.memory_space<vmem>>, %arg4: memref<1x8x10xf32, #tpu.memory_space<vmem>>, %arg5: memref<1x8x1xf32, #tpu.memory_space<vmem>>, %arg6: memref<8x32xf32, #tpu.memory_space<vmem>>, %arg7: memref<1x8x8xf32, #tpu.memory_space<vmem>>, %arg8: memref<1x8x8xf32, #tpu.memory_space<vmem>>, %arg9: memref<2x32xf32, #tpu.memory_space<vmem>>, %arg10: memref<2x32x96xbf16, #tpu.memory_space<vmem>>, %arg11: memref<2x32x32xbf16, #tpu.memory_space<vmem>>, %arg12: memref<2x32x64xbf16, #tpu.memory_space<vmem>>, %arg13: memref<2x1x64xf32, #tpu.memory_space<vmem>>, %arg14: memref<2x64x32xbf16, #tpu.memory_space<vmem>>, %arg15: memref<2x5x32xf32, #tpu.memory_space<vmem>>, %arg16: memref<2x32xf32, #tpu.memory_space<vmem>>, %arg17: memref<10x32xbf16, #tpu.memory_space<vmem>>, %arg18: memref<1x32xf32, #tpu.memory_space<vmem>>, %arg19: memref<2x32x96xbf16, #tpu.memory_space<vmem>>, %arg20: memref<2x32x32xbf16, #tpu.memory_space<vmem>>, %arg21: memref<2x32x32xbf16, #tpu.memory_space<vmem>>, %arg22: memref<2x32x64xbf16, #tpu.memory_space<vmem>>, %arg23: memref<2x32x32xbf16, #tpu.memory_space<vmem>>, %arg24: memref<2x32x64xbf16, #tpu.memory_space<vmem>>, %arg25: memref<2x1x64xf32, #tpu.memory_space<vmem>>, %arg26: memref<2x64x32xbf16, #tpu.memory_space<vmem>>, %arg27: memref<2x7x32xf32, #tpu.memory_space<vmem>>, %arg28: memref<32x10xbf16, #tpu.memory_space<vmem>>, %arg29: memref<1x8x10xf32, #tpu.memory_space<vmem>>) attributes {dimension_semantics = [#tpu.dimension_semantics<parallel>], iteration_bounds = array<i64: 2>, scalar_prefetch = 0 : i64, scratch_operands = 0 : i64, tpu.core_type = #tpu.core_type<tc>, window_params = [{transform_indices = @transform_0, window_bounds = array<i64: 1, 8, 32>}, {transform_indices = @transform_1, window_bounds = array<i64: 1, 8, 8>}, {transform_indices = @transform_2, window_bounds = array<i64: 1, 8, 32>}, {transform_indices = @transform_3, window_bounds = array<i64: 1, 8, 10>}, {transform_indices = @transform_4, window_bounds = array<i64: 1, 8, 1>}, {pipeline_mode = #tpu.pipeline_mode<synchronous>, transform_indices = @transform_5, window_bounds = array<i64: 8, 32>}, {transform_indices = @transform_6, window_bounds = array<i64: 1, 8, 8>}, {transform_indices = @transform_7, window_bounds = array<i64: 1, 8, 8>}, {pipeline_mode = #tpu.pipeline_mode<synchronous>, transform_indices = @transform_8, window_bounds = array<i64: 2, 32>}, {pipeline_mode = #tpu.pipeline_mode<synchronous>, transform_indices = @transform_9, window_bounds = array<i64: 2, 32, 96>}, {pipeline_mode = #tpu.pipeline_mode<synchronous>, transform_indices = @transform_10, window_bounds = array<i64: 2, 32, 32>}, {pipeline_mode = #tpu.pipeline_mode<synchronous>, transform_indices = @transform_11, window_bounds = array<i64: 2, 32, 64>}, {pipeline_mode = #tpu.pipeline_mode<synchronous>, transform_indices = @transform_12, window_bounds = array<i64: 2, 1, 64>}, {pipeline_mode = #tpu.pipeline_mode<synchronous>, transform_indices = @transform_13, window_bounds = array<i64: 2, 64, 32>}, {pipeline_mode = #tpu.pipeline_mode<synchronous>, transform_indices = @transform_14, window_bounds = array<i64: 2, 5, 32>}, {pipeline_mode = #tpu.pipeline_mode<synchronous>, transform_indices = @transform_15, window_bounds = array<i64: 2, 32>}, {pipeline_mode = #tpu.pipeline_mode<synchronous>, transform_indices = @transform_16, window_bounds = array<i64: 10, 32>}, {pipeline_mode = #tpu.pipeline_mode<synchronous>, transform_indices = @transform_17, window_bounds = array<i64: 1, 32>}, {pipeline_mode = #tpu.pipeline_mode<synchronous>, transform_indices = @transform_18, window_bounds = array<i64: 2, 32, 96>}, {pipeline_mode = #tpu.pipeline_mode<synchronous>, transform_indices = @transform_19, window_bounds = array<i64: 2, 32, 32>}, {pipeline_mode = #tpu.pipeline_mode<synchronous>, transform_indices = @transform_20, window_bounds = array<i64: 2, 32, 32>}, {pipeline_mode = #tpu.pipeline_mode<synchronous>, transform_indices = @transform_21, window_bounds = array<i64: 2, 32, 64>}, {pipeline_mode = #tpu.pipeline_mode<synchronous>, transform_indices = @transform_22, window_bounds = array<i64: 2, 32, 32>}, {pipeline_mode = #tpu.pipeline_mode<synchronous>, transform_indices = @transform_23, window_bounds = array<i64: 2, 32, 64>}, {pipeline_mode = #tpu.pipeline_mode<synchronous>, transform_indices = @transform_24, window_bounds = array<i64: 2, 1, 64>}, {pipeline_mode = #tpu.pipeline_mode<synchronous>, transform_indices = @transform_25, window_bounds = array<i64: 2, 64, 32>}, {pipeline_mode = #tpu.pipeline_mode<synchronous>, transform_indices = @transform_26, window_bounds = array<i64: 2, 7, 32>}, {pipeline_mode = #tpu.pipeline_mode<synchronous>, transform_indices = @transform_27, window_bounds = array<i64: 32, 10>}, {transform_indices = @transform_28, window_bounds = array<i64: 1, 8, 10>}]} {
    %c0 = arith.constant 0 : index
    %c0_0 = arith.constant 0 : index
    %c0_1 = arith.constant 0 : index
    %0 = vector.load %arg1[%c0, %c0_0, %c0_1] : memref<1x8x32xf32, #tpu.memory_space<vmem>>, vector<1x8x32xf32>
    %1 = vector.shape_cast %0 : vector<1x8x32xf32> to vector<8x32xf32>
    %c0_2 = arith.constant 0 : index
    %c0_3 = arith.constant 0 : index
    %2 = vector.load %arg9[%c0_2, %c0_3] : memref<2x32xf32, #tpu.memory_space<vmem>>, vector<1x32xf32>
    %c1 = arith.constant 1 : index
    %c0_4 = arith.constant 0 : index
    %3 = vector.load %arg9[%c1, %c0_4] : memref<2x32xf32, #tpu.memory_space<vmem>>, vector<1x32xf32>
    %cst = arith.constant dense<0.000000e+00> : vector<8xf32>
    %4 = vector.multi_reduction <add>, %1, %cst [1] : vector<8x32xf32> to vector<8xf32>
    %5 = vector.shape_cast %4 : vector<8xf32> to vector<8x1xf32>
    %cst_5 = arith.constant 3.200000e+01 : f32
    %6 = vector.broadcast %cst_5 : f32 to vector<8x1xf32>
    %7 = arith.divf %5, %6 : vector<8x1xf32>
    %8 = vector.broadcast %7 : vector<8x1xf32> to vector<8x32xf32>
    %9 = arith.subf %1, %8 : vector<8x32xf32>
    %10 = arith.mulf %9, %9 : vector<8x32xf32>
    %cst_6 = arith.constant dense<0.000000e+00> : vector<8xf32>
    %11 = vector.multi_reduction <add>, %10, %cst_6 [1] : vector<8x32xf32> to vector<8xf32>
    %12 = vector.shape_cast %11 : vector<8xf32> to vector<8x1xf32>
    %cst_7 = arith.constant 3.200000e+01 : f32
    %13 = vector.broadcast %cst_7 : f32 to vector<8x1xf32>
    %14 = arith.divf %12, %13 : vector<8x1xf32>
    %15 = vector.broadcast %7 : vector<8x1xf32> to vector<8x32xf32>
    %16 = arith.subf %1, %15 : vector<8x32xf32>
    %cst_8 = arith.constant 9.99999997E-7 : f32
    %17 = vector.broadcast %cst_8 : f32 to vector<8x1xf32>
    %18 = arith.addf %14, %17 : vector<8x1xf32>
    %19 = math.rsqrt %18 : vector<8x1xf32>
    %20 = vector.broadcast %19 : vector<8x1xf32> to vector<8x32xf32>
    %21 = arith.mulf %16, %20 : vector<8x32xf32>
    %22 = vector.broadcast %2 : vector<1x32xf32> to vector<8x32xf32>
    %23 = arith.mulf %21, %22 : vector<8x32xf32>
    %24 = vector.broadcast %3 : vector<1x32xf32> to vector<8x32xf32>
    %25 = arith.addf %23, %24 : vector<8x32xf32>
    %c0_9 = arith.constant 0 : index
    %c0_10 = arith.constant 0 : index
    %c0_11 = arith.constant 0 : index
    %26 = vector.load %arg2[%c0_9, %c0_10, %c0_11] : memref<1x8x8xf32, #tpu.memory_space<vmem>>, vector<1x8x8xf32>
    %27 = vector.shape_cast %26 : vector<1x8x8xf32> to vector<8x8xf32>
    %c0_12 = arith.constant 0 : index
    %c0_13 = arith.constant 0 : index
    %c0_14 = arith.constant 0 : index
    %28 = vector.load %arg15[%c0_12, %c0_13, %c0_14] : memref<2x5x32xf32, #tpu.memory_space<vmem>>, vector<1x5x32xf32>
    %29 = vector.shape_cast %28 : vector<1x5x32xf32> to vector<5x32xf32>
    %c0_15 = arith.constant 0 : index
    %c0_16 = arith.constant 0 : index
    %c0_17 = arith.constant 0 : index
    %30 = vector.load %arg10[%c0_15, %c0_16, %c0_17] : memref<2x32x96xbf16, #tpu.memory_space<vmem>>, vector<1x32x96xbf16>
    %31 = vector.shape_cast %30 : vector<1x32x96xbf16> to vector<32x96xbf16>
    %c0_18 = arith.constant 0 : index
    %c0_19 = arith.constant 0 : index
    %c0_20 = arith.constant 0 : index
    %32 = vector.load %arg11[%c0_18, %c0_19, %c0_20] : memref<2x32x32xbf16, #tpu.memory_space<vmem>>, vector<1x32x32xbf16>
    %33 = vector.shape_cast %32 : vector<1x32x32xbf16> to vector<32x32xbf16>
    %34 = vector.extract_strided_slice %29 {offsets = [0, 0], sizes = [1, 32], strides = [1, 1]} : vector<5x32xf32> to vector<1x32xf32>
    %35 = vector.extract_strided_slice %29 {offsets = [1, 0], sizes = [1, 32], strides = [1, 1]} : vector<5x32xf32> to vector<1x32xf32>
    %36 = arith.truncf %25 : vector<8x32xf32> to vector<8x32xbf16>
    %cst_21 = arith.constant dense<0.000000e+00> : vector<8x96xf32>
    %37 = tpu.matmul %36, %31, %cst_21 {dimension_numbers = #tpu.dot_dimension_numbers<[1], [0], [0], [1], [0, 0, 1, 1], [], []>} : vector<8x32xbf16>, vector<32x96xbf16>, vector<8x96xf32> -> vector<8x96xf32>
    %38 = vector.extract_strided_slice %37 {offsets = [0, 0], sizes = [8, 32], strides = [1, 1]} : vector<8x96xf32> to vector<8x32xf32>
    %39 = vector.extract_strided_slice %37 {offsets = [0, 32], sizes = [8, 32], strides = [1, 1]} : vector<8x96xf32> to vector<8x32xf32>
    %40 = vector.extract_strided_slice %37 {offsets = [0, 64], sizes = [8, 32], strides = [1, 1]} : vector<8x96xf32> to vector<8x32xf32>
    %41 = arith.truncf %38 : vector<8x32xf32> to vector<8x32xbf16>
    %42 = arith.truncf %39 : vector<8x32xf32> to vector<8x32xbf16>
    %43 = arith.truncf %40 : vector<8x32xf32> to vector<8x32xbf16>
    %44 = vector.extract_strided_slice %41 {offsets = [0, 0], sizes = [8, 8], strides = [1, 1]} : vector<8x32xbf16> to vector<8x8xbf16>
    %45 = vector.extract_strided_slice %42 {offsets = [0, 0], sizes = [8, 8], strides = [1, 1]} : vector<8x32xbf16> to vector<8x8xbf16>
    %46 = vector.extract_strided_slice %43 {offsets = [0, 0], sizes = [8, 8], strides = [1, 1]} : vector<8x32xbf16> to vector<8x8xbf16>
    "tpu.trace_start"() <{level = 10 : i32, message = "qd,kd->qk"}> : () -> ()
    %cst_22 = arith.constant dense<0.000000e+00> : vector<8x8xf32>
    %47 = tpu.matmul %44, %45, %cst_22 {dimension_numbers = #tpu.dot_dimension_numbers<[1], [1], [0], [0], [0, 0, 1, 0], [], []>} : vector<8x8xbf16>, vector<8x8xbf16>, vector<8x8xf32> -> vector<8x8xf32>
    "tpu.trace_stop"() : () -> ()
    %48 = arith.addf %47, %27 : vector<8x8xf32>
    %cst_23 = arith.constant dense<0xFF800000> : vector<8xf32>
    %49 = vector.multi_reduction <maximumf>, %48, %cst_23 [1] : vector<8x8xf32> to vector<8xf32>
    %50 = vector.shape_cast %49 : vector<8xf32> to vector<8x1xf32>
    %51 = vector.broadcast %50 : vector<8x1xf32> to vector<8x8xf32>
    %52 = arith.subf %48, %51 : vector<8x8xf32>
    %53 = math.exp %52 : vector<8x8xf32>
    %cst_24 = arith.constant dense<0.000000e+00> : vector<8xf32>
    %54 = vector.multi_reduction <add>, %53, %cst_24 [1] : vector<8x8xf32> to vector<8xf32>
    %55 = vector.shape_cast %54 : vector<8xf32> to vector<8x1xf32>
    %56 = tpu.reciprocal %55 {approx = true} : vector<8x1xf32> -> vector<8x1xf32>
    %57 = vector.broadcast %56 : vector<8x1xf32> to vector<8x8xf32>
    %58 = arith.mulf %53, %57 : vector<8x8xf32>
    %59 = arith.truncf %58 : vector<8x8xf32> to vector<8x8xbf16>
    %cst_25 = arith.constant dense<0.000000e+00> : vector<8x8xf32>
    %60 = tpu.matmul %59, %46, %cst_25 {dimension_numbers = #tpu.dot_dimension_numbers<[1], [0], [0], [1], [0, 0, 1, 1], [], []>} : vector<8x8xbf16>, vector<8x8xbf16>, vector<8x8xf32> -> vector<8x8xf32>
    %61 = vector.extract_strided_slice %41 {offsets = [0, 8], sizes = [8, 8], strides = [1, 1]} : vector<8x32xbf16> to vector<8x8xbf16>
    %62 = vector.extract_strided_slice %42 {offsets = [0, 8], sizes = [8, 8], strides = [1, 1]} : vector<8x32xbf16> to vector<8x8xbf16>
    %63 = vector.extract_strided_slice %43 {offsets = [0, 8], sizes = [8, 8], strides = [1, 1]} : vector<8x32xbf16> to vector<8x8xbf16>
    "tpu.trace_start"() <{level = 10 : i32, message = "qd,kd->qk"}> : () -> ()
    %cst_26 = arith.constant dense<0.000000e+00> : vector<8x8xf32>
    %64 = tpu.matmul %61, %62, %cst_26 {dimension_numbers = #tpu.dot_dimension_numbers<[1], [1], [0], [0], [0, 0, 1, 0], [], []>} : vector<8x8xbf16>, vector<8x8xbf16>, vector<8x8xf32> -> vector<8x8xf32>
    "tpu.trace_stop"() : () -> ()
    %65 = arith.addf %64, %27 : vector<8x8xf32>
    %cst_27 = arith.constant dense<0xFF800000> : vector<8xf32>
    %66 = vector.multi_reduction <maximumf>, %65, %cst_27 [1] : vector<8x8xf32> to vector<8xf32>
    %67 = vector.shape_cast %66 : vector<8xf32> to vector<8x1xf32>
    %68 = vector.broadcast %67 : vector<8x1xf32> to vector<8x8xf32>
    %69 = arith.subf %65, %68 : vector<8x8xf32>
    %70 = math.exp %69 : vector<8x8xf32>
    %cst_28 = arith.constant dense<0.000000e+00> : vector<8xf32>
    %71 = vector.multi_reduction <add>, %70, %cst_28 [1] : vector<8x8xf32> to vector<8xf32>
    %72 = vector.shape_cast %71 : vector<8xf32> to vector<8x1xf32>
    %73 = tpu.reciprocal %72 {approx = true} : vector<8x1xf32> -> vector<8x1xf32>
    %74 = vector.broadcast %73 : vector<8x1xf32> to vector<8x8xf32>
    %75 = arith.mulf %70, %74 : vector<8x8xf32>
    %76 = arith.truncf %75 : vector<8x8xf32> to vector<8x8xbf16>
    %cst_29 = arith.constant dense<0.000000e+00> : vector<8x8xf32>
    %77 = tpu.matmul %76, %63, %cst_29 {dimension_numbers = #tpu.dot_dimension_numbers<[1], [0], [0], [1], [0, 0, 1, 1], [], []>} : vector<8x8xbf16>, vector<8x8xbf16>, vector<8x8xf32> -> vector<8x8xf32>
    %78 = vector.extract_strided_slice %41 {offsets = [0, 16], sizes = [8, 8], strides = [1, 1]} : vector<8x32xbf16> to vector<8x8xbf16>
    %79 = vector.extract_strided_slice %42 {offsets = [0, 16], sizes = [8, 8], strides = [1, 1]} : vector<8x32xbf16> to vector<8x8xbf16>
    %80 = vector.extract_strided_slice %43 {offsets = [0, 16], sizes = [8, 8], strides = [1, 1]} : vector<8x32xbf16> to vector<8x8xbf16>
    "tpu.trace_start"() <{level = 10 : i32, message = "qd,kd->qk"}> : () -> ()
    %cst_30 = arith.constant dense<0.000000e+00> : vector<8x8xf32>
    %81 = tpu.matmul %78, %79, %cst_30 {dimension_numbers = #tpu.dot_dimension_numbers<[1], [1], [0], [0], [0, 0, 1, 0], [], []>} : vector<8x8xbf16>, vector<8x8xbf16>, vector<8x8xf32> -> vector<8x8xf32>
    "tpu.trace_stop"() : () -> ()
    %82 = arith.addf %81, %27 : vector<8x8xf32>
    %cst_31 = arith.constant dense<0xFF800000> : vector<8xf32>
    %83 = vector.multi_reduction <maximumf>, %82, %cst_31 [1] : vector<8x8xf32> to vector<8xf32>
    %84 = vector.shape_cast %83 : vector<8xf32> to vector<8x1xf32>
    %85 = vector.broadcast %84 : vector<8x1xf32> to vector<8x8xf32>
    %86 = arith.subf %82, %85 : vector<8x8xf32>
    %87 = math.exp %86 : vector<8x8xf32>
    %cst_32 = arith.constant dense<0.000000e+00> : vector<8xf32>
    %88 = vector.multi_reduction <add>, %87, %cst_32 [1] : vector<8x8xf32> to vector<8xf32>
    %89 = vector.shape_cast %88 : vector<8xf32> to vector<8x1xf32>
    %90 = tpu.reciprocal %89 {approx = true} : vector<8x1xf32> -> vector<8x1xf32>
    %91 = vector.broadcast %90 : vector<8x1xf32> to vector<8x8xf32>
    %92 = arith.mulf %87, %91 : vector<8x8xf32>
    %93 = arith.truncf %92 : vector<8x8xf32> to vector<8x8xbf16>
    %cst_33 = arith.constant dense<0.000000e+00> : vector<8x8xf32>
    %94 = tpu.matmul %93, %80, %cst_33 {dimension_numbers = #tpu.dot_dimension_numbers<[1], [0], [0], [1], [0, 0, 1, 1], [], []>} : vector<8x8xbf16>, vector<8x8xbf16>, vector<8x8xf32> -> vector<8x8xf32>
    %95 = vector.extract_strided_slice %41 {offsets = [0, 24], sizes = [8, 8], strides = [1, 1]} : vector<8x32xbf16> to vector<8x8xbf16>
    %96 = vector.extract_strided_slice %42 {offsets = [0, 24], sizes = [8, 8], strides = [1, 1]} : vector<8x32xbf16> to vector<8x8xbf16>
    %97 = vector.extract_strided_slice %43 {offsets = [0, 24], sizes = [8, 8], strides = [1, 1]} : vector<8x32xbf16> to vector<8x8xbf16>
    "tpu.trace_start"() <{level = 10 : i32, message = "qd,kd->qk"}> : () -> ()
    %cst_34 = arith.constant dense<0.000000e+00> : vector<8x8xf32>
    %98 = tpu.matmul %95, %96, %cst_34 {dimension_numbers = #tpu.dot_dimension_numbers<[1], [1], [0], [0], [0, 0, 1, 0], [], []>} : vector<8x8xbf16>, vector<8x8xbf16>, vector<8x8xf32> -> vector<8x8xf32>
    "tpu.trace_stop"() : () -> ()
    %99 = arith.addf %98, %27 : vector<8x8xf32>
    %cst_35 = arith.constant dense<0xFF800000> : vector<8xf32>
    %100 = vector.multi_reduction <maximumf>, %99, %cst_35 [1] : vector<8x8xf32> to vector<8xf32>
    %101 = vector.shape_cast %100 : vector<8xf32> to vector<8x1xf32>
    %102 = vector.broadcast %101 : vector<8x1xf32> to vector<8x8xf32>
    %103 = arith.subf %99, %102 : vector<8x8xf32>
    %104 = math.exp %103 : vector<8x8xf32>
    %cst_36 = arith.constant dense<0.000000e+00> : vector<8xf32>
    %105 = vector.multi_reduction <add>, %104, %cst_36 [1] : vector<8x8xf32> to vector<8xf32>
    %106 = vector.shape_cast %105 : vector<8xf32> to vector<8x1xf32>
    %107 = tpu.reciprocal %106 {approx = true} : vector<8x1xf32> -> vector<8x1xf32>
    %108 = vector.broadcast %107 : vector<8x1xf32> to vector<8x8xf32>
    %109 = arith.mulf %104, %108 : vector<8x8xf32>
    %110 = arith.truncf %109 : vector<8x8xf32> to vector<8x8xbf16>
    %cst_37 = arith.constant dense<0.000000e+00> : vector<8x8xf32>
    %111 = tpu.matmul %110, %97, %cst_37 {dimension_numbers = #tpu.dot_dimension_numbers<[1], [0], [0], [1], [0, 0, 1, 1], [], []>} : vector<8x8xbf16>, vector<8x8xbf16>, vector<8x8xf32> -> vector<8x8xf32>
    %112 = tpu.concatenate %60, %77, %94, %111 in 1 : vector<8x8xf32>, vector<8x8xf32>, vector<8x8xf32>, vector<8x8xf32> -> vector<8x32xf32>
    %113 = arith.truncf %112 : vector<8x32xf32> to vector<8x32xbf16>
    %cst_38 = arith.constant dense<0.000000e+00> : vector<8x32xf32>
    %114 = tpu.matmul %113, %33, %cst_38 {dimension_numbers = #tpu.dot_dimension_numbers<[1], [0], [0], [1], [0, 0, 1, 1], [], []>} : vector<8x32xbf16>, vector<32x32xbf16>, vector<8x32xf32> -> vector<8x32xf32>
    %115 = arith.addf %114, %25 : vector<8x32xf32>
    %cst_39 = arith.constant dense<0.000000e+00> : vector<8xf32>
    %116 = vector.multi_reduction <add>, %115, %cst_39 [1] : vector<8x32xf32> to vector<8xf32>
    %117 = vector.shape_cast %116 : vector<8xf32> to vector<8x1xf32>
    %cst_40 = arith.constant 3.200000e+01 : f32
    %118 = vector.broadcast %cst_40 : f32 to vector<8x1xf32>
    %119 = arith.divf %117, %118 : vector<8x1xf32>
    %120 = vector.broadcast %119 : vector<8x1xf32> to vector<8x32xf32>
    %121 = arith.subf %115, %120 : vector<8x32xf32>
    %122 = arith.mulf %121, %121 : vector<8x32xf32>
    %cst_41 = arith.constant dense<0.000000e+00> : vector<8xf32>
    %123 = vector.multi_reduction <add>, %122, %cst_41 [1] : vector<8x32xf32> to vector<8xf32>
    %124 = vector.shape_cast %123 : vector<8xf32> to vector<8x1xf32>
    %cst_42 = arith.constant 3.200000e+01 : f32
    %125 = vector.broadcast %cst_42 : f32 to vector<8x1xf32>
    %126 = arith.divf %124, %125 : vector<8x1xf32>
    %127 = vector.broadcast %119 : vector<8x1xf32> to vector<8x32xf32>
    %128 = arith.subf %115, %127 : vector<8x32xf32>
    %cst_43 = arith.constant 9.99999997E-7 : f32
    %129 = vector.broadcast %cst_43 : f32 to vector<8x1xf32>
    %130 = arith.addf %126, %129 : vector<8x1xf32>
    %131 = math.rsqrt %130 : vector<8x1xf32>
    %132 = vector.broadcast %131 : vector<8x1xf32> to vector<8x32xf32>
    %133 = arith.mulf %128, %132 : vector<8x32xf32>
    %134 = vector.broadcast %34 : vector<1x32xf32> to vector<8x32xf32>
    %135 = arith.mulf %133, %134 : vector<8x32xf32>
    %136 = vector.broadcast %35 : vector<1x32xf32> to vector<8x32xf32>
    %137 = arith.addf %135, %136 : vector<8x32xf32>
    %c0_44 = arith.constant 0 : index
    %c0_45 = arith.constant 0 : index
    %c0_46 = arith.constant 0 : index
    %138 = vector.load %arg12[%c0_44, %c0_45, %c0_46] : memref<2x32x64xbf16, #tpu.memory_space<vmem>>, vector<1x32x64xbf16>
    %139 = vector.shape_cast %138 : vector<1x32x64xbf16> to vector<32x64xbf16>
    %c0_47 = arith.constant 0 : index
    %c0_48 = arith.constant 0 : index
    %c0_49 = arith.constant 0 : index
    %140 = vector.load %arg13[%c0_47, %c0_48, %c0_49] : memref<2x1x64xf32, #tpu.memory_space<vmem>>, vector<1x1x64xf32>
    %141 = vector.shape_cast %140 : vector<1x1x64xf32> to vector<1x64xf32>
    %c0_50 = arith.constant 0 : index
    %c0_51 = arith.constant 0 : index
    %c0_52 = arith.constant 0 : index
    %142 = vector.load %arg14[%c0_50, %c0_51, %c0_52] : memref<2x64x32xbf16, #tpu.memory_space<vmem>>, vector<1x64x32xbf16>
    %143 = vector.shape_cast %142 : vector<1x64x32xbf16> to vector<64x32xbf16>
    %144 = vector.extract_strided_slice %29 {offsets = [2, 0], sizes = [1, 32], strides = [1, 1]} : vector<5x32xf32> to vector<1x32xf32>
    %145 = vector.extract_strided_slice %29 {offsets = [3, 0], sizes = [1, 32], strides = [1, 1]} : vector<5x32xf32> to vector<1x32xf32>
    %146 = vector.extract_strided_slice %29 {offsets = [4, 0], sizes = [1, 32], strides = [1, 1]} : vector<5x32xf32> to vector<1x32xf32>
    %147 = arith.truncf %137 : vector<8x32xf32> to vector<8x32xbf16>
    %cst_53 = arith.constant dense<0.000000e+00> : vector<8x64xf32>
    %148 = tpu.matmul %147, %139, %cst_53 {dimension_numbers = #tpu.dot_dimension_numbers<[1], [0], [0], [1], [0, 0, 1, 1], [], []>} : vector<8x32xbf16>, vector<32x64xbf16>, vector<8x64xf32> -> vector<8x64xf32>
    %149 = vector.broadcast %141 : vector<1x64xf32> to vector<8x64xf32>
    %150 = arith.addf %148, %149 : vector<8x64xf32>
    %cst_54 = arith.constant 0.000000e+00 : f32
    %151 = vector.broadcast %cst_54 : f32 to vector<8x64xf32>
    %152 = arith.maximumf %150, %151 : vector<8x64xf32>
    %153 = arith.truncf %152 : vector<8x64xf32> to vector<8x64xbf16>
    %cst_55 = arith.constant dense<0.000000e+00> : vector<8x32xf32>
    %154 = tpu.matmul %153, %143, %cst_55 {dimension_numbers = #tpu.dot_dimension_numbers<[1], [0], [0], [1], [0, 0, 1, 1], [], []>} : vector<8x64xbf16>, vector<64x32xbf16>, vector<8x32xf32> -> vector<8x32xf32>
    %155 = vector.broadcast %144 : vector<1x32xf32> to vector<8x32xf32>
    %156 = arith.addf %154, %155 : vector<8x32xf32>
    %157 = arith.addf %156, %137 : vector<8x32xf32>
    %cst_56 = arith.constant dense<0.000000e+00> : vector<8xf32>
    %158 = vector.multi_reduction <add>, %157, %cst_56 [1] : vector<8x32xf32> to vector<8xf32>
    %159 = vector.shape_cast %158 : vector<8xf32> to vector<8x1xf32>
    %cst_57 = arith.constant 3.200000e+01 : f32
    %160 = vector.broadcast %cst_57 : f32 to vector<8x1xf32>
    %161 = arith.divf %159, %160 : vector<8x1xf32>
    %162 = vector.broadcast %161 : vector<8x1xf32> to vector<8x32xf32>
    %163 = arith.subf %157, %162 : vector<8x32xf32>
    %164 = arith.mulf %163, %163 : vector<8x32xf32>
    %cst_58 = arith.constant dense<0.000000e+00> : vector<8xf32>
    %165 = vector.multi_reduction <add>, %164, %cst_58 [1] : vector<8x32xf32> to vector<8xf32>
    %166 = vector.shape_cast %165 : vector<8xf32> to vector<8x1xf32>
    %cst_59 = arith.constant 3.200000e+01 : f32
    %167 = vector.broadcast %cst_59 : f32 to vector<8x1xf32>
    %168 = arith.divf %166, %167 : vector<8x1xf32>
    %169 = vector.broadcast %161 : vector<8x1xf32> to vector<8x32xf32>
    %170 = arith.subf %157, %169 : vector<8x32xf32>
    %cst_60 = arith.constant 9.99999997E-7 : f32
    %171 = vector.broadcast %cst_60 : f32 to vector<8x1xf32>
    %172 = arith.addf %168, %171 : vector<8x1xf32>
    %173 = math.rsqrt %172 : vector<8x1xf32>
    %174 = vector.broadcast %173 : vector<8x1xf32> to vector<8x32xf32>
    %175 = arith.mulf %170, %174 : vector<8x32xf32>
    %176 = vector.broadcast %145 : vector<1x32xf32> to vector<8x32xf32>
    %177 = arith.mulf %175, %176 : vector<8x32xf32>
    %178 = vector.broadcast %146 : vector<1x32xf32> to vector<8x32xf32>
    %179 = arith.addf %177, %178 : vector<8x32xf32>
    %c1_61 = arith.constant 1 : index
    %c0_62 = arith.constant 0 : index
    %c0_63 = arith.constant 0 : index
    %180 = vector.load %arg15[%c1_61, %c0_62, %c0_63] : memref<2x5x32xf32, #tpu.memory_space<vmem>>, vector<1x5x32xf32>
    %181 = vector.shape_cast %180 : vector<1x5x32xf32> to vector<5x32xf32>
    %c1_64 = arith.constant 1 : index
    %c0_65 = arith.constant 0 : index
    %c0_66 = arith.constant 0 : index
    %182 = vector.load %arg10[%c1_64, %c0_65, %c0_66] : memref<2x32x96xbf16, #tpu.memory_space<vmem>>, vector<1x32x96xbf16>
    %183 = vector.shape_cast %182 : vector<1x32x96xbf16> to vector<32x96xbf16>
    %c1_67 = arith.constant 1 : index
    %c0_68 = arith.constant 0 : index
    %c0_69 = arith.constant 0 : index
    %184 = vector.load %arg11[%c1_67, %c0_68, %c0_69] : memref<2x32x32xbf16, #tpu.memory_space<vmem>>, vector<1x32x32xbf16>
    %185 = vector.shape_cast %184 : vector<1x32x32xbf16> to vector<32x32xbf16>
    %186 = vector.extract_strided_slice %181 {offsets = [0, 0], sizes = [1, 32], strides = [1, 1]} : vector<5x32xf32> to vector<1x32xf32>
    %187 = vector.extract_strided_slice %181 {offsets = [1, 0], sizes = [1, 32], strides = [1, 1]} : vector<5x32xf32> to vector<1x32xf32>
    %188 = arith.truncf %179 : vector<8x32xf32> to vector<8x32xbf16>
    %cst_70 = arith.constant dense<0.000000e+00> : vector<8x96xf32>
    %189 = tpu.matmul %188, %183, %cst_70 {dimension_numbers = #tpu.dot_dimension_numbers<[1], [0], [0], [1], [0, 0, 1, 1], [], []>} : vector<8x32xbf16>, vector<32x96xbf16>, vector<8x96xf32> -> vector<8x96xf32>
    %190 = vector.extract_strided_slice %189 {offsets = [0, 0], sizes = [8, 32], strides = [1, 1]} : vector<8x96xf32> to vector<8x32xf32>
    %191 = vector.extract_strided_slice %189 {offsets = [0, 32], sizes = [8, 32], strides = [1, 1]} : vector<8x96xf32> to vector<8x32xf32>
    %192 = vector.extract_strided_slice %189 {offsets = [0, 64], sizes = [8, 32], strides = [1, 1]} : vector<8x96xf32> to vector<8x32xf32>
    %193 = arith.truncf %190 : vector<8x32xf32> to vector<8x32xbf16>
    %194 = arith.truncf %191 : vector<8x32xf32> to vector<8x32xbf16>
    %195 = arith.truncf %192 : vector<8x32xf32> to vector<8x32xbf16>
    %196 = vector.extract_strided_slice %193 {offsets = [0, 0], sizes = [8, 8], strides = [1, 1]} : vector<8x32xbf16> to vector<8x8xbf16>
    %197 = vector.extract_strided_slice %194 {offsets = [0, 0], sizes = [8, 8], strides = [1, 1]} : vector<8x32xbf16> to vector<8x8xbf16>
    %198 = vector.extract_strided_slice %195 {offsets = [0, 0], sizes = [8, 8], strides = [1, 1]} : vector<8x32xbf16> to vector<8x8xbf16>
    "tpu.trace_start"() <{level = 10 : i32, message = "qd,kd->qk"}> : () -> ()
    %cst_71 = arith.constant dense<0.000000e+00> : vector<8x8xf32>
    %199 = tpu.matmul %196, %197, %cst_71 {dimension_numbers = #tpu.dot_dimension_numbers<[1], [1], [0], [0], [0, 0, 1, 0], [], []>} : vector<8x8xbf16>, vector<8x8xbf16>, vector<8x8xf32> -> vector<8x8xf32>
    "tpu.trace_stop"() : () -> ()
    %200 = arith.addf %199, %27 : vector<8x8xf32>
    %cst_72 = arith.constant dense<0xFF800000> : vector<8xf32>
    %201 = vector.multi_reduction <maximumf>, %200, %cst_72 [1] : vector<8x8xf32> to vector<8xf32>
    %202 = vector.shape_cast %201 : vector<8xf32> to vector<8x1xf32>
    %203 = vector.broadcast %202 : vector<8x1xf32> to vector<8x8xf32>
    %204 = arith.subf %200, %203 : vector<8x8xf32>
    %205 = math.exp %204 : vector<8x8xf32>
    %cst_73 = arith.constant dense<0.000000e+00> : vector<8xf32>
    %206 = vector.multi_reduction <add>, %205, %cst_73 [1] : vector<8x8xf32> to vector<8xf32>
    %207 = vector.shape_cast %206 : vector<8xf32> to vector<8x1xf32>
    %208 = tpu.reciprocal %207 {approx = true} : vector<8x1xf32> -> vector<8x1xf32>
    %209 = vector.broadcast %208 : vector<8x1xf32> to vector<8x8xf32>
    %210 = arith.mulf %205, %209 : vector<8x8xf32>
    %211 = arith.truncf %210 : vector<8x8xf32> to vector<8x8xbf16>
    %cst_74 = arith.constant dense<0.000000e+00> : vector<8x8xf32>
    %212 = tpu.matmul %211, %198, %cst_74 {dimension_numbers = #tpu.dot_dimension_numbers<[1], [0], [0], [1], [0, 0, 1, 1], [], []>} : vector<8x8xbf16>, vector<8x8xbf16>, vector<8x8xf32> -> vector<8x8xf32>
    %213 = vector.extract_strided_slice %193 {offsets = [0, 8], sizes = [8, 8], strides = [1, 1]} : vector<8x32xbf16> to vector<8x8xbf16>
    %214 = vector.extract_strided_slice %194 {offsets = [0, 8], sizes = [8, 8], strides = [1, 1]} : vector<8x32xbf16> to vector<8x8xbf16>
    %215 = vector.extract_strided_slice %195 {offsets = [0, 8], sizes = [8, 8], strides = [1, 1]} : vector<8x32xbf16> to vector<8x8xbf16>
    "tpu.trace_start"() <{level = 10 : i32, message = "qd,kd->qk"}> : () -> ()
    %cst_75 = arith.constant dense<0.000000e+00> : vector<8x8xf32>
    %216 = tpu.matmul %213, %214, %cst_75 {dimension_numbers = #tpu.dot_dimension_numbers<[1], [1], [0], [0], [0, 0, 1, 0], [], []>} : vector<8x8xbf16>, vector<8x8xbf16>, vector<8x8xf32> -> vector<8x8xf32>
    "tpu.trace_stop"() : () -> ()
    %217 = arith.addf %216, %27 : vector<8x8xf32>
    %cst_76 = arith.constant dense<0xFF800000> : vector<8xf32>
    %218 = vector.multi_reduction <maximumf>, %217, %cst_76 [1] : vector<8x8xf32> to vector<8xf32>
    %219 = vector.shape_cast %218 : vector<8xf32> to vector<8x1xf32>
    %220 = vector.broadcast %219 : vector<8x1xf32> to vector<8x8xf32>
    %221 = arith.subf %217, %220 : vector<8x8xf32>
    %222 = math.exp %221 : vector<8x8xf32>
    %cst_77 = arith.constant dense<0.000000e+00> : vector<8xf32>
    %223 = vector.multi_reduction <add>, %222, %cst_77 [1] : vector<8x8xf32> to vector<8xf32>
    %224 = vector.shape_cast %223 : vector<8xf32> to vector<8x1xf32>
    %225 = tpu.reciprocal %224 {approx = true} : vector<8x1xf32> -> vector<8x1xf32>
    %226 = vector.broadcast %225 : vector<8x1xf32> to vector<8x8xf32>
    %227 = arith.mulf %222, %226 : vector<8x8xf32>
    %228 = arith.truncf %227 : vector<8x8xf32> to vector<8x8xbf16>
    %cst_78 = arith.constant dense<0.000000e+00> : vector<8x8xf32>
    %229 = tpu.matmul %228, %215, %cst_78 {dimension_numbers = #tpu.dot_dimension_numbers<[1], [0], [0], [1], [0, 0, 1, 1], [], []>} : vector<8x8xbf16>, vector<8x8xbf16>, vector<8x8xf32> -> vector<8x8xf32>
    %230 = vector.extract_strided_slice %193 {offsets = [0, 16], sizes = [8, 8], strides = [1, 1]} : vector<8x32xbf16> to vector<8x8xbf16>
    %231 = vector.extract_strided_slice %194 {offsets = [0, 16], sizes = [8, 8], strides = [1, 1]} : vector<8x32xbf16> to vector<8x8xbf16>
    %232 = vector.extract_strided_slice %195 {offsets = [0, 16], sizes = [8, 8], strides = [1, 1]} : vector<8x32xbf16> to vector<8x8xbf16>
    "tpu.trace_start"() <{level = 10 : i32, message = "qd,kd->qk"}> : () -> ()
    %cst_79 = arith.constant dense<0.000000e+00> : vector<8x8xf32>
    %233 = tpu.matmul %230, %231, %cst_79 {dimension_numbers = #tpu.dot_dimension_numbers<[1], [1], [0], [0], [0, 0, 1, 0], [], []>} : vector<8x8xbf16>, vector<8x8xbf16>, vector<8x8xf32> -> vector<8x8xf32>
    "tpu.trace_stop"() : () -> ()
    %234 = arith.addf %233, %27 : vector<8x8xf32>
    %cst_80 = arith.constant dense<0xFF800000> : vector<8xf32>
    %235 = vector.multi_reduction <maximumf>, %234, %cst_80 [1] : vector<8x8xf32> to vector<8xf32>
    %236 = vector.shape_cast %235 : vector<8xf32> to vector<8x1xf32>
    %237 = vector.broadcast %236 : vector<8x1xf32> to vector<8x8xf32>
    %238 = arith.subf %234, %237 : vector<8x8xf32>
    %239 = math.exp %238 : vector<8x8xf32>
    %cst_81 = arith.constant dense<0.000000e+00> : vector<8xf32>
    %240 = vector.multi_reduction <add>, %239, %cst_81 [1] : vector<8x8xf32> to vector<8xf32>
    %241 = vector.shape_cast %240 : vector<8xf32> to vector<8x1xf32>
    %242 = tpu.reciprocal %241 {approx = true} : vector<8x1xf32> -> vector<8x1xf32>
    %243 = vector.broadcast %242 : vector<8x1xf32> to vector<8x8xf32>
    %244 = arith.mulf %239, %243 : vector<8x8xf32>
    %245 = arith.truncf %244 : vector<8x8xf32> to vector<8x8xbf16>
    %cst_82 = arith.constant dense<0.000000e+00> : vector<8x8xf32>
    %246 = tpu.matmul %245, %232, %cst_82 {dimension_numbers = #tpu.dot_dimension_numbers<[1], [0], [0], [1], [0, 0, 1, 1], [], []>} : vector<8x8xbf16>, vector<8x8xbf16>, vector<8x8xf32> -> vector<8x8xf32>
    %247 = vector.extract_strided_slice %193 {offsets = [0, 24], sizes = [8, 8], strides = [1, 1]} : vector<8x32xbf16> to vector<8x8xbf16>
    %248 = vector.extract_strided_slice %194 {offsets = [0, 24], sizes = [8, 8], strides = [1, 1]} : vector<8x32xbf16> to vector<8x8xbf16>
    %249 = vector.extract_strided_slice %195 {offsets = [0, 24], sizes = [8, 8], strides = [1, 1]} : vector<8x32xbf16> to vector<8x8xbf16>
    "tpu.trace_start"() <{level = 10 : i32, message = "qd,kd->qk"}> : () -> ()
    %cst_83 = arith.constant dense<0.000000e+00> : vector<8x8xf32>
    %250 = tpu.matmul %247, %248, %cst_83 {dimension_numbers = #tpu.dot_dimension_numbers<[1], [1], [0], [0], [0, 0, 1, 0], [], []>} : vector<8x8xbf16>, vector<8x8xbf16>, vector<8x8xf32> -> vector<8x8xf32>
    "tpu.trace_stop"() : () -> ()
    %251 = arith.addf %250, %27 : vector<8x8xf32>
    %cst_84 = arith.constant dense<0xFF800000> : vector<8xf32>
    %252 = vector.multi_reduction <maximumf>, %251, %cst_84 [1] : vector<8x8xf32> to vector<8xf32>
    %253 = vector.shape_cast %252 : vector<8xf32> to vector<8x1xf32>
    %254 = vector.broadcast %253 : vector<8x1xf32> to vector<8x8xf32>
    %255 = arith.subf %251, %254 : vector<8x8xf32>
    %256 = math.exp %255 : vector<8x8xf32>
    %cst_85 = arith.constant dense<0.000000e+00> : vector<8xf32>
    %257 = vector.multi_reduction <add>, %256, %cst_85 [1] : vector<8x8xf32> to vector<8xf32>
    %258 = vector.shape_cast %257 : vector<8xf32> to vector<8x1xf32>
    %259 = tpu.reciprocal %258 {approx = true} : vector<8x1xf32> -> vector<8x1xf32>
    %260 = vector.broadcast %259 : vector<8x1xf32> to vector<8x8xf32>
    %261 = arith.mulf %256, %260 : vector<8x8xf32>
    %262 = arith.truncf %261 : vector<8x8xf32> to vector<8x8xbf16>
    %cst_86 = arith.constant dense<0.000000e+00> : vector<8x8xf32>
    %263 = tpu.matmul %262, %249, %cst_86 {dimension_numbers = #tpu.dot_dimension_numbers<[1], [0], [0], [1], [0, 0, 1, 1], [], []>} : vector<8x8xbf16>, vector<8x8xbf16>, vector<8x8xf32> -> vector<8x8xf32>
    %264 = tpu.concatenate %212, %229, %246, %263 in 1 : vector<8x8xf32>, vector<8x8xf32>, vector<8x8xf32>, vector<8x8xf32> -> vector<8x32xf32>
    %265 = arith.truncf %264 : vector<8x32xf32> to vector<8x32xbf16>
    %cst_87 = arith.constant dense<0.000000e+00> : vector<8x32xf32>
    %266 = tpu.matmul %265, %185, %cst_87 {dimension_numbers = #tpu.dot_dimension_numbers<[1], [0], [0], [1], [0, 0, 1, 1], [], []>} : vector<8x32xbf16>, vector<32x32xbf16>, vector<8x32xf32> -> vector<8x32xf32>
    %267 = arith.addf %266, %179 : vector<8x32xf32>
    %cst_88 = arith.constant dense<0.000000e+00> : vector<8xf32>
    %268 = vector.multi_reduction <add>, %267, %cst_88 [1] : vector<8x32xf32> to vector<8xf32>
    %269 = vector.shape_cast %268 : vector<8xf32> to vector<8x1xf32>
    %cst_89 = arith.constant 3.200000e+01 : f32
    %270 = vector.broadcast %cst_89 : f32 to vector<8x1xf32>
    %271 = arith.divf %269, %270 : vector<8x1xf32>
    %272 = vector.broadcast %271 : vector<8x1xf32> to vector<8x32xf32>
    %273 = arith.subf %267, %272 : vector<8x32xf32>
    %274 = arith.mulf %273, %273 : vector<8x32xf32>
    %cst_90 = arith.constant dense<0.000000e+00> : vector<8xf32>
    %275 = vector.multi_reduction <add>, %274, %cst_90 [1] : vector<8x32xf32> to vector<8xf32>
    %276 = vector.shape_cast %275 : vector<8xf32> to vector<8x1xf32>
    %cst_91 = arith.constant 3.200000e+01 : f32
    %277 = vector.broadcast %cst_91 : f32 to vector<8x1xf32>
    %278 = arith.divf %276, %277 : vector<8x1xf32>
    %279 = vector.broadcast %271 : vector<8x1xf32> to vector<8x32xf32>
    %280 = arith.subf %267, %279 : vector<8x32xf32>
    %cst_92 = arith.constant 9.99999997E-7 : f32
    %281 = vector.broadcast %cst_92 : f32 to vector<8x1xf32>
    %282 = arith.addf %278, %281 : vector<8x1xf32>
    %283 = math.rsqrt %282 : vector<8x1xf32>
    %284 = vector.broadcast %283 : vector<8x1xf32> to vector<8x32xf32>
    %285 = arith.mulf %280, %284 : vector<8x32xf32>
    %286 = vector.broadcast %186 : vector<1x32xf32> to vector<8x32xf32>
    %287 = arith.mulf %285, %286 : vector<8x32xf32>
    %288 = vector.broadcast %187 : vector<1x32xf32> to vector<8x32xf32>
    %289 = arith.addf %287, %288 : vector<8x32xf32>
    %c1_93 = arith.constant 1 : index
    %c0_94 = arith.constant 0 : index
    %c0_95 = arith.constant 0 : index
    %290 = vector.load %arg12[%c1_93, %c0_94, %c0_95] : memref<2x32x64xbf16, #tpu.memory_space<vmem>>, vector<1x32x64xbf16>
    %291 = vector.shape_cast %290 : vector<1x32x64xbf16> to vector<32x64xbf16>
    %c1_96 = arith.constant 1 : index
    %c0_97 = arith.constant 0 : index
    %c0_98 = arith.constant 0 : index
    %292 = vector.load %arg13[%c1_96, %c0_97, %c0_98] : memref<2x1x64xf32, #tpu.memory_space<vmem>>, vector<1x1x64xf32>
    %293 = vector.shape_cast %292 : vector<1x1x64xf32> to vector<1x64xf32>
    %c1_99 = arith.constant 1 : index
    %c0_100 = arith.constant 0 : index
    %c0_101 = arith.constant 0 : index
    %294 = vector.load %arg14[%c1_99, %c0_100, %c0_101] : memref<2x64x32xbf16, #tpu.memory_space<vmem>>, vector<1x64x32xbf16>
    %295 = vector.shape_cast %294 : vector<1x64x32xbf16> to vector<64x32xbf16>
    %296 = vector.extract_strided_slice %181 {offsets = [2, 0], sizes = [1, 32], strides = [1, 1]} : vector<5x32xf32> to vector<1x32xf32>
    %297 = vector.extract_strided_slice %181 {offsets = [3, 0], sizes = [1, 32], strides = [1, 1]} : vector<5x32xf32> to vector<1x32xf32>
    %298 = vector.extract_strided_slice %181 {offsets = [4, 0], sizes = [1, 32], strides = [1, 1]} : vector<5x32xf32> to vector<1x32xf32>
    %299 = arith.truncf %289 : vector<8x32xf32> to vector<8x32xbf16>
    %cst_102 = arith.constant dense<0.000000e+00> : vector<8x64xf32>
    %300 = tpu.matmul %299, %291, %cst_102 {dimension_numbers = #tpu.dot_dimension_numbers<[1], [0], [0], [1], [0, 0, 1, 1], [], []>} : vector<8x32xbf16>, vector<32x64xbf16>, vector<8x64xf32> -> vector<8x64xf32>
    %301 = vector.broadcast %293 : vector<1x64xf32> to vector<8x64xf32>
    %302 = arith.addf %300, %301 : vector<8x64xf32>
    %cst_103 = arith.constant 0.000000e+00 : f32
    %303 = vector.broadcast %cst_103 : f32 to vector<8x64xf32>
    %304 = arith.maximumf %302, %303 : vector<8x64xf32>
    %305 = arith.truncf %304 : vector<8x64xf32> to vector<8x64xbf16>
    %cst_104 = arith.constant dense<0.000000e+00> : vector<8x32xf32>
    %306 = tpu.matmul %305, %295, %cst_104 {dimension_numbers = #tpu.dot_dimension_numbers<[1], [0], [0], [1], [0, 0, 1, 1], [], []>} : vector<8x64xbf16>, vector<64x32xbf16>, vector<8x32xf32> -> vector<8x32xf32>
    %307 = vector.broadcast %296 : vector<1x32xf32> to vector<8x32xf32>
    %308 = arith.addf %306, %307 : vector<8x32xf32>
    %309 = arith.addf %308, %289 : vector<8x32xf32>
    %cst_105 = arith.constant dense<0.000000e+00> : vector<8xf32>
    %310 = vector.multi_reduction <add>, %309, %cst_105 [1] : vector<8x32xf32> to vector<8xf32>
    %311 = vector.shape_cast %310 : vector<8xf32> to vector<8x1xf32>
    %cst_106 = arith.constant 3.200000e+01 : f32
    %312 = vector.broadcast %cst_106 : f32 to vector<8x1xf32>
    %313 = arith.divf %311, %312 : vector<8x1xf32>
    %314 = vector.broadcast %313 : vector<8x1xf32> to vector<8x32xf32>
    %315 = arith.subf %309, %314 : vector<8x32xf32>
    %316 = arith.mulf %315, %315 : vector<8x32xf32>
    %cst_107 = arith.constant dense<0.000000e+00> : vector<8xf32>
    %317 = vector.multi_reduction <add>, %316, %cst_107 [1] : vector<8x32xf32> to vector<8xf32>
    %318 = vector.shape_cast %317 : vector<8xf32> to vector<8x1xf32>
    %cst_108 = arith.constant 3.200000e+01 : f32
    %319 = vector.broadcast %cst_108 : f32 to vector<8x1xf32>
    %320 = arith.divf %318, %319 : vector<8x1xf32>
    %321 = vector.broadcast %313 : vector<8x1xf32> to vector<8x32xf32>
    %322 = arith.subf %309, %321 : vector<8x32xf32>
    %cst_109 = arith.constant 9.99999997E-7 : f32
    %323 = vector.broadcast %cst_109 : f32 to vector<8x1xf32>
    %324 = arith.addf %320, %323 : vector<8x1xf32>
    %325 = math.rsqrt %324 : vector<8x1xf32>
    %326 = vector.broadcast %325 : vector<8x1xf32> to vector<8x32xf32>
    %327 = arith.mulf %322, %326 : vector<8x32xf32>
    %328 = vector.broadcast %297 : vector<1x32xf32> to vector<8x32xf32>
    %329 = arith.mulf %327, %328 : vector<8x32xf32>
    %330 = vector.broadcast %298 : vector<1x32xf32> to vector<8x32xf32>
    %331 = arith.addf %329, %330 : vector<8x32xf32>
    %332 = arith.truncf %331 : vector<8x32xf32> to vector<8x32xbf16>
    %c0_110 = arith.constant 0 : index
    %c0_111 = arith.constant 0 : index
    %c0_112 = arith.constant 0 : index
    %333 = vector.load %arg5[%c0_110, %c0_111, %c0_112] : memref<1x8x1xf32, #tpu.memory_space<vmem>>, vector<1x8x1xf32>
    %334 = vector.shape_cast %333 : vector<1x8x1xf32> to vector<8x1xf32>
    %c0_113 = arith.constant 0 : index
    %c0_114 = arith.constant 0 : index
    %c0_115 = arith.constant 0 : index
    %335 = vector.load %arg4[%c0_113, %c0_114, %c0_115] : memref<1x8x10xf32, #tpu.memory_space<vmem>>, vector<1x8x10xf32>
    %336 = vector.shape_cast %335 : vector<1x8x10xf32> to vector<8x10xf32>
    %337 = arith.truncf %336 : vector<8x10xf32> to vector<8x10xbf16>
    %c0_116 = arith.constant 0 : index
    %c0_117 = arith.constant 0 : index
    %338 = vector.load %arg17[%c0_116, %c0_117] : memref<10x32xbf16, #tpu.memory_space<vmem>>, vector<10x32xbf16>
    %cst_118 = arith.constant dense<0.000000e+00> : vector<8x32xf32>
    %339 = tpu.matmul %337, %338, %cst_118 {dimension_numbers = #tpu.dot_dimension_numbers<[1], [0], [0], [1], [0, 0, 1, 1], [], []>} : vector<8x10xbf16>, vector<10x32xbf16>, vector<8x32xf32> -> vector<8x32xf32>
    %c0_119 = arith.constant 0 : index
    %c0_120 = arith.constant 0 : index
    %340 = vector.load %arg18[%c0_119, %c0_120] : memref<1x32xf32, #tpu.memory_space<vmem>>, vector<1x32xf32>
    %341 = vector.broadcast %340 : vector<1x32xf32> to vector<8x32xf32>
    %342 = arith.addf %339, %341 : vector<8x32xf32>
    %c0_121 = arith.constant 0 : index
    %c0_122 = arith.constant 0 : index
    %c0_123 = arith.constant 0 : index
    %343 = vector.load %arg3[%c0_121, %c0_122, %c0_123] : memref<1x8x32xf32, #tpu.memory_space<vmem>>, vector<1x8x32xf32>
    %344 = vector.shape_cast %343 : vector<1x8x32xf32> to vector<8x32xf32>
    %cst_124 = arith.constant 1.000000e+00 : f32
    %345 = vector.broadcast %cst_124 : f32 to vector<8x1xf32>
    %346 = arith.subf %345, %334 : vector<8x1xf32>
    %347 = vector.broadcast %346 : vector<8x1xf32> to vector<8x32xf32>
    %348 = arith.mulf %344, %347 : vector<8x32xf32>
    %349 = vector.broadcast %334 : vector<8x1xf32> to vector<8x32xf32>
    %350 = arith.mulf %342, %349 : vector<8x32xf32>
    %351 = arith.addf %348, %350 : vector<8x32xf32>
    %c0_125 = arith.constant 0 : index
    %c0_126 = arith.constant 0 : index
    %352 = vector.load %arg6[%c0_125, %c0_126] : memref<8x32xf32, #tpu.memory_space<vmem>>, vector<8x32xf32>
    %353 = arith.addf %351, %352 : vector<8x32xf32>
    %c0_127 = arith.constant 0 : index
    %c0_128 = arith.constant 0 : index
    %354 = vector.load %arg16[%c0_127, %c0_128] : memref<2x32xf32, #tpu.memory_space<vmem>>, vector<1x32xf32>
    %c1_129 = arith.constant 1 : index
    %c0_130 = arith.constant 0 : index
    %355 = vector.load %arg16[%c1_129, %c0_130] : memref<2x32xf32, #tpu.memory_space<vmem>>, vector<1x32xf32>
    %cst_131 = arith.constant dense<0.000000e+00> : vector<8xf32>
    %356 = vector.multi_reduction <add>, %353, %cst_131 [1] : vector<8x32xf32> to vector<8xf32>
    %357 = vector.shape_cast %356 : vector<8xf32> to vector<8x1xf32>
    %cst_132 = arith.constant 3.200000e+01 : f32
    %358 = vector.broadcast %cst_132 : f32 to vector<8x1xf32>
    %359 = arith.divf %357, %358 : vector<8x1xf32>
    %360 = vector.broadcast %359 : vector<8x1xf32> to vector<8x32xf32>
    %361 = arith.subf %353, %360 : vector<8x32xf32>
    %362 = arith.mulf %361, %361 : vector<8x32xf32>
    %cst_133 = arith.constant dense<0.000000e+00> : vector<8xf32>
    %363 = vector.multi_reduction <add>, %362, %cst_133 [1] : vector<8x32xf32> to vector<8xf32>
    %364 = vector.shape_cast %363 : vector<8xf32> to vector<8x1xf32>
    %cst_134 = arith.constant 3.200000e+01 : f32
    %365 = vector.broadcast %cst_134 : f32 to vector<8x1xf32>
    %366 = arith.divf %364, %365 : vector<8x1xf32>
    %367 = vector.broadcast %359 : vector<8x1xf32> to vector<8x32xf32>
    %368 = arith.subf %353, %367 : vector<8x32xf32>
    %cst_135 = arith.constant 9.99999997E-7 : f32
    %369 = vector.broadcast %cst_135 : f32 to vector<8x1xf32>
    %370 = arith.addf %366, %369 : vector<8x1xf32>
    %371 = math.rsqrt %370 : vector<8x1xf32>
    %372 = vector.broadcast %371 : vector<8x1xf32> to vector<8x32xf32>
    %373 = arith.mulf %368, %372 : vector<8x32xf32>
    %374 = vector.broadcast %354 : vector<1x32xf32> to vector<8x32xf32>
    %375 = arith.mulf %373, %374 : vector<8x32xf32>
    %376 = vector.broadcast %355 : vector<1x32xf32> to vector<8x32xf32>
    %377 = arith.addf %375, %376 : vector<8x32xf32>
    %c0_136 = arith.constant 0 : index
    %c0_137 = arith.constant 0 : index
    %c0_138 = arith.constant 0 : index
    %378 = vector.load %arg7[%c0_136, %c0_137, %c0_138] : memref<1x8x8xf32, #tpu.memory_space<vmem>>, vector<1x8x8xf32>
    %379 = vector.shape_cast %378 : vector<1x8x8xf32> to vector<8x8xf32>
    %c0_139 = arith.constant 0 : index
    %c0_140 = arith.constant 0 : index
    %c0_141 = arith.constant 0 : index
    %380 = vector.load %arg8[%c0_139, %c0_140, %c0_141] : memref<1x8x8xf32, #tpu.memory_space<vmem>>, vector<1x8x8xf32>
    %381 = vector.shape_cast %380 : vector<1x8x8xf32> to vector<8x8xf32>
    %c0_142 = arith.constant 0 : index
    %c0_143 = arith.constant 0 : index
    %c0_144 = arith.constant 0 : index
    %382 = vector.load %arg27[%c0_142, %c0_143, %c0_144] : memref<2x7x32xf32, #tpu.memory_space<vmem>>, vector<1x7x32xf32>
    %383 = vector.shape_cast %382 : vector<1x7x32xf32> to vector<7x32xf32>
    %c0_145 = arith.constant 0 : index
    %c0_146 = arith.constant 0 : index
    %c0_147 = arith.constant 0 : index
    %384 = vector.load %arg19[%c0_145, %c0_146, %c0_147] : memref<2x32x96xbf16, #tpu.memory_space<vmem>>, vector<1x32x96xbf16>
    %385 = vector.shape_cast %384 : vector<1x32x96xbf16> to vector<32x96xbf16>
    %c0_148 = arith.constant 0 : index
    %c0_149 = arith.constant 0 : index
    %c0_150 = arith.constant 0 : index
    %386 = vector.load %arg20[%c0_148, %c0_149, %c0_150] : memref<2x32x32xbf16, #tpu.memory_space<vmem>>, vector<1x32x32xbf16>
    %387 = vector.shape_cast %386 : vector<1x32x32xbf16> to vector<32x32xbf16>
    %388 = vector.extract_strided_slice %383 {offsets = [0, 0], sizes = [1, 32], strides = [1, 1]} : vector<7x32xf32> to vector<1x32xf32>
    %389 = vector.extract_strided_slice %383 {offsets = [1, 0], sizes = [1, 32], strides = [1, 1]} : vector<7x32xf32> to vector<1x32xf32>
    %390 = arith.truncf %377 : vector<8x32xf32> to vector<8x32xbf16>
    %cst_151 = arith.constant dense<0.000000e+00> : vector<8x96xf32>
    %391 = tpu.matmul %390, %385, %cst_151 {dimension_numbers = #tpu.dot_dimension_numbers<[1], [0], [0], [1], [0, 0, 1, 1], [], []>} : vector<8x32xbf16>, vector<32x96xbf16>, vector<8x96xf32> -> vector<8x96xf32>
    %392 = vector.extract_strided_slice %391 {offsets = [0, 0], sizes = [8, 32], strides = [1, 1]} : vector<8x96xf32> to vector<8x32xf32>
    %393 = vector.extract_strided_slice %391 {offsets = [0, 32], sizes = [8, 32], strides = [1, 1]} : vector<8x96xf32> to vector<8x32xf32>
    %394 = vector.extract_strided_slice %391 {offsets = [0, 64], sizes = [8, 32], strides = [1, 1]} : vector<8x96xf32> to vector<8x32xf32>
    %395 = arith.truncf %392 : vector<8x32xf32> to vector<8x32xbf16>
    %396 = arith.truncf %393 : vector<8x32xf32> to vector<8x32xbf16>
    %397 = arith.truncf %394 : vector<8x32xf32> to vector<8x32xbf16>
    %398 = vector.extract_strided_slice %395 {offsets = [0, 0], sizes = [8, 8], strides = [1, 1]} : vector<8x32xbf16> to vector<8x8xbf16>
    %399 = vector.extract_strided_slice %396 {offsets = [0, 0], sizes = [8, 8], strides = [1, 1]} : vector<8x32xbf16> to vector<8x8xbf16>
    %400 = vector.extract_strided_slice %397 {offsets = [0, 0], sizes = [8, 8], strides = [1, 1]} : vector<8x32xbf16> to vector<8x8xbf16>
    "tpu.trace_start"() <{level = 10 : i32, message = "qd,kd->qk"}> : () -> ()
    %cst_152 = arith.constant dense<0.000000e+00> : vector<8x8xf32>
    %401 = tpu.matmul %398, %399, %cst_152 {dimension_numbers = #tpu.dot_dimension_numbers<[1], [1], [0], [0], [0, 0, 1, 0], [], []>} : vector<8x8xbf16>, vector<8x8xbf16>, vector<8x8xf32> -> vector<8x8xf32>
    "tpu.trace_stop"() : () -> ()
    %402 = arith.addf %401, %379 : vector<8x8xf32>
    %cst_153 = arith.constant dense<0xFF800000> : vector<8xf32>
    %403 = vector.multi_reduction <maximumf>, %402, %cst_153 [1] : vector<8x8xf32> to vector<8xf32>
    %404 = vector.shape_cast %403 : vector<8xf32> to vector<8x1xf32>
    %405 = vector.broadcast %404 : vector<8x1xf32> to vector<8x8xf32>
    %406 = arith.subf %402, %405 : vector<8x8xf32>
    %407 = math.exp %406 : vector<8x8xf32>
    %cst_154 = arith.constant dense<0.000000e+00> : vector<8xf32>
    %408 = vector.multi_reduction <add>, %407, %cst_154 [1] : vector<8x8xf32> to vector<8xf32>
    %409 = vector.shape_cast %408 : vector<8xf32> to vector<8x1xf32>
    %410 = tpu.reciprocal %409 {approx = true} : vector<8x1xf32> -> vector<8x1xf32>
    %411 = vector.broadcast %410 : vector<8x1xf32> to vector<8x8xf32>
    %412 = arith.mulf %407, %411 : vector<8x8xf32>
    %413 = arith.truncf %412 : vector<8x8xf32> to vector<8x8xbf16>
    %cst_155 = arith.constant dense<0.000000e+00> : vector<8x8xf32>
    %414 = tpu.matmul %413, %400, %cst_155 {dimension_numbers = #tpu.dot_dimension_numbers<[1], [0], [0], [1], [0, 0, 1, 1], [], []>} : vector<8x8xbf16>, vector<8x8xbf16>, vector<8x8xf32> -> vector<8x8xf32>
    %415 = vector.extract_strided_slice %395 {offsets = [0, 8], sizes = [8, 8], strides = [1, 1]} : vector<8x32xbf16> to vector<8x8xbf16>
    %416 = vector.extract_strided_slice %396 {offsets = [0, 8], sizes = [8, 8], strides = [1, 1]} : vector<8x32xbf16> to vector<8x8xbf16>
    %417 = vector.extract_strided_slice %397 {offsets = [0, 8], sizes = [8, 8], strides = [1, 1]} : vector<8x32xbf16> to vector<8x8xbf16>
    "tpu.trace_start"() <{level = 10 : i32, message = "qd,kd->qk"}> : () -> ()
    %cst_156 = arith.constant dense<0.000000e+00> : vector<8x8xf32>
    %418 = tpu.matmul %415, %416, %cst_156 {dimension_numbers = #tpu.dot_dimension_numbers<[1], [1], [0], [0], [0, 0, 1, 0], [], []>} : vector<8x8xbf16>, vector<8x8xbf16>, vector<8x8xf32> -> vector<8x8xf32>
    "tpu.trace_stop"() : () -> ()
    %419 = arith.addf %418, %379 : vector<8x8xf32>
    %cst_157 = arith.constant dense<0xFF800000> : vector<8xf32>
    %420 = vector.multi_reduction <maximumf>, %419, %cst_157 [1] : vector<8x8xf32> to vector<8xf32>
    %421 = vector.shape_cast %420 : vector<8xf32> to vector<8x1xf32>
    %422 = vector.broadcast %421 : vector<8x1xf32> to vector<8x8xf32>
    %423 = arith.subf %419, %422 : vector<8x8xf32>
    %424 = math.exp %423 : vector<8x8xf32>
    %cst_158 = arith.constant dense<0.000000e+00> : vector<8xf32>
    %425 = vector.multi_reduction <add>, %424, %cst_158 [1] : vector<8x8xf32> to vector<8xf32>
    %426 = vector.shape_cast %425 : vector<8xf32> to vector<8x1xf32>
    %427 = tpu.reciprocal %426 {approx = true} : vector<8x1xf32> -> vector<8x1xf32>
    %428 = vector.broadcast %427 : vector<8x1xf32> to vector<8x8xf32>
    %429 = arith.mulf %424, %428 : vector<8x8xf32>
    %430 = arith.truncf %429 : vector<8x8xf32> to vector<8x8xbf16>
    %cst_159 = arith.constant dense<0.000000e+00> : vector<8x8xf32>
    %431 = tpu.matmul %430, %417, %cst_159 {dimension_numbers = #tpu.dot_dimension_numbers<[1], [0], [0], [1], [0, 0, 1, 1], [], []>} : vector<8x8xbf16>, vector<8x8xbf16>, vector<8x8xf32> -> vector<8x8xf32>
    %432 = vector.extract_strided_slice %395 {offsets = [0, 16], sizes = [8, 8], strides = [1, 1]} : vector<8x32xbf16> to vector<8x8xbf16>
    %433 = vector.extract_strided_slice %396 {offsets = [0, 16], sizes = [8, 8], strides = [1, 1]} : vector<8x32xbf16> to vector<8x8xbf16>
    %434 = vector.extract_strided_slice %397 {offsets = [0, 16], sizes = [8, 8], strides = [1, 1]} : vector<8x32xbf16> to vector<8x8xbf16>
    "tpu.trace_start"() <{level = 10 : i32, message = "qd,kd->qk"}> : () -> ()
    %cst_160 = arith.constant dense<0.000000e+00> : vector<8x8xf32>
    %435 = tpu.matmul %432, %433, %cst_160 {dimension_numbers = #tpu.dot_dimension_numbers<[1], [1], [0], [0], [0, 0, 1, 0], [], []>} : vector<8x8xbf16>, vector<8x8xbf16>, vector<8x8xf32> -> vector<8x8xf32>
    "tpu.trace_stop"() : () -> ()
    %436 = arith.addf %435, %379 : vector<8x8xf32>
    %cst_161 = arith.constant dense<0xFF800000> : vector<8xf32>
    %437 = vector.multi_reduction <maximumf>, %436, %cst_161 [1] : vector<8x8xf32> to vector<8xf32>
    %438 = vector.shape_cast %437 : vector<8xf32> to vector<8x1xf32>
    %439 = vector.broadcast %438 : vector<8x1xf32> to vector<8x8xf32>
    %440 = arith.subf %436, %439 : vector<8x8xf32>
    %441 = math.exp %440 : vector<8x8xf32>
    %cst_162 = arith.constant dense<0.000000e+00> : vector<8xf32>
    %442 = vector.multi_reduction <add>, %441, %cst_162 [1] : vector<8x8xf32> to vector<8xf32>
    %443 = vector.shape_cast %442 : vector<8xf32> to vector<8x1xf32>
    %444 = tpu.reciprocal %443 {approx = true} : vector<8x1xf32> -> vector<8x1xf32>
    %445 = vector.broadcast %444 : vector<8x1xf32> to vector<8x8xf32>
    %446 = arith.mulf %441, %445 : vector<8x8xf32>
    %447 = arith.truncf %446 : vector<8x8xf32> to vector<8x8xbf16>
    %cst_163 = arith.constant dense<0.000000e+00> : vector<8x8xf32>
    %448 = tpu.matmul %447, %434, %cst_163 {dimension_numbers = #tpu.dot_dimension_numbers<[1], [0], [0], [1], [0, 0, 1, 1], [], []>} : vector<8x8xbf16>, vector<8x8xbf16>, vector<8x8xf32> -> vector<8x8xf32>
    %449 = vector.extract_strided_slice %395 {offsets = [0, 24], sizes = [8, 8], strides = [1, 1]} : vector<8x32xbf16> to vector<8x8xbf16>
    %450 = vector.extract_strided_slice %396 {offsets = [0, 24], sizes = [8, 8], strides = [1, 1]} : vector<8x32xbf16> to vector<8x8xbf16>
    %451 = vector.extract_strided_slice %397 {offsets = [0, 24], sizes = [8, 8], strides = [1, 1]} : vector<8x32xbf16> to vector<8x8xbf16>
    "tpu.trace_start"() <{level = 10 : i32, message = "qd,kd->qk"}> : () -> ()
    %cst_164 = arith.constant dense<0.000000e+00> : vector<8x8xf32>
    %452 = tpu.matmul %449, %450, %cst_164 {dimension_numbers = #tpu.dot_dimension_numbers<[1], [1], [0], [0], [0, 0, 1, 0], [], []>} : vector<8x8xbf16>, vector<8x8xbf16>, vector<8x8xf32> -> vector<8x8xf32>
    "tpu.trace_stop"() : () -> ()
    %453 = arith.addf %452, %379 : vector<8x8xf32>
    %cst_165 = arith.constant dense<0xFF800000> : vector<8xf32>
    %454 = vector.multi_reduction <maximumf>, %453, %cst_165 [1] : vector<8x8xf32> to vector<8xf32>
    %455 = vector.shape_cast %454 : vector<8xf32> to vector<8x1xf32>
    %456 = vector.broadcast %455 : vector<8x1xf32> to vector<8x8xf32>
    %457 = arith.subf %453, %456 : vector<8x8xf32>
    %458 = math.exp %457 : vector<8x8xf32>
    %cst_166 = arith.constant dense<0.000000e+00> : vector<8xf32>
    %459 = vector.multi_reduction <add>, %458, %cst_166 [1] : vector<8x8xf32> to vector<8xf32>
    %460 = vector.shape_cast %459 : vector<8xf32> to vector<8x1xf32>
    %461 = tpu.reciprocal %460 {approx = true} : vector<8x1xf32> -> vector<8x1xf32>
    %462 = vector.broadcast %461 : vector<8x1xf32> to vector<8x8xf32>
    %463 = arith.mulf %458, %462 : vector<8x8xf32>
    %464 = arith.truncf %463 : vector<8x8xf32> to vector<8x8xbf16>
    %cst_167 = arith.constant dense<0.000000e+00> : vector<8x8xf32>
    %465 = tpu.matmul %464, %451, %cst_167 {dimension_numbers = #tpu.dot_dimension_numbers<[1], [0], [0], [1], [0, 0, 1, 1], [], []>} : vector<8x8xbf16>, vector<8x8xbf16>, vector<8x8xf32> -> vector<8x8xf32>
    %466 = tpu.concatenate %414, %431, %448, %465 in 1 : vector<8x8xf32>, vector<8x8xf32>, vector<8x8xf32>, vector<8x8xf32> -> vector<8x32xf32>
    %467 = arith.truncf %466 : vector<8x32xf32> to vector<8x32xbf16>
    %cst_168 = arith.constant dense<0.000000e+00> : vector<8x32xf32>
    %468 = tpu.matmul %467, %387, %cst_168 {dimension_numbers = #tpu.dot_dimension_numbers<[1], [0], [0], [1], [0, 0, 1, 1], [], []>} : vector<8x32xbf16>, vector<32x32xbf16>, vector<8x32xf32> -> vector<8x32xf32>
    %469 = arith.addf %468, %377 : vector<8x32xf32>
    %cst_169 = arith.constant dense<0.000000e+00> : vector<8xf32>
    %470 = vector.multi_reduction <add>, %469, %cst_169 [1] : vector<8x32xf32> to vector<8xf32>
    %471 = vector.shape_cast %470 : vector<8xf32> to vector<8x1xf32>
    %cst_170 = arith.constant 3.200000e+01 : f32
    %472 = vector.broadcast %cst_170 : f32 to vector<8x1xf32>
    %473 = arith.divf %471, %472 : vector<8x1xf32>
    %474 = vector.broadcast %473 : vector<8x1xf32> to vector<8x32xf32>
    %475 = arith.subf %469, %474 : vector<8x32xf32>
    %476 = arith.mulf %475, %475 : vector<8x32xf32>
    %cst_171 = arith.constant dense<0.000000e+00> : vector<8xf32>
    %477 = vector.multi_reduction <add>, %476, %cst_171 [1] : vector<8x32xf32> to vector<8xf32>
    %478 = vector.shape_cast %477 : vector<8xf32> to vector<8x1xf32>
    %cst_172 = arith.constant 3.200000e+01 : f32
    %479 = vector.broadcast %cst_172 : f32 to vector<8x1xf32>
    %480 = arith.divf %478, %479 : vector<8x1xf32>
    %481 = vector.broadcast %473 : vector<8x1xf32> to vector<8x32xf32>
    %482 = arith.subf %469, %481 : vector<8x32xf32>
    %cst_173 = arith.constant 9.99999997E-7 : f32
    %483 = vector.broadcast %cst_173 : f32 to vector<8x1xf32>
    %484 = arith.addf %480, %483 : vector<8x1xf32>
    %485 = math.rsqrt %484 : vector<8x1xf32>
    %486 = vector.broadcast %485 : vector<8x1xf32> to vector<8x32xf32>
    %487 = arith.mulf %482, %486 : vector<8x32xf32>
    %488 = vector.broadcast %388 : vector<1x32xf32> to vector<8x32xf32>
    %489 = arith.mulf %487, %488 : vector<8x32xf32>
    %490 = vector.broadcast %389 : vector<1x32xf32> to vector<8x32xf32>
    %491 = arith.addf %489, %490 : vector<8x32xf32>
    %c0_174 = arith.constant 0 : index
    %c0_175 = arith.constant 0 : index
    %c0_176 = arith.constant 0 : index
    %492 = vector.load %arg21[%c0_174, %c0_175, %c0_176] : memref<2x32x32xbf16, #tpu.memory_space<vmem>>, vector<1x32x32xbf16>
    %493 = vector.shape_cast %492 : vector<1x32x32xbf16> to vector<32x32xbf16>
    %c0_177 = arith.constant 0 : index
    %c0_178 = arith.constant 0 : index
    %c0_179 = arith.constant 0 : index
    %494 = vector.load %arg22[%c0_177, %c0_178, %c0_179] : memref<2x32x64xbf16, #tpu.memory_space<vmem>>, vector<1x32x64xbf16>
    %495 = vector.shape_cast %494 : vector<1x32x64xbf16> to vector<32x64xbf16>
    %c0_180 = arith.constant 0 : index
    %c0_181 = arith.constant 0 : index
    %c0_182 = arith.constant 0 : index
    %496 = vector.load %arg23[%c0_180, %c0_181, %c0_182] : memref<2x32x32xbf16, #tpu.memory_space<vmem>>, vector<1x32x32xbf16>
    %497 = vector.shape_cast %496 : vector<1x32x32xbf16> to vector<32x32xbf16>
    %498 = vector.extract_strided_slice %383 {offsets = [2, 0], sizes = [1, 32], strides = [1, 1]} : vector<7x32xf32> to vector<1x32xf32>
    %499 = vector.extract_strided_slice %383 {offsets = [3, 0], sizes = [1, 32], strides = [1, 1]} : vector<7x32xf32> to vector<1x32xf32>
    %500 = arith.truncf %491 : vector<8x32xf32> to vector<8x32xbf16>
    %cst_183 = arith.constant dense<0.000000e+00> : vector<8x32xf32>
    %501 = tpu.matmul %500, %493, %cst_183 {dimension_numbers = #tpu.dot_dimension_numbers<[1], [0], [0], [1], [0, 0, 1, 1], [], []>} : vector<8x32xbf16>, vector<32x32xbf16>, vector<8x32xf32> -> vector<8x32xf32>
    %cst_184 = arith.constant dense<0.000000e+00> : vector<8x64xf32>
    %502 = tpu.matmul %332, %495, %cst_184 {dimension_numbers = #tpu.dot_dimension_numbers<[1], [0], [0], [1], [0, 0, 1, 1], [], []>} : vector<8x32xbf16>, vector<32x64xbf16>, vector<8x64xf32> -> vector<8x64xf32>
    %503 = vector.extract_strided_slice %502 {offsets = [0, 0], sizes = [8, 32], strides = [1, 1]} : vector<8x64xf32> to vector<8x32xf32>
    %504 = vector.extract_strided_slice %502 {offsets = [0, 32], sizes = [8, 32], strides = [1, 1]} : vector<8x64xf32> to vector<8x32xf32>
    %505 = arith.truncf %501 : vector<8x32xf32> to vector<8x32xbf16>
    %506 = arith.truncf %503 : vector<8x32xf32> to vector<8x32xbf16>
    %507 = arith.truncf %504 : vector<8x32xf32> to vector<8x32xbf16>
    %508 = vector.extract_strided_slice %505 {offsets = [0, 0], sizes = [8, 8], strides = [1, 1]} : vector<8x32xbf16> to vector<8x8xbf16>
    %509 = vector.extract_strided_slice %506 {offsets = [0, 0], sizes = [8, 8], strides = [1, 1]} : vector<8x32xbf16> to vector<8x8xbf16>
    %510 = vector.extract_strided_slice %507 {offsets = [0, 0], sizes = [8, 8], strides = [1, 1]} : vector<8x32xbf16> to vector<8x8xbf16>
    "tpu.trace_start"() <{level = 10 : i32, message = "qd,kd->qk"}> : () -> ()
    %cst_185 = arith.constant dense<0.000000e+00> : vector<8x8xf32>
    %511 = tpu.matmul %508, %509, %cst_185 {dimension_numbers = #tpu.dot_dimension_numbers<[1], [1], [0], [0], [0, 0, 1, 0], [], []>} : vector<8x8xbf16>, vector<8x8xbf16>, vector<8x8xf32> -> vector<8x8xf32>
    "tpu.trace_stop"() : () -> ()
    %512 = arith.addf %511, %381 : vector<8x8xf32>
    %cst_186 = arith.constant dense<0xFF800000> : vector<8xf32>
    %513 = vector.multi_reduction <maximumf>, %512, %cst_186 [1] : vector<8x8xf32> to vector<8xf32>
    %514 = vector.shape_cast %513 : vector<8xf32> to vector<8x1xf32>
    %515 = vector.broadcast %514 : vector<8x1xf32> to vector<8x8xf32>
    %516 = arith.subf %512, %515 : vector<8x8xf32>
    %517 = math.exp %516 : vector<8x8xf32>
    %cst_187 = arith.constant dense<0.000000e+00> : vector<8xf32>
    %518 = vector.multi_reduction <add>, %517, %cst_187 [1] : vector<8x8xf32> to vector<8xf32>
    %519 = vector.shape_cast %518 : vector<8xf32> to vector<8x1xf32>
    %520 = tpu.reciprocal %519 {approx = true} : vector<8x1xf32> -> vector<8x1xf32>
    %521 = vector.broadcast %520 : vector<8x1xf32> to vector<8x8xf32>
    %522 = arith.mulf %517, %521 : vector<8x8xf32>
    %523 = arith.truncf %522 : vector<8x8xf32> to vector<8x8xbf16>
    %cst_188 = arith.constant dense<0.000000e+00> : vector<8x8xf32>
    %524 = tpu.matmul %523, %510, %cst_188 {dimension_numbers = #tpu.dot_dimension_numbers<[1], [0], [0], [1], [0, 0, 1, 1], [], []>} : vector<8x8xbf16>, vector<8x8xbf16>, vector<8x8xf32> -> vector<8x8xf32>
    %525 = vector.extract_strided_slice %505 {offsets = [0, 8], sizes = [8, 8], strides = [1, 1]} : vector<8x32xbf16> to vector<8x8xbf16>
    %526 = vector.extract_strided_slice %506 {offsets = [0, 8], sizes = [8, 8], strides = [1, 1]} : vector<8x32xbf16> to vector<8x8xbf16>
    %527 = vector.extract_strided_slice %507 {offsets = [0, 8], sizes = [8, 8], strides = [1, 1]} : vector<8x32xbf16> to vector<8x8xbf16>
    "tpu.trace_start"() <{level = 10 : i32, message = "qd,kd->qk"}> : () -> ()
    %cst_189 = arith.constant dense<0.000000e+00> : vector<8x8xf32>
    %528 = tpu.matmul %525, %526, %cst_189 {dimension_numbers = #tpu.dot_dimension_numbers<[1], [1], [0], [0], [0, 0, 1, 0], [], []>} : vector<8x8xbf16>, vector<8x8xbf16>, vector<8x8xf32> -> vector<8x8xf32>
    "tpu.trace_stop"() : () -> ()
    %529 = arith.addf %528, %381 : vector<8x8xf32>
    %cst_190 = arith.constant dense<0xFF800000> : vector<8xf32>
    %530 = vector.multi_reduction <maximumf>, %529, %cst_190 [1] : vector<8x8xf32> to vector<8xf32>
    %531 = vector.shape_cast %530 : vector<8xf32> to vector<8x1xf32>
    %532 = vector.broadcast %531 : vector<8x1xf32> to vector<8x8xf32>
    %533 = arith.subf %529, %532 : vector<8x8xf32>
    %534 = math.exp %533 : vector<8x8xf32>
    %cst_191 = arith.constant dense<0.000000e+00> : vector<8xf32>
    %535 = vector.multi_reduction <add>, %534, %cst_191 [1] : vector<8x8xf32> to vector<8xf32>
    %536 = vector.shape_cast %535 : vector<8xf32> to vector<8x1xf32>
    %537 = tpu.reciprocal %536 {approx = true} : vector<8x1xf32> -> vector<8x1xf32>
    %538 = vector.broadcast %537 : vector<8x1xf32> to vector<8x8xf32>
    %539 = arith.mulf %534, %538 : vector<8x8xf32>
    %540 = arith.truncf %539 : vector<8x8xf32> to vector<8x8xbf16>
    %cst_192 = arith.constant dense<0.000000e+00> : vector<8x8xf32>
    %541 = tpu.matmul %540, %527, %cst_192 {dimension_numbers = #tpu.dot_dimension_numbers<[1], [0], [0], [1], [0, 0, 1, 1], [], []>} : vector<8x8xbf16>, vector<8x8xbf16>, vector<8x8xf32> -> vector<8x8xf32>
    %542 = vector.extract_strided_slice %505 {offsets = [0, 16], sizes = [8, 8], strides = [1, 1]} : vector<8x32xbf16> to vector<8x8xbf16>
    %543 = vector.extract_strided_slice %506 {offsets = [0, 16], sizes = [8, 8], strides = [1, 1]} : vector<8x32xbf16> to vector<8x8xbf16>
    %544 = vector.extract_strided_slice %507 {offsets = [0, 16], sizes = [8, 8], strides = [1, 1]} : vector<8x32xbf16> to vector<8x8xbf16>
    "tpu.trace_start"() <{level = 10 : i32, message = "qd,kd->qk"}> : () -> ()
    %cst_193 = arith.constant dense<0.000000e+00> : vector<8x8xf32>
    %545 = tpu.matmul %542, %543, %cst_193 {dimension_numbers = #tpu.dot_dimension_numbers<[1], [1], [0], [0], [0, 0, 1, 0], [], []>} : vector<8x8xbf16>, vector<8x8xbf16>, vector<8x8xf32> -> vector<8x8xf32>
    "tpu.trace_stop"() : () -> ()
    %546 = arith.addf %545, %381 : vector<8x8xf32>
    %cst_194 = arith.constant dense<0xFF800000> : vector<8xf32>
    %547 = vector.multi_reduction <maximumf>, %546, %cst_194 [1] : vector<8x8xf32> to vector<8xf32>
    %548 = vector.shape_cast %547 : vector<8xf32> to vector<8x1xf32>
    %549 = vector.broadcast %548 : vector<8x1xf32> to vector<8x8xf32>
    %550 = arith.subf %546, %549 : vector<8x8xf32>
    %551 = math.exp %550 : vector<8x8xf32>
    %cst_195 = arith.constant dense<0.000000e+00> : vector<8xf32>
    %552 = vector.multi_reduction <add>, %551, %cst_195 [1] : vector<8x8xf32> to vector<8xf32>
    %553 = vector.shape_cast %552 : vector<8xf32> to vector<8x1xf32>
    %554 = tpu.reciprocal %553 {approx = true} : vector<8x1xf32> -> vector<8x1xf32>
    %555 = vector.broadcast %554 : vector<8x1xf32> to vector<8x8xf32>
    %556 = arith.mulf %551, %555 : vector<8x8xf32>
    %557 = arith.truncf %556 : vector<8x8xf32> to vector<8x8xbf16>
    %cst_196 = arith.constant dense<0.000000e+00> : vector<8x8xf32>
    %558 = tpu.matmul %557, %544, %cst_196 {dimension_numbers = #tpu.dot_dimension_numbers<[1], [0], [0], [1], [0, 0, 1, 1], [], []>} : vector<8x8xbf16>, vector<8x8xbf16>, vector<8x8xf32> -> vector<8x8xf32>
    %559 = vector.extract_strided_slice %505 {offsets = [0, 24], sizes = [8, 8], strides = [1, 1]} : vector<8x32xbf16> to vector<8x8xbf16>
    %560 = vector.extract_strided_slice %506 {offsets = [0, 24], sizes = [8, 8], strides = [1, 1]} : vector<8x32xbf16> to vector<8x8xbf16>
    %561 = vector.extract_strided_slice %507 {offsets = [0, 24], sizes = [8, 8], strides = [1, 1]} : vector<8x32xbf16> to vector<8x8xbf16>
    "tpu.trace_start"() <{level = 10 : i32, message = "qd,kd->qk"}> : () -> ()
    %cst_197 = arith.constant dense<0.000000e+00> : vector<8x8xf32>
    %562 = tpu.matmul %559, %560, %cst_197 {dimension_numbers = #tpu.dot_dimension_numbers<[1], [1], [0], [0], [0, 0, 1, 0], [], []>} : vector<8x8xbf16>, vector<8x8xbf16>, vector<8x8xf32> -> vector<8x8xf32>
    "tpu.trace_stop"() : () -> ()
    %563 = arith.addf %562, %381 : vector<8x8xf32>
    %cst_198 = arith.constant dense<0xFF800000> : vector<8xf32>
    %564 = vector.multi_reduction <maximumf>, %563, %cst_198 [1] : vector<8x8xf32> to vector<8xf32>
    %565 = vector.shape_cast %564 : vector<8xf32> to vector<8x1xf32>
    %566 = vector.broadcast %565 : vector<8x1xf32> to vector<8x8xf32>
    %567 = arith.subf %563, %566 : vector<8x8xf32>
    %568 = math.exp %567 : vector<8x8xf32>
    %cst_199 = arith.constant dense<0.000000e+00> : vector<8xf32>
    %569 = vector.multi_reduction <add>, %568, %cst_199 [1] : vector<8x8xf32> to vector<8xf32>
    %570 = vector.shape_cast %569 : vector<8xf32> to vector<8x1xf32>
    %571 = tpu.reciprocal %570 {approx = true} : vector<8x1xf32> -> vector<8x1xf32>
    %572 = vector.broadcast %571 : vector<8x1xf32> to vector<8x8xf32>
    %573 = arith.mulf %568, %572 : vector<8x8xf32>
    %574 = arith.truncf %573 : vector<8x8xf32> to vector<8x8xbf16>
    %cst_200 = arith.constant dense<0.000000e+00> : vector<8x8xf32>
    %575 = tpu.matmul %574, %561, %cst_200 {dimension_numbers = #tpu.dot_dimension_numbers<[1], [0], [0], [1], [0, 0, 1, 1], [], []>} : vector<8x8xbf16>, vector<8x8xbf16>, vector<8x8xf32> -> vector<8x8xf32>
    %576 = tpu.concatenate %524, %541, %558, %575 in 1 : vector<8x8xf32>, vector<8x8xf32>, vector<8x8xf32>, vector<8x8xf32> -> vector<8x32xf32>
    %577 = arith.truncf %576 : vector<8x32xf32> to vector<8x32xbf16>
    %cst_201 = arith.constant dense<0.000000e+00> : vector<8x32xf32>
    %578 = tpu.matmul %577, %497, %cst_201 {dimension_numbers = #tpu.dot_dimension_numbers<[1], [0], [0], [1], [0, 0, 1, 1], [], []>} : vector<8x32xbf16>, vector<32x32xbf16>, vector<8x32xf32> -> vector<8x32xf32>
    %579 = arith.addf %578, %491 : vector<8x32xf32>
    %cst_202 = arith.constant dense<0.000000e+00> : vector<8xf32>
    %580 = vector.multi_reduction <add>, %579, %cst_202 [1] : vector<8x32xf32> to vector<8xf32>
    %581 = vector.shape_cast %580 : vector<8xf32> to vector<8x1xf32>
    %cst_203 = arith.constant 3.200000e+01 : f32
    %582 = vector.broadcast %cst_203 : f32 to vector<8x1xf32>
    %583 = arith.divf %581, %582 : vector<8x1xf32>
    %584 = vector.broadcast %583 : vector<8x1xf32> to vector<8x32xf32>
    %585 = arith.subf %579, %584 : vector<8x32xf32>
    %586 = arith.mulf %585, %585 : vector<8x32xf32>
    %cst_204 = arith.constant dense<0.000000e+00> : vector<8xf32>
    %587 = vector.multi_reduction <add>, %586, %cst_204 [1] : vector<8x32xf32> to vector<8xf32>
    %588 = vector.shape_cast %587 : vector<8xf32> to vector<8x1xf32>
    %cst_205 = arith.constant 3.200000e+01 : f32
    %589 = vector.broadcast %cst_205 : f32 to vector<8x1xf32>
    %590 = arith.divf %588, %589 : vector<8x1xf32>
    %591 = vector.broadcast %583 : vector<8x1xf32> to vector<8x32xf32>
    %592 = arith.subf %579, %591 : vector<8x32xf32>
    %cst_206 = arith.constant 9.99999997E-7 : f32
    %593 = vector.broadcast %cst_206 : f32 to vector<8x1xf32>
    %594 = arith.addf %590, %593 : vector<8x1xf32>
    %595 = math.rsqrt %594 : vector<8x1xf32>
    %596 = vector.broadcast %595 : vector<8x1xf32> to vector<8x32xf32>
    %597 = arith.mulf %592, %596 : vector<8x32xf32>
    %598 = vector.broadcast %498 : vector<1x32xf32> to vector<8x32xf32>
    %599 = arith.mulf %597, %598 : vector<8x32xf32>
    %600 = vector.broadcast %499 : vector<1x32xf32> to vector<8x32xf32>
    %601 = arith.addf %599, %600 : vector<8x32xf32>
    %c0_207 = arith.constant 0 : index
    %c0_208 = arith.constant 0 : index
    %c0_209 = arith.constant 0 : index
    %602 = vector.load %arg24[%c0_207, %c0_208, %c0_209] : memref<2x32x64xbf16, #tpu.memory_space<vmem>>, vector<1x32x64xbf16>
    %603 = vector.shape_cast %602 : vector<1x32x64xbf16> to vector<32x64xbf16>
    %c0_210 = arith.constant 0 : index
    %c0_211 = arith.constant 0 : index
    %c0_212 = arith.constant 0 : index
    %604 = vector.load %arg25[%c0_210, %c0_211, %c0_212] : memref<2x1x64xf32, #tpu.memory_space<vmem>>, vector<1x1x64xf32>
    %605 = vector.shape_cast %604 : vector<1x1x64xf32> to vector<1x64xf32>
    %c0_213 = arith.constant 0 : index
    %c0_214 = arith.constant 0 : index
    %c0_215 = arith.constant 0 : index
    %606 = vector.load %arg26[%c0_213, %c0_214, %c0_215] : memref<2x64x32xbf16, #tpu.memory_space<vmem>>, vector<1x64x32xbf16>
    %607 = vector.shape_cast %606 : vector<1x64x32xbf16> to vector<64x32xbf16>
    %608 = vector.extract_strided_slice %383 {offsets = [4, 0], sizes = [1, 32], strides = [1, 1]} : vector<7x32xf32> to vector<1x32xf32>
    %609 = vector.extract_strided_slice %383 {offsets = [5, 0], sizes = [1, 32], strides = [1, 1]} : vector<7x32xf32> to vector<1x32xf32>
    %610 = vector.extract_strided_slice %383 {offsets = [6, 0], sizes = [1, 32], strides = [1, 1]} : vector<7x32xf32> to vector<1x32xf32>
    %611 = arith.truncf %601 : vector<8x32xf32> to vector<8x32xbf16>
    %cst_216 = arith.constant dense<0.000000e+00> : vector<8x64xf32>
    %612 = tpu.matmul %611, %603, %cst_216 {dimension_numbers = #tpu.dot_dimension_numbers<[1], [0], [0], [1], [0, 0, 1, 1], [], []>} : vector<8x32xbf16>, vector<32x64xbf16>, vector<8x64xf32> -> vector<8x64xf32>
    %613 = vector.broadcast %605 : vector<1x64xf32> to vector<8x64xf32>
    %614 = arith.addf %612, %613 : vector<8x64xf32>
    %cst_217 = arith.constant 0.000000e+00 : f32
    %615 = vector.broadcast %cst_217 : f32 to vector<8x64xf32>
    %616 = arith.maximumf %614, %615 : vector<8x64xf32>
    %617 = arith.truncf %616 : vector<8x64xf32> to vector<8x64xbf16>
    %cst_218 = arith.constant dense<0.000000e+00> : vector<8x32xf32>
    %618 = tpu.matmul %617, %607, %cst_218 {dimension_numbers = #tpu.dot_dimension_numbers<[1], [0], [0], [1], [0, 0, 1, 1], [], []>} : vector<8x64xbf16>, vector<64x32xbf16>, vector<8x32xf32> -> vector<8x32xf32>
    %619 = vector.broadcast %608 : vector<1x32xf32> to vector<8x32xf32>
    %620 = arith.addf %618, %619 : vector<8x32xf32>
    %621 = arith.addf %620, %601 : vector<8x32xf32>
    %cst_219 = arith.constant dense<0.000000e+00> : vector<8xf32>
    %622 = vector.multi_reduction <add>, %621, %cst_219 [1] : vector<8x32xf32> to vector<8xf32>
    %623 = vector.shape_cast %622 : vector<8xf32> to vector<8x1xf32>
    %cst_220 = arith.constant 3.200000e+01 : f32
    %624 = vector.broadcast %cst_220 : f32 to vector<8x1xf32>
    %625 = arith.divf %623, %624 : vector<8x1xf32>
    %626 = vector.broadcast %625 : vector<8x1xf32> to vector<8x32xf32>
    %627 = arith.subf %621, %626 : vector<8x32xf32>
    %628 = arith.mulf %627, %627 : vector<8x32xf32>
    %cst_221 = arith.constant dense<0.000000e+00> : vector<8xf32>
    %629 = vector.multi_reduction <add>, %628, %cst_221 [1] : vector<8x32xf32> to vector<8xf32>
    %630 = vector.shape_cast %629 : vector<8xf32> to vector<8x1xf32>
    %cst_222 = arith.constant 3.200000e+01 : f32
    %631 = vector.broadcast %cst_222 : f32 to vector<8x1xf32>
    %632 = arith.divf %630, %631 : vector<8x1xf32>
    %633 = vector.broadcast %625 : vector<8x1xf32> to vector<8x32xf32>
    %634 = arith.subf %621, %633 : vector<8x32xf32>
    %cst_223 = arith.constant 9.99999997E-7 : f32
    %635 = vector.broadcast %cst_223 : f32 to vector<8x1xf32>
    %636 = arith.addf %632, %635 : vector<8x1xf32>
    %637 = math.rsqrt %636 : vector<8x1xf32>
    %638 = vector.broadcast %637 : vector<8x1xf32> to vector<8x32xf32>
    %639 = arith.mulf %634, %638 : vector<8x32xf32>
    %640 = vector.broadcast %609 : vector<1x32xf32> to vector<8x32xf32>
    %641 = arith.mulf %639, %640 : vector<8x32xf32>
    %642 = vector.broadcast %610 : vector<1x32xf32> to vector<8x32xf32>
    %643 = arith.addf %641, %642 : vector<8x32xf32>
    %c1_224 = arith.constant 1 : index
    %c0_225 = arith.constant 0 : index
    %c0_226 = arith.constant 0 : index
    %644 = vector.load %arg27[%c1_224, %c0_225, %c0_226] : memref<2x7x32xf32, #tpu.memory_space<vmem>>, vector<1x7x32xf32>
    %645 = vector.shape_cast %644 : vector<1x7x32xf32> to vector<7x32xf32>
    %c1_227 = arith.constant 1 : index
    %c0_228 = arith.constant 0 : index
    %c0_229 = arith.constant 0 : index
    %646 = vector.load %arg19[%c1_227, %c0_228, %c0_229] : memref<2x32x96xbf16, #tpu.memory_space<vmem>>, vector<1x32x96xbf16>
    %647 = vector.shape_cast %646 : vector<1x32x96xbf16> to vector<32x96xbf16>
    %c1_230 = arith.constant 1 : index
    %c0_231 = arith.constant 0 : index
    %c0_232 = arith.constant 0 : index
    %648 = vector.load %arg20[%c1_230, %c0_231, %c0_232] : memref<2x32x32xbf16, #tpu.memory_space<vmem>>, vector<1x32x32xbf16>
    %649 = vector.shape_cast %648 : vector<1x32x32xbf16> to vector<32x32xbf16>
    %650 = vector.extract_strided_slice %645 {offsets = [0, 0], sizes = [1, 32], strides = [1, 1]} : vector<7x32xf32> to vector<1x32xf32>
    %651 = vector.extract_strided_slice %645 {offsets = [1, 0], sizes = [1, 32], strides = [1, 1]} : vector<7x32xf32> to vector<1x32xf32>
    %652 = arith.truncf %643 : vector<8x32xf32> to vector<8x32xbf16>
    %cst_233 = arith.constant dense<0.000000e+00> : vector<8x96xf32>
    %653 = tpu.matmul %652, %647, %cst_233 {dimension_numbers = #tpu.dot_dimension_numbers<[1], [0], [0], [1], [0, 0, 1, 1], [], []>} : vector<8x32xbf16>, vector<32x96xbf16>, vector<8x96xf32> -> vector<8x96xf32>
    %654 = vector.extract_strided_slice %653 {offsets = [0, 0], sizes = [8, 32], strides = [1, 1]} : vector<8x96xf32> to vector<8x32xf32>
    %655 = vector.extract_strided_slice %653 {offsets = [0, 32], sizes = [8, 32], strides = [1, 1]} : vector<8x96xf32> to vector<8x32xf32>
    %656 = vector.extract_strided_slice %653 {offsets = [0, 64], sizes = [8, 32], strides = [1, 1]} : vector<8x96xf32> to vector<8x32xf32>
    %657 = arith.truncf %654 : vector<8x32xf32> to vector<8x32xbf16>
    %658 = arith.truncf %655 : vector<8x32xf32> to vector<8x32xbf16>
    %659 = arith.truncf %656 : vector<8x32xf32> to vector<8x32xbf16>
    %660 = vector.extract_strided_slice %657 {offsets = [0, 0], sizes = [8, 8], strides = [1, 1]} : vector<8x32xbf16> to vector<8x8xbf16>
    %661 = vector.extract_strided_slice %658 {offsets = [0, 0], sizes = [8, 8], strides = [1, 1]} : vector<8x32xbf16> to vector<8x8xbf16>
    %662 = vector.extract_strided_slice %659 {offsets = [0, 0], sizes = [8, 8], strides = [1, 1]} : vector<8x32xbf16> to vector<8x8xbf16>
    "tpu.trace_start"() <{level = 10 : i32, message = "qd,kd->qk"}> : () -> ()
    %cst_234 = arith.constant dense<0.000000e+00> : vector<8x8xf32>
    %663 = tpu.matmul %660, %661, %cst_234 {dimension_numbers = #tpu.dot_dimension_numbers<[1], [1], [0], [0], [0, 0, 1, 0], [], []>} : vector<8x8xbf16>, vector<8x8xbf16>, vector<8x8xf32> -> vector<8x8xf32>
    "tpu.trace_stop"() : () -> ()
    %664 = arith.addf %663, %379 : vector<8x8xf32>
    %cst_235 = arith.constant dense<0xFF800000> : vector<8xf32>
    %665 = vector.multi_reduction <maximumf>, %664, %cst_235 [1] : vector<8x8xf32> to vector<8xf32>
    %666 = vector.shape_cast %665 : vector<8xf32> to vector<8x1xf32>
    %667 = vector.broadcast %666 : vector<8x1xf32> to vector<8x8xf32>
    %668 = arith.subf %664, %667 : vector<8x8xf32>
    %669 = math.exp %668 : vector<8x8xf32>
    %cst_236 = arith.constant dense<0.000000e+00> : vector<8xf32>
    %670 = vector.multi_reduction <add>, %669, %cst_236 [1] : vector<8x8xf32> to vector<8xf32>
    %671 = vector.shape_cast %670 : vector<8xf32> to vector<8x1xf32>
    %672 = tpu.reciprocal %671 {approx = true} : vector<8x1xf32> -> vector<8x1xf32>
    %673 = vector.broadcast %672 : vector<8x1xf32> to vector<8x8xf32>
    %674 = arith.mulf %669, %673 : vector<8x8xf32>
    %675 = arith.truncf %674 : vector<8x8xf32> to vector<8x8xbf16>
    %cst_237 = arith.constant dense<0.000000e+00> : vector<8x8xf32>
    %676 = tpu.matmul %675, %662, %cst_237 {dimension_numbers = #tpu.dot_dimension_numbers<[1], [0], [0], [1], [0, 0, 1, 1], [], []>} : vector<8x8xbf16>, vector<8x8xbf16>, vector<8x8xf32> -> vector<8x8xf32>
    %677 = vector.extract_strided_slice %657 {offsets = [0, 8], sizes = [8, 8], strides = [1, 1]} : vector<8x32xbf16> to vector<8x8xbf16>
    %678 = vector.extract_strided_slice %658 {offsets = [0, 8], sizes = [8, 8], strides = [1, 1]} : vector<8x32xbf16> to vector<8x8xbf16>
    %679 = vector.extract_strided_slice %659 {offsets = [0, 8], sizes = [8, 8], strides = [1, 1]} : vector<8x32xbf16> to vector<8x8xbf16>
    "tpu.trace_start"() <{level = 10 : i32, message = "qd,kd->qk"}> : () -> ()
    %cst_238 = arith.constant dense<0.000000e+00> : vector<8x8xf32>
    %680 = tpu.matmul %677, %678, %cst_238 {dimension_numbers = #tpu.dot_dimension_numbers<[1], [1], [0], [0], [0, 0, 1, 0], [], []>} : vector<8x8xbf16>, vector<8x8xbf16>, vector<8x8xf32> -> vector<8x8xf32>
    "tpu.trace_stop"() : () -> ()
    %681 = arith.addf %680, %379 : vector<8x8xf32>
    %cst_239 = arith.constant dense<0xFF800000> : vector<8xf32>
    %682 = vector.multi_reduction <maximumf>, %681, %cst_239 [1] : vector<8x8xf32> to vector<8xf32>
    %683 = vector.shape_cast %682 : vector<8xf32> to vector<8x1xf32>
    %684 = vector.broadcast %683 : vector<8x1xf32> to vector<8x8xf32>
    %685 = arith.subf %681, %684 : vector<8x8xf32>
    %686 = math.exp %685 : vector<8x8xf32>
    %cst_240 = arith.constant dense<0.000000e+00> : vector<8xf32>
    %687 = vector.multi_reduction <add>, %686, %cst_240 [1] : vector<8x8xf32> to vector<8xf32>
    %688 = vector.shape_cast %687 : vector<8xf32> to vector<8x1xf32>
    %689 = tpu.reciprocal %688 {approx = true} : vector<8x1xf32> -> vector<8x1xf32>
    %690 = vector.broadcast %689 : vector<8x1xf32> to vector<8x8xf32>
    %691 = arith.mulf %686, %690 : vector<8x8xf32>
    %692 = arith.truncf %691 : vector<8x8xf32> to vector<8x8xbf16>
    %cst_241 = arith.constant dense<0.000000e+00> : vector<8x8xf32>
    %693 = tpu.matmul %692, %679, %cst_241 {dimension_numbers = #tpu.dot_dimension_numbers<[1], [0], [0], [1], [0, 0, 1, 1], [], []>} : vector<8x8xbf16>, vector<8x8xbf16>, vector<8x8xf32> -> vector<8x8xf32>
    %694 = vector.extract_strided_slice %657 {offsets = [0, 16], sizes = [8, 8], strides = [1, 1]} : vector<8x32xbf16> to vector<8x8xbf16>
    %695 = vector.extract_strided_slice %658 {offsets = [0, 16], sizes = [8, 8], strides = [1, 1]} : vector<8x32xbf16> to vector<8x8xbf16>
    %696 = vector.extract_strided_slice %659 {offsets = [0, 16], sizes = [8, 8], strides = [1, 1]} : vector<8x32xbf16> to vector<8x8xbf16>
    "tpu.trace_start"() <{level = 10 : i32, message = "qd,kd->qk"}> : () -> ()
    %cst_242 = arith.constant dense<0.000000e+00> : vector<8x8xf32>
    %697 = tpu.matmul %694, %695, %cst_242 {dimension_numbers = #tpu.dot_dimension_numbers<[1], [1], [0], [0], [0, 0, 1, 0], [], []>} : vector<8x8xbf16>, vector<8x8xbf16>, vector<8x8xf32> -> vector<8x8xf32>
    "tpu.trace_stop"() : () -> ()
    %698 = arith.addf %697, %379 : vector<8x8xf32>
    %cst_243 = arith.constant dense<0xFF800000> : vector<8xf32>
    %699 = vector.multi_reduction <maximumf>, %698, %cst_243 [1] : vector<8x8xf32> to vector<8xf32>
    %700 = vector.shape_cast %699 : vector<8xf32> to vector<8x1xf32>
    %701 = vector.broadcast %700 : vector<8x1xf32> to vector<8x8xf32>
    %702 = arith.subf %698, %701 : vector<8x8xf32>
    %703 = math.exp %702 : vector<8x8xf32>
    %cst_244 = arith.constant dense<0.000000e+00> : vector<8xf32>
    %704 = vector.multi_reduction <add>, %703, %cst_244 [1] : vector<8x8xf32> to vector<8xf32>
    %705 = vector.shape_cast %704 : vector<8xf32> to vector<8x1xf32>
    %706 = tpu.reciprocal %705 {approx = true} : vector<8x1xf32> -> vector<8x1xf32>
    %707 = vector.broadcast %706 : vector<8x1xf32> to vector<8x8xf32>
    %708 = arith.mulf %703, %707 : vector<8x8xf32>
    %709 = arith.truncf %708 : vector<8x8xf32> to vector<8x8xbf16>
    %cst_245 = arith.constant dense<0.000000e+00> : vector<8x8xf32>
    %710 = tpu.matmul %709, %696, %cst_245 {dimension_numbers = #tpu.dot_dimension_numbers<[1], [0], [0], [1], [0, 0, 1, 1], [], []>} : vector<8x8xbf16>, vector<8x8xbf16>, vector<8x8xf32> -> vector<8x8xf32>
    %711 = vector.extract_strided_slice %657 {offsets = [0, 24], sizes = [8, 8], strides = [1, 1]} : vector<8x32xbf16> to vector<8x8xbf16>
    %712 = vector.extract_strided_slice %658 {offsets = [0, 24], sizes = [8, 8], strides = [1, 1]} : vector<8x32xbf16> to vector<8x8xbf16>
    %713 = vector.extract_strided_slice %659 {offsets = [0, 24], sizes = [8, 8], strides = [1, 1]} : vector<8x32xbf16> to vector<8x8xbf16>
    "tpu.trace_start"() <{level = 10 : i32, message = "qd,kd->qk"}> : () -> ()
    %cst_246 = arith.constant dense<0.000000e+00> : vector<8x8xf32>
    %714 = tpu.matmul %711, %712, %cst_246 {dimension_numbers = #tpu.dot_dimension_numbers<[1], [1], [0], [0], [0, 0, 1, 0], [], []>} : vector<8x8xbf16>, vector<8x8xbf16>, vector<8x8xf32> -> vector<8x8xf32>
    "tpu.trace_stop"() : () -> ()
    %715 = arith.addf %714, %379 : vector<8x8xf32>
    %cst_247 = arith.constant dense<0xFF800000> : vector<8xf32>
    %716 = vector.multi_reduction <maximumf>, %715, %cst_247 [1] : vector<8x8xf32> to vector<8xf32>
    %717 = vector.shape_cast %716 : vector<8xf32> to vector<8x1xf32>
    %718 = vector.broadcast %717 : vector<8x1xf32> to vector<8x8xf32>
    %719 = arith.subf %715, %718 : vector<8x8xf32>
    %720 = math.exp %719 : vector<8x8xf32>
    %cst_248 = arith.constant dense<0.000000e+00> : vector<8xf32>
    %721 = vector.multi_reduction <add>, %720, %cst_248 [1] : vector<8x8xf32> to vector<8xf32>
    %722 = vector.shape_cast %721 : vector<8xf32> to vector<8x1xf32>
    %723 = tpu.reciprocal %722 {approx = true} : vector<8x1xf32> -> vector<8x1xf32>
    %724 = vector.broadcast %723 : vector<8x1xf32> to vector<8x8xf32>
    %725 = arith.mulf %720, %724 : vector<8x8xf32>
    %726 = arith.truncf %725 : vector<8x8xf32> to vector<8x8xbf16>
    %cst_249 = arith.constant dense<0.000000e+00> : vector<8x8xf32>
    %727 = tpu.matmul %726, %713, %cst_249 {dimension_numbers = #tpu.dot_dimension_numbers<[1], [0], [0], [1], [0, 0, 1, 1], [], []>} : vector<8x8xbf16>, vector<8x8xbf16>, vector<8x8xf32> -> vector<8x8xf32>
    %728 = tpu.concatenate %676, %693, %710, %727 in 1 : vector<8x8xf32>, vector<8x8xf32>, vector<8x8xf32>, vector<8x8xf32> -> vector<8x32xf32>
    %729 = arith.truncf %728 : vector<8x32xf32> to vector<8x32xbf16>
    %cst_250 = arith.constant dense<0.000000e+00> : vector<8x32xf32>
    %730 = tpu.matmul %729, %649, %cst_250 {dimension_numbers = #tpu.dot_dimension_numbers<[1], [0], [0], [1], [0, 0, 1, 1], [], []>} : vector<8x32xbf16>, vector<32x32xbf16>, vector<8x32xf32> -> vector<8x32xf32>
    %731 = arith.addf %730, %643 : vector<8x32xf32>
    %cst_251 = arith.constant dense<0.000000e+00> : vector<8xf32>
    %732 = vector.multi_reduction <add>, %731, %cst_251 [1] : vector<8x32xf32> to vector<8xf32>
    %733 = vector.shape_cast %732 : vector<8xf32> to vector<8x1xf32>
    %cst_252 = arith.constant 3.200000e+01 : f32
    %734 = vector.broadcast %cst_252 : f32 to vector<8x1xf32>
    %735 = arith.divf %733, %734 : vector<8x1xf32>
    %736 = vector.broadcast %735 : vector<8x1xf32> to vector<8x32xf32>
    %737 = arith.subf %731, %736 : vector<8x32xf32>
    %738 = arith.mulf %737, %737 : vector<8x32xf32>
    %cst_253 = arith.constant dense<0.000000e+00> : vector<8xf32>
    %739 = vector.multi_reduction <add>, %738, %cst_253 [1] : vector<8x32xf32> to vector<8xf32>
    %740 = vector.shape_cast %739 : vector<8xf32> to vector<8x1xf32>
    %cst_254 = arith.constant 3.200000e+01 : f32
    %741 = vector.broadcast %cst_254 : f32 to vector<8x1xf32>
    %742 = arith.divf %740, %741 : vector<8x1xf32>
    %743 = vector.broadcast %735 : vector<8x1xf32> to vector<8x32xf32>
    %744 = arith.subf %731, %743 : vector<8x32xf32>
    %cst_255 = arith.constant 9.99999997E-7 : f32
    %745 = vector.broadcast %cst_255 : f32 to vector<8x1xf32>
    %746 = arith.addf %742, %745 : vector<8x1xf32>
    %747 = math.rsqrt %746 : vector<8x1xf32>
    %748 = vector.broadcast %747 : vector<8x1xf32> to vector<8x32xf32>
    %749 = arith.mulf %744, %748 : vector<8x32xf32>
    %750 = vector.broadcast %650 : vector<1x32xf32> to vector<8x32xf32>
    %751 = arith.mulf %749, %750 : vector<8x32xf32>
    %752 = vector.broadcast %651 : vector<1x32xf32> to vector<8x32xf32>
    %753 = arith.addf %751, %752 : vector<8x32xf32>
    %c1_256 = arith.constant 1 : index
    %c0_257 = arith.constant 0 : index
    %c0_258 = arith.constant 0 : index
    %754 = vector.load %arg21[%c1_256, %c0_257, %c0_258] : memref<2x32x32xbf16, #tpu.memory_space<vmem>>, vector<1x32x32xbf16>
    %755 = vector.shape_cast %754 : vector<1x32x32xbf16> to vector<32x32xbf16>
    %c1_259 = arith.constant 1 : index
    %c0_260 = arith.constant 0 : index
    %c0_261 = arith.constant 0 : index
    %756 = vector.load %arg22[%c1_259, %c0_260, %c0_261] : memref<2x32x64xbf16, #tpu.memory_space<vmem>>, vector<1x32x64xbf16>
    %757 = vector.shape_cast %756 : vector<1x32x64xbf16> to vector<32x64xbf16>
    %c1_262 = arith.constant 1 : index
    %c0_263 = arith.constant 0 : index
    %c0_264 = arith.constant 0 : index
    %758 = vector.load %arg23[%c1_262, %c0_263, %c0_264] : memref<2x32x32xbf16, #tpu.memory_space<vmem>>, vector<1x32x32xbf16>
    %759 = vector.shape_cast %758 : vector<1x32x32xbf16> to vector<32x32xbf16>
    %760 = vector.extract_strided_slice %645 {offsets = [2, 0], sizes = [1, 32], strides = [1, 1]} : vector<7x32xf32> to vector<1x32xf32>
    %761 = vector.extract_strided_slice %645 {offsets = [3, 0], sizes = [1, 32], strides = [1, 1]} : vector<7x32xf32> to vector<1x32xf32>
    %762 = arith.truncf %753 : vector<8x32xf32> to vector<8x32xbf16>
    %cst_265 = arith.constant dense<0.000000e+00> : vector<8x32xf32>
    %763 = tpu.matmul %762, %755, %cst_265 {dimension_numbers = #tpu.dot_dimension_numbers<[1], [0], [0], [1], [0, 0, 1, 1], [], []>} : vector<8x32xbf16>, vector<32x32xbf16>, vector<8x32xf32> -> vector<8x32xf32>
    %cst_266 = arith.constant dense<0.000000e+00> : vector<8x64xf32>
    %764 = tpu.matmul %332, %757, %cst_266 {dimension_numbers = #tpu.dot_dimension_numbers<[1], [0], [0], [1], [0, 0, 1, 1], [], []>} : vector<8x32xbf16>, vector<32x64xbf16>, vector<8x64xf32> -> vector<8x64xf32>
    %765 = vector.extract_strided_slice %764 {offsets = [0, 0], sizes = [8, 32], strides = [1, 1]} : vector<8x64xf32> to vector<8x32xf32>
    %766 = vector.extract_strided_slice %764 {offsets = [0, 32], sizes = [8, 32], strides = [1, 1]} : vector<8x64xf32> to vector<8x32xf32>
    %767 = arith.truncf %763 : vector<8x32xf32> to vector<8x32xbf16>
    %768 = arith.truncf %765 : vector<8x32xf32> to vector<8x32xbf16>
    %769 = arith.truncf %766 : vector<8x32xf32> to vector<8x32xbf16>
    %770 = vector.extract_strided_slice %767 {offsets = [0, 0], sizes = [8, 8], strides = [1, 1]} : vector<8x32xbf16> to vector<8x8xbf16>
    %771 = vector.extract_strided_slice %768 {offsets = [0, 0], sizes = [8, 8], strides = [1, 1]} : vector<8x32xbf16> to vector<8x8xbf16>
    %772 = vector.extract_strided_slice %769 {offsets = [0, 0], sizes = [8, 8], strides = [1, 1]} : vector<8x32xbf16> to vector<8x8xbf16>
    "tpu.trace_start"() <{level = 10 : i32, message = "qd,kd->qk"}> : () -> ()
    %cst_267 = arith.constant dense<0.000000e+00> : vector<8x8xf32>
    %773 = tpu.matmul %770, %771, %cst_267 {dimension_numbers = #tpu.dot_dimension_numbers<[1], [1], [0], [0], [0, 0, 1, 0], [], []>} : vector<8x8xbf16>, vector<8x8xbf16>, vector<8x8xf32> -> vector<8x8xf32>
    "tpu.trace_stop"() : () -> ()
    %774 = arith.addf %773, %381 : vector<8x8xf32>
    %cst_268 = arith.constant dense<0xFF800000> : vector<8xf32>
    %775 = vector.multi_reduction <maximumf>, %774, %cst_268 [1] : vector<8x8xf32> to vector<8xf32>
    %776 = vector.shape_cast %775 : vector<8xf32> to vector<8x1xf32>
    %777 = vector.broadcast %776 : vector<8x1xf32> to vector<8x8xf32>
    %778 = arith.subf %774, %777 : vector<8x8xf32>
    %779 = math.exp %778 : vector<8x8xf32>
    %cst_269 = arith.constant dense<0.000000e+00> : vector<8xf32>
    %780 = vector.multi_reduction <add>, %779, %cst_269 [1] : vector<8x8xf32> to vector<8xf32>
    %781 = vector.shape_cast %780 : vector<8xf32> to vector<8x1xf32>
    %782 = tpu.reciprocal %781 {approx = true} : vector<8x1xf32> -> vector<8x1xf32>
    %783 = vector.broadcast %782 : vector<8x1xf32> to vector<8x8xf32>
    %784 = arith.mulf %779, %783 : vector<8x8xf32>
    %785 = arith.truncf %784 : vector<8x8xf32> to vector<8x8xbf16>
    %cst_270 = arith.constant dense<0.000000e+00> : vector<8x8xf32>
    %786 = tpu.matmul %785, %772, %cst_270 {dimension_numbers = #tpu.dot_dimension_numbers<[1], [0], [0], [1], [0, 0, 1, 1], [], []>} : vector<8x8xbf16>, vector<8x8xbf16>, vector<8x8xf32> -> vector<8x8xf32>
    %787 = vector.extract_strided_slice %767 {offsets = [0, 8], sizes = [8, 8], strides = [1, 1]} : vector<8x32xbf16> to vector<8x8xbf16>
    %788 = vector.extract_strided_slice %768 {offsets = [0, 8], sizes = [8, 8], strides = [1, 1]} : vector<8x32xbf16> to vector<8x8xbf16>
    %789 = vector.extract_strided_slice %769 {offsets = [0, 8], sizes = [8, 8], strides = [1, 1]} : vector<8x32xbf16> to vector<8x8xbf16>
    "tpu.trace_start"() <{level = 10 : i32, message = "qd,kd->qk"}> : () -> ()
    %cst_271 = arith.constant dense<0.000000e+00> : vector<8x8xf32>
    %790 = tpu.matmul %787, %788, %cst_271 {dimension_numbers = #tpu.dot_dimension_numbers<[1], [1], [0], [0], [0, 0, 1, 0], [], []>} : vector<8x8xbf16>, vector<8x8xbf16>, vector<8x8xf32> -> vector<8x8xf32>
    "tpu.trace_stop"() : () -> ()
    %791 = arith.addf %790, %381 : vector<8x8xf32>
    %cst_272 = arith.constant dense<0xFF800000> : vector<8xf32>
    %792 = vector.multi_reduction <maximumf>, %791, %cst_272 [1] : vector<8x8xf32> to vector<8xf32>
    %793 = vector.shape_cast %792 : vector<8xf32> to vector<8x1xf32>
    %794 = vector.broadcast %793 : vector<8x1xf32> to vector<8x8xf32>
    %795 = arith.subf %791, %794 : vector<8x8xf32>
    %796 = math.exp %795 : vector<8x8xf32>
    %cst_273 = arith.constant dense<0.000000e+00> : vector<8xf32>
    %797 = vector.multi_reduction <add>, %796, %cst_273 [1] : vector<8x8xf32> to vector<8xf32>
    %798 = vector.shape_cast %797 : vector<8xf32> to vector<8x1xf32>
    %799 = tpu.reciprocal %798 {approx = true} : vector<8x1xf32> -> vector<8x1xf32>
    %800 = vector.broadcast %799 : vector<8x1xf32> to vector<8x8xf32>
    %801 = arith.mulf %796, %800 : vector<8x8xf32>
    %802 = arith.truncf %801 : vector<8x8xf32> to vector<8x8xbf16>
    %cst_274 = arith.constant dense<0.000000e+00> : vector<8x8xf32>
    %803 = tpu.matmul %802, %789, %cst_274 {dimension_numbers = #tpu.dot_dimension_numbers<[1], [0], [0], [1], [0, 0, 1, 1], [], []>} : vector<8x8xbf16>, vector<8x8xbf16>, vector<8x8xf32> -> vector<8x8xf32>
    %804 = vector.extract_strided_slice %767 {offsets = [0, 16], sizes = [8, 8], strides = [1, 1]} : vector<8x32xbf16> to vector<8x8xbf16>
    %805 = vector.extract_strided_slice %768 {offsets = [0, 16], sizes = [8, 8], strides = [1, 1]} : vector<8x32xbf16> to vector<8x8xbf16>
    %806 = vector.extract_strided_slice %769 {offsets = [0, 16], sizes = [8, 8], strides = [1, 1]} : vector<8x32xbf16> to vector<8x8xbf16>
    "tpu.trace_start"() <{level = 10 : i32, message = "qd,kd->qk"}> : () -> ()
    %cst_275 = arith.constant dense<0.000000e+00> : vector<8x8xf32>
    %807 = tpu.matmul %804, %805, %cst_275 {dimension_numbers = #tpu.dot_dimension_numbers<[1], [1], [0], [0], [0, 0, 1, 0], [], []>} : vector<8x8xbf16>, vector<8x8xbf16>, vector<8x8xf32> -> vector<8x8xf32>
    "tpu.trace_stop"() : () -> ()
    %808 = arith.addf %807, %381 : vector<8x8xf32>
    %cst_276 = arith.constant dense<0xFF800000> : vector<8xf32>
    %809 = vector.multi_reduction <maximumf>, %808, %cst_276 [1] : vector<8x8xf32> to vector<8xf32>
    %810 = vector.shape_cast %809 : vector<8xf32> to vector<8x1xf32>
    %811 = vector.broadcast %810 : vector<8x1xf32> to vector<8x8xf32>
    %812 = arith.subf %808, %811 : vector<8x8xf32>
    %813 = math.exp %812 : vector<8x8xf32>
    %cst_277 = arith.constant dense<0.000000e+00> : vector<8xf32>
    %814 = vector.multi_reduction <add>, %813, %cst_277 [1] : vector<8x8xf32> to vector<8xf32>
    %815 = vector.shape_cast %814 : vector<8xf32> to vector<8x1xf32>
    %816 = tpu.reciprocal %815 {approx = true} : vector<8x1xf32> -> vector<8x1xf32>
    %817 = vector.broadcast %816 : vector<8x1xf32> to vector<8x8xf32>
    %818 = arith.mulf %813, %817 : vector<8x8xf32>
    %819 = arith.truncf %818 : vector<8x8xf32> to vector<8x8xbf16>
    %cst_278 = arith.constant dense<0.000000e+00> : vector<8x8xf32>
    %820 = tpu.matmul %819, %806, %cst_278 {dimension_numbers = #tpu.dot_dimension_numbers<[1], [0], [0], [1], [0, 0, 1, 1], [], []>} : vector<8x8xbf16>, vector<8x8xbf16>, vector<8x8xf32> -> vector<8x8xf32>
    %821 = vector.extract_strided_slice %767 {offsets = [0, 24], sizes = [8, 8], strides = [1, 1]} : vector<8x32xbf16> to vector<8x8xbf16>
    %822 = vector.extract_strided_slice %768 {offsets = [0, 24], sizes = [8, 8], strides = [1, 1]} : vector<8x32xbf16> to vector<8x8xbf16>
    %823 = vector.extract_strided_slice %769 {offsets = [0, 24], sizes = [8, 8], strides = [1, 1]} : vector<8x32xbf16> to vector<8x8xbf16>
    "tpu.trace_start"() <{level = 10 : i32, message = "qd,kd->qk"}> : () -> ()
    %cst_279 = arith.constant dense<0.000000e+00> : vector<8x8xf32>
    %824 = tpu.matmul %821, %822, %cst_279 {dimension_numbers = #tpu.dot_dimension_numbers<[1], [1], [0], [0], [0, 0, 1, 0], [], []>} : vector<8x8xbf16>, vector<8x8xbf16>, vector<8x8xf32> -> vector<8x8xf32>
    "tpu.trace_stop"() : () -> ()
    %825 = arith.addf %824, %381 : vector<8x8xf32>
    %cst_280 = arith.constant dense<0xFF800000> : vector<8xf32>
    %826 = vector.multi_reduction <maximumf>, %825, %cst_280 [1] : vector<8x8xf32> to vector<8xf32>
    %827 = vector.shape_cast %826 : vector<8xf32> to vector<8x1xf32>
    %828 = vector.broadcast %827 : vector<8x1xf32> to vector<8x8xf32>
    %829 = arith.subf %825, %828 : vector<8x8xf32>
    %830 = math.exp %829 : vector<8x8xf32>
    %cst_281 = arith.constant dense<0.000000e+00> : vector<8xf32>
    %831 = vector.multi_reduction <add>, %830, %cst_281 [1] : vector<8x8xf32> to vector<8xf32>
    %832 = vector.shape_cast %831 : vector<8xf32> to vector<8x1xf32>
    %833 = tpu.reciprocal %832 {approx = true} : vector<8x1xf32> -> vector<8x1xf32>
    %834 = vector.broadcast %833 : vector<8x1xf32> to vector<8x8xf32>
    %835 = arith.mulf %830, %834 : vector<8x8xf32>
    %836 = arith.truncf %835 : vector<8x8xf32> to vector<8x8xbf16>
    %cst_282 = arith.constant dense<0.000000e+00> : vector<8x8xf32>
    %837 = tpu.matmul %836, %823, %cst_282 {dimension_numbers = #tpu.dot_dimension_numbers<[1], [0], [0], [1], [0, 0, 1, 1], [], []>} : vector<8x8xbf16>, vector<8x8xbf16>, vector<8x8xf32> -> vector<8x8xf32>
    %838 = tpu.concatenate %786, %803, %820, %837 in 1 : vector<8x8xf32>, vector<8x8xf32>, vector<8x8xf32>, vector<8x8xf32> -> vector<8x32xf32>
    %839 = arith.truncf %838 : vector<8x32xf32> to vector<8x32xbf16>
    %cst_283 = arith.constant dense<0.000000e+00> : vector<8x32xf32>
    %840 = tpu.matmul %839, %759, %cst_283 {dimension_numbers = #tpu.dot_dimension_numbers<[1], [0], [0], [1], [0, 0, 1, 1], [], []>} : vector<8x32xbf16>, vector<32x32xbf16>, vector<8x32xf32> -> vector<8x32xf32>
    %841 = arith.addf %840, %753 : vector<8x32xf32>
    %cst_284 = arith.constant dense<0.000000e+00> : vector<8xf32>
    %842 = vector.multi_reduction <add>, %841, %cst_284 [1] : vector<8x32xf32> to vector<8xf32>
    %843 = vector.shape_cast %842 : vector<8xf32> to vector<8x1xf32>
    %cst_285 = arith.constant 3.200000e+01 : f32
    %844 = vector.broadcast %cst_285 : f32 to vector<8x1xf32>
    %845 = arith.divf %843, %844 : vector<8x1xf32>
    %846 = vector.broadcast %845 : vector<8x1xf32> to vector<8x32xf32>
    %847 = arith.subf %841, %846 : vector<8x32xf32>
    %848 = arith.mulf %847, %847 : vector<8x32xf32>
    %cst_286 = arith.constant dense<0.000000e+00> : vector<8xf32>
    %849 = vector.multi_reduction <add>, %848, %cst_286 [1] : vector<8x32xf32> to vector<8xf32>
    %850 = vector.shape_cast %849 : vector<8xf32> to vector<8x1xf32>
    %cst_287 = arith.constant 3.200000e+01 : f32
    %851 = vector.broadcast %cst_287 : f32 to vector<8x1xf32>
    %852 = arith.divf %850, %851 : vector<8x1xf32>
    %853 = vector.broadcast %845 : vector<8x1xf32> to vector<8x32xf32>
    %854 = arith.subf %841, %853 : vector<8x32xf32>
    %cst_288 = arith.constant 9.99999997E-7 : f32
    %855 = vector.broadcast %cst_288 : f32 to vector<8x1xf32>
    %856 = arith.addf %852, %855 : vector<8x1xf32>
    %857 = math.rsqrt %856 : vector<8x1xf32>
    %858 = vector.broadcast %857 : vector<8x1xf32> to vector<8x32xf32>
    %859 = arith.mulf %854, %858 : vector<8x32xf32>
    %860 = vector.broadcast %760 : vector<1x32xf32> to vector<8x32xf32>
    %861 = arith.mulf %859, %860 : vector<8x32xf32>
    %862 = vector.broadcast %761 : vector<1x32xf32> to vector<8x32xf32>
    %863 = arith.addf %861, %862 : vector<8x32xf32>
    %c1_289 = arith.constant 1 : index
    %c0_290 = arith.constant 0 : index
    %c0_291 = arith.constant 0 : index
    %864 = vector.load %arg24[%c1_289, %c0_290, %c0_291] : memref<2x32x64xbf16, #tpu.memory_space<vmem>>, vector<1x32x64xbf16>
    %865 = vector.shape_cast %864 : vector<1x32x64xbf16> to vector<32x64xbf16>
    %c1_292 = arith.constant 1 : index
    %c0_293 = arith.constant 0 : index
    %c0_294 = arith.constant 0 : index
    %866 = vector.load %arg25[%c1_292, %c0_293, %c0_294] : memref<2x1x64xf32, #tpu.memory_space<vmem>>, vector<1x1x64xf32>
    %867 = vector.shape_cast %866 : vector<1x1x64xf32> to vector<1x64xf32>
    %c1_295 = arith.constant 1 : index
    %c0_296 = arith.constant 0 : index
    %c0_297 = arith.constant 0 : index
    %868 = vector.load %arg26[%c1_295, %c0_296, %c0_297] : memref<2x64x32xbf16, #tpu.memory_space<vmem>>, vector<1x64x32xbf16>
    %869 = vector.shape_cast %868 : vector<1x64x32xbf16> to vector<64x32xbf16>
    %870 = vector.extract_strided_slice %645 {offsets = [4, 0], sizes = [1, 32], strides = [1, 1]} : vector<7x32xf32> to vector<1x32xf32>
    %871 = vector.extract_strided_slice %645 {offsets = [5, 0], sizes = [1, 32], strides = [1, 1]} : vector<7x32xf32> to vector<1x32xf32>
    %872 = vector.extract_strided_slice %645 {offsets = [6, 0], sizes = [1, 32], strides = [1, 1]} : vector<7x32xf32> to vector<1x32xf32>
    %873 = arith.truncf %863 : vector<8x32xf32> to vector<8x32xbf16>
    %cst_298 = arith.constant dense<0.000000e+00> : vector<8x64xf32>
    %874 = tpu.matmul %873, %865, %cst_298 {dimension_numbers = #tpu.dot_dimension_numbers<[1], [0], [0], [1], [0, 0, 1, 1], [], []>} : vector<8x32xbf16>, vector<32x64xbf16>, vector<8x64xf32> -> vector<8x64xf32>
    %875 = vector.broadcast %867 : vector<1x64xf32> to vector<8x64xf32>
    %876 = arith.addf %874, %875 : vector<8x64xf32>
    %cst_299 = arith.constant 0.000000e+00 : f32
    %877 = vector.broadcast %cst_299 : f32 to vector<8x64xf32>
    %878 = arith.maximumf %876, %877 : vector<8x64xf32>
    %879 = arith.truncf %878 : vector<8x64xf32> to vector<8x64xbf16>
    %cst_300 = arith.constant dense<0.000000e+00> : vector<8x32xf32>
    %880 = tpu.matmul %879, %869, %cst_300 {dimension_numbers = #tpu.dot_dimension_numbers<[1], [0], [0], [1], [0, 0, 1, 1], [], []>} : vector<8x64xbf16>, vector<64x32xbf16>, vector<8x32xf32> -> vector<8x32xf32>
    %881 = vector.broadcast %870 : vector<1x32xf32> to vector<8x32xf32>
    %882 = arith.addf %880, %881 : vector<8x32xf32>
    %883 = arith.addf %882, %863 : vector<8x32xf32>
    %cst_301 = arith.constant dense<0.000000e+00> : vector<8xf32>
    %884 = vector.multi_reduction <add>, %883, %cst_301 [1] : vector<8x32xf32> to vector<8xf32>
    %885 = vector.shape_cast %884 : vector<8xf32> to vector<8x1xf32>
    %cst_302 = arith.constant 3.200000e+01 : f32
    %886 = vector.broadcast %cst_302 : f32 to vector<8x1xf32>
    %887 = arith.divf %885, %886 : vector<8x1xf32>
    %888 = vector.broadcast %887 : vector<8x1xf32> to vector<8x32xf32>
    %889 = arith.subf %883, %888 : vector<8x32xf32>
    %890 = arith.mulf %889, %889 : vector<8x32xf32>
    %cst_303 = arith.constant dense<0.000000e+00> : vector<8xf32>
    %891 = vector.multi_reduction <add>, %890, %cst_303 [1] : vector<8x32xf32> to vector<8xf32>
    %892 = vector.shape_cast %891 : vector<8xf32> to vector<8x1xf32>
    %cst_304 = arith.constant 3.200000e+01 : f32
    %893 = vector.broadcast %cst_304 : f32 to vector<8x1xf32>
    %894 = arith.divf %892, %893 : vector<8x1xf32>
    %895 = vector.broadcast %887 : vector<8x1xf32> to vector<8x32xf32>
    %896 = arith.subf %883, %895 : vector<8x32xf32>
    %cst_305 = arith.constant 9.99999997E-7 : f32
    %897 = vector.broadcast %cst_305 : f32 to vector<8x1xf32>
    %898 = arith.addf %894, %897 : vector<8x1xf32>
    %899 = math.rsqrt %898 : vector<8x1xf32>
    %900 = vector.broadcast %899 : vector<8x1xf32> to vector<8x32xf32>
    %901 = arith.mulf %896, %900 : vector<8x32xf32>
    %902 = vector.broadcast %871 : vector<1x32xf32> to vector<8x32xf32>
    %903 = arith.mulf %901, %902 : vector<8x32xf32>
    %904 = vector.broadcast %872 : vector<1x32xf32> to vector<8x32xf32>
    %905 = arith.addf %903, %904 : vector<8x32xf32>
    %906 = arith.truncf %905 : vector<8x32xf32> to vector<8x32xbf16>
    %c0_306 = arith.constant 0 : index
    %c0_307 = arith.constant 0 : index
    %907 = vector.load %arg28[%c0_306, %c0_307] : memref<32x10xbf16, #tpu.memory_space<vmem>>, vector<32x10xbf16>
    %cst_308 = arith.constant dense<0.000000e+00> : vector<8x10xf32>
    %908 = tpu.matmul %906, %907, %cst_308 {dimension_numbers = #tpu.dot_dimension_numbers<[1], [0], [0], [1], [0, 0, 1, 1], [], []>} : vector<8x32xbf16>, vector<32x10xbf16>, vector<8x10xf32> -> vector<8x10xf32>
    %c0_309 = arith.constant 0 : index
    %c0_310 = arith.constant 0 : index
    %c0_311 = arith.constant 0 : index
    %909 = vector.load %arg29[%c0_309, %c0_310, %c0_311] : memref<1x8x10xf32, #tpu.memory_space<vmem>>, vector<1x8x10xf32>
    %910 = vector.shape_cast %909 : vector<1x8x10xf32> to vector<8x10xf32>
    %911 = vector.shape_cast %908 : vector<8x10xf32> to vector<1x8x10xf32>
    tpu.vector_store %arg29[%c0_309, %c0_310, %c0_311], %911 {strides = array<i32>} : memref<1x8x10xf32, #tpu.memory_space<vmem>>, vector<1x8x10xf32>,
    return
  }
  func.func @transform_0(%arg0: i32) -> (i32, i32, i32) {
    %c0_i32 = arith.constant 0 : i32
    %c0_i32_0 = arith.constant 0 : i32
    %c0_i32_1 = arith.constant 0 : i32
    return %arg0, %c0_i32, %c0_i32_0 : i32, i32, i32
  }
  func.func @transform_1(%arg0: i32) -> (i32, i32, i32) {
    %c0_i32 = arith.constant 0 : i32
    %c0_i32_0 = arith.constant 0 : i32
    %c0_i32_1 = arith.constant 0 : i32
    return %arg0, %c0_i32, %c0_i32_0 : i32, i32, i32
  }
  func.func @transform_2(%arg0: i32) -> (i32, i32, i32) {
    %c0_i32 = arith.constant 0 : i32
    %c0_i32_0 = arith.constant 0 : i32
    %c0_i32_1 = arith.constant 0 : i32
    return %arg0, %c0_i32, %c0_i32_0 : i32, i32, i32
  }
  func.func @transform_3(%arg0: i32) -> (i32, i32, i32) {
    %c0_i32 = arith.constant 0 : i32
    %c0_i32_0 = arith.constant 0 : i32
    %c0_i32_1 = arith.constant 0 : i32
    return %arg0, %c0_i32, %c0_i32_0 : i32, i32, i32
  }
  func.func @transform_4(%arg0: i32) -> (i32, i32, i32) {
    %c0_i32 = arith.constant 0 : i32
    %c0_i32_0 = arith.constant 0 : i32
    %c0_i32_1 = arith.constant 0 : i32
    return %arg0, %c0_i32, %c0_i32_0 : i32, i32, i32
  }
  func.func @transform_5(%arg0: i32) -> (i32, i32) {
    %c0_i32 = arith.constant 0 : i32
    %c0_i32_0 = arith.constant 0 : i32
    %c0_i32_1 = arith.constant 0 : i32
    return %c0_i32, %c0_i32_0 : i32, i32
  }
  func.func @transform_6(%arg0: i32) -> (i32, i32, i32) {
    %c0_i32 = arith.constant 0 : i32
    %c0_i32_0 = arith.constant 0 : i32
    %c0_i32_1 = arith.constant 0 : i32
    return %arg0, %c0_i32, %c0_i32_0 : i32, i32, i32
  }
  func.func @transform_7(%arg0: i32) -> (i32, i32, i32) {
    %c0_i32 = arith.constant 0 : i32
    %c0_i32_0 = arith.constant 0 : i32
    %c0_i32_1 = arith.constant 0 : i32
    return %arg0, %c0_i32, %c0_i32_0 : i32, i32, i32
  }
  func.func @transform_8(%arg0: i32) -> (i32, i32) {
    %c0_i32 = arith.constant 0 : i32
    %c0_i32_0 = arith.constant 0 : i32
    %c0_i32_1 = arith.constant 0 : i32
    return %c0_i32, %c0_i32_0 : i32, i32
  }
  func.func @transform_9(%arg0: i32) -> (i32, i32, i32) {
    %c0_i32 = arith.constant 0 : i32
    %c0_i32_0 = arith.constant 0 : i32
    %c0_i32_1 = arith.constant 0 : i32
    %c0_i32_2 = arith.constant 0 : i32
    return %c0_i32, %c0_i32_0, %c0_i32_1 : i32, i32, i32
  }
  func.func @transform_10(%arg0: i32) -> (i32, i32, i32) {
    %c0_i32 = arith.constant 0 : i32
    %c0_i32_0 = arith.constant 0 : i32
    %c0_i32_1 = arith.constant 0 : i32
    %c0_i32_2 = arith.constant 0 : i32
    return %c0_i32, %c0_i32_0, %c0_i32_1 : i32, i32, i32
  }
  func.func @transform_11(%arg0: i32) -> (i32, i32, i32) {
    %c0_i32 = arith.constant 0 : i32
    %c0_i32_0 = arith.constant 0 : i32
    %c0_i32_1 = arith.constant 0 : i32
    %c0_i32_2 = arith.constant 0 : i32
    return %c0_i32, %c0_i32_0, %c0_i32_1 : i32, i32, i32
  }
  func.func @transform_12(%arg0: i32) -> (i32, i32, i32) {
    %c0_i32 = arith.constant 0 : i32
    %c0_i32_0 = arith.constant 0 : i32
    %c0_i32_1 = arith.constant 0 : i32
    %c0_i32_2 = arith.constant 0 : i32
    return %c0_i32, %c0_i32_0, %c0_i32_1 : i32, i32, i32
  }
  func.func @transform_13(%arg0: i32) -> (i32, i32, i32) {
    %c0_i32 = arith.constant 0 : i32
    %c0_i32_0 = arith.constant 0 : i32
    %c0_i32_1 = arith.constant 0 : i32
    %c0_i32_2 = arith.constant 0 : i32
    return %c0_i32, %c0_i32_0, %c0_i32_1 : i32, i32, i32
  }
  func.func @transform_14(%arg0: i32) -> (i32, i32, i32) {
    %c0_i32 = arith.constant 0 : i32
    %c0_i32_0 = arith.constant 0 : i32
    %c0_i32_1 = arith.constant 0 : i32
    %c0_i32_2 = arith.constant 0 : i32
    return %c0_i32, %c0_i32_0, %c0_i32_1 : i32, i32, i32
  }
  func.func @transform_15(%arg0: i32) -> (i32, i32) {
    %c0_i32 = arith.constant 0 : i32
    %c0_i32_0 = arith.constant 0 : i32
    %c0_i32_1 = arith.constant 0 : i32
    return %c0_i32, %c0_i32_0 : i32, i32
  }
  func.func @transform_16(%arg0: i32) -> (i32, i32) {
    %c0_i32 = arith.constant 0 : i32
    %c0_i32_0 = arith.constant 0 : i32
    %c0_i32_1 = arith.constant 0 : i32
    return %c0_i32, %c0_i32_0 : i32, i32
  }
  func.func @transform_17(%arg0: i32) -> (i32, i32) {
    %c0_i32 = arith.constant 0 : i32
    %c0_i32_0 = arith.constant 0 : i32
    %c0_i32_1 = arith.constant 0 : i32
    return %c0_i32, %c0_i32_0 : i32, i32
  }
  func.func @transform_18(%arg0: i32) -> (i32, i32, i32) {
    %c0_i32 = arith.constant 0 : i32
    %c0_i32_0 = arith.constant 0 : i32
    %c0_i32_1 = arith.constant 0 : i32
    %c0_i32_2 = arith.constant 0 : i32
    return %c0_i32, %c0_i32_0, %c0_i32_1 : i32, i32, i32
  }
  func.func @transform_19(%arg0: i32) -> (i32, i32, i32) {
    %c0_i32 = arith.constant 0 : i32
    %c0_i32_0 = arith.constant 0 : i32
    %c0_i32_1 = arith.constant 0 : i32
    %c0_i32_2 = arith.constant 0 : i32
    return %c0_i32, %c0_i32_0, %c0_i32_1 : i32, i32, i32
  }
  func.func @transform_20(%arg0: i32) -> (i32, i32, i32) {
    %c0_i32 = arith.constant 0 : i32
    %c0_i32_0 = arith.constant 0 : i32
    %c0_i32_1 = arith.constant 0 : i32
    %c0_i32_2 = arith.constant 0 : i32
    return %c0_i32, %c0_i32_0, %c0_i32_1 : i32, i32, i32
  }
  func.func @transform_21(%arg0: i32) -> (i32, i32, i32) {
    %c0_i32 = arith.constant 0 : i32
    %c0_i32_0 = arith.constant 0 : i32
    %c0_i32_1 = arith.constant 0 : i32
    %c0_i32_2 = arith.constant 0 : i32
    return %c0_i32, %c0_i32_0, %c0_i32_1 : i32, i32, i32
  }
  func.func @transform_22(%arg0: i32) -> (i32, i32, i32) {
    %c0_i32 = arith.constant 0 : i32
    %c0_i32_0 = arith.constant 0 : i32
    %c0_i32_1 = arith.constant 0 : i32
    %c0_i32_2 = arith.constant 0 : i32
    return %c0_i32, %c0_i32_0, %c0_i32_1 : i32, i32, i32
  }
  func.func @transform_23(%arg0: i32) -> (i32, i32, i32) {
    %c0_i32 = arith.constant 0 : i32
    %c0_i32_0 = arith.constant 0 : i32
    %c0_i32_1 = arith.constant 0 : i32
    %c0_i32_2 = arith.constant 0 : i32
    return %c0_i32, %c0_i32_0, %c0_i32_1 : i32, i32, i32
  }
  func.func @transform_24(%arg0: i32) -> (i32, i32, i32) {
    %c0_i32 = arith.constant 0 : i32
    %c0_i32_0 = arith.constant 0 : i32
    %c0_i32_1 = arith.constant 0 : i32
    %c0_i32_2 = arith.constant 0 : i32
    return %c0_i32, %c0_i32_0, %c0_i32_1 : i32, i32, i32
  }
  func.func @transform_25(%arg0: i32) -> (i32, i32, i32) {
    %c0_i32 = arith.constant 0 : i32
    %c0_i32_0 = arith.constant 0 : i32
    %c0_i32_1 = arith.constant 0 : i32
    %c0_i32_2 = arith.constant 0 : i32
    return %c0_i32, %c0_i32_0, %c0_i32_1 : i32, i32, i32
  }
  func.func @transform_26(%arg0: i32) -> (i32, i32, i32) {
    %c0_i32 = arith.constant 0 : i32
    %c0_i32_0 = arith.constant 0 : i32
    %c0_i32_1 = arith.constant 0 : i32
    %c0_i32_2 = arith.constant 0 : i32
    return %c0_i32, %c0_i32_0, %c0_i32_1 : i32, i32, i32
  }
  func.func @transform_27(%arg0: i32) -> (i32, i32) {
    %c0_i32 = arith.constant 0 : i32
    %c0_i32_0 = arith.constant 0 : i32
    %c0_i32_1 = arith.constant 0 : i32
    return %c0_i32, %c0_i32_0 : i32, i32
  }
  func.func @transform_28(%arg0: i32) -> (i32, i32, i32) {
    %c0_i32 = arith.constant 0 : i32
    %c0_i32_0 = arith.constant 0 : i32
    %c0_i32_1 = arith.constant 0 : i32
    return %arg0, %c0_i32, %c0_i32_0 : i32, i32, i32
  }
}

</mosaic_0001>

<llo_original>
// kernel: transformer_forward.1
$region0: #{transformer_forward.1}
  #allocation0 [shape = 'u32[]', space=smem, size = 0x4, offset = 0x4, fixed_abs, tag = 'smem constant byte address 0x4 - core index']
  #allocation1 [shape = 'u32[144,128]{1,0:T(1,128)}', space=vmem, size = 0x12000, scoped, tag = 'internal scratch']
  %s0 = inlined_call_operand.vmem [shape: f32[2,8,32], index: 0, kind: input, shape index: {}]
  %s1 = inlined_call_operand.vmem [shape: f32[2,8,8], index: 1, kind: input, shape index: {}, may-alias: {1,7}]
  %s2 = inlined_call_operand.vmem [shape: f32[2,8,32], index: 2, kind: input, shape index: {}]
  %s3 = inlined_call_operand.vmem [shape: f32[2,8,10], index: 3, kind: input, shape index: {}]
  %s4 = inlined_call_operand.vmem [shape: f32[2,8,1], index: 4, kind: input, shape index: {}]
  %s5 = inlined_call_operand.vmem [shape: f32[8,32], index: 5, kind: input, shape index: {}]
  %s6 = inlined_call_operand.vmem [shape: f32[2,8,8], index: 6, kind: input, shape index: {}]
  %s7 = inlined_call_operand.vmem [shape: f32[2,8,8], index: 7, kind: input, shape index: {}, may-alias: {1,7}]
  %s8 = inlined_call_operand.vmem [shape: f32[2,32], index: 8, kind: input, shape index: {}]
  %s9 = inlined_call_operand.vmem [shape: bf16[2,32,96], index: 9, kind: input, shape index: {}]
  %s10 = inlined_call_operand.vmem [shape: bf16[2,32,32], index: 10, kind: input, shape index: {}]
  %s11 = inlined_call_operand.vmem [shape: bf16[2,32,64], index: 11, kind: input, shape index: {}]
  %s12 = inlined_call_operand.vmem [shape: f32[2,1,64], index: 12, kind: input, shape index: {}]
  %s13 = inlined_call_operand.vmem [shape: bf16[2,64,32], index: 13, kind: input, shape index: {}]
  %s14 = inlined_call_operand.vmem [shape: f32[2,5,32], index: 14, kind: input, shape index: {}]
  %s15 = inlined_call_operand.vmem [shape: f32[2,32], index: 15, kind: input, shape index: {}]
  %s16 = inlined_call_operand.vmem [shape: bf16[10,32], index: 16, kind: input, shape index: {}]
  %s17 = inlined_call_operand.vmem [shape: f32[1,32], index: 17, kind: input, shape index: {}]
  %s18 = inlined_call_operand.vmem [shape: bf16[2,32,96], index: 18, kind: input, shape index: {}]
  %s19 = inlined_call_operand.vmem [shape: bf16[2,32,32], index: 19, kind: input, shape index: {}]
  %s20 = inlined_call_operand.vmem [shape: bf16[2,32,32], index: 20, kind: input, shape index: {}]
  %s21 = inlined_call_operand.vmem [shape: bf16[2,32,64], index: 21, kind: input, shape index: {}]
  %s22 = inlined_call_operand.vmem [shape: bf16[2,32,32], index: 22, kind: input, shape index: {}]
  %s23 = inlined_call_operand.vmem [shape: bf16[2,32,64], index: 23, kind: input, shape index: {}]
  %s24 = inlined_call_operand.vmem [shape: f32[2,1,64], index: 24, kind: input, shape index: {}]
  %s25 = inlined_call_operand.vmem [shape: bf16[2,64,32], index: 25, kind: input, shape index: {}]
  %s26 = inlined_call_operand.vmem [shape: f32[2,7,32], index: 26, kind: input, shape index: {}]
  %s27 = inlined_call_operand.vmem [shape: bf16[32,10], index: 27, kind: input, shape index: {}]
  %s28 = inlined_call_operand.hbm [shape: f32[2,8,10], index: 28, kind: output, shape index: {}]
  %s29 = sld [smem:[#allocation0]]
  $region145: #{transformer_forward.1} parent=0
    _
  %s31 = ssub.s32 1, %s29
  %s32 = scalar_select 0, %s31, %s29
  $region1: #{transformer_forward.1} parent=0
    #allocation2 [shape = 'u8[8192]{0}', space=vmem, size = 0x2000, scoped, tag = 'output window, operand 0']
    #allocation3 [shape = 's32[2]{0}', space=sflag, size = 0x8, scoped, tag = 'scoped memory for transformer_forward.1']
    %33 = vsyncpa [#allocation3], 0
    %s34 = scalar_lea.sflag [#allocation3], 1
    %35 = vsyncpa %s34, 0
    loop: start=0, step=1, limit=4
    $region2: #{transformer_forward.1} parent=1 // loop_pre_header
      _
    $region3: #{transformer_forward.1} parent=1 // loop_header
      %s37 = sphi 0, %s41
      %p38 = scmp.ge.s32.totalorder %s37, 4
      %s47 = sphi 0, %s49
      %s50 = sphi 0, %s47
      %s51 = sphi 0, %s50
      %s67 = sphi 0, %s51
      %s73 = sphi 0, %s75
      %s76 = sphi 0, %s73
      %s77 = sphi 0, %s76
      %s93 = sphi 0, %s77
      %s99 = sphi 0, %s101
      %s102 = sphi 0, %s99
      %s103 = sphi 0, %s102
      %s119 = sphi 0, %s103
      %s125 = sphi 0, %s127
      %s128 = sphi 0, %s125
      %s129 = sphi 0, %s128
      %s145 = sphi 0, %s129
      %s151 = sphi 0, %s153
      %s154 = sphi 0, %s151
      %s155 = sphi 0, %s154
      %s171 = sphi 0, %s155
      %s175 = sphi 0, %s175
      %s177 = sphi 0, %s175
      %s178 = sphi 0, %s177
      %s192 = sphi 0, %s178
      %s198 = sphi 0, %s200
      %s201 = sphi 0, %s198
      %s202 = sphi 0, %s201
      %s218 = sphi 0, %s202
      %s224 = sphi 0, %s226
      %s227 = sphi 0, %s224
      %s228 = sphi 0, %s227
      %s244 = sphi 0, %s228
      %s248 = sphi 0, %s248
      %s250 = sphi 0, %s248
      %s251 = sphi 0, %s250
      %s265 = sphi 0, %s251
      %s269 = sphi 0, %s269
      %s271 = sphi 0, %s269
      %s272 = sphi 0, %s271
      %s286 = sphi 0, %s272
      %s290 = sphi 0, %s290
      %s292 = sphi 0, %s290
      %s293 = sphi 0, %s292
      %s307 = sphi 0, %s293
      %s311 = sphi 0, %s311
      %s313 = sphi 0, %s311
      %s314 = sphi 0, %s313
      %s328 = sphi 0, %s314
      %s332 = sphi 0, %s332
      %s334 = sphi 0, %s332
      %s335 = sphi 0, %s334
      %s349 = sphi 0, %s335
      %s353 = sphi 0, %s353
      %s355 = sphi 0, %s353
      %s356 = sphi 0, %s355
      %s370 = sphi 0, %s356
      %s374 = sphi 0, %s374
      %s376 = sphi 0, %s374
      %s377 = sphi 0, %s376
      %s391 = sphi 0, %s377
      %s395 = sphi 0, %s395
      %s397 = sphi 0, %s395
      %s398 = sphi 0, %s397
      %s412 = sphi 0, %s398
      %s416 = sphi 0, %s416
      %s418 = sphi 0, %s416
      %s419 = sphi 0, %s418
      %s433 = sphi 0, %s419
      %s437 = sphi 0, %s437
      %s439 = sphi 0, %s437
      %s440 = sphi 0, %s439
      %s454 = sphi 0, %s440
      %s458 = sphi 0, %s458
      %s460 = sphi 0, %s458
      %s461 = sphi 0, %s460
      %s475 = sphi 0, %s461
      %s479 = sphi 0, %s479
      %s481 = sphi 0, %s479
      %s482 = sphi 0, %s481
      %s496 = sphi 0, %s482
      %s500 = sphi 0, %s500
      %s502 = sphi 0, %s500
      %s503 = sphi 0, %s502
      %s517 = sphi 0, %s503
      %s521 = sphi 0, %s521
      %s523 = sphi 0, %s521
      %s524 = sphi 0, %s523
      %s538 = sphi 0, %s524
      %s542 = sphi 0, %s542
      %s544 = sphi 0, %s542
      %s545 = sphi 0, %s544
      %s559 = sphi 0, %s545
      %s563 = sphi 0, %s563
      %s565 = sphi 0, %s563
      %s566 = sphi 0, %s565
      %s580 = sphi 0, %s566
      %s584 = sphi 0, %s584
      %s586 = sphi 0, %s584
      %s587 = sphi 0, %s586
      %s601 = sphi 0, %s587
      %s605 = sphi 0, %s605
      %s607 = sphi 0, %s605
      %s608 = sphi 0, %s607
      %s622 = sphi 0, %s608
      %s626 = sphi 0, %s626
      %s628 = sphi 0, %s626
      %s629 = sphi 0, %s628
      %s643 = sphi 0, %s629
      %s647 = sphi 0, %s647
      %s649 = sphi 0, %s647
      %s650 = sphi 0, %s649
      %s664 = sphi 0, %s650
      %s670 = sphi 0, %s672
      %s673 = sphi 0, %s670
      %s674 = sphi 0, %s673
      %s690 = sphi 0, %s674
    $region4: #{transformer_forward.1} parent=1 // loop_header_branch
      %40 = sbr.rel (%p38) target = $region8
    $region5: #{transformer_forward.1} parent=1 // loop_body
      %s42 = ssub.s32 %s37, 1
      %s43 = ssub.s32 %s37, 2
      %s44 = sadd.s32 %s37, 1
      %s45 = ssub.s32 %s37, %s44
      %p46 = scmp.eq.s32.totalorder %s45, 0
      %s48 = sadd.s32 %s47, 1
      %s49 = scalar_select %p46, %s47, %s48
      %p52 = pneg %p46
      %p53 = scmp.eq.s32.totalorder %s37, 1
      %p54 = por %p52, %p53
      %p55 = scmp.ne.s32.totalorder %s47, %s50
      %p56 = scmp.eq.s32.totalorder %s37, 0
      %p57 = por %p55, %p56
      %p58 = scmp.ne.s32.totalorder %s47, %s50
      %p59 = scmp.eq.s32.totalorder %s42, 1
      %p60 = por %p58, %p59
      %p61 = scmp.ne.s32.totalorder %s50, %s51
      %p62 = scmp.eq.s32.totalorder %s42, 0
      %p63 = por %p61, %p62
      %p64 = scmp.ne.s32.totalorder %s50, %s51
      %p65 = scmp.eq.s32.totalorder %s43, 1
      %p66 = por %p64, %p65
      %p68 = scmp.ne.s32.totalorder %s51, %s67
      %p69 = scmp.eq.s32.totalorder %s43, 0
      %p70 = por %p68, %p69
      %s71 = ssub.s32 %s37, %s44
      %p72 = scmp.eq.s32.totalorder %s71, 0
      %s74 = sadd.s32 %s73, 1
      %s75 = scalar_select %p72, %s73, %s74
      %p78 = pneg %p72
      %p79 = scmp.eq.s32.totalorder %s37, 1
      %p80 = por %p78, %p79
      %p81 = scmp.ne.s32.totalorder %s73, %s76
      %p82 = scmp.eq.s32.totalorder %s37, 0
      %p83 = por %p81, %p82
      %p84 = scmp.ne.s32.totalorder %s73, %s76
      %p85 = scmp.eq.s32.totalorder %s42, 1
      %p86 = por %p84, %p85
      %p87 = scmp.ne.s32.totalorder %s76, %s77
      %p88 = scmp.eq.s32.totalorder %s42, 0
      %p89 = por %p87, %p88
      %p90 = scmp.ne.s32.totalorder %s76, %s77
      %p91 = scmp.eq.s32.totalorder %s43, 1
      %p92 = por %p90, %p91
      %p94 = scmp.ne.s32.totalorder %s77, %s93
      %p95 = scmp.eq.s32.totalorder %s43, 0
      %p96 = por %p94, %p95
      %s97 = ssub.s32 %s37, %s44
      %p98 = scmp.eq.s32.totalorder %s97, 0
      %s100 = sadd.s32 %s99, 1
      %s101 = scalar_select %p98, %s99, %s100
      %p104 = pneg %p98
      %p105 = scmp.eq.s32.totalorder %s37, 1
      %p106 = por %p104, %p105
      %p107 = scmp.ne.s32.totalorder %s99, %s102
      %p108 = scmp.eq.s32.totalorder %s37, 0
      %p109 = por %p107, %p108
      %p110 = scmp.ne.s32.totalorder %s99, %s102
      %p111 = scmp.eq.s32.totalorder %s42, 1
      %p112 = por %p110, %p111
      %p113 = scmp.ne.s32.totalorder %s102, %s103
      %p114 = scmp.eq.s32.totalorder %s42, 0
      %p115 = por %p113, %p114
      %p116 = scmp.ne.s32.totalorder %s102, %s103
      %p117 = scmp.eq.s32.totalorder %s43, 1
      %p118 = por %p116, %p117
      %p120 = scmp.ne.s32.totalorder %s103, %s119
      %p121 = scmp.eq.s32.totalorder %s43, 0
      %p122 = por %p120, %p121
      %s123 = ssub.s32 %s37, %s44
      %p124 = scmp.eq.s32.totalorder %s123, 0
      %s126 = sadd.s32 %s125, 1
      %s127 = scalar_select %p124, %s125, %s126
      %p130 = pneg %p124
      %p131 = scmp.eq.s32.totalorder %s37, 1
      %p132 = por %p130, %p131
      %p133 = scmp.ne.s32.totalorder %s125, %s128
      %p134 = scmp.eq.s32.totalorder %s37, 0
      %p135 = por %p133, %p134
      %p136 = scmp.ne.s32.totalorder %s125, %s128
      %p137 = scmp.eq.s32.totalorder %s42, 1
      %p138 = por %p136, %p137
      %p139 = scmp.ne.s32.totalorder %s128, %s129
      %p140 = scmp.eq.s32.totalorder %s42, 0
      %p141 = por %p139, %p140
      %p142 = scmp.ne.s32.totalorder %s128, %s129
      %p143 = scmp.eq.s32.totalorder %s43, 1
      %p144 = por %p142, %p143
      %p146 = scmp.ne.s32.totalorder %s129, %s145
      %p147 = scmp.eq.s32.totalorder %s43, 0
      %p148 = por %p146, %p147
      %s149 = ssub.s32 %s37, %s44
      %p150 = scmp.eq.s32.totalorder %s149, 0
      %s152 = sadd.s32 %s151, 1
      %s153 = scalar_select %p150, %s151, %s152
      %p156 = pneg %p150
      %p157 = scmp.eq.s32.totalorder %s37, 1
      %p158 = por %p156, %p157
      %p159 = scmp.ne.s32.totalorder %s151, %s154
      %p160 = scmp.eq.s32.totalorder %s37, 0
      %p161 = por %p159, %p160
      %p162 = scmp.ne.s32.totalorder %s151, %s154
      %p163 = scmp.eq.s32.totalorder %s42, 1
      %p164 = por %p162, %p163
      %p165 = scmp.ne.s32.totalorder %s154, %s155
      %p166 = scmp.eq.s32.totalorder %s42, 0
      %p167 = por %p165, %p166
      %p168 = scmp.ne.s32.totalorder %s154, %s155
      %p169 = scmp.eq.s32.totalorder %s43, 1
      %p170 = por %p168, %p169
      %p172 = scmp.ne.s32.totalorder %s155, %s171
      %p173 = scmp.eq.s32.totalorder %s43, 0
      %p174 = por %p172, %p173
      %s176 = sadd.s32 %s175, 1
      %p179 = scmp.eq.s32.totalorder %s37, 1
      %p180 = scmp.ne.s32.totalorder %s175, %s177
      %p181 = scmp.eq.s32.totalorder %s37, 0
      %p182 = por %p180, %p181
      %p183 = scmp.ne.s32.totalorder %s175, %s177
      %p184 = scmp.eq.s32.totalorder %s42, 1
      %p185 = por %p183, %p184
      %p186 = scmp.ne.s32.totalorder %s177, %s178
      %p187 = scmp.eq.s32.totalorder %s42, 0
      %p188 = por %p186, %p187
      %p189 = scmp.ne.s32.totalorder %s177, %s178
      %p190 = scmp.eq.s32.totalorder %s43, 1
      %p191 = por %p189, %p190
      %p193 = scmp.ne.s32.totalorder %s178, %s192
      %p194 = scmp.eq.s32.totalorder %s43, 0
      %p195 = por %p193, %p194
      %s196 = ssub.s32 %s37, %s44
      %p197 = scmp.eq.s32.totalorder %s196, 0
      %s199 = sadd.s32 %s198, 1
      %s200 = scalar_select %p197, %s198, %s199
      %p203 = pneg %p197
      %p204 = scmp.eq.s32.totalorder %s37, 1
      %p205 = por %p203, %p204
      %p206 = scmp.ne.s32.totalorder %s198, %s201
      %p207 = scmp.eq.s32.totalorder %s37, 0
      %p208 = por %p206, %p207
      %p209 = scmp.ne.s32.totalorder %s198, %s201
      %p210 = scmp.eq.s32.totalorder %s42, 1
      %p211 = por %p209, %p210
      %p212 = scmp.ne.s32.totalorder %s201, %s202
      %p213 = scmp.eq.s32.totalorder %s42, 0
      %p214 = por %p212, %p213
      %p215 = scmp.ne.s32.totalorder %s201, %s202
      %p216 = scmp.eq.s32.totalorder %s43, 1
      %p217 = por %p215, %p216
      %p219 = scmp.ne.s32.totalorder %s202, %s218
      %p220 = scmp.eq.s32.totalorder %s43, 0
      %p221 = por %p219, %p220
      %s222 = ssub.s32 %s37, %s44
      %p223 = scmp.eq.s32.totalorder %s222, 0
      %s225 = sadd.s32 %s224, 1
      %s226 = scalar_select %p223, %s224, %s225
      %p229 = pneg %p223
      %p230 = scmp.eq.s32.totalorder %s37, 1
      %p231 = por %p229, %p230
      %p232 = scmp.ne.s32.totalorder %s224, %s227
      %p233 = scmp.eq.s32.totalorder %s37, 0
      %p234 = por %p232, %p233
      %p235 = scmp.ne.s32.totalorder %s224, %s227
      %p236 = scmp.eq.s32.totalorder %s42, 1
      %p237 = por %p235, %p236
      %p238 = scmp.ne.s32.totalorder %s227, %s228
      %p239 = scmp.eq.s32.totalorder %s42, 0
      %p240 = por %p238, %p239
      %p241 = scmp.ne.s32.totalorder %s227, %s228
      %p242 = scmp.eq.s32.totalorder %s43, 1
      %p243 = por %p241, %p242
      %p245 = scmp.ne.s32.totalorder %s228, %s244
      %p246 = scmp.eq.s32.totalorder %s43, 0
      %p247 = por %p245, %p246
      %s249 = sadd.s32 %s248, 1
      %p252 = scmp.eq.s32.totalorder %s37, 1
      %p253 = scmp.ne.s32.totalorder %s248, %s250
      %p254 = scmp.eq.s32.totalorder %s37, 0
      %p255 = por %p253, %p254
      %p256 = scmp.ne.s32.totalorder %s248, %s250
      %p257 = scmp.eq.s32.totalorder %s42, 1
      %p258 = por %p256, %p257
      %p259 = scmp.ne.s32.totalorder %s250, %s251
      %p260 = scmp.eq.s32.totalorder %s42, 0
      %p261 = por %p259, %p260
      %p262 = scmp.ne.s32.totalorder %s250, %s251
      %p263 = scmp.eq.s32.totalorder %s43, 1
      %p264 = por %p262, %p263
      %p266 = scmp.ne.s32.totalorder %s251, %s265
      %p267 = scmp.eq.s32.totalorder %s43, 0
      %p268 = por %p266, %p267
      %s270 = sadd.s32 %s269, 1
      %p273 = scmp.eq.s32.totalorder %s37, 1
      %p274 = scmp.ne.s32.totalorder %s269, %s271
      %p275 = scmp.eq.s32.totalorder %s37, 0
      %p276 = por %p274, %p275
      %p277 = scmp.ne.s32.totalorder %s269, %s271
      %p278 = scmp.eq.s32.totalorder %s42, 1
      %p279 = por %p277, %p278
      %p280 = scmp.ne.s32.totalorder %s271, %s272
      %p281 = scmp.eq.s32.totalorder %s42, 0
      %p282 = por %p280, %p281
      %p283 = scmp.ne.s32.totalorder %s271, %s272
      %p284 = scmp.eq.s32.totalorder %s43, 1
      %p285 = por %p283, %p284
      %p287 = scmp.ne.s32.totalorder %s272, %s286
      %p288 = scmp.eq.s32.totalorder %s43, 0
      %p289 = por %p287, %p288
      %s291 = sadd.s32 %s290, 1
      %p294 = scmp.eq.s32.totalorder %s37, 1
      %p295 = scmp.ne.s32.totalorder %s290, %s292
      %p296 = scmp.eq.s32.totalorder %s37, 0
      %p297 = por %p295, %p296
      %p298 = scmp.ne.s32.totalorder %s290, %s292
      %p299 = scmp.eq.s32.totalorder %s42, 1
      %p300 = por %p298, %p299
      %p301 = scmp.ne.s32.totalorder %s292, %s293
      %p302 = scmp.eq.s32.totalorder %s42, 0
      %p303 = por %p301, %p302
      %p304 = scmp.ne.s32.totalorder %s292, %s293
      %p305 = scmp.eq.s32.totalorder %s43, 1
      %p306 = por %p304, %p305
      %p308 = scmp.ne.s32.totalorder %s293, %s307
      %p309 = scmp.eq.s32.totalorder %s43, 0
      %p310 = por %p308, %p309
      %s312 = sadd.s32 %s311, 1
      %p315 = scmp.eq.s32.totalorder %s37, 1
      %p316 = scmp.ne.s32.totalorder %s311, %s313
      %p317 = scmp.eq.s32.totalorder %s37, 0
      %p318 = por %p316, %p317
      %p319 = scmp.ne.s32.totalorder %s311, %s313
      %p320 = scmp.eq.s32.totalorder %s42, 1
      %p321 = por %p319, %p320
      %p322 = scmp.ne.s32.totalorder %s313, %s314
      %p323 = scmp.eq.s32.totalorder %s42, 0
      %p324 = por %p322, %p323
      %p325 = scmp.ne.s32.totalorder %s313, %s314
      %p326 = scmp.eq.s32.totalorder %s43, 1
      %p327 = por %p325, %p326
      %p329 = scmp.ne.s32.totalorder %s314, %s328
      %p330 = scmp.eq.s32.totalorder %s43, 0
      %p331 = por %p329, %p330
      %s333 = sadd.s32 %s332, 1
      %p336 = scmp.eq.s32.totalorder %s37, 1
      %p337 = scmp.ne.s32.totalorder %s332, %s334
      %p338 = scmp.eq.s32.totalorder %s37, 0
      %p339 = por %p337, %p338
      %p340 = scmp.ne.s32.totalorder %s332, %s334
      %p341 = scmp.eq.s32.totalorder %s42, 1
      %p342 = por %p340, %p341
      %p343 = scmp.ne.s32.totalorder %s334, %s335
      %p344 = scmp.eq.s32.totalorder %s42, 0
      %p345 = por %p343, %p344
      %p346 = scmp.ne.s32.totalorder %s334, %s335
      %p347 = scmp.eq.s32.totalorder %s43, 1
      %p348 = por %p346, %p347
      %p350 = scmp.ne.s32.totalorder %s335, %s349
      %p351 = scmp.eq.s32.totalorder %s43, 0
      %p352 = por %p350, %p351
      %s354 = sadd.s32 %s353, 1
      %p357 = scmp.eq.s32.totalorder %s37, 1
      %p358 = scmp.ne.s32.totalorder %s353, %s355
      %p359 = scmp.eq.s32.totalorder %s37, 0
      %p360 = por %p358, %p359
      %p361 = scmp.ne.s32.totalorder %s353, %s355
      %p362 = scmp.eq.s32.totalorder %s42, 1
      %p363 = por %p361, %p362
      %p364 = scmp.ne.s32.totalorder %s355, %s356
      %p365 = scmp.eq.s32.totalorder %s42, 0
      %p366 = por %p364, %p365
      %p367 = scmp.ne.s32.totalorder %s355, %s356
      %p368 = scmp.eq.s32.totalorder %s43, 1
      %p369 = por %p367, %p368
      %p371 = scmp.ne.s32.totalorder %s356, %s370
      %p372 = scmp.eq.s32.totalorder %s43, 0
      %p373 = por %p371, %p372
      %s375 = sadd.s32 %s374, 1
      %p378 = scmp.eq.s32.totalorder %s37, 1
      %p379 = scmp.ne.s32.totalorder %s374, %s376
      %p380 = scmp.eq.s32.totalorder %s37, 0
      %p381 = por %p379, %p380
      %p382 = scmp.ne.s32.totalorder %s374, %s376
      %p383 = scmp.eq.s32.totalorder %s42, 1
      %p384 = por %p382, %p383
      %p385 = scmp.ne.s32.totalorder %s376, %s377
      %p386 = scmp.eq.s32.totalorder %s42, 0
      %p387 = por %p385, %p386
      %p388 = scmp.ne.s32.totalorder %s376, %s377
      %p389 = scmp.eq.s32.totalorder %s43, 1
      %p390 = por %p388, %p389
      %p392 = scmp.ne.s32.totalorder %s377, %s391
      %p393 = scmp.eq.s32.totalorder %s43, 0
      %p394 = por %p392, %p393
      %s396 = sadd.s32 %s395, 1
      %p399 = scmp.eq.s32.totalorder %s37, 1
      %p400 = scmp.ne.s32.totalorder %s395, %s397
      %p401 = scmp.eq.s32.totalorder %s37, 0
      %p402 = por %p400, %p401
      %p403 = scmp.ne.s32.totalorder %s395, %s397
      %p404 = scmp.eq.s32.totalorder %s42, 1
      %p405 = por %p403, %p404
      %p406 = scmp.ne.s32.totalorder %s397, %s398
      %p407 = scmp.eq.s32.totalorder %s42, 0
      %p408 = por %p406, %p407
      %p409 = scmp.ne.s32.totalorder %s397, %s398
      %p410 = scmp.eq.s32.totalorder %s43, 1
      %p411 = por %p409, %p410
      %p413 = scmp.ne.s32.totalorder %s398, %s412
      %p414 = scmp.eq.s32.totalorder %s43, 0
      %p415 = por %p413, %p414
      %s417 = sadd.s32 %s416, 1
      %p420 = scmp.eq.s32.totalorder %s37, 1
      %p421 = scmp.ne.s32.totalorder %s416, %s418
      %p422 = scmp.eq.s32.totalorder %s37, 0
      %p423 = por %p421, %p422
      %p424 = scmp.ne.s32.totalorder %s416, %s418
      %p425 = scmp.eq.s32.totalorder %s42, 1
      %p426 = por %p424, %p425
      %p427 = scmp.ne.s32.totalorder %s418, %s419
      %p428 = scmp.eq.s32.totalorder %s42, 0
      %p429 = por %p427, %p428
      %p430 = scmp.ne.s32.totalorder %s418, %s419
      %p431 = scmp.eq.s32.totalorder %s43, 1
      %p432 = por %p430, %p431
      %p434 = scmp.ne.s32.totalorder %s419, %s433
      %p435 = scmp.eq.s32.totalorder %s43, 0
      %p436 = por %p434, %p435
      %s438 = sadd.s32 %s437, 1
      %p441 = scmp.eq.s32.totalorder %s37, 1
      %p442 = scmp.ne.s32.totalorder %s437, %s439
      %p443 = scmp.eq.s32.totalorder %s37, 0
      %p444 = por %p442, %p443
      %p445 = scmp.ne.s32.totalorder %s437, %s439
      %p446 = scmp.eq.s32.totalorder %s42, 1
      %p447 = por %p445, %p446
      %p448 = scmp.ne.s32.totalorder %s439, %s440
      %p449 = scmp.eq.s32.totalorder %s42, 0
      %p450 = por %p448, %p449
      %p451 = scmp.ne.s32.totalorder %s439, %s440
      %p452 = scmp.eq.s32.totalorder %s43, 1
      %p453 = por %p451, %p452
      %p455 = scmp.ne.s32.totalorder %s440, %s454
      %p456 = scmp.eq.s32.totalorder %s43, 0
      %p457 = por %p455, %p456
      %s459 = sadd.s32 %s458, 1
      %p462 = scmp.eq.s32.totalorder %s37, 1
      %p463 = scmp.ne.s32.totalorder %s458, %s460
      %p464 = scmp.eq.s32.totalorder %s37, 0
      %p465 = por %p463, %p464
      %p466 = scmp.ne.s32.totalorder %s458, %s460
      %p467 = scmp.eq.s32.totalorder %s42, 1
      %p468 = por %p466, %p467
      %p469 = scmp.ne.s32.totalorder %s460, %s461
      %p470 = scmp.eq.s32.totalorder %s42, 0
      %p471 = por %p469, %p470
      %p472 = scmp.ne.s32.totalorder %s460, %s461
      %p473 = scmp.eq.s32.totalorder %s43, 1
      %p474 = por %p472, %p473
      %p476 = scmp.ne.s32.totalorder %s461, %s475
      %p477 = scmp.eq.s32.totalorder %s43, 0
      %p478 = por %p476, %p477
      %s480 = sadd.s32 %s479, 1
      %p483 = scmp.eq.s32.totalorder %s37, 1
      %p484 = scmp.ne.s32.totalorder %s479, %s481
      %p485 = scmp.eq.s32.totalorder %s37, 0
      %p486 = por %p484, %p485
      %p487 = scmp.ne.s32.totalorder %s479, %s481
      %p488 = scmp.eq.s32.totalorder %s42, 1
      %p489 = por %p487, %p488
      %p490 = scmp.ne.s32.totalorder %s481, %s482
      %p491 = scmp.eq.s32.totalorder %s42, 0
      %p492 = por %p490, %p491
      %p493 = scmp.ne.s32.totalorder %s481, %s482
      %p494 = scmp.eq.s32.totalorder %s43, 1
      %p495 = por %p493, %p494
      %p497 = scmp.ne.s32.totalorder %s482, %s496
      %p498 = scmp.eq.s32.totalorder %s43, 0
      %p499 = por %p497, %p498
      %s501 = sadd.s32 %s500, 1
      %p504 = scmp.eq.s32.totalorder %s37, 1
      %p505 = scmp.ne.s32.totalorder %s500, %s502
      %p506 = scmp.eq.s32.totalorder %s37, 0
      %p507 = por %p505, %p506
      %p508 = scmp.ne.s32.totalorder %s500, %s502
      %p509 = scmp.eq.s32.totalorder %s42, 1
      %p510 = por %p508, %p509
      %p511 = scmp.ne.s32.totalorder %s502, %s503
      %p512 = scmp.eq.s32.totalorder %s42, 0
      %p513 = por %p511, %p512
      %p514 = scmp.ne.s32.totalorder %s502, %s503
      %p515 = scmp.eq.s32.totalorder %s43, 1
      %p516 = por %p514, %p515
      %p518 = scmp.ne.s32.totalorder %s503, %s517
      %p519 = scmp.eq.s32.totalorder %s43, 0
      %p520 = por %p518, %p519
      %s522 = sadd.s32 %s521, 1
      %p525 = scmp.eq.s32.totalorder %s37, 1
      %p526 = scmp.ne.s32.totalorder %s521, %s523
      %p527 = scmp.eq.s32.totalorder %s37, 0
      %p528 = por %p526, %p527
      %p529 = scmp.ne.s32.totalorder %s521, %s523
      %p530 = scmp.eq.s32.totalorder %s42, 1
      %p531 = por %p529, %p530
      %p532 = scmp.ne.s32.totalorder %s523, %s524
      %p533 = scmp.eq.s32.totalorder %s42, 0
      %p534 = por %p532, %p533
      %p535 = scmp.ne.s32.totalorder %s523, %s524
      %p536 = scmp.eq.s32.totalorder %s43, 1
      %p537 = por %p535, %p536
      %p539 = scmp.ne.s32.totalorder %s524, %s538
      %p540 = scmp.eq.s32.totalorder %s43, 0
      %p541 = por %p539, %p540
      %s543 = sadd.s32 %s542, 1
      %p546 = scmp.eq.s32.totalorder %s37, 1
      %p547 = scmp.ne.s32.totalorder %s542, %s544
      %p548 = scmp.eq.s32.totalorder %s37, 0
      %p549 = por %p547, %p548
      %p550 = scmp.ne.s32.totalorder %s542, %s544
      %p551 = scmp.eq.s32.totalorder %s42, 1
      %p552 = por %p550, %p551
      %p553 = scmp.ne.s32.totalorder %s544, %s545
      %p554 = scmp.eq.s32.totalorder %s42, 0
      %p555 = por %p553, %p554
      %p556 = scmp.ne.s32.totalorder %s544, %s545
      %p557 = scmp.eq.s32.totalorder %s43, 1
      %p558 = por %p556, %p557
      %p560 = scmp.ne.s32.totalorder %s545, %s559
      %p561 = scmp.eq.s32.totalorder %s43, 0
      %p562 = por %p560, %p561
      %s564 = sadd.s32 %s563, 1
      %p567 = scmp.eq.s32.totalorder %s37, 1
      %p568 = scmp.ne.s32.totalorder %s563, %s565
      %p569 = scmp.eq.s32.totalorder %s37, 0
      %p570 = por %p568, %p569
      %p571 = scmp.ne.s32.totalorder %s563, %s565
      %p572 = scmp.eq.s32.totalorder %s42, 1
      %p573 = por %p571, %p572
      %p574 = scmp.ne.s32.totalorder %s565, %s566
      %p575 = scmp.eq.s32.totalorder %s42, 0
      %p576 = por %p574, %p575
      %p577 = scmp.ne.s32.totalorder %s565, %s566
      %p578 = scmp.eq.s32.totalorder %s43, 1
      %p579 = por %p577, %p578
      %p581 = scmp.ne.s32.totalorder %s566, %s580
      %p582 = scmp.eq.s32.totalorder %s43, 0
      %p583 = por %p581, %p582
      %s585 = sadd.s32 %s584, 1
      %p588 = scmp.eq.s32.totalorder %s37, 1
      %p589 = scmp.ne.s32.totalorder %s584, %s586
      %p590 = scmp.eq.s32.totalorder %s37, 0
      %p591 = por %p589, %p590
      %p592 = scmp.ne.s32.totalorder %s584, %s586
      %p593 = scmp.eq.s32.totalorder %s42, 1
      %p594 = por %p592, %p593
      %p595 = scmp.ne.s32.totalorder %s586, %s587
      %p596 = scmp.eq.s32.totalorder %s42, 0
      %p597 = por %p595, %p596
      %p598 = scmp.ne.s32.totalorder %s586, %s587
      %p599 = scmp.eq.s32.totalorder %s43, 1
      %p600 = por %p598, %p599
      %p602 = scmp.ne.s32.totalorder %s587, %s601
      %p603 = scmp.eq.s32.totalorder %s43, 0
      %p604 = por %p602, %p603
      %s606 = sadd.s32 %s605, 1
      %p609 = scmp.eq.s32.totalorder %s37, 1
      %p610 = scmp.ne.s32.totalorder %s605, %s607
      %p611 = scmp.eq.s32.totalorder %s37, 0
      %p612 = por %p610, %p611
      %p613 = scmp.ne.s32.totalorder %s605, %s607
      %p614 = scmp.eq.s32.totalorder %s42, 1
      %p615 = por %p613, %p614
      %p616 = scmp.ne.s32.totalorder %s607, %s608
      %p617 = scmp.eq.s32.totalorder %s42, 0
      %p618 = por %p616, %p617
      %p619 = scmp.ne.s32.totalorder %s607, %s608
      %p620 = scmp.eq.s32.totalorder %s43, 1
      %p621 = por %p619, %p620
      %p623 = scmp.ne.s32.totalorder %s608, %s622
      %p624 = scmp.eq.s32.totalorder %s43, 0
      %p625 = por %p623, %p624
      %s627 = sadd.s32 %s626, 1
      %p630 = scmp.eq.s32.totalorder %s37, 1
      %p631 = scmp.ne.s32.totalorder %s626, %s628
      %p632 = scmp.eq.s32.totalorder %s37, 0
      %p633 = por %p631, %p632
      %p634 = scmp.ne.s32.totalorder %s626, %s628
      %p635 = scmp.eq.s32.totalorder %s42, 1
      %p636 = por %p634, %p635
      %p637 = scmp.ne.s32.totalorder %s628, %s629
      %p638 = scmp.eq.s32.totalorder %s42, 0
      %p639 = por %p637, %p638
      %p640 = scmp.ne.s32.totalorder %s628, %s629
      %p641 = scmp.eq.s32.totalorder %s43, 1
      %p642 = por %p640, %p641
      %p644 = scmp.ne.s32.totalorder %s629, %s643
      %p645 = scmp.eq.s32.totalorder %s43, 0
      %p646 = por %p644, %p645
      %s648 = sadd.s32 %s647, 1
      %p651 = scmp.eq.s32.totalorder %s37, 1
      %p652 = scmp.ne.s32.totalorder %s647, %s649
      %p653 = scmp.eq.s32.totalorder %s37, 0
      %p654 = por %p652, %p653
      %p655 = scmp.ne.s32.totalorder %s647, %s649
      %p656 = scmp.eq.s32.totalorder %s42, 1
      %p657 = por %p655, %p656
      %p658 = scmp.ne.s32.totalorder %s649, %s650
      %p659 = scmp.eq.s32.totalorder %s42, 0
      %p660 = por %p658, %p659
      %p661 = scmp.ne.s32.totalorder %s649, %s650
      %p662 = scmp.eq.s32.totalorder %s43, 1
      %p663 = por %p661, %p662
      %p665 = scmp.ne.s32.totalorder %s650, %s664
      %p666 = scmp.eq.s32.totalorder %s43, 0
      %p667 = por %p665, %p666
      %s668 = ssub.s32 %s37, %s44
      %p669 = scmp.eq.s32.totalorder %s668, 0
      %s671 = sadd.s32 %s670, 1
      %s672 = scalar_select %p669, %s670, %s671
      %p675 = pneg %p669
      %p676 = scmp.eq.s32.totalorder %s37, 1
      %p677 = por %p675, %p676
      %p678 = scmp.ne.s32.totalorder %s670, %s673
      %p679 = scmp.eq.s32.totalorder %s37, 0
      %p680 = por %p678, %p679
      %p681 = scmp.ne.s32.totalorder %s670, %s673
      %p682 = scmp.eq.s32.totalorder %s42, 1
      %p683 = por %p681, %p682
      %p684 = scmp.ne.s32.totalorder %s673, %s674
      %p685 = scmp.eq.s32.totalorder %s42, 0
      %p686 = por %p684, %p685
      %p687 = scmp.ne.s32.totalorder %s673, %s674
      %p688 = scmp.eq.s32.totalorder %s43, 1
      %p689 = por %p687, %p688
      %p691 = scmp.ne.s32.totalorder %s674, %s690
      %p692 = scmp.eq.s32.totalorder %s43, 0
      %p693 = por %p691, %p692
      %p694 = scmp.le.s32.totalorder 1, %s37
      %p695 = scmp.lt.s32.totalorder %s37, 3
      %p696 = pnand %p694, %p695
      %p697 = pneg %p696
      // Predicated region
      $region9: #{transformer_forward.1} parent=5 // pred_check
        _
      $region10: #{transformer_forward.1} parent=5 // pred_check_branch
        %699 = sbr.rel (%p696) target = $region12
      $region11: #{transformer_forward.1} parent=5 // pred_region
        %s700 = ssub.s32 %s37, 1
        // Predicated region
        $region13: #{transformer_forward.1} parent=11 // pred_check
          %p701 = pneg %p188
        $region14: #{transformer_forward.1} parent=11 // pred_check_branch
          %703 = sbr.rel (%p701) target = $region16
        $region15: #{transformer_forward.1} parent=11 // pred_region
          _
        $region16: #{transformer_forward.1} parent=11 // pred_fallthru
          _
        // Predicated region
        $region17: #{transformer_forward.1} parent=11 // pred_check
          %p704 = pneg %p261
        $region18: #{transformer_forward.1} parent=11 // pred_check_branch
          %706 = sbr.rel (%p704) target = $region20
        $region19: #{transformer_forward.1} parent=11 // pred_region
          _
        $region20: #{transformer_forward.1} parent=11 // pred_fallthru
          _
        // Predicated region
        $region21: #{transformer_forward.1} parent=11 // pred_check
          %p707 = pneg %p282
        $region22: #{transformer_forward.1} parent=11 // pred_check_branch
          %709 = sbr.rel (%p707) target = $region24
        $region23: #{transformer_forward.1} parent=11 // pred_region
          _
        $region24: #{transformer_forward.1} parent=11 // pred_fallthru
          _
        // Predicated region
        $region25: #{transformer_forward.1} parent=11 // pred_check
          %p710 = pneg %p303
        $region26: #{transformer_forward.1} parent=11 // pred_check_branch
          %712 = sbr.rel (%p710) target = $region28
        $region27: #{transformer_forward.1} parent=11 // pred_region
          _
        $region28: #{transformer_forward.1} parent=11 // pred_fallthru
          _
        // Predicated region
        $region29: #{transformer_forward.1} parent=11 // pred_check
          %p713 = pneg %p324
        $region30: #{transformer_forward.1} parent=11 // pred_check_branch
          %715 = sbr.rel (%p713) target = $region32
        $region31: #{transformer_forward.1} parent=11 // pred_region
          _
        $region32: #{transformer_forward.1} parent=11 // pred_fallthru
          _
        // Predicated region
        $region33: #{transformer_forward.1} parent=11 // pred_check
          %p716 = pneg %p345
        $region34: #{transformer_forward.1} parent=11 // pred_check_branch
          %718 = sbr.rel (%p716) target = $region36
        $region35: #{transformer_forward.1} parent=11 // pred_region
          _
        $region36: #{transformer_forward.1} parent=11 // pred_fallthru
          _
        // Predicated region
        $region37: #{transformer_forward.1} parent=11 // pred_check
          %p719 = pneg %p366
        $region38: #{transformer_forward.1} parent=11 // pred_check_branch
          %721 = sbr.rel (%p719) target = $region40
        $region39: #{transformer_forward.1} parent=11 // pred_region
          _
        $region40: #{transformer_forward.1} parent=11 // pred_fallthru
          _
        // Predicated region
        $region41: #{transformer_forward.1} parent=11 // pred_check
          %p722 = pneg %p387
        $region42: #{transformer_forward.1} parent=11 // pred_check_branch
          %724 = sbr.rel (%p722) target = $region44
        $region43: #{transformer_forward.1} parent=11 // pred_region
          _
        $region44: #{transformer_forward.1} parent=11 // pred_fallthru
          _
        // Predicated region
        $region45: #{transformer_forward.1} parent=11 // pred_check
          %p725 = pneg %p408
        $region46: #{transformer_forward.1} parent=11 // pred_check_branch
          %727 = sbr.rel (%p725) target = $region48
        $region47: #{transformer_forward.1} parent=11 // pred_region
          _
        $region48: #{transformer_forward.1} parent=11 // pred_fallthru
          _
        // Predicated region
        $region49: #{transformer_forward.1} parent=11 // pred_check
          %p728 = pneg %p429
        $region50: #{transformer_forward.1} parent=11 // pred_check_branch
          %730 = sbr.rel (%p728) target = $region52
        $region51: #{transformer_forward.1} parent=11 // pred_region
          _
        $region52: #{transformer_forward.1} parent=11 // pred_fallthru
          _
        // Predicated region
        $region53: #{transformer_forward.1} parent=11 // pred_check
          %p731 = pneg %p450
        $region54: #{transformer_forward.1} parent=11 // pred_check_branch
          %733 = sbr.rel (%p731) target = $region56
        $region55: #{transformer_forward.1} parent=11 // pred_region
          _
        $region56: #{transformer_forward.1} parent=11 // pred_fallthru
          _
        // Predicated region
        $region57: #{transformer_forward.1} parent=11 // pred_check
          %p734 = pneg %p471
        $region58: #{transformer_forward.1} parent=11 // pred_check_branch
          %736 = sbr.rel (%p734) target = $region60
        $region59: #{transformer_forward.1} parent=11 // pred_region
          _
        $region60: #{transformer_forward.1} parent=11 // pred_fallthru
          _
        // Predicated region
        $region61: #{transformer_forward.1} parent=11 // pred_check
          %p737 = pneg %p492
        $region62: #{transformer_forward.1} parent=11 // pred_check_branch
          %739 = sbr.rel (%p737) target = $region64
        $region63: #{transformer_forward.1} parent=11 // pred_region
          _
        $region64: #{transformer_forward.1} parent=11 // pred_fallthru
          _
        // Predicated region
        $region65: #{transformer_forward.1} parent=11 // pred_check
          %p740 = pneg %p513
        $region66: #{transformer_forward.1} parent=11 // pred_check_branch
          %742 = sbr.rel (%p740) target = $region68
        $region67: #{transformer_forward.1} parent=11 // pred_region
          _
        $region68: #{transformer_forward.1} parent=11 // pred_fallthru
          _
        // Predicated region
        $region69: #{transformer_forward.1} parent=11 // pred_check
          %p743 = pneg %p534
        $region70: #{transformer_forward.1} parent=11 // pred_check_branch
          %745 = sbr.rel (%p743) target = $region72
        $region71: #{transformer_forward.1} parent=11 // pred_region
          _
        $region72: #{transformer_forward.1} parent=11 // pred_fallthru
          _
        // Predicated region
        $region73: #{transformer_forward.1} parent=11 // pred_check
          %p746 = pneg %p555
        $region74: #{transformer_forward.1} parent=11 // pred_check_branch
          %748 = sbr.rel (%p746) target = $region76
        $region75: #{transformer_forward.1} parent=11 // pred_region
          _
        $region76: #{transformer_forward.1} parent=11 // pred_fallthru
          _
        // Predicated region
        $region77: #{transformer_forward.1} parent=11 // pred_check
          %p749 = pneg %p576
        $region78: #{transformer_forward.1} parent=11 // pred_check_branch
          %751 = sbr.rel (%p749) target = $region80
        $region79: #{transformer_forward.1} parent=11 // pred_region
          _
        $region80: #{transformer_forward.1} parent=11 // pred_fallthru
          _
        // Predicated region
        $region81: #{transformer_forward.1} parent=11 // pred_check
          %p752 = pneg %p597
        $region82: #{transformer_forward.1} parent=11 // pred_check_branch
          %754 = sbr.rel (%p752) target = $region84
        $region83: #{transformer_forward.1} parent=11 // pred_region
          _
        $region84: #{transformer_forward.1} parent=11 // pred_fallthru
          _
        // Predicated region
        $region85: #{transformer_forward.1} parent=11 // pred_check
          %p755 = pneg %p618
        $region86: #{transformer_forward.1} parent=11 // pred_check_branch
          %757 = sbr.rel (%p755) target = $region88
        $region87: #{transformer_forward.1} parent=11 // pred_region
          _
        $region88: #{transformer_forward.1} parent=11 // pred_fallthru
          _
        // Predicated region
        $region89: #{transformer_forward.1} parent=11 // pred_check
          %p758 = pneg %p639
        $region90: #{transformer_forward.1} parent=11 // pred_check_branch
          %760 = sbr.rel (%p758) target = $region92
        $region91: #{transformer_forward.1} parent=11 // pred_region
          _
        $region92: #{transformer_forward.1} parent=11 // pred_fallthru
          _
        // Predicated region
        $region93: #{transformer_forward.1} parent=11 // pred_check
          %p761 = pneg %p660
        $region94: #{transformer_forward.1} parent=11 // pred_check_branch
          %763 = sbr.rel (%p761) target = $region96
        $region95: #{transformer_forward.1} parent=11 // pred_region
          _
        $region96: #{transformer_forward.1} parent=11 // pred_fallthru
          _
      $region12: #{transformer_forward.1} parent=5 // pred_fallthru
        _
      %p764 = scmp.lt.s32.totalorder %s37, 2
      // Predicated region
      $region97: #{transformer_forward.1} parent=5 // pred_check
        %p765 = pneg %p764
      $region98: #{transformer_forward.1} parent=5 // pred_check_branch
        %767 = sbr.rel (%p765) target = $region100
      $region99: #{transformer_forward.1} parent=5 // pred_region
        // Predicated region
        $region101: #{transformer_forward.1} parent=99 // pred_check
          %p768 = pneg %p57
        $region102: #{transformer_forward.1} parent=99 // pred_check_branch
          %770 = sbr.rel (%p768) target = $region104
        $region103: #{transformer_forward.1} parent=99 // pred_region
          %p771 = scmp.lt.s32.totalorder %s37, 1
          %s772 = scalar_select %p771, %s37, 1
          %s773 = smul.addr %s772, 8
          %s774 = scalar_lea.vmem %s0, %s773
        $region104: #{transformer_forward.1} parent=99 // pred_fallthru
          _
        // Predicated region
        $region105: #{transformer_forward.1} parent=99 // pred_check
          %p775 = pneg %p83
        $region106: #{transformer_forward.1} parent=99 // pred_check_branch
          %777 = sbr.rel (%p775) target = $region108
        $region107: #{transformer_forward.1} parent=99 // pred_region
          %p778 = scmp.lt.s32.totalorder %s37, 1
          %s779 = scalar_select %p778, %s37, 1
          %s780 = smul.addr %s779, 8
          %s781 = scalar_lea.vmem %s1, %s780
        $region108: #{transformer_forward.1} parent=99 // pred_fallthru
          _
        // Predicated region
        $region109: #{transformer_forward.1} parent=99 // pred_check
          %p782 = pneg %p109
        $region110: #{transformer_forward.1} parent=99 // pred_check_branch
          %784 = sbr.rel (%p782) target = $region112
        $region111: #{transformer_forward.1} parent=99 // pred_region
          %p785 = scmp.lt.s32.totalorder %s37, 1
          %s786 = scalar_select %p785, %s37, 1
          %s787 = smul.addr %s786, 8
          %s788 = scalar_lea.vmem %s2, %s787
        $region112: #{transformer_forward.1} parent=99 // pred_fallthru
          _
        // Predicated region
        $region113: #{transformer_forward.1} parent=99 // pred_check
          %p789 = pneg %p135
        $region114: #{transformer_forward.1} parent=99 // pred_check_branch
          %791 = sbr.rel (%p789) target = $region116
        $region115: #{transformer_forward.1} parent=99 // pred_region
          %p792 = scmp.lt.s32.totalorder %s37, 1
          %s793 = scalar_select %p792, %s37, 1
          %s794 = smul.addr %s793, 8
          %s795 = scalar_lea.vmem %s3, %s794
        $region116: #{transformer_forward.1} parent=99 // pred_fallthru
          _
        // Predicated region
        $region117: #{transformer_forward.1} parent=99 // pred_check
          %p796 = pneg %p161
        $region118: #{transformer_forward.1} parent=99 // pred_check_branch
          %798 = sbr.rel (%p796) target = $region120
        $region119: #{transformer_forward.1} parent=99 // pred_region
          %p799 = scmp.lt.s32.totalorder %s37, 1
          %s800 = scalar_select %p799, %s37, 1
          %s801 = smul.addr %s800, 8
          %s802 = scalar_lea.vmem %s4, %s801
        $region120: #{transformer_forward.1} parent=99 // pred_fallthru
          _
        // Predicated region
        $region121: #{transformer_forward.1} parent=99 // pred_check
          %p803 = pneg %p208
        $region122: #{transformer_forward.1} parent=99 // pred_check_branch
          %805 = sbr.rel (%p803) target = $region124
        $region123: #{transformer_forward.1} parent=99 // pred_region
          %p806 = scmp.lt.s32.totalorder %s37, 1
          %s807 = scalar_select %p806, %s37, 1
          %s808 = smul.addr %s807, 8
          %s809 = scalar_lea.vmem %s6, %s808
        $region124: #{transformer_forward.1} parent=99 // pred_fallthru
          _
        // Predicated region
        $region125: #{transformer_forward.1} parent=99 // pred_check
          %p810 = pneg %p234
        $region126: #{transformer_forward.1} parent=99 // pred_check_branch
          %812 = sbr.rel (%p810) target = $region128
        $region127: #{transformer_forward.1} parent=99 // pred_region
          %p813 = scmp.lt.s32.totalorder %s37, 1
          %s814 = scalar_select %p813, %s37, 1
          %s815 = smul.addr %s814, 8
          %s816 = scalar_lea.vmem %s7, %s815
        $region128: #{transformer_forward.1} parent=99 // pred_fallthru
          _
      $region100: #{transformer_forward.1} parent=5 // pred_fallthru
        _
      %p817 = scmp.le.s32.totalorder 1, %s37
      %p818 = scmp.lt.s32.totalorder %s37, 3
      %p819 = pnand %p817, %p818
      %p820 = pneg %p819
      // Predicated region
      $region129: #{transformer_forward.1} parent=5 // pred_check
        _
      $region130: #{transformer_forward.1} parent=5 // pred_check_branch
        %822 = sbr.rel (%p819) target = $region132
      $region131: #{transformer_forward.1} parent=5 // pred_region
        %s823 = ssub.s32 %s37, 1
        %p824 = scmp.lt.s32.totalorder %s42, 1
        %s825 = scalar_select %p824, %s42, 1
        %s826 = smul.addr %s825, 8
        %s827 = scalar_lea.vmem %s0, %s826
        %p828 = pneg %p63
        %p829 = pneg %p60
        %p830 = scmp.lt.s32.totalorder %s42, 1
        %s831 = scalar_select %p830, %s42, 1
        %s832 = smul.addr %s831, 8
        %s833 = scalar_lea.vmem %s1, %s832
        %p834 = pneg %p89
        %p835 = pneg %p86
        %p836 = scmp.lt.s32.totalorder %s42, 1
        %s837 = scalar_select %p836, %s42, 1
        %s838 = smul.addr %s837, 8
        %s839 = scalar_lea.vmem %s2, %s838
        %p840 = pneg %p115
        %p841 = pneg %p112
        %p842 = scmp.lt.s32.totalorder %s42, 1
        %s843 = scalar_select %p842, %s42, 1
        %s844 = smul.addr %s843, 8
        %s845 = scalar_lea.vmem %s3, %s844
        %p846 = pneg %p141
        %p847 = pneg %p138
        %p848 = scmp.lt.s32.totalorder %s42, 1
        %s849 = scalar_select %p848, %s42, 1
        %s850 = smul.addr %s849, 8
        %s851 = scalar_lea.vmem %s4, %s850
        %p852 = pneg %p167
        %p853 = pneg %p164
        %p854 = pneg %p188
        %p855 = pneg %p185
        %p856 = scmp.lt.s32.totalorder %s42, 1
        %s857 = scalar_select %p856, %s42, 1
        %s858 = smul.addr %s857, 8
        %s859 = scalar_lea.vmem %s6, %s858
        %p860 = pneg %p214
        %p861 = pneg %p211
        %p862 = scmp.lt.s32.totalorder %s42, 1
        %s863 = scalar_select %p862, %s42, 1
        %s864 = smul.addr %s863, 8
        %s865 = scalar_lea.vmem %s7, %s864
        %p866 = pneg %p240
        %p867 = pneg %p237
        %p868 = pneg %p261
        %p869 = pneg %p258
        %p870 = pneg %p282
        %p871 = pneg %p279
        %p872 = pneg %p303
        %p873 = pneg %p300
        %p874 = pneg %p324
        %p875 = pneg %p321
        %p876 = pneg %p345
        %p877 = pneg %p342
        %p878 = pneg %p366
        %p879 = pneg %p363
        %p880 = pneg %p387
        %p881 = pneg %p384
        %p882 = pneg %p408
        %p883 = pneg %p405
        %p884 = pneg %p429
        %p885 = pneg %p426
        %p886 = pneg %p450
        %p887 = pneg %p447
        %p888 = pneg %p471
        %p889 = pneg %p468
        %p890 = pneg %p492
        %p891 = pneg %p489
        %p892 = pneg %p513
        %p893 = pneg %p510
        %p894 = pneg %p534
        %p895 = pneg %p531
        %p896 = pneg %p555
        %p897 = pneg %p552
        %p898 = pneg %p576
        %p899 = pneg %p573
        %p900 = pneg %p597
        %p901 = pneg %p594
        %p902 = pneg %p618
        %p903 = pneg %p615
        %p904 = pneg %p639
        %p905 = pneg %p636
        %p906 = pneg %p660
        %p907 = pneg %p657
        %p908 = pneg %p686
        %p909 = pneg %p683
        %s910 = sand.u32 %s673, 1
        %s911 = scalar_lea.sflag [#allocation3], %s910
        %s912 = sand.u32 %s673, 1
        %s913 = smul.addr %s912, 8
        %s914 = scalar_lea.vmem [#allocation2], %s913
        %p915 = scmp.lt.s32.totalorder %s42, 1
        %s916 = scalar_select %p915, %s42, 1
        %s917 = smul.addr %s916, 8
        %s918 = scalar_lea.vmem %s0, %s917
        %p919 = scmp.lt.s32.totalorder %s42, 1
        %s920 = scalar_select %p919, %s42, 1
        %s921 = smul.addr %s920, 8
        %s922 = scalar_lea.vmem %s1, %s921
        %p923 = scmp.lt.s32.totalorder %s42, 1
        %s924 = scalar_select %p923, %s42, 1
        %s925 = smul.addr %s924, 8
        %s926 = scalar_lea.vmem %s2, %s925
        %p927 = scmp.lt.s32.totalorder %s42, 1
        %s928 = scalar_select %p927, %s42, 1
        %s929 = smul.addr %s928, 8
        %s930 = scalar_lea.vmem %s3, %s929
        %p931 = scmp.lt.s32.totalorder %s42, 1
        %s932 = scalar_select %p931, %s42, 1
        %s933 = smul.addr %s932, 8
        %s934 = scalar_lea.vmem %s4, %s933
        %p935 = scmp.lt.s32.totalorder %s42, 1
        %s936 = scalar_select %p935, %s42, 1
        %s937 = smul.addr %s936, 8
        %s938 = scalar_lea.vmem %s6, %s937
        %p939 = scmp.lt.s32.totalorder %s42, 1
        %s940 = scalar_select %p939, %s42, 1
        %s941 = smul.addr %s940, 8
        %s942 = scalar_lea.vmem %s7, %s941
        %v944 = vld [vmem:[%s918] sm:$0xff]
        %v945 = vld [vmem:[%s8] sm:$0x1]
        %v946 = vld [vmem:[%s8 + $0x1] sm:$0x1]
        %vm947 = vcmask 261120
        %v948 = vsel %vm947, %v944, 0.0
        %949 = vadd.xlane.f32.xlu0 %v948
        %v950 = vpop.xlane.xlu0 %949
        %v951 = vrcp.pop 32.0
        %v952 = vmul.f32 %v950, %v951
        %v953 = vsub.f32 %v944, %v952
        %v954 = vmul.f32 %v953, %v953
        %v955 = vsel %vm947, %v954, 0.0
        %956 = vadd.xlane.f32.xlu0 %v955
        %v957 = vpop.xlane.xlu0 %956
        %v958 = vmul.f32 %v957, %v951
        %v959 = vadd.f32 %v958, 1e-06
        %v960 = vrsqrt.pop %v959
        %v961 = vmul.f32 %v953, %v960
        %v962 = vlaneseq
        %v963 = vshrl.u32 %v962, 7
        %v964 = vsub.s32 0, %v963
        %v965 = vrot.slane %v945, %v964
        %v966 = vmul.f32 %v961, %v965
        %v967 = vlaneseq
        %v968 = vshrl.u32 %v967, 7
        %v969 = vsub.s32 0, %v968
        %v970 = vrot.slane %v946, %v969
        %v971 = vadd.f32 %v966, %v970
        %v972 = vld [vmem:[%s922] sm:$0xff]
        %v973 = vld [vmem:[%s14] sm:$0x1f]
        %v974 = vld [vmem:[%s9] sm:$0xf]
        %v975 = vld [vmem:[%s9 + $0x4] sm:$0xf]
        %v976 = vld [vmem:[%s9 + $0x8] sm:$0xf]
        %v977 = vld [vmem:[%s9 + $0xc] sm:$0xf]
        %v978 = vld [vmem:[%s10] sm:$0xf]
        %v979 = vld [vmem:[%s10 + $0x4] sm:$0xf]
        %v980 = vld [vmem:[%s10 + $0x8] sm:$0xf]
        %v981 = vld [vmem:[%s10 + $0xc] sm:$0xf]
        %v982 = vpack.c.bf16 %v971, %v971
        %v987 = vunpack.c.l.b16 %v974
        %v988 = vunpack.c.l.b16 %v975
        %v989 = vunpack.c.l.b16 %v976
        %v990 = vunpack.c.l.b16 %v977
        %v991 = vpack.c.b16 %v988, %v987
        %v992 = vpack.c.b16 %v990, %v989
        %v996 = vsel %vm947, %v982, 0
        %998 = vmatprep.subr.bf16.mxu0 0
        %999 = vmatpush1.bf16.msra.mxu0 %v991
        %1000 = vmatprep.subr.bf16.mxu0 0
        %1001 = vmatpush1.bf16.msra.mxu0 %v992
        %1002 = vmatprep.subr.bf16.mxu0 0
        %1003 = vmatpush1.bf16.msra.mxu0 0
        %1004 = vmatprep.subr.bf16.mxu0 0
        %1005 = vmatpush1.bf16.msra.mxu0 0
        %1006 = vmatprep.subr.bf16.mxu0 0
        %1007 = vmatpush1.bf16.msra.mxu0 0
        %1008 = vmatprep.subr.bf16.mxu0 0
        %1009 = vmatpush1.bf16.msra.mxu0 0
        %1010 = vmatprep.subr.bf16.mxu0 0
        %1011 = vmatpush1.bf16.msra.mxu0 0
        %1012 = vmatprep.subr.bf16.mxu0 0
        %1013 = vmatpush1.bf16.msra.mxu0 0
        %1014 = vmatprep.subr.bf16.mxu0 0
        %1015 = vmatpush1.bf16.msra.mxu0 0
        %1016 = vmatprep.subr.bf16.mxu0 0
        %1017 = vmatpush1.bf16.msra.mxu0 0
        %1018 = vmatprep.subr.bf16.mxu0 0
        %1019 = vmatpush1.bf16.msra.mxu0 0
        %1020 = vmatprep.subr.bf16.mxu0 0
        %1021 = vmatpush1.bf16.msra.mxu0 0
        %1022 = vmatprep.subr.bf16.mxu0 0
        %1023 = vmatpush1.bf16.msra.mxu0 0
        %1024 = vmatprep.subr.bf16.mxu0 0
        %1025 = vmatpush1.bf16.msra.mxu0 0
        %1026 = vmatprep.subr.bf16.mxu0 0
        %1027 = vmatpush1.bf16.msra.mxu0 0
        %1028 = vmatprep.subr.bf16.mxu0 0
        %1029 = vmatpush1.bf16.msra.mxu0 0
        %1030 = vmatprep.mubr.bf16.mxu0 0
        %1031 = vmatmul.mubr.bf16.gmra.mrb[0].mxu0 %v996
        %v1032 = vpop.f32.mrb[0].mxu0
        %v1033 = vadd.f32 0.0, %v1032
        %v1034 = vpop.f32.mrb[0].mxu0
        %v1035 = vpop.f32.mrb[0].mxu0
        %v1036 = vpop.f32.mrb[0].mxu0
        %1037 = vdwg.mxu0
        %v1038 = vpack.c.bf16 %v1033, %v1033
        %1040 = vrot.lane.b32.xlu0 %v1038, 96
        %v1041 = vpop.permute.xlu0 %1040
        %vm1042 = vcmask 64512
        %v1044 = vsel %vm1042, %v1038, 0
        %v1047 = vsel %vm1042, %v1041, 0
        %1049 = vmatprep.subr.bf16.mxu0 0
        %1050 = vmatpush1.bf16.xpose.msra.mxu0 %v1047
        %1051 = vmatprep.subr.bf16.mxu0 0
        %1052 = vmatpush1.bf16.xpose.msra.mxu0 0
        %1053 = vmatprep.subr.bf16.mxu0 0
        %1054 = vmatpush1.bf16.xpose.msra.mxu0 0
        %1055 = vmatprep.subr.bf16.mxu0 0
        %1056 = vmatpush1.bf16.xpose.msra.mxu0 0
        %1057 = vmatprep.subr.bf16.mxu0 0
        %1058 = vmatpush1.bf16.xpose.msra.mxu0 0
        %1059 = vmatprep.subr.bf16.mxu0 0
        %1060 = vmatpush1.bf16.xpose.msra.mxu0 0
        %1061 = vmatprep.subr.bf16.mxu0 0
        %1062 = vmatpush1.bf16.xpose.msra.mxu0 0
        %1063 = vmatprep.subr.bf16.mxu0 0
        %1064 = vmatpush1.bf16.xpose.msra.mxu0 0
        %1065 = vmatprep.subr.bf16.mxu0 0
        %1066 = vmatpush1.bf16.xpose.msra.mxu0 0
        %1067 = vmatprep.subr.bf16.mxu0 0
        %1068 = vmatpush1.bf16.xpose.msra.mxu0 0
        %1069 = vmatprep.subr.bf16.mxu0 0
        %1070 = vmatpush1.bf16.xpose.msra.mxu0 0
        %1071 = vmatprep.subr.bf16.mxu0 0
        %1072 = vmatpush1.bf16.xpose.msra.mxu0 0
        %1073 = vmatprep.subr.bf16.mxu0 0
        %1074 = vmatpush1.bf16.xpose.msra.mxu0 0
        %1075 = vmatprep.subr.bf16.mxu0 0
        %1076 = vmatpush1.bf16.xpose.msra.mxu0 0
        %1077 = vmatprep.subr.bf16.mxu0 0
        %1078 = vmatpush1.bf16.xpose.msra.mxu0 0
        %1079 = vmatprep.subr.bf16.mxu0 0
        %1080 = vmatpush1.bf16.xpose.msra.mxu0 0
        %1081 = vmatprep.mubr.bf16.mxu0 0
        %1082 = vmatmul.mubr.bf16.gmra.mrb[0].mxu0 %v1044
        %v1083 = vpop.f32.mrb[0].mxu0
        %v1084 = vadd.f32 %v972, %v1083
        %v1085 = vpop.f32.mrb[0].mxu0
        %v1086 = vpop.f32.mrb[0].mxu0
        %v1087 = vpop.f32.mrb[0].mxu0
        %1088 = vdwg.mxu0
        %v1089 = vsel %vm1042, %v1084, -inf
        %1090 = vmax.xlane.f32.xlu0 %v1089
        %v1091 = vpop.xlane.xlu0 %1090
        %v1092 = vsub.f32 %v1084, %v1091
        %v1093 = vmul.f32 %v1092, 1.442695
        %v1094 = vpow.pop %v1093
        %v1095 = vsel %vm1042, %v1094, 0.0
        %1096 = vadd.xlane.f32.xlu0 %v1095
        %v1097 = vpop.xlane.xlu0 %1096
        %v1098 = vrcp.pop %v1097
        %v1099 = vmul.f32 %v1094, %v1098
        %v1100 = vpack.c.bf16 %v1099, %v1099
        %1101 = vrot.lane.b32.xlu0 %v1038, 64
        %v1102 = vpop.permute.xlu0 %1101
        %v1104 = vsel %vm1042, %v1100, 0
        %vm1106 = vcmask 1043456
        %v1108 = vsel %vm1106, %v1102, 0
        %1110 = vmatprep.subr.bf16.mxu0 0
        %1111 = vmatpush1.bf16.msra.mxu0 %v1108
        %1112 = vmatprep.subr.bf16.mxu0 0
        %1113 = vmatpush1.bf16.msra.mxu0 0
        %1114 = vmatprep.subr.bf16.mxu0 0
        %1115 = vmatpush1.bf16.msra.mxu0 0
        %1116 = vmatprep.subr.bf16.mxu0 0
        %1117 = vmatpush1.bf16.msra.mxu0 0
        %1118 = vmatprep.subr.bf16.mxu0 0
        %1119 = vmatpush1.bf16.msra.mxu0 0
        %1120 = vmatprep.subr.bf16.mxu0 0
        %1121 = vmatpush1.bf16.msra.mxu0 0
        %1122 = vmatprep.subr.bf16.mxu0 0
        %1123 = vmatpush1.bf16.msra.mxu0 0
        %1124 = vmatprep.subr.bf16.mxu0 0
        %1125 = vmatpush1.bf16.msra.mxu0 0
        %1126 = vmatprep.subr.bf16.mxu0 0
        %1127 = vmatpush1.bf16.msra.mxu0 0
        %1128 = vmatprep.subr.bf16.mxu0 0
        %1129 = vmatpush1.bf16.msra.mxu0 0
        %1130 = vmatprep.subr.bf16.mxu0 0
        %1131 = vmatpush1.bf16.msra.mxu0 0
        %1132 = vmatprep.subr.bf16.mxu0 0
        %1133 = vmatpush1.bf16.msra.mxu0 0
        %1134 = vmatprep.subr.bf16.mxu0 0
        %1135 = vmatpush1.bf16.msra.mxu0 0
        %1136 = vmatprep.subr.bf16.mxu0 0
        %1137 = vmatpush1.bf16.msra.mxu0 0
        %1138 = vmatprep.subr.bf16.mxu0 0
        %1139 = vmatpush1.bf16.msra.mxu0 0
        %1140 = vmatprep.subr.bf16.mxu0 0
        %1141 = vmatpush1.bf16.msra.mxu0 0
        %1142 = vmatprep.mubr.bf16.mxu0 0
        %1143 = vmatmul.mubr.bf16.gmra.mrb[0].mxu0 %v1104
        %v1144 = vpop.f32.mrb[0].mxu0
        %v1145 = vadd.f32 0.0, %v1144
        %v1146 = vpop.f32.mrb[0].mxu0
        %v1147 = vpop.f32.mrb[0].mxu0
        %v1148 = vpop.f32.mrb[0].mxu0
        %1149 = vdwg.mxu0
        %1150 = vrot.lane.b32.xlu0 %v1038, 120
        %v1151 = vpop.permute.xlu0 %1150
        %1152 = vrot.lane.b32.xlu0 %v1038, 88
        %v1153 = vpop.permute.xlu0 %1152
        %v1155 = vsel %vm1042, %v1151, 0
        %v1158 = vsel %vm1042, %v1153, 0
        %1160 = vmatprep.subr.bf16.mxu0 0
        %1161 = vmatpush1.bf16.xpose.msra.mxu0 %v1158
        %1162 = vmatprep.subr.bf16.mxu0 0
        %1163 = vmatpush1.bf16.xpose.msra.mxu0 0
        %1164 = vmatprep.subr.bf16.mxu0 0
        %1165 = vmatpush1.bf16.xpose.msra.mxu0 0
        %1166 = vmatprep.subr.bf16.mxu0 0
        %1167 = vmatpush1.bf16.xpose.msra.mxu0 0
        %1168 = vmatprep.subr.bf16.mxu0 0
        %1169 = vmatpush1.bf16.xpose.msra.mxu0 0
        %1170 = vmatprep.subr.bf16.mxu0 0
        %1171 = vmatpush1.bf16.xpose.msra.mxu0 0
        %1172 = vmatprep.subr.bf16.mxu0 0
        %1173 = vmatpush1.bf16.xpose.msra.mxu0 0
        %1174 = vmatprep.subr.bf16.mxu0 0
        %1175 = vmatpush1.bf16.xpose.msra.mxu0 0
        %1176 = vmatprep.subr.bf16.mxu0 0
        %1177 = vmatpush1.bf16.xpose.msra.mxu0 0
        %1178 = vmatprep.subr.bf16.mxu0 0
        %1179 = vmatpush1.bf16.xpose.msra.mxu0 0
        %1180 = vmatprep.subr.bf16.mxu0 0
        %1181 = vmatpush1.bf16.xpose.msra.mxu0 0
        %1182 = vmatprep.subr.bf16.mxu0 0
        %1183 = vmatpush1.bf16.xpose.msra.mxu0 0
        %1184 = vmatprep.subr.bf16.mxu0 0
        %1185 = vmatpush1.bf16.xpose.msra.mxu0 0
        %1186 = vmatprep.subr.bf16.mxu0 0
        %1187 = vmatpush1.bf16.xpose.msra.mxu0 0
        %1188 = vmatprep.subr.bf16.mxu0 0
        %1189 = vmatpush1.bf16.xpose.msra.mxu0 0
        %1190 = vmatprep.subr.bf16.mxu0 0
        %1191 = vmatpush1.bf16.xpose.msra.mxu0 0
        %1192 = vmatprep.mubr.bf16.mxu0 0
        %1193 = vmatmul.mubr.bf16.gmra.mrb[0].mxu0 %v1155
        %v1194 = vpop.f32.mrb[0].mxu0
        %v1195 = vadd.f32 %v972, %v1194
        %v1196 = vpop.f32.mrb[0].mxu0
        %v1197 = vpop.f32.mrb[0].mxu0
        %v1198 = vpop.f32.mrb[0].mxu0
        %1199 = vdwg.mxu0
        %v1200 = vsel %vm1042, %v1195, -inf
        %1201 = vmax.xlane.f32.xlu0 %v1200
        %v1202 = vpop.xlane.xlu0 %1201
        %v1203 = vsub.f32 %v1195, %v1202
        %v1204 = vmul.f32 %v1203, 1.442695
        %v1205 = vpow.pop %v1204
        %v1206 = vsel %vm1042, %v1205, 0.0
        %1207 = vadd.xlane.f32.xlu0 %v1206
        %v1208 = vpop.xlane.xlu0 %1207
        %v1209 = vrcp.pop %v1208
        %v1210 = vmul.f32 %v1205, %v1209
        %v1211 = vpack.c.bf16 %v1210, %v1210
        %1212 = vrot.lane.b32.xlu0 %v1038, 56
        %v1213 = vpop.permute.xlu0 %1212
        %v1215 = vsel %vm1042, %v1211, 0
        %v1218 = vsel %vm1106, %v1213, 0
        %1220 = vmatprep.subr.bf16.mxu0 0
        %1221 = vmatpush1.bf16.msra.mxu0 %v1218
        %1222 = vmatprep.subr.bf16.mxu0 0
        %1223 = vmatpush1.bf16.msra.mxu0 0
        %1224 = vmatprep.subr.bf16.mxu0 0
        %1225 = vmatpush1.bf16.msra.mxu0 0
        %1226 = vmatprep.subr.bf16.mxu0 0
        %1227 = vmatpush1.bf16.msra.mxu0 0
        %1228 = vmatprep.subr.bf16.mxu0 0
        %1229 = vmatpush1.bf16.msra.mxu0 0
        %1230 = vmatprep.subr.bf16.mxu0 0
        %1231 = vmatpush1.bf16.msra.mxu0 0
        %1232 = vmatprep.subr.bf16.mxu0 0
        %1233 = vmatpush1.bf16.msra.mxu0 0
        %1234 = vmatprep.subr.bf16.mxu0 0
        %1235 = vmatpush1.bf16.msra.mxu0 0
        %1236 = vmatprep.subr.bf16.mxu0 0
        %1237 = vmatpush1.bf16.msra.mxu0 0
        %1238 = vmatprep.subr.bf16.mxu0 0
        %1239 = vmatpush1.bf16.msra.mxu0 0
        %1240 = vmatprep.subr.bf16.mxu0 0
        %1241 = vmatpush1.bf16.msra.mxu0 0
        %1242 = vmatprep.subr.bf16.mxu0 0
        %1243 = vmatpush1.bf16.msra.mxu0 0
        %1244 = vmatprep.subr.bf16.mxu0 0
        %1245 = vmatpush1.bf16.msra.mxu0 0
        %1246 = vmatprep.subr.bf16.mxu0 0
        %1247 = vmatpush1.bf16.msra.mxu0 0
        %1248 = vmatprep.subr.bf16.mxu0 0
        %1249 = vmatpush1.bf16.msra.mxu0 0
        %1250 = vmatprep.subr.bf16.mxu0 0
        %1251 = vmatpush1.bf16.msra.mxu0 0
        %1252 = vmatprep.mubr.bf16.mxu0 0
        %1253 = vmatmul.mubr.bf16.gmra.mrb[0].mxu0 %v1215
        %v1254 = vpop.f32.mrb[0].mxu0
        %v1255 = vadd.f32 0.0, %v1254
        %v1256 = vpop.f32.mrb[0].mxu0
        %v1257 = vpop.f32.mrb[0].mxu0
        %v1258 = vpop.f32.mrb[0].mxu0
        %1259 = vdwg.mxu0
        %1260 = vrot.lane.b32.xlu0 %v1038, 112
        %v1261 = vpop.permute.xlu0 %1260
        %1262 = vrot.lane.b32.xlu0 %v1038, 80
        %v1263 = vpop.permute.xlu0 %1262
        %v1265 = vsel %vm1042, %v1261, 0
        %v1268 = vsel %vm1042, %v1263, 0
        %1270 = vmatprep.subr.bf16.mxu0 0
        %1271 = vmatpush1.bf16.xpose.msra.mxu0 %v1268
        %1272 = vmatprep.subr.bf16.mxu0 0
        %1273 = vmatpush1.bf16.xpose.msra.mxu0 0
        %1274 = vmatprep.subr.bf16.mxu0 0
        %1275 = vmatpush1.bf16.xpose.msra.mxu0 0
        %1276 = vmatprep.subr.bf16.mxu0 0
        %1277 = vmatpush1.bf16.xpose.msra.mxu0 0
        %1278 = vmatprep.subr.bf16.mxu0 0
        %1279 = vmatpush1.bf16.xpose.msra.mxu0 0
        %1280 = vmatprep.subr.bf16.mxu0 0
        %1281 = vmatpush1.bf16.xpose.msra.mxu0 0
        %1282 = vmatprep.subr.bf16.mxu0 0
        %1283 = vmatpush1.bf16.xpose.msra.mxu0 0
        %1284 = vmatprep.subr.bf16.mxu0 0
        %1285 = vmatpush1.bf16.xpose.msra.mxu0 0
        %1286 = vmatprep.subr.bf16.mxu0 0
        %1287 = vmatpush1.bf16.xpose.msra.mxu0 0
        %1288 = vmatprep.subr.bf16.mxu0 0
        %1289 = vmatpush1.bf16.xpose.msra.mxu0 0
        %1290 = vmatprep.subr.bf16.mxu0 0
        %1291 = vmatpush1.bf16.xpose.msra.mxu0 0
        %1292 = vmatprep.subr.bf16.mxu0 0
        %1293 = vmatpush1.bf16.xpose.msra.mxu0 0
        %1294 = vmatprep.subr.bf16.mxu0 0
        %1295 = vmatpush1.bf16.xpose.msra.mxu0 0
        %1296 = vmatprep.subr.bf16.mxu0 0
        %1297 = vmatpush1.bf16.xpose.msra.mxu0 0
        %1298 = vmatprep.subr.bf16.mxu0 0
        %1299 = vmatpush1.bf16.xpose.msra.mxu0 0
        %1300 = vmatprep.subr.bf16.mxu0 0
        %1301 = vmatpush1.bf16.xpose.msra.mxu0 0
        %1302 = vmatprep.mubr.bf16.mxu0 0
        %1303 = vmatmul.mubr.bf16.gmra.mrb[0].mxu0 %v1265
        %v1304 = vpop.f32.mrb[0].mxu0
        %v1305 = vadd.f32 %v972, %v1304
        %v1306 = vpop.f32.mrb[0].mxu0
        %v1307 = vpop.f32.mrb[0].mxu0
        %v1308 = vpop.f32.mrb[0].mxu0
        %1309 = vdwg.mxu0
        %v1310 = vsel %vm1042, %v1305, -inf
        %1311 = vmax.xlane.f32.xlu0 %v1310
        %v1312 = vpop.xlane.xlu0 %1311
        %v1313 = vsub.f32 %v1305, %v1312
        %v1314 = vmul.f32 %v1313, 1.442695
        %v1315 = vpow.pop %v1314
        %v1316 = vsel %vm1042, %v1315, 0.0
        %1317 = vadd.xlane.f32.xlu0 %v1316
        %v1318 = vpop.xlane.xlu0 %1317
        %v1319 = vrcp.pop %v1318
        %v1320 = vmul.f32 %v1315, %v1319
        %v1321 = vpack.c.bf16 %v1320, %v1320
        %1322 = vrot.lane.b32.xlu0 %v1038, 48
        %v1323 = vpop.permute.xlu0 %1322
        %v1325 = vsel %vm1042, %v1321, 0
        %v1328 = vsel %vm1106, %v1323, 0
        %1330 = vmatprep.subr.bf16.mxu0 0
        %1331 = vmatpush1.bf16.msra.mxu0 %v1328
        %1332 = vmatprep.subr.bf16.mxu0 0
        %1333 = vmatpush1.bf16.msra.mxu0 0
        %1334 = vmatprep.subr.bf16.mxu0 0
        %1335 = vmatpush1.bf16.msra.mxu0 0
        %1336 = vmatprep.subr.bf16.mxu0 0
        %1337 = vmatpush1.bf16.msra.mxu0 0
        %1338 = vmatprep.subr.bf16.mxu0 0
        %1339 = vmatpush1.bf16.msra.mxu0 0
        %1340 = vmatprep.subr.bf16.mxu0 0
        %1341 = vmatpush1.bf16.msra.mxu0 0
        %1342 = vmatprep.subr.bf16.mxu0 0
        %1343 = vmatpush1.bf16.msra.mxu0 0
        %1344 = vmatprep.subr.bf16.mxu0 0
        %1345 = vmatpush1.bf16.msra.mxu0 0
        %1346 = vmatprep.subr.bf16.mxu0 0
        %1347 = vmatpush1.bf16.msra.mxu0 0
        %1348 = vmatprep.subr.bf16.mxu0 0
        %1349 = vmatpush1.bf16.msra.mxu0 0
        %1350 = vmatprep.subr.bf16.mxu0 0
        %1351 = vmatpush1.bf16.msra.mxu0 0
        %1352 = vmatprep.subr.bf16.mxu0 0
        %1353 = vmatpush1.bf16.msra.mxu0 0
        %1354 = vmatprep.subr.bf16.mxu0 0
        %1355 = vmatpush1.bf16.msra.mxu0 0
        %1356 = vmatprep.subr.bf16.mxu0 0
        %1357 = vmatpush1.bf16.msra.mxu0 0
        %1358 = vmatprep.subr.bf16.mxu0 0
        %1359 = vmatpush1.bf16.msra.mxu0 0
        %1360 = vmatprep.subr.bf16.mxu0 0
        %1361 = vmatpush1.bf16.msra.mxu0 0
        %1362 = vmatprep.mubr.bf16.mxu0 0
        %1363 = vmatmul.mubr.bf16.gmra.mrb[0].mxu0 %v1325
        %v1364 = vpop.f32.mrb[0].mxu0
        %v1365 = vadd.f32 0.0, %v1364
        %v1366 = vpop.f32.mrb[0].mxu0
        %v1367 = vpop.f32.mrb[0].mxu0
        %v1368 = vpop.f32.mrb[0].mxu0
        %1369 = vdwg.mxu0
        %1370 = vrot.lane.b32.xlu0 %v1038, 104
        %v1371 = vpop.permute.xlu0 %1370
        %1372 = vrot.lane.b32.xlu0 %v1038, 72
        %v1373 = vpop.permute.xlu0 %1372
        %v1375 = vsel %vm1042, %v1371, 0
        %v1378 = vsel %vm1042, %v1373, 0
        %1380 = vmatprep.subr.bf16.mxu0 0
        %1381 = vmatpush1.bf16.xpose.msra.mxu0 %v1378
        %1382 = vmatprep.subr.bf16.mxu0 0
        %1383 = vmatpush1.bf16.xpose.msra.mxu0 0
        %1384 = vmatprep.subr.bf16.mxu0 0
        %1385 = vmatpush1.bf16.xpose.msra.mxu0 0
        %1386 = vmatprep.subr.bf16.mxu0 0
        %1387 = vmatpush1.bf16.xpose.msra.mxu0 0
        %1388 = vmatprep.subr.bf16.mxu0 0
        %1389 = vmatpush1.bf16.xpose.msra.mxu0 0
        %1390 = vmatprep.subr.bf16.mxu0 0
        %1391 = vmatpush1.bf16.xpose.msra.mxu0 0
        %1392 = vmatprep.subr.bf16.mxu0 0
        %1393 = vmatpush1.bf16.xpose.msra.mxu0 0
        %1394 = vmatprep.subr.bf16.mxu0 0
        %1395 = vmatpush1.bf16.xpose.msra.mxu0 0
        %1396 = vmatprep.subr.bf16.mxu0 0
        %1397 = vmatpush1.bf16.xpose.msra.mxu0 0
        %1398 = vmatprep.subr.bf16.mxu0 0
        %1399 = vmatpush1.bf16.xpose.msra.mxu0 0
        %1400 = vmatprep.subr.bf16.mxu0 0
        %1401 = vmatpush1.bf16.xpose.msra.mxu0 0
        %1402 = vmatprep.subr.bf16.mxu0 0
        %1403 = vmatpush1.bf16.xpose.msra.mxu0 0
        %1404 = vmatprep.subr.bf16.mxu0 0
        %1405 = vmatpush1.bf16.xpose.msra.mxu0 0
        %1406 = vmatprep.subr.bf16.mxu0 0
        %1407 = vmatpush1.bf16.xpose.msra.mxu0 0
        %1408 = vmatprep.subr.bf16.mxu0 0
        %1409 = vmatpush1.bf16.xpose.msra.mxu0 0
        %1410 = vmatprep.subr.bf16.mxu0 0
        %1411 = vmatpush1.bf16.xpose.msra.mxu0 0
        %1412 = vmatprep.mubr.bf16.mxu0 0
        %1413 = vmatmul.mubr.bf16.gmra.mrb[0].mxu0 %v1375
        %v1414 = vpop.f32.mrb[0].mxu0
        %v1415 = vadd.f32 %v972, %v1414
        %v1416 = vpop.f32.mrb[0].mxu0
        %v1417 = vpop.f32.mrb[0].mxu0
        %v1418 = vpop.f32.mrb[0].mxu0
        %1419 = vdwg.mxu0
        %v1420 = vsel %vm1042, %v1415, -inf
        %1421 = vmax.xlane.f32.xlu0 %v1420
        %v1422 = vpop.xlane.xlu0 %1421
        %v1423 = vsub.f32 %v1415, %v1422
        %v1424 = vmul.f32 %v1423, 1.442695
        %v1425 = vpow.pop %v1424
        %v1426 = vsel %vm1042, %v1425, 0.0
        %1427 = vadd.xlane.f32.xlu0 %v1426
        %v1428 = vpop.xlane.xlu0 %1427
        %v1429 = vrcp.pop %v1428
        %v1430 = vmul.f32 %v1425, %v1429
        %v1431 = vpack.c.bf16 %v1430, %v1430
        %1432 = vrot.lane.b32.xlu0 %v1038, 40
        %v1433 = vpop.permute.xlu0 %1432
        %v1435 = vsel %vm1042, %v1431, 0
        %v1438 = vsel %vm1106, %v1433, 0
        %1440 = vmatprep.subr.bf16.mxu0 0
        %1441 = vmatpush1.bf16.msra.mxu0 %v1438
        %1442 = vmatprep.subr.bf16.mxu0 0
        %1443 = vmatpush1.bf16.msra.mxu0 0
        %1444 = vmatprep.subr.bf16.mxu0 0
        %1445 = vmatpush1.bf16.msra.mxu0 0
        %1446 = vmatprep.subr.bf16.mxu0 0
        %1447 = vmatpush1.bf16.msra.mxu0 0
        %1448 = vmatprep.subr.bf16.mxu0 0
        %1449 = vmatpush1.bf16.msra.mxu0 0
        %1450 = vmatprep.subr.bf16.mxu0 0
        %1451 = vmatpush1.bf16.msra.mxu0 0
        %1452 = vmatprep.subr.bf16.mxu0 0
        %1453 = vmatpush1.bf16.msra.mxu0 0
        %1454 = vmatprep.subr.bf16.mxu0 0
        %1455 = vmatpush1.bf16.msra.mxu0 0
        %1456 = vmatprep.subr.bf16.mxu0 0
        %1457 = vmatpush1.bf16.msra.mxu0 0
        %1458 = vmatprep.subr.bf16.mxu0 0
        %1459 = vmatpush1.bf16.msra.mxu0 0
        %1460 = vmatprep.subr.bf16.mxu0 0
        %1461 = vmatpush1.bf16.msra.mxu0 0
        %1462 = vmatprep.subr.bf16.mxu0 0
        %1463 = vmatpush1.bf16.msra.mxu0 0
        %1464 = vmatprep.subr.bf16.mxu0 0
        %1465 = vmatpush1.bf16.msra.mxu0 0
        %1466 = vmatprep.subr.bf16.mxu0 0
        %1467 = vmatpush1.bf16.msra.mxu0 0
        %1468 = vmatprep.subr.bf16.mxu0 0
        %1469 = vmatpush1.bf16.msra.mxu0 0
        %1470 = vmatprep.subr.bf16.mxu0 0
        %1471 = vmatpush1.bf16.msra.mxu0 0
        %1472 = vmatprep.mubr.bf16.mxu0 0
        %1473 = vmatmul.mubr.bf16.gmra.mrb[0].mxu0 %v1435
        %v1474 = vpop.f32.mrb[0].mxu0
        %v1475 = vadd.f32 0.0, %v1474
        %v1476 = vpop.f32.mrb[0].mxu0
        %v1477 = vpop.f32.mrb[0].mxu0
        %v1478 = vpop.f32.mrb[0].mxu0
        %1479 = vdwg.mxu0
        %1481 = vrot.lane.b32.xlu0 %v1255, 8
        %v1482 = vpop.permute.xlu0 %1481
        %1485 = vrot.lane.b32.xlu0 %v1365, 16
        %v1486 = vpop.permute.xlu0 %1485
        %1489 = vrot.lane.b32.xlu0 %v1475, 24
        %v1490 = vpop.permute.xlu0 %1489
        %v1492 = vsel %vm1042, %v1145, %v1482
        %vm1493 = vcmask 130048
        %v1494 = vsel %vm1493, %v1492, %v1486
        %vm1495 = vcmask 195584
        %v1496 = vsel %vm1495, %v1494, %v1490
        %v1497 = vpack.c.bf16 %v1496, %v1496
        %v1502 = vunpack.c.l.b16 %v978
        %v1503 = vunpack.c.l.b16 %v979
        %v1504 = vunpack.c.l.b16 %v980
        %v1505 = vunpack.c.l.b16 %v981
        %v1506 = vpack.c.b16 %v1503, %v1502
        %v1507 = vpack.c.b16 %v1505, %v1504
        %v1511 = vsel %vm947, %v1497, 0
        %1513 = vmatprep.subr.bf16.mxu0 0
        %1514 = vmatpush1.bf16.msra.mxu0 %v1506
        %1515 = vmatprep.subr.bf16.mxu0 0
        %1516 = vmatpush1.bf16.msra.mxu0 %v1507
        %1517 = vmatprep.subr.bf16.mxu0 0
        %1518 = vmatpush1.bf16.msra.mxu0 0
        %1519 = vmatprep.subr.bf16.mxu0 0
        %1520 = vmatpush1.bf16.msra.mxu0 0
        %1521 = vmatprep.subr.bf16.mxu0 0
        %1522 = vmatpush1.bf16.msra.mxu0 0
        %1523 = vmatprep.subr.bf16.mxu0 0
        %1524 = vmatpush1.bf16.msra.mxu0 0
        %1525 = vmatprep.subr.bf16.mxu0 0
        %1526 = vmatpush1.bf16.msra.mxu0 0
        %1527 = vmatprep.subr.bf16.mxu0 0
        %1528 = vmatpush1.bf16.msra.mxu0 0
        %1529 = vmatprep.subr.bf16.mxu0 0
        %1530 = vmatpush1.bf16.msra.mxu0 0
        %1531 = vmatprep.subr.bf16.mxu0 0
        %1532 = vmatpush1.bf16.msra.mxu0 0
        %1533 = vmatprep.subr.bf16.mxu0 0
        %1534 = vmatpush1.bf16.msra.mxu0 0
        %1535 = vmatprep.subr.bf16.mxu0 0
        %1536 = vmatpush1.bf16.msra.mxu0 0
        %1537 = vmatprep.subr.bf16.mxu0 0
        %1538 = vmatpush1.bf16.msra.mxu0 0
        %1539 = vmatprep.subr.bf16.mxu0 0
        %1540 = vmatpush1.bf16.msra.mxu0 0
        %1541 = vmatprep.subr.bf16.mxu0 0
        %1542 = vmatpush1.bf16.msra.mxu0 0
        %1543 = vmatprep.subr.bf16.mxu0 0
        %1544 = vmatpush1.bf16.msra.mxu0 0
        %1545 = vmatprep.mubr.bf16.mxu0 0
        %1546 = vmatmul.mubr.bf16.gmra.mrb[0].mxu0 %v1511
        %v1547 = vpop.f32.mrb[0].mxu0
        %v1548 = vadd.f32 %v971, %v1547
        %v1549 = vpop.f32.mrb[0].mxu0
        %v1550 = vpop.f32.mrb[0].mxu0
        %v1551 = vpop.f32.mrb[0].mxu0
        %1552 = vdwg.mxu0
        %v1553 = vsel %vm947, %v1548, 0.0
        %1554 = vadd.xlane.f32.xlu0 %v1553
        %v1555 = vpop.xlane.xlu0 %1554
        %v1556 = vmul.f32 %v1555, %v951
        %v1557 = vsub.f32 %v1548, %v1556
        %v1558 = vmul.f32 %v1557, %v1557
        %v1559 = vsel %vm947, %v1558, 0.0
        %1560 = vadd.xlane.f32.xlu0 %v1559
        %v1561 = vpop.xlane.xlu0 %1560
        %v1562 = vmul.f32 %v1561, %v951
        %v1563 = vadd.f32 %v1562, 1e-06
        %v1564 = vrsqrt.pop %v1563
        %v1565 = vmul.f32 %v1557, %v1564
        %v1566 = vlaneseq
        %v1567 = vshrl.u32 %v1566, 7
        %v1568 = vsub.s32 0, %v1567
        %v1569 = vrot.slane %v973, %v1568
        %v1570 = vmul.f32 %v1565, %v1569
        %v1571 = vlaneseq
        %v1572 = vshrl.u32 %v1571, 7
        %v1573 = vsub.s32 1, %v1572
        %v1574 = vrot.slane %v973, %v1573
        %v1575 = vadd.f32 %v1570, %v1574
        %v1576 = vld [vmem:[%s11] sm:$0xf]
        %v1577 = vld [vmem:[%s11 + $0x4] sm:$0xf]
        %v1578 = vld [vmem:[%s11 + $0x8] sm:$0xf]
        %v1579 = vld [vmem:[%s11 + $0xc] sm:$0xf]
        %v1580 = vld [vmem:[%s12] sm:$0x1]
        %v1581 = vld [vmem:[%s13] sm:$0xf]
        %v1582 = vld [vmem:[%s13 + $0x4] sm:$0xf]
        %v1583 = vld [vmem:[%s13 + $0x8] sm:$0xf]
        %v1584 = vld [vmem:[%s13 + $0xc] sm:$0xf]
        %v1585 = vld [vmem:[%s13 + $0x10] sm:$0xf]
        %v1586 = vld [vmem:[%s13 + $0x14] sm:$0xf]
        %v1587 = vld [vmem:[%s13 + $0x18] sm:$0xf]
        %v1588 = vld [vmem:[%s13 + $0x1c] sm:$0xf]
        %v1589 = vpack.c.bf16 %v1575, %v1575
        %v1591 = vlaneseq
        %v1592 = vshrl.u32 %v1591, 7
        %v1593 = vsub.s32 0, %v1592
        %v1594 = vrot.slane %v1580, %v1593
        %v1600 = vunpack.c.l.b16 %v1576
        %v1601 = vunpack.c.l.b16 %v1577
        %v1602 = vunpack.c.l.b16 %v1578
        %v1603 = vunpack.c.l.b16 %v1579
        %v1604 = vpack.c.b16 %v1601, %v1600
        %v1605 = vpack.c.b16 %v1603, %v1602
        %v1609 = vsel %vm947, %v1589, 0
        %1611 = vmatprep.subr.bf16.mxu0 0
        %1612 = vmatpush1.bf16.msra.mxu0 %v1604
        %1613 = vmatprep.subr.bf16.mxu0 0
        %1614 = vmatpush1.bf16.msra.mxu0 %v1605
        %1615 = vmatprep.subr.bf16.mxu0 0
        %1616 = vmatpush1.bf16.msra.mxu0 0
        %1617 = vmatprep.subr.bf16.mxu0 0
        %1618 = vmatpush1.bf16.msra.mxu0 0
        %1619 = vmatprep.subr.bf16.mxu0 0
        %1620 = vmatpush1.bf16.msra.mxu0 0
        %1621 = vmatprep.subr.bf16.mxu0 0
        %1622 = vmatpush1.bf16.msra.mxu0 0
        %1623 = vmatprep.subr.bf16.mxu0 0
        %1624 = vmatpush1.bf16.msra.mxu0 0
        %1625 = vmatprep.subr.bf16.mxu0 0
        %1626 = vmatpush1.bf16.msra.mxu0 0
        %1627 = vmatprep.subr.bf16.mxu0 0
        %1628 = vmatpush1.bf16.msra.mxu0 0
        %1629 = vmatprep.subr.bf16.mxu0 0
        %1630 = vmatpush1.bf16.msra.mxu0 0
        %1631 = vmatprep.subr.bf16.mxu0 0
        %1632 = vmatpush1.bf16.msra.mxu0 0
        %1633 = vmatprep.subr.bf16.mxu0 0
        %1634 = vmatpush1.bf16.msra.mxu0 0
        %1635 = vmatprep.subr.bf16.mxu0 0
        %1636 = vmatpush1.bf16.msra.mxu0 0
        %1637 = vmatprep.subr.bf16.mxu0 0
        %1638 = vmatpush1.bf16.msra.mxu0 0
        %1639 = vmatprep.subr.bf16.mxu0 0
        %1640 = vmatpush1.bf16.msra.mxu0 0
        %1641 = vmatprep.subr.bf16.mxu0 0
        %1642 = vmatpush1.bf16.msra.mxu0 0
        %1643 = vmatprep.mubr.bf16.mxu0 0
        %1644 = vmatmul.mubr.bf16.gmra.mrb[0].mxu0 %v1609
        %v1645 = vpop.f32.mrb[0].mxu0
        %v1646 = vadd.f32 %v1594, %v1645
        %v1647 = vpop.f32.mrb[0].mxu0
        %v1648 = vpop.f32.mrb[0].mxu0
        %v1649 = vpop.f32.mrb[0].mxu0
        %1650 = vdwg.mxu0
        %v1651 = vmax.f32 %v1646, 0.0
        %v1652 = vpack.c.bf16 %v1651, %v1651
        %v1653 = vlaneseq
        %v1654 = vshrl.u32 %v1653, 7
        %v1655 = vsub.s32 2, %v1654
        %v1656 = vrot.slane %v973, %v1655
        %v1665 = vunpack.c.l.b16 %v1581
        %v1666 = vunpack.c.l.b16 %v1582
        %v1667 = vunpack.c.l.b16 %v1583
        %v1668 = vunpack.c.l.b16 %v1584
        %v1669 = vunpack.c.l.b16 %v1585
        %v1670 = vunpack.c.l.b16 %v1586
        %v1671 = vunpack.c.l.b16 %v1587
        %v1672 = vunpack.c.l.b16 %v1588
        %v1673 = vpack.c.b16 %v1666, %v1665
        %v1674 = vpack.c.b16 %v1668, %v1667
        %v1675 = vpack.c.b16 %v1670, %v1669
        %v1676 = vpack.c.b16 %v1672, %v1671
        %vm1681 = vcmask 523264
        %v1683 = vsel %vm1681, %v1652, 0
        %1685 = vmatprep.subr.bf16.mxu0 0
        %1686 = vmatpush1.bf16.msra.mxu0 %v1673
        %1687 = vmatprep.subr.bf16.mxu0 0
        %1688 = vmatpush1.bf16.msra.mxu0 %v1674
        %1689 = vmatprep.subr.bf16.mxu0 0
        %1690 = vmatpush1.bf16.msra.mxu0 %v1675
        %1691 = vmatprep.subr.bf16.mxu0 0
        %1692 = vmatpush1.bf16.msra.mxu0 %v1676
        %1693 = vmatprep.subr.bf16.mxu0 0
        %1694 = vmatpush1.bf16.msra.mxu0 0
        %1695 = vmatprep.subr.bf16.mxu0 0
        %1696 = vmatpush1.bf16.msra.mxu0 0
        %1697 = vmatprep.subr.bf16.mxu0 0
        %1698 = vmatpush1.bf16.msra.mxu0 0
        %1699 = vmatprep.subr.bf16.mxu0 0
        %1700 = vmatpush1.bf16.msra.mxu0 0
        %1701 = vmatprep.subr.bf16.mxu0 0
        %1702 = vmatpush1.bf16.msra.mxu0 0
        %1703 = vmatprep.subr.bf16.mxu0 0
        %1704 = vmatpush1.bf16.msra.mxu0 0
        %1705 = vmatprep.subr.bf16.mxu0 0
        %1706 = vmatpush1.bf16.msra.mxu0 0
        %1707 = vmatprep.subr.bf16.mxu0 0
        %1708 = vmatpush1.bf16.msra.mxu0 0
        %1709 = vmatprep.subr.bf16.mxu0 0
        %1710 = vmatpush1.bf16.msra.mxu0 0
        %1711 = vmatprep.subr.bf16.mxu0 0
        %1712 = vmatpush1.bf16.msra.mxu0 0
        %1713 = vmatprep.subr.bf16.mxu0 0
        %1714 = vmatpush1.bf16.msra.mxu0 0
        %1715 = vmatprep.subr.bf16.mxu0 0
        %1716 = vmatpush1.bf16.msra.mxu0 0
        %1717 = vmatprep.mubr.bf16.mxu0 0
        %1718 = vmatmul.mubr.bf16.gmra.mrb[0].mxu0 %v1683
        %v1719 = vpop.f32.mrb[0].mxu0
        %v1720 = vadd.f32 %v1656, %v1719
        %v1721 = vpop.f32.mrb[0].mxu0
        %v1722 = vpop.f32.mrb[0].mxu0
        %v1723 = vpop.f32.mrb[0].mxu0
        %1724 = vdwg.mxu0
        %v1725 = vadd.f32 %v1720, %v1575
        %v1726 = vsel %vm947, %v1725, 0.0
        %1727 = vadd.xlane.f32.xlu0 %v1726
        %v1728 = vpop.xlane.xlu0 %1727
        %v1729 = vmul.f32 %v1728, %v951
        %v1730 = vsub.f32 %v1725, %v1729
        %v1731 = vmul.f32 %v1730, %v1730
        %v1732 = vsel %vm947, %v1731, 0.0
        %1733 = vadd.xlane.f32.xlu0 %v1732
        %v1734 = vpop.xlane.xlu0 %1733
        %v1735 = vmul.f32 %v1734, %v951
        %v1736 = vadd.f32 %v1735, 1e-06
        %v1737 = vrsqrt.pop %v1736
        %v1738 = vmul.f32 %v1730, %v1737
        %v1739 = vlaneseq
        %v1740 = vshrl.u32 %v1739, 7
        %v1741 = vsub.s32 3, %v1740
        %v1742 = vrot.slane %v973, %v1741
        %v1743 = vmul.f32 %v1738, %v1742
        %v1744 = vlaneseq
        %v1745 = vshrl.u32 %v1744, 7
        %v1746 = vsub.s32 4, %v1745
        %v1747 = vrot.slane %v973, %v1746
        %v1748 = vadd.f32 %v1743, %v1747
        %s1749 = scalar_lea.vmem %s14, 8
        %v1750 = vld [vmem:[%s1749] sm:$0x1f]
        %s1751 = scalar_lea.vmem %s9, 16
        %v1752 = vld [vmem:[%s1751] sm:$0xf]
        %v1753 = vld [vmem:[%s1751 + $0x4] sm:$0xf]
        %v1754 = vld [vmem:[%s1751 + $0x8] sm:$0xf]
        %v1755 = vld [vmem:[%s1751 + $0xc] sm:$0xf]
        %s1756 = scalar_lea.vmem %s10, 16
        %v1757 = vld [vmem:[%s1756] sm:$0xf]
        %v1758 = vld [vmem:[%s1756 + $0x4] sm:$0xf]
        %v1759 = vld [vmem:[%s1756 + $0x8] sm:$0xf]
        %v1760 = vld [vmem:[%s1756 + $0xc] sm:$0xf]
        %v1761 = vpack.c.bf16 %v1748, %v1748
        %v1766 = vunpack.c.l.b16 %v1752
        %v1767 = vunpack.c.l.b16 %v1753
        %v1768 = vunpack.c.l.b16 %v1754
        %v1769 = vunpack.c.l.b16 %v1755
        %v1770 = vpack.c.b16 %v1767, %v1766
        %v1771 = vpack.c.b16 %v1769, %v1768
        %v1775 = vsel %vm947, %v1761, 0
        %1777 = vmatprep.subr.bf16.mxu0 0
        %1778 = vmatpush1.bf16.msra.mxu0 %v1770
        %1779 = vmatprep.subr.bf16.mxu0 0
        %1780 = vmatpush1.bf16.msra.mxu0 %v1771
        %1781 = vmatprep.subr.bf16.mxu0 0
        %1782 = vmatpush1.bf16.msra.mxu0 0
        %1783 = vmatprep.subr.bf16.mxu0 0
        %1784 = vmatpush1.bf16.msra.mxu0 0
        %1785 = vmatprep.subr.bf16.mxu0 0
        %1786 = vmatpush1.bf16.msra.mxu0 0
        %1787 = vmatprep.subr.bf16.mxu0 0
        %1788 = vmatpush1.bf16.msra.mxu0 0
        %1789 = vmatprep.subr.bf16.mxu0 0
        %1790 = vmatpush1.bf16.msra.mxu0 0
        %1791 = vmatprep.subr.bf16.mxu0 0
        %1792 = vmatpush1.bf16.msra.mxu0 0
        %1793 = vmatprep.subr.bf16.mxu0 0
        %1794 = vmatpush1.bf16.msra.mxu0 0
        %1795 = vmatprep.subr.bf16.mxu0 0
        %1796 = vmatpush1.bf16.msra.mxu0 0
        %1797 = vmatprep.subr.bf16.mxu0 0
        %1798 = vmatpush1.bf16.msra.mxu0 0
        %1799 = vmatprep.subr.bf16.mxu0 0
        %1800 = vmatpush1.bf16.msra.mxu0 0
        %1801 = vmatprep.subr.bf16.mxu0 0
        %1802 = vmatpush1.bf16.msra.mxu0 0
        %1803 = vmatprep.subr.bf16.mxu0 0
        %1804 = vmatpush1.bf16.msra.mxu0 0
        %1805 = vmatprep.subr.bf16.mxu0 0
        %1806 = vmatpush1.bf16.msra.mxu0 0
        %1807 = vmatprep.subr.bf16.mxu0 0
        %1808 = vmatpush1.bf16.msra.mxu0 0
        %1809 = vmatprep.mubr.bf16.mxu0 0
        %1810 = vmatmul.mubr.bf16.gmra.mrb[0].mxu0 %v1775
        %v1811 = vpop.f32.mrb[0].mxu0
        %v1812 = vadd.f32 0.0, %v1811
        %v1813 = vpop.f32.mrb[0].mxu0
        %v1814 = vpop.f32.mrb[0].mxu0
        %v1815 = vpop.f32.mrb[0].mxu0
        %1816 = vdwg.mxu0
        %v1817 = vpack.c.bf16 %v1812, %v1812
        %1819 = vrot.lane.b32.xlu0 %v1817, 96
        %v1820 = vpop.permute.xlu0 %1819
        %v1822 = vsel %vm1042, %v1817, 0
        %v1825 = vsel %vm1042, %v1820, 0
        %1827 = vmatprep.subr.bf16.mxu0 0
        %1828 = vmatpush1.bf16.xpose.msra.mxu0 %v1825
        %1829 = vmatprep.subr.bf16.mxu0 0
        %1830 = vmatpush1.bf16.xpose.msra.mxu0 0
        %1831 = vmatprep.subr.bf16.mxu0 0
        %1832 = vmatpush1.bf16.xpose.msra.mxu0 0
        %1833 = vmatprep.subr.bf16.mxu0 0
        %1834 = vmatpush1.bf16.xpose.msra.mxu0 0
        %1835 = vmatprep.subr.bf16.mxu0 0
        %1836 = vmatpush1.bf16.xpose.msra.mxu0 0
        %1837 = vmatprep.subr.bf16.mxu0 0
        %1838 = vmatpush1.bf16.xpose.msra.mxu0 0
        %1839 = vmatprep.subr.bf16.mxu0 0
        %1840 = vmatpush1.bf16.xpose.msra.mxu0 0
        %1841 = vmatprep.subr.bf16.mxu0 0
        %1842 = vmatpush1.bf16.xpose.msra.mxu0 0
        %1843 = vmatprep.subr.bf16.mxu0 0
        %1844 = vmatpush1.bf16.xpose.msra.mxu0 0
        %1845 = vmatprep.subr.bf16.mxu0 0
        %1846 = vmatpush1.bf16.xpose.msra.mxu0 0
        %1847 = vmatprep.subr.bf16.mxu0 0
        %1848 = vmatpush1.bf16.xpose.msra.mxu0 0
        %1849 = vmatprep.subr.bf16.mxu0 0
        %1850 = vmatpush1.bf16.xpose.msra.mxu0 0
        %1851 = vmatprep.subr.bf16.mxu0 0
        %1852 = vmatpush1.bf16.xpose.msra.mxu0 0
        %1853 = vmatprep.subr.bf16.mxu0 0
        %1854 = vmatpush1.bf16.xpose.msra.mxu0 0
        %1855 = vmatprep.subr.bf16.mxu0 0
        %1856 = vmatpush1.bf16.xpose.msra.mxu0 0
        %1857 = vmatprep.subr.bf16.mxu0 0
        %1858 = vmatpush1.bf16.xpose.msra.mxu0 0
        %1859 = vmatprep.mubr.bf16.mxu0 0
        %1860 = vmatmul.mubr.bf16.gmra.mrb[0].mxu0 %v1822
        %v1861 = vpop.f32.mrb[0].mxu0
        %v1862 = vadd.f32 %v972, %v1861
        %v1863 = vpop.f32.mrb[0].mxu0
        %v1864 = vpop.f32.mrb[0].mxu0
        %v1865 = vpop.f32.mrb[0].mxu0
        %1866 = vdwg.mxu0
        %v1867 = vsel %vm1042, %v1862, -inf
        %1868 = vmax.xlane.f32.xlu0 %v1867
        %v1869 = vpop.xlane.xlu0 %1868
        %v1870 = vsub.f32 %v1862, %v1869
        %v1871 = vmul.f32 %v1870, 1.442695
        %v1872 = vpow.pop %v1871
        %v1873 = vsel %vm1042, %v1872, 0.0
        %1874 = vadd.xlane.f32.xlu0 %v1873
        %v1875 = vpop.xlane.xlu0 %1874
        %v1876 = vrcp.pop %v1875
        %v1877 = vmul.f32 %v1872, %v1876
        %v1878 = vpack.c.bf16 %v1877, %v1877
        %1879 = vrot.lane.b32.xlu0 %v1817, 64
        %v1880 = vpop.permute.xlu0 %1879
        %v1882 = vsel %vm1042, %v1878, 0
        %v1885 = vsel %vm1106, %v1880, 0
        %1887 = vmatprep.subr.bf16.mxu0 0
        %1888 = vmatpush1.bf16.msra.mxu0 %v1885
        %1889 = vmatprep.subr.bf16.mxu0 0
        %1890 = vmatpush1.bf16.msra.mxu0 0
        %1891 = vmatprep.subr.bf16.mxu0 0
        %1892 = vmatpush1.bf16.msra.mxu0 0
        %1893 = vmatprep.subr.bf16.mxu0 0
        %1894 = vmatpush1.bf16.msra.mxu0 0
        %1895 = vmatprep.subr.bf16.mxu0 0
        %1896 = vmatpush1.bf16.msra.mxu0 0
        %1897 = vmatprep.subr.bf16.mxu0 0
        %1898 = vmatpush1.bf16.msra.mxu0 0
        %1899 = vmatprep.subr.bf16.mxu0 0
        %1900 = vmatpush1.bf16.msra.mxu0 0
        %1901 = vmatprep.subr.bf16.mxu0 0
        %1902 = vmatpush1.bf16.msra.mxu0 0
        %1903 = vmatprep.subr.bf16.mxu0 0
        %1904 = vmatpush1.bf16.msra.mxu0 0
        %1905 = vmatprep.subr.bf16.mxu0 0
        %1906 = vmatpush1.bf16.msra.mxu0 0
        %1907 = vmatprep.subr.bf16.mxu0 0
        %1908 = vmatpush1.bf16.msra.mxu0 0
        %1909 = vmatprep.subr.bf16.mxu0 0
        %1910 = vmatpush1.bf16.msra.mxu0 0
        %1911 = vmatprep.subr.bf16.mxu0 0
        %1912 = vmatpush1.bf16.msra.mxu0 0
        %1913 = vmatprep.subr.bf16.mxu0 0
        %1914 = vmatpush1.bf16.msra.mxu0 0
        %1915 = vmatprep.subr.bf16.mxu0 0
        %1916 = vmatpush1.bf16.msra.mxu0 0
        %1917 = vmatprep.subr.bf16.mxu0 0
        %1918 = vmatpush1.bf16.msra.mxu0 0
        %1919 = vmatprep.mubr.bf16.mxu0 0
        %1920 = vmatmul.mubr.bf16.gmra.mrb[0].mxu0 %v1882
        %v1921 = vpop.f32.mrb[0].mxu0
        %v1922 = vadd.f32 0.0, %v1921
        %v1923 = vpop.f32.mrb[0].mxu0
        %v1924 = vpop.f32.mrb[0].mxu0
        %v1925 = vpop.f32.mrb[0].mxu0
        %1926 = vdwg.mxu0
        %1927 = vrot.lane.b32.xlu0 %v1817, 120
        %v1928 = vpop.permute.xlu0 %1927
        %1929 = vrot.lane.b32.xlu0 %v1817, 88
        %v1930 = vpop.permute.xlu0 %1929
        %v1932 = vsel %vm1042, %v1928, 0
        %v1935 = vsel %vm1042, %v1930, 0
        %1937 = vmatprep.subr.bf16.mxu0 0
        %1938 = vmatpush1.bf16.xpose.msra.mxu0 %v1935
        %1939 = vmatprep.subr.bf16.mxu0 0
        %1940 = vmatpush1.bf16.xpose.msra.mxu0 0
        %1941 = vmatprep.subr.bf16.mxu0 0
        %1942 = vmatpush1.bf16.xpose.msra.mxu0 0
        %1943 = vmatprep.subr.bf16.mxu0 0
        %1944 = vmatpush1.bf16.xpose.msra.mxu0 0
        %1945 = vmatprep.subr.bf16.mxu0 0
        %1946 = vmatpush1.bf16.xpose.msra.mxu0 0
        %1947 = vmatprep.subr.bf16.mxu0 0
        %1948 = vmatpush1.bf16.xpose.msra.mxu0 0
        %1949 = vmatprep.subr.bf16.mxu0 0
        %1950 = vmatpush1.bf16.xpose.msra.mxu0 0
        %1951 = vmatprep.subr.bf16.mxu0 0
        %1952 = vmatpush1.bf16.xpose.msra.mxu0 0
        %1953 = vmatprep.subr.bf16.mxu0 0
        %1954 = vmatpush1.bf16.xpose.msra.mxu0 0
        %1955 = vmatprep.subr.bf16.mxu0 0
        %1956 = vmatpush1.bf16.xpose.msra.mxu0 0
        %1957 = vmatprep.subr.bf16.mxu0 0
        %1958 = vmatpush1.bf16.xpose.msra.mxu0 0
        %1959 = vmatprep.subr.bf16.mxu0 0
        %1960 = vmatpush1.bf16.xpose.msra.mxu0 0
        %1961 = vmatprep.subr.bf16.mxu0 0
        %1962 = vmatpush1.bf16.xpose.msra.mxu0 0
        %1963 = vmatprep.subr.bf16.mxu0 0
        %1964 = vmatpush1.bf16.xpose.msra.mxu0 0
        %1965 = vmatprep.subr.bf16.mxu0 0
        %1966 = vmatpush1.bf16.xpose.msra.mxu0 0
        %1967 = vmatprep.subr.bf16.mxu0 0
        %1968 = vmatpush1.bf16.xpose.msra.mxu0 0
        %1969 = vmatprep.mubr.bf16.mxu0 0
        %1970 = vmatmul.mubr.bf16.gmra.mrb[0].mxu0 %v1932
        %v1971 = vpop.f32.mrb[0].mxu0
        %v1972 = vadd.f32 %v972, %v1971
        %v1973 = vpop.f32.mrb[0].mxu0
        %v1974 = vpop.f32.mrb[0].mxu0
        %v1975 = vpop.f32.mrb[0].mxu0
        %1976 = vdwg.mxu0
        %v1977 = vsel %vm1042, %v1972, -inf
        %1978 = vmax.xlane.f32.xlu0 %v1977
        %v1979 = vpop.xlane.xlu0 %1978
        %v1980 = vsub.f32 %v1972, %v1979
        %v1981 = vmul.f32 %v1980, 1.442695
        %v1982 = vpow.pop %v1981
        %v1983 = vsel %vm1042, %v1982, 0.0
        %1984 = vadd.xlane.f32.xlu0 %v1983
        %v1985 = vpop.xlane.xlu0 %1984
        %v1986 = vrcp.pop %v1985
        %v1987 = vmul.f32 %v1982, %v1986
        %v1988 = vpack.c.bf16 %v1987, %v1987
        %1989 = vrot.lane.b32.xlu0 %v1817, 56
        %v1990 = vpop.permute.xlu0 %1989
        %v1992 = vsel %vm1042, %v1988, 0
        %v1995 = vsel %vm1106, %v1990, 0
        %1997 = vmatprep.subr.bf16.mxu0 0
        %1998 = vmatpush1.bf16.msra.mxu0 %v1995
        %1999 = vmatprep.subr.bf16.mxu0 0
        %2000 = vmatpush1.bf16.msra.mxu0 0
        %2001 = vmatprep.subr.bf16.mxu0 0
        %2002 = vmatpush1.bf16.msra.mxu0 0
        %2003 = vmatprep.subr.bf16.mxu0 0
        %2004 = vmatpush1.bf16.msra.mxu0 0
        %2005 = vmatprep.subr.bf16.mxu0 0
        %2006 = vmatpush1.bf16.msra.mxu0 0
        %2007 = vmatprep.subr.bf16.mxu0 0
        %2008 = vmatpush1.bf16.msra.mxu0 0
        %2009 = vmatprep.subr.bf16.mxu0 0
        %2010 = vmatpush1.bf16.msra.mxu0 0
        %2011 = vmatprep.subr.bf16.mxu0 0
        %2012 = vmatpush1.bf16.msra.mxu0 0
        %2013 = vmatprep.subr.bf16.mxu0 0
        %2014 = vmatpush1.bf16.msra.mxu0 0
        %2015 = vmatprep.subr.bf16.mxu0 0
        %2016 = vmatpush1.bf16.msra.mxu0 0
        %2017 = vmatprep.subr.bf16.mxu0 0
        %2018 = vmatpush1.bf16.msra.mxu0 0
        %2019 = vmatprep.subr.bf16.mxu0 0
        %2020 = vmatpush1.bf16.msra.mxu0 0
        %2021 = vmatprep.subr.bf16.mxu0 0
        %2022 = vmatpush1.bf16.msra.mxu0 0
        %2023 = vmatprep.subr.bf16.mxu0 0
        %2024 = vmatpush1.bf16.msra.mxu0 0
        %2025 = vmatprep.subr.bf16.mxu0 0
        %2026 = vmatpush1.bf16.msra.mxu0 0
        %2027 = vmatprep.subr.bf16.mxu0 0
        %2028 = vmatpush1.bf16.msra.mxu0 0
        %2029 = vmatprep.mubr.bf16.mxu0 0
        %2030 = vmatmul.mubr.bf16.gmra.mrb[0].mxu0 %v1992
        %v2031 = vpop.f32.mrb[0].mxu0
        %v2032 = vadd.f32 0.0, %v2031
        %v2033 = vpop.f32.mrb[0].mxu0
        %v2034 = vpop.f32.mrb[0].mxu0
        %v2035 = vpop.f32.mrb[0].mxu0
        %2036 = vdwg.mxu0
        %2037 = vrot.lane.b32.xlu0 %v1817, 112
        %v2038 = vpop.permute.xlu0 %2037
        %2039 = vrot.lane.b32.xlu0 %v1817, 80
        %v2040 = vpop.permute.xlu0 %2039
        %v2042 = vsel %vm1042, %v2038, 0
        %v2045 = vsel %vm1042, %v2040, 0
        %2047 = vmatprep.subr.bf16.mxu0 0
        %2048 = vmatpush1.bf16.xpose.msra.mxu0 %v2045
        %2049 = vmatprep.subr.bf16.mxu0 0
        %2050 = vmatpush1.bf16.xpose.msra.mxu0 0
        %2051 = vmatprep.subr.bf16.mxu0 0
        %2052 = vmatpush1.bf16.xpose.msra.mxu0 0
        %2053 = vmatprep.subr.bf16.mxu0 0
        %2054 = vmatpush1.bf16.xpose.msra.mxu0 0
        %2055 = vmatprep.subr.bf16.mxu0 0
        %2056 = vmatpush1.bf16.xpose.msra.mxu0 0
        %2057 = vmatprep.subr.bf16.mxu0 0
        %2058 = vmatpush1.bf16.xpose.msra.mxu0 0
        %2059 = vmatprep.subr.bf16.mxu0 0
        %2060 = vmatpush1.bf16.xpose.msra.mxu0 0
        %2061 = vmatprep.subr.bf16.mxu0 0
        %2062 = vmatpush1.bf16.xpose.msra.mxu0 0
        %2063 = vmatprep.subr.bf16.mxu0 0
        %2064 = vmatpush1.bf16.xpose.msra.mxu0 0
        %2065 = vmatprep.subr.bf16.mxu0 0
        %2066 = vmatpush1.bf16.xpose.msra.mxu0 0
        %2067 = vmatprep.subr.bf16.mxu0 0
        %2068 = vmatpush1.bf16.xpose.msra.mxu0 0
        %2069 = vmatprep.subr.bf16.mxu0 0
        %2070 = vmatpush1.bf16.xpose.msra.mxu0 0
        %2071 = vmatprep.subr.bf16.mxu0 0
        %2072 = vmatpush1.bf16.xpose.msra.mxu0 0
        %2073 = vmatprep.subr.bf16.mxu0 0
        %2074 = vmatpush1.bf16.xpose.msra.mxu0 0
        %2075 = vmatprep.subr.bf16.mxu0 0
        %2076 = vmatpush1.bf16.xpose.msra.mxu0 0
        %2077 = vmatprep.subr.bf16.mxu0 0
        %2078 = vmatpush1.bf16.xpose.msra.mxu0 0
        %2079 = vmatprep.mubr.bf16.mxu0 0
        %2080 = vmatmul.mubr.bf16.gmra.mrb[0].mxu0 %v2042
        %v2081 = vpop.f32.mrb[0].mxu0
        %v2082 = vadd.f32 %v972, %v2081
        %v2083 = vpop.f32.mrb[0].mxu0
        %v2084 = vpop.f32.mrb[0].mxu0
        %v2085 = vpop.f32.mrb[0].mxu0
        %2086 = vdwg.mxu0
        %v2087 = vsel %vm1042, %v2082, -inf
        %2088 = vmax.xlane.f32.xlu0 %v2087
        %v2089 = vpop.xlane.xlu0 %2088
        %v2090 = vsub.f32 %v2082, %v2089
        %v2091 = vmul.f32 %v2090, 1.442695
        %v2092 = vpow.pop %v2091
        %v2093 = vsel %vm1042, %v2092, 0.0
        %2094 = vadd.xlane.f32.xlu0 %v2093
        %v2095 = vpop.xlane.xlu0 %2094
        %v2096 = vrcp.pop %v2095
        %v2097 = vmul.f32 %v2092, %v2096
        %v2098 = vpack.c.bf16 %v2097, %v2097
        %2099 = vrot.lane.b32.xlu0 %v1817, 48
        %v2100 = vpop.permute.xlu0 %2099
        %v2102 = vsel %vm1042, %v2098, 0
        %v2105 = vsel %vm1106, %v2100, 0
        %2107 = vmatprep.subr.bf16.mxu0 0
        %2108 = vmatpush1.bf16.msra.mxu0 %v2105
        %2109 = vmatprep.subr.bf16.mxu0 0
        %2110 = vmatpush1.bf16.msra.mxu0 0
        %2111 = vmatprep.subr.bf16.mxu0 0
        %2112 = vmatpush1.bf16.msra.mxu0 0
        %2113 = vmatprep.subr.bf16.mxu0 0
        %2114 = vmatpush1.bf16.msra.mxu0 0
        %2115 = vmatprep.subr.bf16.mxu0 0
        %2116 = vmatpush1.bf16.msra.mxu0 0
        %2117 = vmatprep.subr.bf16.mxu0 0
        %2118 = vmatpush1.bf16.msra.mxu0 0
        %2119 = vmatprep.subr.bf16.mxu0 0
        %2120 = vmatpush1.bf16.msra.mxu0 0
        %2121 = vmatprep.subr.bf16.mxu0 0
        %2122 = vmatpush1.bf16.msra.mxu0 0
        %2123 = vmatprep.subr.bf16.mxu0 0
        %2124 = vmatpush1.bf16.msra.mxu0 0
        %2125 = vmatprep.subr.bf16.mxu0 0
        %2126 = vmatpush1.bf16.msra.mxu0 0
        %2127 = vmatprep.subr.bf16.mxu0 0
        %2128 = vmatpush1.bf16.msra.mxu0 0
        %2129 = vmatprep.subr.bf16.mxu0 0
        %2130 = vmatpush1.bf16.msra.mxu0 0
        %2131 = vmatprep.subr.bf16.mxu0 0
        %2132 = vmatpush1.bf16.msra.mxu0 0
        %2133 = vmatprep.subr.bf16.mxu0 0
        %2134 = vmatpush1.bf16.msra.mxu0 0
        %2135 = vmatprep.subr.bf16.mxu0 0
        %2136 = vmatpush1.bf16.msra.mxu0 0
        %2137 = vmatprep.subr.bf16.mxu0 0
        %2138 = vmatpush1.bf16.msra.mxu0 0
        %2139 = vmatprep.mubr.bf16.mxu0 0
        %2140 = vmatmul.mubr.bf16.gmra.mrb[0].mxu0 %v2102
        %v2141 = vpop.f32.mrb[0].mxu0
        %v2142 = vadd.f32 0.0, %v2141
        %v2143 = vpop.f32.mrb[0].mxu0
        %v2144 = vpop.f32.mrb[0].mxu0
        %v2145 = vpop.f32.mrb[0].mxu0
        %2146 = vdwg.mxu0
        %2147 = vrot.lane.b32.xlu0 %v1817, 104
        %v2148 = vpop.permute.xlu0 %2147
        %2149 = vrot.lane.b32.xlu0 %v1817, 72
        %v2150 = vpop.permute.xlu0 %2149
        %v2152 = vsel %vm1042, %v2148, 0
        %v2155 = vsel %vm1042, %v2150, 0
        %2157 = vmatprep.subr.bf16.mxu0 0
        %2158 = vmatpush1.bf16.xpose.msra.mxu0 %v2155
        %2159 = vmatprep.subr.bf16.mxu0 0
        %2160 = vmatpush1.bf16.xpose.msra.mxu0 0
        %2161 = vmatprep.subr.bf16.mxu0 0
        %2162 = vmatpush1.bf16.xpose.msra.mxu0 0
        %2163 = vmatprep.subr.bf16.mxu0 0
        %2164 = vmatpush1.bf16.xpose.msra.mxu0 0
        %2165 = vmatprep.subr.bf16.mxu0 0
        %2166 = vmatpush1.bf16.xpose.msra.mxu0 0
        %2167 = vmatprep.subr.bf16.mxu0 0
        %2168 = vmatpush1.bf16.xpose.msra.mxu0 0
        %2169 = vmatprep.subr.bf16.mxu0 0
        %2170 = vmatpush1.bf16.xpose.msra.mxu0 0
        %2171 = vmatprep.subr.bf16.mxu0 0
        %2172 = vmatpush1.bf16.xpose.msra.mxu0 0
        %2173 = vmatprep.subr.bf16.mxu0 0
        %2174 = vmatpush1.bf16.xpose.msra.mxu0 0
        %2175 = vmatprep.subr.bf16.mxu0 0
        %2176 = vmatpush1.bf16.xpose.msra.mxu0 0
        %2177 = vmatprep.subr.bf16.mxu0 0
        %2178 = vmatpush1.bf16.xpose.msra.mxu0 0
        %2179 = vmatprep.subr.bf16.mxu0 0
        %2180 = vmatpush1.bf16.xpose.msra.mxu0 0
        %2181 = vmatprep.subr.bf16.mxu0 0
        %2182 = vmatpush1.bf16.xpose.msra.mxu0 0
        %2183 = vmatprep.subr.bf16.mxu0 0
        %2184 = vmatpush1.bf16.xpose.msra.mxu0 0
        %2185 = vmatprep.subr.bf16.mxu0 0
        %2186 = vmatpush1.bf16.xpose.msra.mxu0 0
        %2187 = vmatprep.subr.bf16.mxu0 0
        %2188 = vmatpush1.bf16.xpose.msra.mxu0 0
        %2189 = vmatprep.mubr.bf16.mxu0 0
        %2190 = vmatmul.mubr.bf16.gmra.mrb[0].mxu0 %v2152
        %v2191 = vpop.f32.mrb[0].mxu0
        %v2192 = vadd.f32 %v972, %v2191
        %v2193 = vpop.f32.mrb[0].mxu0
        %v2194 = vpop.f32.mrb[0].mxu0
        %v2195 = vpop.f32.mrb[0].mxu0
        %2196 = vdwg.mxu0
        %v2197 = vsel %vm1042, %v2192, -inf
        %2198 = vmax.xlane.f32.xlu0 %v2197
        %v2199 = vpop.xlane.xlu0 %2198
        %v2200 = vsub.f32 %v2192, %v2199
        %v2201 = vmul.f32 %v2200, 1.442695
        %v2202 = vpow.pop %v2201
        %v2203 = vsel %vm1042, %v2202, 0.0
        %2204 = vadd.xlane.f32.xlu0 %v2203
        %v2205 = vpop.xlane.xlu0 %2204
        %v2206 = vrcp.pop %v2205
        %v2207 = vmul.f32 %v2202, %v2206
        %v2208 = vpack.c.bf16 %v2207, %v2207
        %2209 = vrot.lane.b32.xlu0 %v1817, 40
        %v2210 = vpop.permute.xlu0 %2209
        %v2212 = vsel %vm1042, %v2208, 0
        %v2215 = vsel %vm1106, %v2210, 0
        %2217 = vmatprep.subr.bf16.mxu0 0
        %2218 = vmatpush1.bf16.msra.mxu0 %v2215
        %2219 = vmatprep.subr.bf16.mxu0 0
        %2220 = vmatpush1.bf16.msra.mxu0 0
        %2221 = vmatprep.subr.bf16.mxu0 0
        %2222 = vmatpush1.bf16.msra.mxu0 0
        %2223 = vmatprep.subr.bf16.mxu0 0
        %2224 = vmatpush1.bf16.msra.mxu0 0
        %2225 = vmatprep.subr.bf16.mxu0 0
        %2226 = vmatpush1.bf16.msra.mxu0 0
        %2227 = vmatprep.subr.bf16.mxu0 0
        %2228 = vmatpush1.bf16.msra.mxu0 0
        %2229 = vmatprep.subr.bf16.mxu0 0
        %2230 = vmatpush1.bf16.msra.mxu0 0
        %2231 = vmatprep.subr.bf16.mxu0 0
        %2232 = vmatpush1.bf16.msra.mxu0 0
        %2233 = vmatprep.subr.bf16.mxu0 0
        %2234 = vmatpush1.bf16.msra.mxu0 0
        %2235 = vmatprep.subr.bf16.mxu0 0
        %2236 = vmatpush1.bf16.msra.mxu0 0
        %2237 = vmatprep.subr.bf16.mxu0 0
        %2238 = vmatpush1.bf16.msra.mxu0 0
        %2239 = vmatprep.subr.bf16.mxu0 0
        %2240 = vmatpush1.bf16.msra.mxu0 0
        %2241 = vmatprep.subr.bf16.mxu0 0
        %2242 = vmatpush1.bf16.msra.mxu0 0
        %2243 = vmatprep.subr.bf16.mxu0 0
        %2244 = vmatpush1.bf16.msra.mxu0 0
        %2245 = vmatprep.subr.bf16.mxu0 0
        %2246 = vmatpush1.bf16.msra.mxu0 0
        %2247 = vmatprep.subr.bf16.mxu0 0
        %2248 = vmatpush1.bf16.msra.mxu0 0
        %2249 = vmatprep.mubr.bf16.mxu0 0
        %2250 = vmatmul.mubr.bf16.gmra.mrb[0].mxu0 %v2212
        %v2251 = vpop.f32.mrb[0].mxu0
        %v2252 = vadd.f32 0.0, %v2251
        %v2253 = vpop.f32.mrb[0].mxu0
        %v2254 = vpop.f32.mrb[0].mxu0
        %v2255 = vpop.f32.mrb[0].mxu0
        %2256 = vdwg.mxu0
        %2258 = vrot.lane.b32.xlu0 %v2032, 8
        %v2259 = vpop.permute.xlu0 %2258
        %2262 = vrot.lane.b32.xlu0 %v2142, 16
        %v2263 = vpop.permute.xlu0 %2262
        %2266 = vrot.lane.b32.xlu0 %v2252, 24
        %v2267 = vpop.permute.xlu0 %2266
        %v2269 = vsel %vm1042, %v1922, %v2259
        %v2270 = vsel %vm1493, %v2269, %v2263
        %v2271 = vsel %vm1495, %v2270, %v2267
        %v2272 = vpack.c.bf16 %v2271, %v2271
        %v2277 = vunpack.c.l.b16 %v1757
        %v2278 = vunpack.c.l.b16 %v1758
        %v2279 = vunpack.c.l.b16 %v1759
        %v2280 = vunpack.c.l.b16 %v1760
        %v2281 = vpack.c.b16 %v2278, %v2277
        %v2282 = vpack.c.b16 %v2280, %v2279
        %v2286 = vsel %vm947, %v2272, 0
        %2288 = vmatprep.subr.bf16.mxu0 0
        %2289 = vmatpush1.bf16.msra.mxu0 %v2281
        %2290 = vmatprep.subr.bf16.mxu0 0
        %2291 = vmatpush1.bf16.msra.mxu0 %v2282
        %2292 = vmatprep.subr.bf16.mxu0 0
        %2293 = vmatpush1.bf16.msra.mxu0 0
        %2294 = vmatprep.subr.bf16.mxu0 0
        %2295 = vmatpush1.bf16.msra.mxu0 0
        %2296 = vmatprep.subr.bf16.mxu0 0
        %2297 = vmatpush1.bf16.msra.mxu0 0
        %2298 = vmatprep.subr.bf16.mxu0 0
        %2299 = vmatpush1.bf16.msra.mxu0 0
        %2300 = vmatprep.subr.bf16.mxu0 0
        %2301 = vmatpush1.bf16.msra.mxu0 0
        %2302 = vmatprep.subr.bf16.mxu0 0
        %2303 = vmatpush1.bf16.msra.mxu0 0
        %2304 = vmatprep.subr.bf16.mxu0 0
        %2305 = vmatpush1.bf16.msra.mxu0 0
        %2306 = vmatprep.subr.bf16.mxu0 0
        %2307 = vmatpush1.bf16.msra.mxu0 0
        %2308 = vmatprep.subr.bf16.mxu0 0
        %2309 = vmatpush1.bf16.msra.mxu0 0
        %2310 = vmatprep.subr.bf16.mxu0 0
        %2311 = vmatpush1.bf16.msra.mxu0 0
        %2312 = vmatprep.subr.bf16.mxu0 0
        %2313 = vmatpush1.bf16.msra.mxu0 0
        %2314 = vmatprep.subr.bf16.mxu0 0
        %2315 = vmatpush1.bf16.msra.mxu0 0
        %2316 = vmatprep.subr.bf16.mxu0 0
        %2317 = vmatpush1.bf16.msra.mxu0 0
        %2318 = vmatprep.subr.bf16.mxu0 0
        %2319 = vmatpush1.bf16.msra.mxu0 0
        %2320 = vmatprep.mubr.bf16.mxu0 0
        %2321 = vmatmul.mubr.bf16.gmra.mrb[0].mxu0 %v2286
        %v2322 = vpop.f32.mrb[0].mxu0
        %v2323 = vadd.f32 %v1748, %v2322
        %v2324 = vpop.f32.mrb[0].mxu0
        %v2325 = vpop.f32.mrb[0].mxu0
        %v2326 = vpop.f32.mrb[0].mxu0
        %2327 = vdwg.mxu0
        %v2328 = vsel %vm947, %v2323, 0.0
        %2329 = vadd.xlane.f32.xlu0 %v2328
        %v2330 = vpop.xlane.xlu0 %2329
        %v2331 = vmul.f32 %v2330, %v951
        %v2332 = vsub.f32 %v2323, %v2331
        %v2333 = vmul.f32 %v2332, %v2332
        %v2334 = vsel %vm947, %v2333, 0.0
        %2335 = vadd.xlane.f32.xlu0 %v2334
        %v2336 = vpop.xlane.xlu0 %2335
        %v2337 = vmul.f32 %v2336, %v951
        %v2338 = vadd.f32 %v2337, 1e-06
        %v2339 = vrsqrt.pop %v2338
        %v2340 = vmul.f32 %v2332, %v2339
        %v2341 = vlaneseq
        %v2342 = vshrl.u32 %v2341, 7
        %v2343 = vsub.s32 0, %v2342
        %v2344 = vrot.slane %v1750, %v2343
        %v2345 = vmul.f32 %v2340, %v2344
        %v2346 = vlaneseq
        %v2347 = vshrl.u32 %v2346, 7
        %v2348 = vsub.s32 1, %v2347
        %v2349 = vrot.slane %v1750, %v2348
        %v2350 = vadd.f32 %v2345, %v2349
        %s2351 = scalar_lea.vmem %s11, 16
        %v2352 = vld [vmem:[%s2351] sm:$0xf]
        %v2353 = vld [vmem:[%s2351 + $0x4] sm:$0xf]
        %v2354 = vld [vmem:[%s2351 + $0x8] sm:$0xf]
        %v2355 = vld [vmem:[%s2351 + $0xc] sm:$0xf]
        %s2356 = scalar_lea.vmem %s12, 1
        %v2357 = vld [vmem:[%s2356] sm:$0x1]
        %s2358 = scalar_lea.vmem %s13, 32
        %v2359 = vld [vmem:[%s2358] sm:$0xf]
        %v2360 = vld [vmem:[%s2358 + $0x4] sm:$0xf]
        %v2361 = vld [vmem:[%s2358 + $0x8] sm:$0xf]
        %v2362 = vld [vmem:[%s2358 + $0xc] sm:$0xf]
        %v2363 = vld [vmem:[%s2358 + $0x10] sm:$0xf]
        %v2364 = vld [vmem:[%s2358 + $0x14] sm:$0xf]
        %v2365 = vld [vmem:[%s2358 + $0x18] sm:$0xf]
        %v2366 = vld [vmem:[%s2358 + $0x1c] sm:$0xf]
        %v2367 = vpack.c.bf16 %v2350, %v2350
        %v2369 = vlaneseq
        %v2370 = vshrl.u32 %v2369, 7
        %v2371 = vsub.s32 0, %v2370
        %v2372 = vrot.slane %v2357, %v2371
        %v2378 = vunpack.c.l.b16 %v2352
        %v2379 = vunpack.c.l.b16 %v2353
        %v2380 = vunpack.c.l.b16 %v2354
        %v2381 = vunpack.c.l.b16 %v2355
        %v2382 = vpack.c.b16 %v2379, %v2378
        %v2383 = vpack.c.b16 %v2381, %v2380
        %v2387 = vsel %vm947, %v2367, 0
        %2389 = vmatprep.subr.bf16.mxu0 0
        %2390 = vmatpush1.bf16.msra.mxu0 %v2382
        %2391 = vmatprep.subr.bf16.mxu0 0
        %2392 = vmatpush1.bf16.msra.mxu0 %v2383
        %2393 = vmatprep.subr.bf16.mxu0 0
        %2394 = vmatpush1.bf16.msra.mxu0 0
        %2395 = vmatprep.subr.bf16.mxu0 0
        %2396 = vmatpush1.bf16.msra.mxu0 0
        %2397 = vmatprep.subr.bf16.mxu0 0
        %2398 = vmatpush1.bf16.msra.mxu0 0
        %2399 = vmatprep.subr.bf16.mxu0 0
        %2400 = vmatpush1.bf16.msra.mxu0 0
        %2401 = vmatprep.subr.bf16.mxu0 0
        %2402 = vmatpush1.bf16.msra.mxu0 0
        %2403 = vmatprep.subr.bf16.mxu0 0
        %2404 = vmatpush1.bf16.msra.mxu0 0
        %2405 = vmatprep.subr.bf16.mxu0 0
        %2406 = vmatpush1.bf16.msra.mxu0 0
        %2407 = vmatprep.subr.bf16.mxu0 0
        %2408 = vmatpush1.bf16.msra.mxu0 0
        %2409 = vmatprep.subr.bf16.mxu0 0
        %2410 = vmatpush1.bf16.msra.mxu0 0
        %2411 = vmatprep.subr.bf16.mxu0 0
        %2412 = vmatpush1.bf16.msra.mxu0 0
        %2413 = vmatprep.subr.bf16.mxu0 0
        %2414 = vmatpush1.bf16.msra.mxu0 0
        %2415 = vmatprep.subr.bf16.mxu0 0
        %2416 = vmatpush1.bf16.msra.mxu0 0
        %2417 = vmatprep.subr.bf16.mxu0 0
        %2418 = vmatpush1.bf16.msra.mxu0 0
        %2419 = vmatprep.subr.bf16.mxu0 0
        %2420 = vmatpush1.bf16.msra.mxu0 0
        %2421 = vmatprep.mubr.bf16.mxu0 0
        %2422 = vmatmul.mubr.bf16.gmra.mrb[0].mxu0 %v2387
        %v2423 = vpop.f32.mrb[0].mxu0
        %v2424 = vadd.f32 %v2372, %v2423
        %v2425 = vpop.f32.mrb[0].mxu0
        %v2426 = vpop.f32.mrb[0].mxu0
        %v2427 = vpop.f32.mrb[0].mxu0
        %2428 = vdwg.mxu0
        %v2429 = vmax.f32 %v2424, 0.0
        %v2430 = vpack.c.bf16 %v2429, %v2429
        %v2431 = vlaneseq
        %v2432 = vshrl.u32 %v2431, 7
        %v2433 = vsub.s32 2, %v2432
        %v2434 = vrot.slane %v1750, %v2433
        %v2443 = vunpack.c.l.b16 %v2359
        %v2444 = vunpack.c.l.b16 %v2360
        %v2445 = vunpack.c.l.b16 %v2361
        %v2446 = vunpack.c.l.b16 %v2362
        %v2447 = vunpack.c.l.b16 %v2363
        %v2448 = vunpack.c.l.b16 %v2364
        %v2449 = vunpack.c.l.b16 %v2365
        %v2450 = vunpack.c.l.b16 %v2366
        %v2451 = vpack.c.b16 %v2444, %v2443
        %v2452 = vpack.c.b16 %v2446, %v2445
        %v2453 = vpack.c.b16 %v2448, %v2447
        %v2454 = vpack.c.b16 %v2450, %v2449
        %v2460 = vsel %vm1681, %v2430, 0
        %2462 = vmatprep.subr.bf16.mxu0 0
        %2463 = vmatpush1.bf16.msra.mxu0 %v2451
        %2464 = vmatprep.subr.bf16.mxu0 0
        %2465 = vmatpush1.bf16.msra.mxu0 %v2452
        %2466 = vmatprep.subr.bf16.mxu0 0
        %2467 = vmatpush1.bf16.msra.mxu0 %v2453
        %2468 = vmatprep.subr.bf16.mxu0 0
        %2469 = vmatpush1.bf16.msra.mxu0 %v2454
        %2470 = vmatprep.subr.bf16.mxu0 0
        %2471 = vmatpush1.bf16.msra.mxu0 0
        %2472 = vmatprep.subr.bf16.mxu0 0
        %2473 = vmatpush1.bf16.msra.mxu0 0
        %2474 = vmatprep.subr.bf16.mxu0 0
        %2475 = vmatpush1.bf16.msra.mxu0 0
        %2476 = vmatprep.subr.bf16.mxu0 0
        %2477 = vmatpush1.bf16.msra.mxu0 0
        %2478 = vmatprep.subr.bf16.mxu0 0
        %2479 = vmatpush1.bf16.msra.mxu0 0
        %2480 = vmatprep.subr.bf16.mxu0 0
        %2481 = vmatpush1.bf16.msra.mxu0 0
        %2482 = vmatprep.subr.bf16.mxu0 0
        %2483 = vmatpush1.bf16.msra.mxu0 0
        %2484 = vmatprep.subr.bf16.mxu0 0
        %2485 = vmatpush1.bf16.msra.mxu0 0
        %2486 = vmatprep.subr.bf16.mxu0 0
        %2487 = vmatpush1.bf16.msra.mxu0 0
        %2488 = vmatprep.subr.bf16.mxu0 0
        %2489 = vmatpush1.bf16.msra.mxu0 0
        %2490 = vmatprep.subr.bf16.mxu0 0
        %2491 = vmatpush1.bf16.msra.mxu0 0
        %2492 = vmatprep.subr.bf16.mxu0 0
        %2493 = vmatpush1.bf16.msra.mxu0 0
        %2494 = vmatprep.mubr.bf16.mxu0 0
        %2495 = vmatmul.mubr.bf16.gmra.mrb[0].mxu0 %v2460
        %v2496 = vpop.f32.mrb[0].mxu0
        %v2497 = vadd.f32 %v2434, %v2496
        %v2498 = vpop.f32.mrb[0].mxu0
        %v2499 = vpop.f32.mrb[0].mxu0
        %v2500 = vpop.f32.mrb[0].mxu0
        %2501 = vdwg.mxu0
        %v2502 = vadd.f32 %v2497, %v2350
        %v2503 = vsel %vm947, %v2502, 0.0
        %2504 = vadd.xlane.f32.xlu0 %v2503
        %v2505 = vpop.xlane.xlu0 %2504
        %v2506 = vmul.f32 %v2505, %v951
        %v2507 = vsub.f32 %v2502, %v2506
        %v2508 = vmul.f32 %v2507, %v2507
        %v2509 = vsel %vm947, %v2508, 0.0
        %2510 = vadd.xlane.f32.xlu0 %v2509
        %v2511 = vpop.xlane.xlu0 %2510
        %v2512 = vmul.f32 %v2511, %v951
        %v2513 = vadd.f32 %v2512, 1e-06
        %v2514 = vrsqrt.pop %v2513
        %v2515 = vmul.f32 %v2507, %v2514
        %v2516 = vlaneseq
        %v2517 = vshrl.u32 %v2516, 7
        %v2518 = vsub.s32 3, %v2517
        %v2519 = vrot.slane %v1750, %v2518
        %v2520 = vmul.f32 %v2515, %v2519
        %v2521 = vlaneseq
        %v2522 = vshrl.u32 %v2521, 7
        %v2523 = vsub.s32 4, %v2522
        %v2524 = vrot.slane %v1750, %v2523
        %v2525 = vadd.f32 %v2520, %v2524
        %v2526 = vpack.c.bf16 %v2525, %v2525
        %v2527 = vld [vmem:[%s934] sm:$0xff]
        %v2528 = vld [vmem:[%s930] sm:$0xff]
        %v2529 = vpack.c.bf16 %v2528, %v2528
        %v2530 = vld [vmem:[%s16] sm:$0xf]
        %v2531 = vld [vmem:[%s16 + $0x4] sm:$0x1]
        %v2532 = vld [vmem:[%s17] sm:$0x1]
        %v2534 = vlaneseq
        %v2535 = vshrl.u32 %v2534, 7
        %v2536 = vsub.s32 0, %v2535
        %v2537 = vrot.slane %v2532, %v2536
        %v2541 = vunpack.c.l.b16 %v2530
        %v2542 = vunpack.c.l.b16 %v2531
        %v2543 = vpack.c.b16 %v2542, %v2541
        %vm2544 = vcmask 80896
        %v2546 = vsel %vm2544, %v2529, 0
        %vm2548 = vcmask 1044480
        %v2550 = vsel %vm2548, %v2543, 0
        %2552 = vmatprep.subr.bf16.mxu0 0
        %2553 = vmatpush1.bf16.msra.mxu0 %v2550
        %2554 = vmatprep.subr.bf16.mxu0 0
        %2555 = vmatpush1.bf16.msra.mxu0 0
        %2556 = vmatprep.subr.bf16.mxu0 0
        %2557 = vmatpush1.bf16.msra.mxu0 0
        %2558 = vmatprep.subr.bf16.mxu0 0
        %2559 = vmatpush1.bf16.msra.mxu0 0
        %2560 = vmatprep.subr.bf16.mxu0 0
        %2561 = vmatpush1.bf16.msra.mxu0 0
        %2562 = vmatprep.subr.bf16.mxu0 0
        %2563 = vmatpush1.bf16.msra.mxu0 0
        %2564 = vmatprep.subr.bf16.mxu0 0
        %2565 = vmatpush1.bf16.msra.mxu0 0
        %2566 = vmatprep.subr.bf16.mxu0 0
        %2567 = vmatpush1.bf16.msra.mxu0 0
        %2568 = vmatprep.subr.bf16.mxu0 0
        %2569 = vmatpush1.bf16.msra.mxu0 0
        %2570 = vmatprep.subr.bf16.mxu0 0
        %2571 = vmatpush1.bf16.msra.mxu0 0
        %2572 = vmatprep.subr.bf16.mxu0 0
        %2573 = vmatpush1.bf16.msra.mxu0 0
        %2574 = vmatprep.subr.bf16.mxu0 0
        %2575 = vmatpush1.bf16.msra.mxu0 0
        %2576 = vmatprep.subr.bf16.mxu0 0
        %2577 = vmatpush1.bf16.msra.mxu0 0
        %2578 = vmatprep.subr.bf16.mxu0 0
        %2579 = vmatpush1.bf16.msra.mxu0 0
        %2580 = vmatprep.subr.bf16.mxu0 0
        %2581 = vmatpush1.bf16.msra.mxu0 0
        %2582 = vmatprep.subr.bf16.mxu0 0
        %2583 = vmatpush1.bf16.msra.mxu0 0
        %2584 = vmatprep.mubr.bf16.mxu0 0
        %2585 = vmatmul.mubr.bf16.gmra.mrb[0].mxu0 %v2546
        %v2586 = vpop.f32.mrb[0].mxu0
        %v2587 = vadd.f32 %v2537, %v2586
        %v2588 = vpop.f32.mrb[0].mxu0
        %v2589 = vpop.f32.mrb[0].mxu0
        %v2590 = vpop.f32.mrb[0].mxu0
        %2591 = vdwg.mxu0
        %v2592 = vld [vmem:[%s926] sm:$0xff]
        %v2593 = vsub.f32 1.0, %v2527
        %2595 = vset.pattern.permute.xlu0 0
        %2596 = vperm.xlu0 %2595, %v2593
        %v2597 = vpop.permute.xlu0 %2596
        %v2599 = vmul.f32 %v2592, %v2597
        %2601 = vset.pattern.permute.xlu0 0
        %2602 = vperm.xlu0 %2601, %v2527
        %v2603 = vpop.permute.xlu0 %2602
        %v2605 = vmul.f32 %v2587, %v2603
        %v2606 = vadd.f32 %v2599, %v2605
        %v2607 = vld [vmem:[%s5] sm:$0xff]
        %v2608 = vadd.f32 %v2606, %v2607
        %v2609 = vld [vmem:[%s15] sm:$0x1]
        %v2610 = vld [vmem:[%s15 + $0x1] sm:$0x1]
        %v2611 = vsel %vm947, %v2608, 0.0
        %2612 = vadd.xlane.f32.xlu0 %v2611
        %v2613 = vpop.xlane.xlu0 %2612
        %v2614 = vmul.f32 %v2613, %v951
        %v2615 = vsub.f32 %v2608, %v2614
        %v2616 = vmul.f32 %v2615, %v2615
        %v2617 = vsel %vm947, %v2616, 0.0
        %2618 = vadd.xlane.f32.xlu0 %v2617
        %v2619 = vpop.xlane.xlu0 %2618
        %v2620 = vmul.f32 %v2619, %v951
        %v2621 = vadd.f32 %v2620, 1e-06
        %v2622 = vrsqrt.pop %v2621
        %v2623 = vmul.f32 %v2615, %v2622
        %v2624 = vlaneseq
        %v2625 = vshrl.u32 %v2624, 7
        %v2626 = vsub.s32 0, %v2625
        %v2627 = vrot.slane %v2609, %v2626
        %v2628 = vmul.f32 %v2623, %v2627
        %v2629 = vlaneseq
        %v2630 = vshrl.u32 %v2629, 7
        %v2631 = vsub.s32 0, %v2630
        %v2632 = vrot.slane %v2610, %v2631
        %v2633 = vadd.f32 %v2628, %v2632
        %v2634 = vld [vmem:[%s938] sm:$0xff]
        %v2635 = vld [vmem:[%s942] sm:$0xff]
        %v2636 = vld [vmem:[%s26] sm:$0x7f]
        %v2637 = vld [vmem:[%s18] sm:$0xf]
        %v2638 = vld [vmem:[%s18 + $0x4] sm:$0xf]
        %v2639 = vld [vmem:[%s18 + $0x8] sm:$0xf]
        %v2640 = vld [vmem:[%s18 + $0xc] sm:$0xf]
        %v2641 = vld [vmem:[%s19] sm:$0xf]
        %v2642 = vld [vmem:[%s19 + $0x4] sm:$0xf]
        %v2643 = vld [vmem:[%s19 + $0x8] sm:$0xf]
        %v2644 = vld [vmem:[%s19 + $0xc] sm:$0xf]
        %v2645 = vpack.c.bf16 %v2633, %v2633
        %v2650 = vunpack.c.l.b16 %v2637
        %v2651 = vunpack.c.l.b16 %v2638
        %v2652 = vunpack.c.l.b16 %v2639
        %v2653 = vunpack.c.l.b16 %v2640
        %v2654 = vpack.c.b16 %v2651, %v2650
        %v2655 = vpack.c.b16 %v2653, %v2652
        %v2659 = vsel %vm947, %v2645, 0
        %2661 = vmatprep.subr.bf16.mxu0 0
        %2662 = vmatpush1.bf16.msra.mxu0 %v2654
        %2663 = vmatprep.subr.bf16.mxu0 0
        %2664 = vmatpush1.bf16.msra.mxu0 %v2655
        %2665 = vmatprep.subr.bf16.mxu0 0
        %2666 = vmatpush1.bf16.msra.mxu0 0
        %2667 = vmatprep.subr.bf16.mxu0 0
        %2668 = vmatpush1.bf16.msra.mxu0 0
        %2669 = vmatprep.subr.bf16.mxu0 0
        %2670 = vmatpush1.bf16.msra.mxu0 0
        %2671 = vmatprep.subr.bf16.mxu0 0
        %2672 = vmatpush1.bf16.msra.mxu0 0
        %2673 = vmatprep.subr.bf16.mxu0 0
        %2674 = vmatpush1.bf16.msra.mxu0 0
        %2675 = vmatprep.subr.bf16.mxu0 0
        %2676 = vmatpush1.bf16.msra.mxu0 0
        %2677 = vmatprep.subr.bf16.mxu0 0
        %2678 = vmatpush1.bf16.msra.mxu0 0
        %2679 = vmatprep.subr.bf16.mxu0 0
        %2680 = vmatpush1.bf16.msra.mxu0 0
        %2681 = vmatprep.subr.bf16.mxu0 0
        %2682 = vmatpush1.bf16.msra.mxu0 0
        %2683 = vmatprep.subr.bf16.mxu0 0
        %2684 = vmatpush1.bf16.msra.mxu0 0
        %2685 = vmatprep.subr.bf16.mxu0 0
        %2686 = vmatpush1.bf16.msra.mxu0 0
        %2687 = vmatprep.subr.bf16.mxu0 0
        %2688 = vmatpush1.bf16.msra.mxu0 0
        %2689 = vmatprep.subr.bf16.mxu0 0
        %2690 = vmatpush1.bf16.msra.mxu0 0
        %2691 = vmatprep.subr.bf16.mxu0 0
        %2692 = vmatpush1.bf16.msra.mxu0 0
        %2693 = vmatprep.mubr.bf16.mxu0 0
        %2694 = vmatmul.mubr.bf16.gmra.mrb[0].mxu0 %v2659
        %v2695 = vpop.f32.mrb[0].mxu0
        %v2696 = vadd.f32 0.0, %v2695
        %v2697 = vpop.f32.mrb[0].mxu0
        %v2698 = vpop.f32.mrb[0].mxu0
        %v2699 = vpop.f32.mrb[0].mxu0
        %2700 = vdwg.mxu0
        %v2701 = vpack.c.bf16 %v2696, %v2696
        %2703 = vrot.lane.b32.xlu0 %v2701, 96
        %v2704 = vpop.permute.xlu0 %2703
        %v2706 = vsel %vm1042, %v2701, 0
        %v2709 = vsel %vm1042, %v2704, 0
        %2711 = vmatprep.subr.bf16.mxu0 0
        %2712 = vmatpush1.bf16.xpose.msra.mxu0 %v2709
        %2713 = vmatprep.subr.bf16.mxu0 0
        %2714 = vmatpush1.bf16.xpose.msra.mxu0 0
        %2715 = vmatprep.subr.bf16.mxu0 0
        %2716 = vmatpush1.bf16.xpose.msra.mxu0 0
        %2717 = vmatprep.subr.bf16.mxu0 0
        %2718 = vmatpush1.bf16.xpose.msra.mxu0 0
        %2719 = vmatprep.subr.bf16.mxu0 0
        %2720 = vmatpush1.bf16.xpose.msra.mxu0 0
        %2721 = vmatprep.subr.bf16.mxu0 0
        %2722 = vmatpush1.bf16.xpose.msra.mxu0 0
        %2723 = vmatprep.subr.bf16.mxu0 0
        %2724 = vmatpush1.bf16.xpose.msra.mxu0 0
        %2725 = vmatprep.subr.bf16.mxu0 0
        %2726 = vmatpush1.bf16.xpose.msra.mxu0 0
        %2727 = vmatprep.subr.bf16.mxu0 0
        %2728 = vmatpush1.bf16.xpose.msra.mxu0 0
        %2729 = vmatprep.subr.bf16.mxu0 0
        %2730 = vmatpush1.bf16.xpose.msra.mxu0 0
        %2731 = vmatprep.subr.bf16.mxu0 0
        %2732 = vmatpush1.bf16.xpose.msra.mxu0 0
        %2733 = vmatprep.subr.bf16.mxu0 0
        %2734 = vmatpush1.bf16.xpose.msra.mxu0 0
        %2735 = vmatprep.subr.bf16.mxu0 0
        %2736 = vmatpush1.bf16.xpose.msra.mxu0 0
        %2737 = vmatprep.subr.bf16.mxu0 0
        %2738 = vmatpush1.bf16.xpose.msra.mxu0 0
        %2739 = vmatprep.subr.bf16.mxu0 0
        %2740 = vmatpush1.bf16.xpose.msra.mxu0 0
        %2741 = vmatprep.subr.bf16.mxu0 0
        %2742 = vmatpush1.bf16.xpose.msra.mxu0 0
        %2743 = vmatprep.mubr.bf16.mxu0 0
        %2744 = vmatmul.mubr.bf16.gmra.mrb[0].mxu0 %v2706
        %v2745 = vpop.f32.mrb[0].mxu0
        %v2746 = vadd.f32 %v2634, %v2745
        %v2747 = vpop.f32.mrb[0].mxu0
        %v2748 = vpop.f32.mrb[0].mxu0
        %v2749 = vpop.f32.mrb[0].mxu0
        %2750 = vdwg.mxu0
        %v2751 = vsel %vm1042, %v2746, -inf
        %2752 = vmax.xlane.f32.xlu0 %v2751
        %v2753 = vpop.xlane.xlu0 %2752
        %v2754 = vsub.f32 %v2746, %v2753
        %v2755 = vmul.f32 %v2754, 1.442695
        %v2756 = vpow.pop %v2755
        %v2757 = vsel %vm1042, %v2756, 0.0
        %2758 = vadd.xlane.f32.xlu0 %v2757
        %v2759 = vpop.xlane.xlu0 %2758
        %v2760 = vrcp.pop %v2759
        %v2761 = vmul.f32 %v2756, %v2760
        %v2762 = vpack.c.bf16 %v2761, %v2761
        %2763 = vrot.lane.b32.xlu0 %v2701, 64
        %v2764 = vpop.permute.xlu0 %2763
        %v2766 = vsel %vm1042, %v2762, 0
        %v2769 = vsel %vm1106, %v2764, 0
        %2771 = vmatprep.subr.bf16.mxu0 0
        %2772 = vmatpush1.bf16.msra.mxu0 %v2769
        %2773 = vmatprep.subr.bf16.mxu0 0
        %2774 = vmatpush1.bf16.msra.mxu0 0
        %2775 = vmatprep.subr.bf16.mxu0 0
        %2776 = vmatpush1.bf16.msra.mxu0 0
        %2777 = vmatprep.subr.bf16.mxu0 0
        %2778 = vmatpush1.bf16.msra.mxu0 0
        %2779 = vmatprep.subr.bf16.mxu0 0
        %2780 = vmatpush1.bf16.msra.mxu0 0
        %2781 = vmatprep.subr.bf16.mxu0 0
        %2782 = vmatpush1.bf16.msra.mxu0 0
        %2783 = vmatprep.subr.bf16.mxu0 0
        %2784 = vmatpush1.bf16.msra.mxu0 0
        %2785 = vmatprep.subr.bf16.mxu0 0
        %2786 = vmatpush1.bf16.msra.mxu0 0
        %2787 = vmatprep.subr.bf16.mxu0 0
        %2788 = vmatpush1.bf16.msra.mxu0 0
        %2789 = vmatprep.subr.bf16.mxu0 0
        %2790 = vmatpush1.bf16.msra.mxu0 0
        %2791 = vmatprep.subr.bf16.mxu0 0
        %2792 = vmatpush1.bf16.msra.mxu0 0
        %2793 = vmatprep.subr.bf16.mxu0 0
        %2794 = vmatpush1.bf16.msra.mxu0 0
        %2795 = vmatprep.subr.bf16.mxu0 0
        %2796 = vmatpush1.bf16.msra.mxu0 0
        %2797 = vmatprep.subr.bf16.mxu0 0
        %2798 = vmatpush1.bf16.msra.mxu0 0
        %2799 = vmatprep.subr.bf16.mxu0 0
        %2800 = vmatpush1.bf16.msra.mxu0 0
        %2801 = vmatprep.subr.bf16.mxu0 0
        %2802 = vmatpush1.bf16.msra.mxu0 0
        %2803 = vmatprep.mubr.bf16.mxu0 0
        %2804 = vmatmul.mubr.bf16.gmra.mrb[0].mxu0 %v2766
        %v2805 = vpop.f32.mrb[0].mxu0
        %v2806 = vadd.f32 0.0, %v2805
        %v2807 = vpop.f32.mrb[0].mxu0
        %v2808 = vpop.f32.mrb[0].mxu0
        %v2809 = vpop.f32.mrb[0].mxu0
        %2810 = vdwg.mxu0
        %2811 = vrot.lane.b32.xlu0 %v2701, 120
        %v2812 = vpop.permute.xlu0 %2811
        %2813 = vrot.lane.b32.xlu0 %v2701, 88
        %v2814 = vpop.permute.xlu0 %2813
        %v2816 = vsel %vm1042, %v2812, 0
        %v2819 = vsel %vm1042, %v2814, 0
        %2821 = vmatprep.subr.bf16.mxu0 0
        %2822 = vmatpush1.bf16.xpose.msra.mxu0 %v2819
        %2823 = vmatprep.subr.bf16.mxu0 0
        %2824 = vmatpush1.bf16.xpose.msra.mxu0 0
        %2825 = vmatprep.subr.bf16.mxu0 0
        %2826 = vmatpush1.bf16.xpose.msra.mxu0 0
        %2827 = vmatprep.subr.bf16.mxu0 0
        %2828 = vmatpush1.bf16.xpose.msra.mxu0 0
        %2829 = vmatprep.subr.bf16.mxu0 0
        %2830 = vmatpush1.bf16.xpose.msra.mxu0 0
        %2831 = vmatprep.subr.bf16.mxu0 0
        %2832 = vmatpush1.bf16.xpose.msra.mxu0 0
        %2833 = vmatprep.subr.bf16.mxu0 0
        %2834 = vmatpush1.bf16.xpose.msra.mxu0 0
        %2835 = vmatprep.subr.bf16.mxu0 0
        %2836 = vmatpush1.bf16.xpose.msra.mxu0 0
        %2837 = vmatprep.subr.bf16.mxu0 0
        %2838 = vmatpush1.bf16.xpose.msra.mxu0 0
        %2839 = vmatprep.subr.bf16.mxu0 0
        %2840 = vmatpush1.bf16.xpose.msra.mxu0 0
        %2841 = vmatprep.subr.bf16.mxu0 0
        %2842 = vmatpush1.bf16.xpose.msra.mxu0 0
        %2843 = vmatprep.subr.bf16.mxu0 0
        %2844 = vmatpush1.bf16.xpose.msra.mxu0 0
        %2845 = vmatprep.subr.bf16.mxu0 0
        %2846 = vmatpush1.bf16.xpose.msra.mxu0 0
        %2847 = vmatprep.subr.bf16.mxu0 0
        %2848 = vmatpush1.bf16.xpose.msra.mxu0 0
        %2849 = vmatprep.subr.bf16.mxu0 0
        %2850 = vmatpush1.bf16.xpose.msra.mxu0 0
        %2851 = vmatprep.subr.bf16.mxu0 0
        %2852 = vmatpush1.bf16.xpose.msra.mxu0 0
        %2853 = vmatprep.mubr.bf16.mxu0 0
        %2854 = vmatmul.mubr.bf16.gmra.mrb[0].mxu0 %v2816
        %v2855 = vpop.f32.mrb[0].mxu0
        %v2856 = vadd.f32 %v2634, %v2855
        %v2857 = vpop.f32.mrb[0].mxu0
        %v2858 = vpop.f32.mrb[0].mxu0
        %v2859 = vpop.f32.mrb[0].mxu0
        %2860 = vdwg.mxu0
        %v2861 = vsel %vm1042, %v2856, -inf
        %2862 = vmax.xlane.f32.xlu0 %v2861
        %v2863 = vpop.xlane.xlu0 %2862
        %v2864 = vsub.f32 %v2856, %v2863
        %v2865 = vmul.f32 %v2864, 1.442695
        %v2866 = vpow.pop %v2865
        %v2867 = vsel %vm1042, %v2866, 0.0
        %2868 = vadd.xlane.f32.xlu0 %v2867
        %v2869 = vpop.xlane.xlu0 %2868
        %v2870 = vrcp.pop %v2869
        %v2871 = vmul.f32 %v2866, %v2870
        %v2872 = vpack.c.bf16 %v2871, %v2871
        %2873 = vrot.lane.b32.xlu0 %v2701, 56
        %v2874 = vpop.permute.xlu0 %2873
        %v2876 = vsel %vm1042, %v2872, 0
        %v2879 = vsel %vm1106, %v2874, 0
        %2881 = vmatprep.subr.bf16.mxu0 0
        %2882 = vmatpush1.bf16.msra.mxu0 %v2879
        %2883 = vmatprep.subr.bf16.mxu0 0
        %2884 = vmatpush1.bf16.msra.mxu0 0
        %2885 = vmatprep.subr.bf16.mxu0 0
        %2886 = vmatpush1.bf16.msra.mxu0 0
        %2887 = vmatprep.subr.bf16.mxu0 0
        %2888 = vmatpush1.bf16.msra.mxu0 0
        %2889 = vmatprep.subr.bf16.mxu0 0
        %2890 = vmatpush1.bf16.msra.mxu0 0
        %2891 = vmatprep.subr.bf16.mxu0 0
        %2892 = vmatpush1.bf16.msra.mxu0 0
        %2893 = vmatprep.subr.bf16.mxu0 0
        %2894 = vmatpush1.bf16.msra.mxu0 0
        %2895 = vmatprep.subr.bf16.mxu0 0
        %2896 = vmatpush1.bf16.msra.mxu0 0
        %2897 = vmatprep.subr.bf16.mxu0 0
        %2898 = vmatpush1.bf16.msra.mxu0 0
        %2899 = vmatprep.subr.bf16.mxu0 0
        %2900 = vmatpush1.bf16.msra.mxu0 0
        %2901 = vmatprep.subr.bf16.mxu0 0
        %2902 = vmatpush1.bf16.msra.mxu0 0
        %2903 = vmatprep.subr.bf16.mxu0 0
        %2904 = vmatpush1.bf16.msra.mxu0 0
        %2905 = vmatprep.subr.bf16.mxu0 0
        %2906 = vmatpush1.bf16.msra.mxu0 0
        %2907 = vmatprep.subr.bf16.mxu0 0
        %2908 = vmatpush1.bf16.msra.mxu0 0
        %2909 = vmatprep.subr.bf16.mxu0 0
        %2910 = vmatpush1.bf16.msra.mxu0 0
        %2911 = vmatprep.subr.bf16.mxu0 0
        %2912 = vmatpush1.bf16.msra.mxu0 0
        %2913 = vmatprep.mubr.bf16.mxu0 0
        %2914 = vmatmul.mubr.bf16.gmra.mrb[0].mxu0 %v2876
        %v2915 = vpop.f32.mrb[0].mxu0
        %v2916 = vadd.f32 0.0, %v2915
        %v2917 = vpop.f32.mrb[0].mxu0
        %v2918 = vpop.f32.mrb[0].mxu0
        %v2919 = vpop.f32.mrb[0].mxu0
        %2920 = vdwg.mxu0
        %2921 = vrot.lane.b32.xlu0 %v2701, 112
        %v2922 = vpop.permute.xlu0 %2921
        %2923 = vrot.lane.b32.xlu0 %v2701, 80
        %v2924 = vpop.permute.xlu0 %2923
        %v2926 = vsel %vm1042, %v2922, 0
        %v2929 = vsel %vm1042, %v2924, 0
        %2931 = vmatprep.subr.bf16.mxu0 0
        %2932 = vmatpush1.bf16.xpose.msra.mxu0 %v2929
        %2933 = vmatprep.subr.bf16.mxu0 0
        %2934 = vmatpush1.bf16.xpose.msra.mxu0 0
        %2935 = vmatprep.subr.bf16.mxu0 0
        %2936 = vmatpush1.bf16.xpose.msra.mxu0 0
        %2937 = vmatprep.subr.bf16.mxu0 0
        %2938 = vmatpush1.bf16.xpose.msra.mxu0 0
        %2939 = vmatprep.subr.bf16.mxu0 0
        %2940 = vmatpush1.bf16.xpose.msra.mxu0 0
        %2941 = vmatprep.subr.bf16.mxu0 0
        %2942 = vmatpush1.bf16.xpose.msra.mxu0 0
        %2943 = vmatprep.subr.bf16.mxu0 0
        %2944 = vmatpush1.bf16.xpose.msra.mxu0 0
        %2945 = vmatprep.subr.bf16.mxu0 0
        %2946 = vmatpush1.bf16.xpose.msra.mxu0 0
        %2947 = vmatprep.subr.bf16.mxu0 0
        %2948 = vmatpush1.bf16.xpose.msra.mxu0 0
        %2949 = vmatprep.subr.bf16.mxu0 0
        %2950 = vmatpush1.bf16.xpose.msra.mxu0 0
        %2951 = vmatprep.subr.bf16.mxu0 0
        %2952 = vmatpush1.bf16.xpose.msra.mxu0 0
        %2953 = vmatprep.subr.bf16.mxu0 0
        %2954 = vmatpush1.bf16.xpose.msra.mxu0 0
        %2955 = vmatprep.subr.bf16.mxu0 0
        %2956 = vmatpush1.bf16.xpose.msra.mxu0 0
        %2957 = vmatprep.subr.bf16.mxu0 0
        %2958 = vmatpush1.bf16.xpose.msra.mxu0 0
        %2959 = vmatprep.subr.bf16.mxu0 0
        %2960 = vmatpush1.bf16.xpose.msra.mxu0 0
        %2961 = vmatprep.subr.bf16.mxu0 0
        %2962 = vmatpush1.bf16.xpose.msra.mxu0 0
        %2963 = vmatprep.mubr.bf16.mxu0 0
        %2964 = vmatmul.mubr.bf16.gmra.mrb[0].mxu0 %v2926
        %v2965 = vpop.f32.mrb[0].mxu0
        %v2966 = vadd.f32 %v2634, %v2965
        %v2967 = vpop.f32.mrb[0].mxu0
        %v2968 = vpop.f32.mrb[0].mxu0
        %v2969 = vpop.f32.mrb[0].mxu0
        %2970 = vdwg.mxu0
        %v2971 = vsel %vm1042, %v2966, -inf
        %2972 = vmax.xlane.f32.xlu0 %v2971
        %v2973 = vpop.xlane.xlu0 %2972
        %v2974 = vsub.f32 %v2966, %v2973
        %v2975 = vmul.f32 %v2974, 1.442695
        %v2976 = vpow.pop %v2975
        %v2977 = vsel %vm1042, %v2976, 0.0
        %2978 = vadd.xlane.f32.xlu0 %v2977
        %v2979 = vpop.xlane.xlu0 %2978
        %v2980 = vrcp.pop %v2979
        %v2981 = vmul.f32 %v2976, %v2980
        %v2982 = vpack.c.bf16 %v2981, %v2981
        %2983 = vrot.lane.b32.xlu0 %v2701, 48
        %v2984 = vpop.permute.xlu0 %2983
        %v2986 = vsel %vm1042, %v2982, 0
        %v2989 = vsel %vm1106, %v2984, 0
        %2991 = vmatprep.subr.bf16.mxu0 0
        %2992 = vmatpush1.bf16.msra.mxu0 %v2989
        %2993 = vmatprep.subr.bf16.mxu0 0
        %2994 = vmatpush1.bf16.msra.mxu0 0
        %2995 = vmatprep.subr.bf16.mxu0 0
        %2996 = vmatpush1.bf16.msra.mxu0 0
        %2997 = vmatprep.subr.bf16.mxu0 0
        %2998 = vmatpush1.bf16.msra.mxu0 0
        %2999 = vmatprep.subr.bf16.mxu0 0
        %3000 = vmatpush1.bf16.msra.mxu0 0
        %3001 = vmatprep.subr.bf16.mxu0 0
        %3002 = vmatpush1.bf16.msra.mxu0 0
        %3003 = vmatprep.subr.bf16.mxu0 0
        %3004 = vmatpush1.bf16.msra.mxu0 0
        %3005 = vmatprep.subr.bf16.mxu0 0
        %3006 = vmatpush1.bf16.msra.mxu0 0
        %3007 = vmatprep.subr.bf16.mxu0 0
        %3008 = vmatpush1.bf16.msra.mxu0 0
        %3009 = vmatprep.subr.bf16.mxu0 0
        %3010 = vmatpush1.bf16.msra.mxu0 0
        %3011 = vmatprep.subr.bf16.mxu0 0
        %3012 = vmatpush1.bf16.msra.mxu0 0
        %3013 = vmatprep.subr.bf16.mxu0 0
        %3014 = vmatpush1.bf16.msra.mxu0 0
        %3015 = vmatprep.subr.bf16.mxu0 0
        %3016 = vmatpush1.bf16.msra.mxu0 0
        %3017 = vmatprep.subr.bf16.mxu0 0
        %3018 = vmatpush1.bf16.msra.mxu0 0
        %3019 = vmatprep.subr.bf16.mxu0 0
        %3020 = vmatpush1.bf16.msra.mxu0 0
        %3021 = vmatprep.subr.bf16.mxu0 0
        %3022 = vmatpush1.bf16.msra.mxu0 0
        %3023 = vmatprep.mubr.bf16.mxu0 0
        %3024 = vmatmul.mubr.bf16.gmra.mrb[0].mxu0 %v2986
        %v3025 = vpop.f32.mrb[0].mxu0
        %v3026 = vadd.f32 0.0, %v3025
        %v3027 = vpop.f32.mrb[0].mxu0
        %v3028 = vpop.f32.mrb[0].mxu0
        %v3029 = vpop.f32.mrb[0].mxu0
        %3030 = vdwg.mxu0
        %3031 = vrot.lane.b32.xlu0 %v2701, 104
        %v3032 = vpop.permute.xlu0 %3031
        %3033 = vrot.lane.b32.xlu0 %v2701, 72
        %v3034 = vpop.permute.xlu0 %3033
        %v3036 = vsel %vm1042, %v3032, 0
        %v3039 = vsel %vm1042, %v3034, 0
        %3041 = vmatprep.subr.bf16.mxu0 0
        %3042 = vmatpush1.bf16.xpose.msra.mxu0 %v3039
        %3043 = vmatprep.subr.bf16.mxu0 0
        %3044 = vmatpush1.bf16.xpose.msra.mxu0 0
        %3045 = vmatprep.subr.bf16.mxu0 0
        %3046 = vmatpush1.bf16.xpose.msra.mxu0 0
        %3047 = vmatprep.subr.bf16.mxu0 0
        %3048 = vmatpush1.bf16.xpose.msra.mxu0 0
        %3049 = vmatprep.subr.bf16.mxu0 0
        %3050 = vmatpush1.bf16.xpose.msra.mxu0 0
        %3051 = vmatprep.subr.bf16.mxu0 0
        %3052 = vmatpush1.bf16.xpose.msra.mxu0 0
        %3053 = vmatprep.subr.bf16.mxu0 0
        %3054 = vmatpush1.bf16.xpose.msra.mxu0 0
        %3055 = vmatprep.subr.bf16.mxu0 0
        %3056 = vmatpush1.bf16.xpose.msra.mxu0 0
        %3057 = vmatprep.subr.bf16.mxu0 0
        %3058 = vmatpush1.bf16.xpose.msra.mxu0 0
        %3059 = vmatprep.subr.bf16.mxu0 0
        %3060 = vmatpush1.bf16.xpose.msra.mxu0 0
        %3061 = vmatprep.subr.bf16.mxu0 0
        %3062 = vmatpush1.bf16.xpose.msra.mxu0 0
        %3063 = vmatprep.subr.bf16.mxu0 0
        %3064 = vmatpush1.bf16.xpose.msra.mxu0 0
        %3065 = vmatprep.subr.bf16.mxu0 0
        %3066 = vmatpush1.bf16.xpose.msra.mxu0 0
        %3067 = vmatprep.subr.bf16.mxu0 0
        %3068 = vmatpush1.bf16.xpose.msra.mxu0 0
        %3069 = vmatprep.subr.bf16.mxu0 0
        %3070 = vmatpush1.bf16.xpose.msra.mxu0 0
        %3071 = vmatprep.subr.bf16.mxu0 0
        %3072 = vmatpush1.bf16.xpose.msra.mxu0 0
        %3073 = vmatprep.mubr.bf16.mxu0 0
        %3074 = vmatmul.mubr.bf16.gmra.mrb[0].mxu0 %v3036
        %v3075 = vpop.f32.mrb[0].mxu0
        %v3076 = vadd.f32 %v2634, %v3075
        %v3077 = vpop.f32.mrb[0].mxu0
        %v3078 = vpop.f32.mrb[0].mxu0
        %v3079 = vpop.f32.mrb[0].mxu0
        %3080 = vdwg.mxu0
        %v3081 = vsel %vm1042, %v3076, -inf
        %3082 = vmax.xlane.f32.xlu0 %v3081
        %v3083 = vpop.xlane.xlu0 %3082
        %v3084 = vsub.f32 %v3076, %v3083
        %v3085 = vmul.f32 %v3084, 1.442695
        %v3086 = vpow.pop %v3085
        %v3087 = vsel %vm1042, %v3086, 0.0
        %3088 = vadd.xlane.f32.xlu0 %v3087
        %v3089 = vpop.xlane.xlu0 %3088
        %v3090 = vrcp.pop %v3089
        %v3091 = vmul.f32 %v3086, %v3090
        %v3092 = vpack.c.bf16 %v3091, %v3091
        %3093 = vrot.lane.b32.xlu0 %v2701, 40
        %v3094 = vpop.permute.xlu0 %3093
        %v3096 = vsel %vm1042, %v3092, 0
        %v3099 = vsel %vm1106, %v3094, 0
        %3101 = vmatprep.subr.bf16.mxu0 0
        %3102 = vmatpush1.bf16.msra.mxu0 %v3099
        %3103 = vmatprep.subr.bf16.mxu0 0
        %3104 = vmatpush1.bf16.msra.mxu0 0
        %3105 = vmatprep.subr.bf16.mxu0 0
        %3106 = vmatpush1.bf16.msra.mxu0 0
        %3107 = vmatprep.subr.bf16.mxu0 0
        %3108 = vmatpush1.bf16.msra.mxu0 0
        %3109 = vmatprep.subr.bf16.mxu0 0
        %3110 = vmatpush1.bf16.msra.mxu0 0
        %3111 = vmatprep.subr.bf16.mxu0 0
        %3112 = vmatpush1.bf16.msra.mxu0 0
        %3113 = vmatprep.subr.bf16.mxu0 0
        %3114 = vmatpush1.bf16.msra.mxu0 0
        %3115 = vmatprep.subr.bf16.mxu0 0
        %3116 = vmatpush1.bf16.msra.mxu0 0
        %3117 = vmatprep.subr.bf16.mxu0 0
        %3118 = vmatpush1.bf16.msra.mxu0 0
        %3119 = vmatprep.subr.bf16.mxu0 0
        %3120 = vmatpush1.bf16.msra.mxu0 0
        %3121 = vmatprep.subr.bf16.mxu0 0
        %3122 = vmatpush1.bf16.msra.mxu0 0
        %3123 = vmatprep.subr.bf16.mxu0 0
        %3124 = vmatpush1.bf16.msra.mxu0 0
        %3125 = vmatprep.subr.bf16.mxu0 0
        %3126 = vmatpush1.bf16.msra.mxu0 0
        %3127 = vmatprep.subr.bf16.mxu0 0
        %3128 = vmatpush1.bf16.msra.mxu0 0
        %3129 = vmatprep.subr.bf16.mxu0 0
        %3130 = vmatpush1.bf16.msra.mxu0 0
        %3131 = vmatprep.subr.bf16.mxu0 0
        %3132 = vmatpush1.bf16.msra.mxu0 0
        %3133 = vmatprep.mubr.bf16.mxu0 0
        %3134 = vmatmul.mubr.bf16.gmra.mrb[0].mxu0 %v3096
        %v3135 = vpop.f32.mrb[0].mxu0
        %v3136 = vadd.f32 0.0, %v3135
        %v3137 = vpop.f32.mrb[0].mxu0
        %v3138 = vpop.f32.mrb[0].mxu0
        %v3139 = vpop.f32.mrb[0].mxu0
        %3140 = vdwg.mxu0
        %3142 = vrot.lane.b32.xlu0 %v2916, 8
        %v3143 = vpop.permute.xlu0 %3142
        %3146 = vrot.lane.b32.xlu0 %v3026, 16
        %v3147 = vpop.permute.xlu0 %3146
        %3150 = vrot.lane.b32.xlu0 %v3136, 24
        %v3151 = vpop.permute.xlu0 %3150
        %v3153 = vsel %vm1042, %v2806, %v3143
        %v3154 = vsel %vm1493, %v3153, %v3147
        %v3155 = vsel %vm1495, %v3154, %v3151
        %v3156 = vpack.c.bf16 %v3155, %v3155
        %v3161 = vunpack.c.l.b16 %v2641
        %v3162 = vunpack.c.l.b16 %v2642
        %v3163 = vunpack.c.l.b16 %v2643
        %v3164 = vunpack.c.l.b16 %v2644
        %v3165 = vpack.c.b16 %v3162, %v3161
        %v3166 = vpack.c.b16 %v3164, %v3163
        %v3170 = vsel %vm947, %v3156, 0
        %3172 = vmatprep.subr.bf16.mxu0 0
        %3173 = vmatpush1.bf16.msra.mxu0 %v3165
        %3174 = vmatprep.subr.bf16.mxu0 0
        %3175 = vmatpush1.bf16.msra.mxu0 %v3166
        %3176 = vmatprep.subr.bf16.mxu0 0
        %3177 = vmatpush1.bf16.msra.mxu0 0
        %3178 = vmatprep.subr.bf16.mxu0 0
        %3179 = vmatpush1.bf16.msra.mxu0 0
        %3180 = vmatprep.subr.bf16.mxu0 0
        %3181 = vmatpush1.bf16.msra.mxu0 0
        %3182 = vmatprep.subr.bf16.mxu0 0
        %3183 = vmatpush1.bf16.msra.mxu0 0
        %3184 = vmatprep.subr.bf16.mxu0 0
        %3185 = vmatpush1.bf16.msra.mxu0 0
        %3186 = vmatprep.subr.bf16.mxu0 0
        %3187 = vmatpush1.bf16.msra.mxu0 0
        %3188 = vmatprep.subr.bf16.mxu0 0
        %3189 = vmatpush1.bf16.msra.mxu0 0
        %3190 = vmatprep.subr.bf16.mxu0 0
        %3191 = vmatpush1.bf16.msra.mxu0 0
        %3192 = vmatprep.subr.bf16.mxu0 0
        %3193 = vmatpush1.bf16.msra.mxu0 0
        %3194 = vmatprep.subr.bf16.mxu0 0
        %3195 = vmatpush1.bf16.msra.mxu0 0
        %3196 = vmatprep.subr.bf16.mxu0 0
        %3197 = vmatpush1.bf16.msra.mxu0 0
        %3198 = vmatprep.subr.bf16.mxu0 0
        %3199 = vmatpush1.bf16.msra.mxu0 0
        %3200 = vmatprep.subr.bf16.mxu0 0
        %3201 = vmatpush1.bf16.msra.mxu0 0
        %3202 = vmatprep.subr.bf16.mxu0 0
        %3203 = vmatpush1.bf16.msra.mxu0 0
        %3204 = vmatprep.mubr.bf16.mxu0 0
        %3205 = vmatmul.mubr.bf16.gmra.mrb[0].mxu0 %v3170
        %v3206 = vpop.f32.mrb[0].mxu0
        %v3207 = vadd.f32 %v2633, %v3206
        %v3208 = vpop.f32.mrb[0].mxu0
        %v3209 = vpop.f32.mrb[0].mxu0
        %v3210 = vpop.f32.mrb[0].mxu0
        %3211 = vdwg.mxu0
        %v3212 = vsel %vm947, %v3207, 0.0
        %3213 = vadd.xlane.f32.xlu0 %v3212
        %v3214 = vpop.xlane.xlu0 %3213
        %v3215 = vmul.f32 %v3214, %v951
        %v3216 = vsub.f32 %v3207, %v3215
        %v3217 = vmul.f32 %v3216, %v3216
        %v3218 = vsel %vm947, %v3217, 0.0
        %3219 = vadd.xlane.f32.xlu0 %v3218
        %v3220 = vpop.xlane.xlu0 %3219
        %v3221 = vmul.f32 %v3220, %v951
        %v3222 = vadd.f32 %v3221, 1e-06
        %v3223 = vrsqrt.pop %v3222
        %v3224 = vmul.f32 %v3216, %v3223
        %v3225 = vlaneseq
        %v3226 = vshrl.u32 %v3225, 7
        %v3227 = vsub.s32 0, %v3226
        %v3228 = vrot.slane %v2636, %v3227
        %v3229 = vmul.f32 %v3224, %v3228
        %v3230 = vlaneseq
        %v3231 = vshrl.u32 %v3230, 7
        %v3232 = vsub.s32 1, %v3231
        %v3233 = vrot.slane %v2636, %v3232
        %v3234 = vadd.f32 %v3229, %v3233
        %v3235 = vld [vmem:[%s20] sm:$0xf]
        %v3236 = vld [vmem:[%s20 + $0x4] sm:$0xf]
        %v3237 = vld [vmem:[%s20 + $0x8] sm:$0xf]
        %v3238 = vld [vmem:[%s20 + $0xc] sm:$0xf]
        %v3239 = vld [vmem:[%s21] sm:$0xf]
        %v3240 = vld [vmem:[%s21 + $0x4] sm:$0xf]
        %v3241 = vld [vmem:[%s21 + $0x8] sm:$0xf]
        %v3242 = vld [vmem:[%s21 + $0xc] sm:$0xf]
        %v3243 = vld [vmem:[%s22] sm:$0xf]
        %v3244 = vld [vmem:[%s22 + $0x4] sm:$0xf]
        %v3245 = vld [vmem:[%s22 + $0x8] sm:$0xf]
        %v3246 = vld [vmem:[%s22 + $0xc] sm:$0xf]
        %v3247 = vpack.c.bf16 %v3234, %v3234
        %v3252 = vunpack.c.l.b16 %v3235
        %v3253 = vunpack.c.l.b16 %v3236
        %v3254 = vunpack.c.l.b16 %v3237
        %v3255 = vunpack.c.l.b16 %v3238
        %v3256 = vpack.c.b16 %v3253, %v3252
        %v3257 = vpack.c.b16 %v3255, %v3254
        %v3261 = vsel %vm947, %v3247, 0
        %3263 = vmatprep.subr.bf16.mxu0 0
        %3264 = vmatpush1.bf16.msra.mxu0 %v3256
        %3265 = vmatprep.subr.bf16.mxu0 0
        %3266 = vmatpush1.bf16.msra.mxu0 %v3257
        %3267 = vmatprep.subr.bf16.mxu0 0
        %3268 = vmatpush1.bf16.msra.mxu0 0
        %3269 = vmatprep.subr.bf16.mxu0 0
        %3270 = vmatpush1.bf16.msra.mxu0 0
        %3271 = vmatprep.subr.bf16.mxu0 0
        %3272 = vmatpush1.bf16.msra.mxu0 0
        %3273 = vmatprep.subr.bf16.mxu0 0
        %3274 = vmatpush1.bf16.msra.mxu0 0
        %3275 = vmatprep.subr.bf16.mxu0 0
        %3276 = vmatpush1.bf16.msra.mxu0 0
        %3277 = vmatprep.subr.bf16.mxu0 0
        %3278 = vmatpush1.bf16.msra.mxu0 0
        %3279 = vmatprep.subr.bf16.mxu0 0
        %3280 = vmatpush1.bf16.msra.mxu0 0
        %3281 = vmatprep.subr.bf16.mxu0 0
        %3282 = vmatpush1.bf16.msra.mxu0 0
        %3283 = vmatprep.subr.bf16.mxu0 0
        %3284 = vmatpush1.bf16.msra.mxu0 0
        %3285 = vmatprep.subr.bf16.mxu0 0
        %3286 = vmatpush1.bf16.msra.mxu0 0
        %3287 = vmatprep.subr.bf16.mxu0 0
        %3288 = vmatpush1.bf16.msra.mxu0 0
        %3289 = vmatprep.subr.bf16.mxu0 0
        %3290 = vmatpush1.bf16.msra.mxu0 0
        %3291 = vmatprep.subr.bf16.mxu0 0
        %3292 = vmatpush1.bf16.msra.mxu0 0
        %3293 = vmatprep.subr.bf16.mxu0 0
        %3294 = vmatpush1.bf16.msra.mxu0 0
        %3295 = vmatprep.mubr.bf16.mxu0 0
        %3296 = vmatmul.mubr.bf16.gmra.mrb[0].mxu0 %v3261
        %v3297 = vpop.f32.mrb[0].mxu0
        %v3298 = vadd.f32 0.0, %v3297
        %v3299 = vpop.f32.mrb[0].mxu0
        %v3300 = vpop.f32.mrb[0].mxu0
        %v3301 = vpop.f32.mrb[0].mxu0
        %3302 = vdwg.mxu0
        %v3307 = vunpack.c.l.b16 %v3239
        %v3308 = vunpack.c.l.b16 %v3240
        %v3309 = vunpack.c.l.b16 %v3241
        %v3310 = vunpack.c.l.b16 %v3242
        %v3311 = vpack.c.b16 %v3308, %v3307
        %v3312 = vpack.c.b16 %v3310, %v3309
        %v3316 = vsel %vm947, %v2526, 0
        %3318 = vmatprep.subr.bf16.mxu0 0
        %3319 = vmatpush1.bf16.msra.mxu0 %v3311
        %3320 = vmatprep.subr.bf16.mxu0 0
        %3321 = vmatpush1.bf16.msra.mxu0 %v3312
        %3322 = vmatprep.subr.bf16.mxu0 0
        %3323 = vmatpush1.bf16.msra.mxu0 0
        %3324 = vmatprep.subr.bf16.mxu0 0
        %3325 = vmatpush1.bf16.msra.mxu0 0
        %3326 = vmatprep.subr.bf16.mxu0 0
        %3327 = vmatpush1.bf16.msra.mxu0 0
        %3328 = vmatprep.subr.bf16.mxu0 0
        %3329 = vmatpush1.bf16.msra.mxu0 0
        %3330 = vmatprep.subr.bf16.mxu0 0
        %3331 = vmatpush1.bf16.msra.mxu0 0
        %3332 = vmatprep.subr.bf16.mxu0 0
        %3333 = vmatpush1.bf16.msra.mxu0 0
        %3334 = vmatprep.subr.bf16.mxu0 0
        %3335 = vmatpush1.bf16.msra.mxu0 0
        %3336 = vmatprep.subr.bf16.mxu0 0
        %3337 = vmatpush1.bf16.msra.mxu0 0
        %3338 = vmatprep.subr.bf16.mxu0 0
        %3339 = vmatpush1.bf16.msra.mxu0 0
        %3340 = vmatprep.subr.bf16.mxu0 0
        %3341 = vmatpush1.bf16.msra.mxu0 0
        %3342 = vmatprep.subr.bf16.mxu0 0
        %3343 = vmatpush1.bf16.msra.mxu0 0
        %3344 = vmatprep.subr.bf16.mxu0 0
        %3345 = vmatpush1.bf16.msra.mxu0 0
        %3346 = vmatprep.subr.bf16.mxu0 0
        %3347 = vmatpush1.bf16.msra.mxu0 0
        %3348 = vmatprep.subr.bf16.mxu0 0
        %3349 = vmatpush1.bf16.msra.mxu0 0
        %3350 = vmatprep.mubr.bf16.mxu0 0
        %3351 = vmatmul.mubr.bf16.gmra.mrb[0].mxu0 %v3316
        %v3352 = vpop.f32.mrb[0].mxu0
        %v3353 = vadd.f32 0.0, %v3352
        %v3354 = vpop.f32.mrb[0].mxu0
        %v3355 = vpop.f32.mrb[0].mxu0
        %v3356 = vpop.f32.mrb[0].mxu0
        %3357 = vdwg.mxu0
        %v3358 = vpack.c.bf16 %v3298, %v3298
        %v3359 = vpack.c.bf16 %v3353, %v3353
        %v3361 = vsel %vm1042, %v3358, 0
        %v3364 = vsel %vm1042, %v3359, 0
        %3366 = vmatprep.subr.bf16.mxu0 0
        %3367 = vmatpush1.bf16.xpose.msra.mxu0 %v3364
        %3368 = vmatprep.subr.bf16.mxu0 0
        %3369 = vmatpush1.bf16.xpose.msra.mxu0 0
        %3370 = vmatprep.subr.bf16.mxu0 0
        %3371 = vmatpush1.bf16.xpose.msra.mxu0 0
        %3372 = vmatprep.subr.bf16.mxu0 0
        %3373 = vmatpush1.bf16.xpose.msra.mxu0 0
        %3374 = vmatprep.subr.bf16.mxu0 0
        %3375 = vmatpush1.bf16.xpose.msra.mxu0 0
        %3376 = vmatprep.subr.bf16.mxu0 0
        %3377 = vmatpush1.bf16.xpose.msra.mxu0 0
        %3378 = vmatprep.subr.bf16.mxu0 0
        %3379 = vmatpush1.bf16.xpose.msra.mxu0 0
        %3380 = vmatprep.subr.bf16.mxu0 0
        %3381 = vmatpush1.bf16.xpose.msra.mxu0 0
        %3382 = vmatprep.subr.bf16.mxu0 0
        %3383 = vmatpush1.bf16.xpose.msra.mxu0 0
        %3384 = vmatprep.subr.bf16.mxu0 0
        %3385 = vmatpush1.bf16.xpose.msra.mxu0 0
        %3386 = vmatprep.subr.bf16.mxu0 0
        %3387 = vmatpush1.bf16.xpose.msra.mxu0 0
        %3388 = vmatprep.subr.bf16.mxu0 0
        %3389 = vmatpush1.bf16.xpose.msra.mxu0 0
        %3390 = vmatprep.subr.bf16.mxu0 0
        %3391 = vmatpush1.bf16.xpose.msra.mxu0 0
        %3392 = vmatprep.subr.bf16.mxu0 0
        %3393 = vmatpush1.bf16.xpose.msra.mxu0 0
        %3394 = vmatprep.subr.bf16.mxu0 0
        %3395 = vmatpush1.bf16.xpose.msra.mxu0 0
        %3396 = vmatprep.subr.bf16.mxu0 0
        %3397 = vmatpush1.bf16.xpose.msra.mxu0 0
        %3398 = vmatprep.mubr.bf16.mxu0 0
        %3399 = vmatmul.mubr.bf16.gmra.mrb[0].mxu0 %v3361
        %v3400 = vpop.f32.mrb[0].mxu0
        %v3401 = vadd.f32 %v2635, %v3400
        %v3402 = vpop.f32.mrb[0].mxu0
        %v3403 = vpop.f32.mrb[0].mxu0
        %v3404 = vpop.f32.mrb[0].mxu0
        %3405 = vdwg.mxu0
        %v3406 = vsel %vm1042, %v3401, -inf
        %3407 = vmax.xlane.f32.xlu0 %v3406
        %v3408 = vpop.xlane.xlu0 %3407
        %v3409 = vsub.f32 %v3401, %v3408
        %v3410 = vmul.f32 %v3409, 1.442695
        %v3411 = vpow.pop %v3410
        %v3412 = vsel %vm1042, %v3411, 0.0
        %3413 = vadd.xlane.f32.xlu0 %v3412
        %v3414 = vpop.xlane.xlu0 %3413
        %v3415 = vrcp.pop %v3414
        %v3416 = vmul.f32 %v3411, %v3415
        %v3417 = vpack.c.bf16 %v3416, %v3416
        %3419 = vrot.lane.b32.xlu0 %v3359, 96
        %v3420 = vpop.permute.xlu0 %3419
        %v3422 = vsel %vm1042, %v3417, 0
        %v3425 = vsel %vm1106, %v3420, 0
        %3427 = vmatprep.subr.bf16.mxu0 0
        %3428 = vmatpush1.bf16.msra.mxu0 %v3425
        %3429 = vmatprep.subr.bf16.mxu0 0
        %3430 = vmatpush1.bf16.msra.mxu0 0
        %3431 = vmatprep.subr.bf16.mxu0 0
        %3432 = vmatpush1.bf16.msra.mxu0 0
        %3433 = vmatprep.subr.bf16.mxu0 0
        %3434 = vmatpush1.bf16.msra.mxu0 0
        %3435 = vmatprep.subr.bf16.mxu0 0
        %3436 = vmatpush1.bf16.msra.mxu0 0
        %3437 = vmatprep.subr.bf16.mxu0 0
        %3438 = vmatpush1.bf16.msra.mxu0 0
        %3439 = vmatprep.subr.bf16.mxu0 0
        %3440 = vmatpush1.bf16.msra.mxu0 0
        %3441 = vmatprep.subr.bf16.mxu0 0
        %3442 = vmatpush1.bf16.msra.mxu0 0
        %3443 = vmatprep.subr.bf16.mxu0 0
        %3444 = vmatpush1.bf16.msra.mxu0 0
        %3445 = vmatprep.subr.bf16.mxu0 0
        %3446 = vmatpush1.bf16.msra.mxu0 0
        %3447 = vmatprep.subr.bf16.mxu0 0
        %3448 = vmatpush1.bf16.msra.mxu0 0
        %3449 = vmatprep.subr.bf16.mxu0 0
        %3450 = vmatpush1.bf16.msra.mxu0 0
        %3451 = vmatprep.subr.bf16.mxu0 0
        %3452 = vmatpush1.bf16.msra.mxu0 0
        %3453 = vmatprep.subr.bf16.mxu0 0
        %3454 = vmatpush1.bf16.msra.mxu0 0
        %3455 = vmatprep.subr.bf16.mxu0 0
        %3456 = vmatpush1.bf16.msra.mxu0 0
        %3457 = vmatprep.subr.bf16.mxu0 0
        %3458 = vmatpush1.bf16.msra.mxu0 0
        %3459 = vmatprep.mubr.bf16.mxu0 0
        %3460 = vmatmul.mubr.bf16.gmra.mrb[0].mxu0 %v3422
        %v3461 = vpop.f32.mrb[0].mxu0
        %v3462 = vadd.f32 0.0, %v3461
        %v3463 = vpop.f32.mrb[0].mxu0
        %v3464 = vpop.f32.mrb[0].mxu0
        %v3465 = vpop.f32.mrb[0].mxu0
        %3466 = vdwg.mxu0
        %3468 = vrot.lane.b32.xlu0 %v3358, 120
        %v3469 = vpop.permute.xlu0 %3468
        %3470 = vrot.lane.b32.xlu0 %v3359, 120
        %v3471 = vpop.permute.xlu0 %3470
        %v3473 = vsel %vm1042, %v3469, 0
        %v3476 = vsel %vm1042, %v3471, 0
        %3478 = vmatprep.subr.bf16.mxu0 0
        %3479 = vmatpush1.bf16.xpose.msra.mxu0 %v3476
        %3480 = vmatprep.subr.bf16.mxu0 0
        %3481 = vmatpush1.bf16.xpose.msra.mxu0 0
        %3482 = vmatprep.subr.bf16.mxu0 0
        %3483 = vmatpush1.bf16.xpose.msra.mxu0 0
        %3484 = vmatprep.subr.bf16.mxu0 0
        %3485 = vmatpush1.bf16.xpose.msra.mxu0 0
        %3486 = vmatprep.subr.bf16.mxu0 0
        %3487 = vmatpush1.bf16.xpose.msra.mxu0 0
        %3488 = vmatprep.subr.bf16.mxu0 0
        %3489 = vmatpush1.bf16.xpose.msra.mxu0 0
        %3490 = vmatprep.subr.bf16.mxu0 0
        %3491 = vmatpush1.bf16.xpose.msra.mxu0 0
        %3492 = vmatprep.subr.bf16.mxu0 0
        %3493 = vmatpush1.bf16.xpose.msra.mxu0 0
        %3494 = vmatprep.subr.bf16.mxu0 0
        %3495 = vmatpush1.bf16.xpose.msra.mxu0 0
        %3496 = vmatprep.subr.bf16.mxu0 0
        %3497 = vmatpush1.bf16.xpose.msra.mxu0 0
        %3498 = vmatprep.subr.bf16.mxu0 0
        %3499 = vmatpush1.bf16.xpose.msra.mxu0 0
        %3500 = vmatprep.subr.bf16.mxu0 0
        %3501 = vmatpush1.bf16.xpose.msra.mxu0 0
        %3502 = vmatprep.subr.bf16.mxu0 0
        %3503 = vmatpush1.bf16.xpose.msra.mxu0 0
        %3504 = vmatprep.subr.bf16.mxu0 0
        %3505 = vmatpush1.bf16.xpose.msra.mxu0 0
        %3506 = vmatprep.subr.bf16.mxu0 0
        %3507 = vmatpush1.bf16.xpose.msra.mxu0 0
        %3508 = vmatprep.subr.bf16.mxu0 0
        %3509 = vmatpush1.bf16.xpose.msra.mxu0 0
        %3510 = vmatprep.mubr.bf16.mxu0 0
        %3511 = vmatmul.mubr.bf16.gmra.mrb[0].mxu0 %v3473
        %v3512 = vpop.f32.mrb[0].mxu0
        %v3513 = vadd.f32 %v2635, %v3512
        %v3514 = vpop.f32.mrb[0].mxu0
        %v3515 = vpop.f32.mrb[0].mxu0
        %v3516 = vpop.f32.mrb[0].mxu0
        %3517 = vdwg.mxu0
        %v3518 = vsel %vm1042, %v3513, -inf
        %3519 = vmax.xlane.f32.xlu0 %v3518
        %v3520 = vpop.xlane.xlu0 %3519
        %v3521 = vsub.f32 %v3513, %v3520
        %v3522 = vmul.f32 %v3521, 1.442695
        %v3523 = vpow.pop %v3522
        %v3524 = vsel %vm1042, %v3523, 0.0
        %3525 = vadd.xlane.f32.xlu0 %v3524
        %v3526 = vpop.xlane.xlu0 %3525
        %v3527 = vrcp.pop %v3526
        %v3528 = vmul.f32 %v3523, %v3527
        %v3529 = vpack.c.bf16 %v3528, %v3528
        %3530 = vrot.lane.b32.xlu0 %v3359, 88
        %v3531 = vpop.permute.xlu0 %3530
        %v3533 = vsel %vm1042, %v3529, 0
        %v3536 = vsel %vm1106, %v3531, 0
        %3538 = vmatprep.subr.bf16.mxu0 0
        %3539 = vmatpush1.bf16.msra.mxu0 %v3536
        %3540 = vmatprep.subr.bf16.mxu0 0
        %3541 = vmatpush1.bf16.msra.mxu0 0
        %3542 = vmatprep.subr.bf16.mxu0 0
        %3543 = vmatpush1.bf16.msra.mxu0 0
        %3544 = vmatprep.subr.bf16.mxu0 0
        %3545 = vmatpush1.bf16.msra.mxu0 0
        %3546 = vmatprep.subr.bf16.mxu0 0
        %3547 = vmatpush1.bf16.msra.mxu0 0
        %3548 = vmatprep.subr.bf16.mxu0 0
        %3549 = vmatpush1.bf16.msra.mxu0 0
        %3550 = vmatprep.subr.bf16.mxu0 0
        %3551 = vmatpush1.bf16.msra.mxu0 0
        %3552 = vmatprep.subr.bf16.mxu0 0
        %3553 = vmatpush1.bf16.msra.mxu0 0
        %3554 = vmatprep.subr.bf16.mxu0 0
        %3555 = vmatpush1.bf16.msra.mxu0 0
        %3556 = vmatprep.subr.bf16.mxu0 0
        %3557 = vmatpush1.bf16.msra.mxu0 0
        %3558 = vmatprep.subr.bf16.mxu0 0
        %3559 = vmatpush1.bf16.msra.mxu0 0
        %3560 = vmatprep.subr.bf16.mxu0 0
        %3561 = vmatpush1.bf16.msra.mxu0 0
        %3562 = vmatprep.subr.bf16.mxu0 0
        %3563 = vmatpush1.bf16.msra.mxu0 0
        %3564 = vmatprep.subr.bf16.mxu0 0
        %3565 = vmatpush1.bf16.msra.mxu0 0
        %3566 = vmatprep.subr.bf16.mxu0 0
        %3567 = vmatpush1.bf16.msra.mxu0 0
        %3568 = vmatprep.subr.bf16.mxu0 0
        %3569 = vmatpush1.bf16.msra.mxu0 0
        %3570 = vmatprep.mubr.bf16.mxu0 0
        %3571 = vmatmul.mubr.bf16.gmra.mrb[0].mxu0 %v3533
        %v3572 = vpop.f32.mrb[0].mxu0
        %v3573 = vadd.f32 0.0, %v3572
        %v3574 = vpop.f32.mrb[0].mxu0
        %v3575 = vpop.f32.mrb[0].mxu0
        %v3576 = vpop.f32.mrb[0].mxu0
        %3577 = vdwg.mxu0
        %3578 = vrot.lane.b32.xlu0 %v3358, 112
        %v3579 = vpop.permute.xlu0 %3578
        %3580 = vrot.lane.b32.xlu0 %v3359, 112
        %v3581 = vpop.permute.xlu0 %3580
        %v3583 = vsel %vm1042, %v3579, 0
        %v3586 = vsel %vm1042, %v3581, 0
        %3588 = vmatprep.subr.bf16.mxu0 0
        %3589 = vmatpush1.bf16.xpose.msra.mxu0 %v3586
        %3590 = vmatprep.subr.bf16.mxu0 0
        %3591 = vmatpush1.bf16.xpose.msra.mxu0 0
        %3592 = vmatprep.subr.bf16.mxu0 0
        %3593 = vmatpush1.bf16.xpose.msra.mxu0 0
        %3594 = vmatprep.subr.bf16.mxu0 0
        %3595 = vmatpush1.bf16.xpose.msra.mxu0 0
        %3596 = vmatprep.subr.bf16.mxu0 0
        %3597 = vmatpush1.bf16.xpose.msra.mxu0 0
        %3598 = vmatprep.subr.bf16.mxu0 0
        %3599 = vmatpush1.bf16.xpose.msra.mxu0 0
        %3600 = vmatprep.subr.bf16.mxu0 0
        %3601 = vmatpush1.bf16.xpose.msra.mxu0 0
        %3602 = vmatprep.subr.bf16.mxu0 0
        %3603 = vmatpush1.bf16.xpose.msra.mxu0 0
        %3604 = vmatprep.subr.bf16.mxu0 0
        %3605 = vmatpush1.bf16.xpose.msra.mxu0 0
        %3606 = vmatprep.subr.bf16.mxu0 0
        %3607 = vmatpush1.bf16.xpose.msra.mxu0 0
        %3608 = vmatprep.subr.bf16.mxu0 0
        %3609 = vmatpush1.bf16.xpose.msra.mxu0 0
        %3610 = vmatprep.subr.bf16.mxu0 0
        %3611 = vmatpush1.bf16.xpose.msra.mxu0 0
        %3612 = vmatprep.subr.bf16.mxu0 0
        %3613 = vmatpush1.bf16.xpose.msra.mxu0 0
        %3614 = vmatprep.subr.bf16.mxu0 0
        %3615 = vmatpush1.bf16.xpose.msra.mxu0 0
        %3616 = vmatprep.subr.bf16.mxu0 0
        %3617 = vmatpush1.bf16.xpose.msra.mxu0 0
        %3618 = vmatprep.subr.bf16.mxu0 0
        %3619 = vmatpush1.bf16.xpose.msra.mxu0 0
        %3620 = vmatprep.mubr.bf16.mxu0 0
        %3621 = vmatmul.mubr.bf16.gmra.mrb[0].mxu0 %v3583
        %v3622 = vpop.f32.mrb[0].mxu0
        %v3623 = vadd.f32 %v2635, %v3622
        %v3624 = vpop.f32.mrb[0].mxu0
        %v3625 = vpop.f32.mrb[0].mxu0
        %v3626 = vpop.f32.mrb[0].mxu0
        %3627 = vdwg.mxu0
        %v3628 = vsel %vm1042, %v3623, -inf
        %3629 = vmax.xlane.f32.xlu0 %v3628
        %v3630 = vpop.xlane.xlu0 %3629
        %v3631 = vsub.f32 %v3623, %v3630
        %v3632 = vmul.f32 %v3631, 1.442695
        %v3633 = vpow.pop %v3632
        %v3634 = vsel %vm1042, %v3633, 0.0
        %3635 = vadd.xlane.f32.xlu0 %v3634
        %v3636 = vpop.xlane.xlu0 %3635
        %v3637 = vrcp.pop %v3636
        %v3638 = vmul.f32 %v3633, %v3637
        %v3639 = vpack.c.bf16 %v3638, %v3638
        %3640 = vrot.lane.b32.xlu0 %v3359, 80
        %v3641 = vpop.permute.xlu0 %3640
        %v3643 = vsel %vm1042, %v3639, 0
        %v3646 = vsel %vm1106, %v3641, 0
        %3648 = vmatprep.subr.bf16.mxu0 0
        %3649 = vmatpush1.bf16.msra.mxu0 %v3646
        %3650 = vmatprep.subr.bf16.mxu0 0
        %3651 = vmatpush1.bf16.msra.mxu0 0
        %3652 = vmatprep.subr.bf16.mxu0 0
        %3653 = vmatpush1.bf16.msra.mxu0 0
        %3654 = vmatprep.subr.bf16.mxu0 0
        %3655 = vmatpush1.bf16.msra.mxu0 0
        %3656 = vmatprep.subr.bf16.mxu0 0
        %3657 = vmatpush1.bf16.msra.mxu0 0
        %3658 = vmatprep.subr.bf16.mxu0 0
        %3659 = vmatpush1.bf16.msra.mxu0 0
        %3660 = vmatprep.subr.bf16.mxu0 0
        %3661 = vmatpush1.bf16.msra.mxu0 0
        %3662 = vmatprep.subr.bf16.mxu0 0
        %3663 = vmatpush1.bf16.msra.mxu0 0
        %3664 = vmatprep.subr.bf16.mxu0 0
        %3665 = vmatpush1.bf16.msra.mxu0 0
        %3666 = vmatprep.subr.bf16.mxu0 0
        %3667 = vmatpush1.bf16.msra.mxu0 0
        %3668 = vmatprep.subr.bf16.mxu0 0
        %3669 = vmatpush1.bf16.msra.mxu0 0
        %3670 = vmatprep.subr.bf16.mxu0 0
        %3671 = vmatpush1.bf16.msra.mxu0 0
        %3672 = vmatprep.subr.bf16.mxu0 0
        %3673 = vmatpush1.bf16.msra.mxu0 0
        %3674 = vmatprep.subr.bf16.mxu0 0
        %3675 = vmatpush1.bf16.msra.mxu0 0
        %3676 = vmatprep.subr.bf16.mxu0 0
        %3677 = vmatpush1.bf16.msra.mxu0 0
        %3678 = vmatprep.subr.bf16.mxu0 0
        %3679 = vmatpush1.bf16.msra.mxu0 0
        %3680 = vmatprep.mubr.bf16.mxu0 0
        %3681 = vmatmul.mubr.bf16.gmra.mrb[0].mxu0 %v3643
        %v3682 = vpop.f32.mrb[0].mxu0
        %v3683 = vadd.f32 0.0, %v3682
        %v3684 = vpop.f32.mrb[0].mxu0
        %v3685 = vpop.f32.mrb[0].mxu0
        %v3686 = vpop.f32.mrb[0].mxu0
        %3687 = vdwg.mxu0
        %3688 = vrot.lane.b32.xlu0 %v3358, 104
        %v3689 = vpop.permute.xlu0 %3688
        %3690 = vrot.lane.b32.xlu0 %v3359, 104
        %v3691 = vpop.permute.xlu0 %3690
        %v3693 = vsel %vm1042, %v3689, 0
        %v3696 = vsel %vm1042, %v3691, 0
        %3698 = vmatprep.subr.bf16.mxu0 0
        %3699 = vmatpush1.bf16.xpose.msra.mxu0 %v3696
        %3700 = vmatprep.subr.bf16.mxu0 0
        %3701 = vmatpush1.bf16.xpose.msra.mxu0 0
        %3702 = vmatprep.subr.bf16.mxu0 0
        %3703 = vmatpush1.bf16.xpose.msra.mxu0 0
        %3704 = vmatprep.subr.bf16.mxu0 0
        %3705 = vmatpush1.bf16.xpose.msra.mxu0 0
        %3706 = vmatprep.subr.bf16.mxu0 0
        %3707 = vmatpush1.bf16.xpose.msra.mxu0 0
        %3708 = vmatprep.subr.bf16.mxu0 0
        %3709 = vmatpush1.bf16.xpose.msra.mxu0 0
        %3710 = vmatprep.subr.bf16.mxu0 0
        %3711 = vmatpush1.bf16.xpose.msra.mxu0 0
        %3712 = vmatprep.subr.bf16.mxu0 0
        %3713 = vmatpush1.bf16.xpose.msra.mxu0 0
        %3714 = vmatprep.subr.bf16.mxu0 0
        %3715 = vmatpush1.bf16.xpose.msra.mxu0 0
        %3716 = vmatprep.subr.bf16.mxu0 0
        %3717 = vmatpush1.bf16.xpose.msra.mxu0 0
        %3718 = vmatprep.subr.bf16.mxu0 0
        %3719 = vmatpush1.bf16.xpose.msra.mxu0 0
        %3720 = vmatprep.subr.bf16.mxu0 0
        %3721 = vmatpush1.bf16.xpose.msra.mxu0 0
        %3722 = vmatprep.subr.bf16.mxu0 0
        %3723 = vmatpush1.bf16.xpose.msra.mxu0 0
        %3724 = vmatprep.subr.bf16.mxu0 0
        %3725 = vmatpush1.bf16.xpose.msra.mxu0 0
        %3726 = vmatprep.subr.bf16.mxu0 0
        %3727 = vmatpush1.bf16.xpose.msra.mxu0 0
        %3728 = vmatprep.subr.bf16.mxu0 0
        %3729 = vmatpush1.bf16.xpose.msra.mxu0 0
        %3730 = vmatprep.mubr.bf16.mxu0 0
        %3731 = vmatmul.mubr.bf16.gmra.mrb[0].mxu0 %v3693
        %v3732 = vpop.f32.mrb[0].mxu0
        %v3733 = vadd.f32 %v2635, %v3732
        %v3734 = vpop.f32.mrb[0].mxu0
        %v3735 = vpop.f32.mrb[0].mxu0
        %v3736 = vpop.f32.mrb[0].mxu0
        %3737 = vdwg.mxu0
        %v3738 = vsel %vm1042, %v3733, -inf
        %3739 = vmax.xlane.f32.xlu0 %v3738
        %v3740 = vpop.xlane.xlu0 %3739
        %v3741 = vsub.f32 %v3733, %v3740
        %v3742 = vmul.f32 %v3741, 1.442695
        %v3743 = vpow.pop %v3742
        %v3744 = vsel %vm1042, %v3743, 0.0
        %3745 = vadd.xlane.f32.xlu0 %v3744
        %v3746 = vpop.xlane.xlu0 %3745
        %v3747 = vrcp.pop %v3746
        %v3748 = vmul.f32 %v3743, %v3747
        %v3749 = vpack.c.bf16 %v3748, %v3748
        %3750 = vrot.lane.b32.xlu0 %v3359, 72
        %v3751 = vpop.permute.xlu0 %3750
        %v3753 = vsel %vm1042, %v3749, 0
        %v3756 = vsel %vm1106, %v3751, 0
        %3758 = vmatprep.subr.bf16.mxu0 0
        %3759 = vmatpush1.bf16.msra.mxu0 %v3756
        %3760 = vmatprep.subr.bf16.mxu0 0
        %3761 = vmatpush1.bf16.msra.mxu0 0
        %3762 = vmatprep.subr.bf16.mxu0 0
        %3763 = vmatpush1.bf16.msra.mxu0 0
        %3764 = vmatprep.subr.bf16.mxu0 0
        %3765 = vmatpush1.bf16.msra.mxu0 0
        %3766 = vmatprep.subr.bf16.mxu0 0
        %3767 = vmatpush1.bf16.msra.mxu0 0
        %3768 = vmatprep.subr.bf16.mxu0 0
        %3769 = vmatpush1.bf16.msra.mxu0 0
        %3770 = vmatprep.subr.bf16.mxu0 0
        %3771 = vmatpush1.bf16.msra.mxu0 0
        %3772 = vmatprep.subr.bf16.mxu0 0
        %3773 = vmatpush1.bf16.msra.mxu0 0
        %3774 = vmatprep.subr.bf16.mxu0 0
        %3775 = vmatpush1.bf16.msra.mxu0 0
        %3776 = vmatprep.subr.bf16.mxu0 0
        %3777 = vmatpush1.bf16.msra.mxu0 0
        %3778 = vmatprep.subr.bf16.mxu0 0
        %3779 = vmatpush1.bf16.msra.mxu0 0
        %3780 = vmatprep.subr.bf16.mxu0 0
        %3781 = vmatpush1.bf16.msra.mxu0 0
        %3782 = vmatprep.subr.bf16.mxu0 0
        %3783 = vmatpush1.bf16.msra.mxu0 0
        %3784 = vmatprep.subr.bf16.mxu0 0
        %3785 = vmatpush1.bf16.msra.mxu0 0
        %3786 = vmatprep.subr.bf16.mxu0 0
        %3787 = vmatpush1.bf16.msra.mxu0 0
        %3788 = vmatprep.subr.bf16.mxu0 0
        %3789 = vmatpush1.bf16.msra.mxu0 0
        %3790 = vmatprep.mubr.bf16.mxu0 0
        %3791 = vmatmul.mubr.bf16.gmra.mrb[0].mxu0 %v3753
        %v3792 = vpop.f32.mrb[0].mxu0
        %v3793 = vadd.f32 0.0, %v3792
        %v3794 = vpop.f32.mrb[0].mxu0
        %v3795 = vpop.f32.mrb[0].mxu0
        %v3796 = vpop.f32.mrb[0].mxu0
        %3797 = vdwg.mxu0
        %3799 = vrot.lane.b32.xlu0 %v3573, 8
        %v3800 = vpop.permute.xlu0 %3799
        %3803 = vrot.lane.b32.xlu0 %v3683, 16
        %v3804 = vpop.permute.xlu0 %3803
        %3807 = vrot.lane.b32.xlu0 %v3793, 24
        %v3808 = vpop.permute.xlu0 %3807
        %v3810 = vsel %vm1042, %v3462, %v3800
        %v3811 = vsel %vm1493, %v3810, %v3804
        %v3812 = vsel %vm1495, %v3811, %v3808
        %v3813 = vpack.c.bf16 %v3812, %v3812
        %v3818 = vunpack.c.l.b16 %v3243
        %v3819 = vunpack.c.l.b16 %v3244
        %v3820 = vunpack.c.l.b16 %v3245
        %v3821 = vunpack.c.l.b16 %v3246
        %v3822 = vpack.c.b16 %v3819, %v3818
        %v3823 = vpack.c.b16 %v3821, %v3820
        %v3827 = vsel %vm947, %v3813, 0
        %3829 = vmatprep.subr.bf16.mxu0 0
        %3830 = vmatpush1.bf16.msra.mxu0 %v3822
        %3831 = vmatprep.subr.bf16.mxu0 0
        %3832 = vmatpush1.bf16.msra.mxu0 %v3823
        %3833 = vmatprep.subr.bf16.mxu0 0
        %3834 = vmatpush1.bf16.msra.mxu0 0
        %3835 = vmatprep.subr.bf16.mxu0 0
        %3836 = vmatpush1.bf16.msra.mxu0 0
        %3837 = vmatprep.subr.bf16.mxu0 0
        %3838 = vmatpush1.bf16.msra.mxu0 0
        %3839 = vmatprep.subr.bf16.mxu0 0
        %3840 = vmatpush1.bf16.msra.mxu0 0
        %3841 = vmatprep.subr.bf16.mxu0 0
        %3842 = vmatpush1.bf16.msra.mxu0 0
        %3843 = vmatprep.subr.bf16.mxu0 0
        %3844 = vmatpush1.bf16.msra.mxu0 0
        %3845 = vmatprep.subr.bf16.mxu0 0
        %3846 = vmatpush1.bf16.msra.mxu0 0
        %3847 = vmatprep.subr.bf16.mxu0 0
        %3848 = vmatpush1.bf16.msra.mxu0 0
        %3849 = vmatprep.subr.bf16.mxu0 0
        %3850 = vmatpush1.bf16.msra.mxu0 0
        %3851 = vmatprep.subr.bf16.mxu0 0
        %3852 = vmatpush1.bf16.msra.mxu0 0
        %3853 = vmatprep.subr.bf16.mxu0 0
        %3854 = vmatpush1.bf16.msra.mxu0 0
        %3855 = vmatprep.subr.bf16.mxu0 0
        %3856 = vmatpush1.bf16.msra.mxu0 0
        %3857 = vmatprep.subr.bf16.mxu0 0
        %3858 = vmatpush1.bf16.msra.mxu0 0
        %3859 = vmatprep.subr.bf16.mxu0 0
        %3860 = vmatpush1.bf16.msra.mxu0 0
        %3861 = vmatprep.mubr.bf16.mxu0 0
        %3862 = vmatmul.mubr.bf16.gmra.mrb[0].mxu0 %v3827
        %v3863 = vpop.f32.mrb[0].mxu0
        %v3864 = vadd.f32 %v3234, %v3863
        %v3865 = vpop.f32.mrb[0].mxu0
        %v3866 = vpop.f32.mrb[0].mxu0
        %v3867 = vpop.f32.mrb[0].mxu0
        %3868 = vdwg.mxu0
        %v3869 = vsel %vm947, %v3864, 0.0
        %3870 = vadd.xlane.f32.xlu0 %v3869
        %v3871 = vpop.xlane.xlu0 %3870
        %v3872 = vmul.f32 %v3871, %v951
        %v3873 = vsub.f32 %v3864, %v3872
        %v3874 = vmul.f32 %v3873, %v3873
        %v3875 = vsel %vm947, %v3874, 0.0
        %3876 = vadd.xlane.f32.xlu0 %v3875
        %v3877 = vpop.xlane.xlu0 %3876
        %v3878 = vmul.f32 %v3877, %v951
        %v3879 = vadd.f32 %v3878, 1e-06
        %v3880 = vrsqrt.pop %v3879
        %v3881 = vmul.f32 %v3873, %v3880
        %v3882 = vlaneseq
        %v3883 = vshrl.u32 %v3882, 7
        %v3884 = vsub.s32 2, %v3883
        %v3885 = vrot.slane %v2636, %v3884
        %v3886 = vmul.f32 %v3881, %v3885
        %v3887 = vlaneseq
        %v3888 = vshrl.u32 %v3887, 7
        %v3889 = vsub.s32 3, %v3888
        %v3890 = vrot.slane %v2636, %v3889
        %v3891 = vadd.f32 %v3886, %v3890
        %v3892 = vld [vmem:[%s23] sm:$0xf]
        %v3893 = vld [vmem:[%s23 + $0x4] sm:$0xf]
        %v3894 = vld [vmem:[%s23 + $0x8] sm:$0xf]
        %v3895 = vld [vmem:[%s23 + $0xc] sm:$0xf]
        %v3896 = vld [vmem:[%s24] sm:$0x1]
        %v3897 = vld [vmem:[%s25] sm:$0xf]
        %v3898 = vld [vmem:[%s25 + $0x4] sm:$0xf]
        %v3899 = vld [vmem:[%s25 + $0x8] sm:$0xf]
        %v3900 = vld [vmem:[%s25 + $0xc] sm:$0xf]
        %v3901 = vld [vmem:[%s25 + $0x10] sm:$0xf]
        %v3902 = vld [vmem:[%s25 + $0x14] sm:$0xf]
        %v3903 = vld [vmem:[%s25 + $0x18] sm:$0xf]
        %v3904 = vld [vmem:[%s25 + $0x1c] sm:$0xf]
        %v3905 = vpack.c.bf16 %v3891, %v3891
        %v3907 = vlaneseq
        %v3908 = vshrl.u32 %v3907, 7
        %v3909 = vsub.s32 0, %v3908
        %v3910 = vrot.slane %v3896, %v3909
        %v3916 = vunpack.c.l.b16 %v3892
        %v3917 = vunpack.c.l.b16 %v3893
        %v3918 = vunpack.c.l.b16 %v3894
        %v3919 = vunpack.c.l.b16 %v3895
        %v3920 = vpack.c.b16 %v3917, %v3916
        %v3921 = vpack.c.b16 %v3919, %v3918
        %v3925 = vsel %vm947, %v3905, 0
        %3927 = vmatprep.subr.bf16.mxu0 0
        %3928 = vmatpush1.bf16.msra.mxu0 %v3920
        %3929 = vmatprep.subr.bf16.mxu0 0
        %3930 = vmatpush1.bf16.msra.mxu0 %v3921
        %3931 = vmatprep.subr.bf16.mxu0 0
        %3932 = vmatpush1.bf16.msra.mxu0 0
        %3933 = vmatprep.subr.bf16.mxu0 0
        %3934 = vmatpush1.bf16.msra.mxu0 0
        %3935 = vmatprep.subr.bf16.mxu0 0
        %3936 = vmatpush1.bf16.msra.mxu0 0
        %3937 = vmatprep.subr.bf16.mxu0 0
        %3938 = vmatpush1.bf16.msra.mxu0 0
        %3939 = vmatprep.subr.bf16.mxu0 0
        %3940 = vmatpush1.bf16.msra.mxu0 0
        %3941 = vmatprep.subr.bf16.mxu0 0
        %3942 = vmatpush1.bf16.msra.mxu0 0
        %3943 = vmatprep.subr.bf16.mxu0 0
        %3944 = vmatpush1.bf16.msra.mxu0 0
        %3945 = vmatprep.subr.bf16.mxu0 0
        %3946 = vmatpush1.bf16.msra.mxu0 0
        %3947 = vmatprep.subr.bf16.mxu0 0
        %3948 = vmatpush1.bf16.msra.mxu0 0
        %3949 = vmatprep.subr.bf16.mxu0 0
        %3950 = vmatpush1.bf16.msra.mxu0 0
        %3951 = vmatprep.subr.bf16.mxu0 0
        %3952 = vmatpush1.bf16.msra.mxu0 0
        %3953 = vmatprep.subr.bf16.mxu0 0
        %3954 = vmatpush1.bf16.msra.mxu0 0
        %3955 = vmatprep.subr.bf16.mxu0 0
        %3956 = vmatpush1.bf16.msra.mxu0 0
        %3957 = vmatprep.subr.bf16.mxu0 0
        %3958 = vmatpush1.bf16.msra.mxu0 0
        %3959 = vmatprep.mubr.bf16.mxu0 0
        %3960 = vmatmul.mubr.bf16.gmra.mrb[0].mxu0 %v3925
        %v3961 = vpop.f32.mrb[0].mxu0
        %v3962 = vadd.f32 %v3910, %v3961
        %v3963 = vpop.f32.mrb[0].mxu0
        %v3964 = vpop.f32.mrb[0].mxu0
        %v3965 = vpop.f32.mrb[0].mxu0
        %3966 = vdwg.mxu0
        %v3967 = vmax.f32 %v3962, 0.0
        %v3968 = vpack.c.bf16 %v3967, %v3967
        %v3969 = vlaneseq
        %v3970 = vshrl.u32 %v3969, 7
        %v3971 = vsub.s32 4, %v3970
        %v3972 = vrot.slane %v2636, %v3971
        %v3981 = vunpack.c.l.b16 %v3897
        %v3982 = vunpack.c.l.b16 %v3898
        %v3983 = vunpack.c.l.b16 %v3899
        %v3984 = vunpack.c.l.b16 %v3900
        %v3985 = vunpack.c.l.b16 %v3901
        %v3986 = vunpack.c.l.b16 %v3902
        %v3987 = vunpack.c.l.b16 %v3903
        %v3988 = vunpack.c.l.b16 %v3904
        %v3989 = vpack.c.b16 %v3982, %v3981
        %v3990 = vpack.c.b16 %v3984, %v3983
        %v3991 = vpack.c.b16 %v3986, %v3985
        %v3992 = vpack.c.b16 %v3988, %v3987
        %v3998 = vsel %vm1681, %v3968, 0
        %4000 = vmatprep.subr.bf16.mxu0 0
        %4001 = vmatpush1.bf16.msra.mxu0 %v3989
        %4002 = vmatprep.subr.bf16.mxu0 0
        %4003 = vmatpush1.bf16.msra.mxu0 %v3990
        %4004 = vmatprep.subr.bf16.mxu0 0
        %4005 = vmatpush1.bf16.msra.mxu0 %v3991
        %4006 = vmatprep.subr.bf16.mxu0 0
        %4007 = vmatpush1.bf16.msra.mxu0 %v3992
        %4008 = vmatprep.subr.bf16.mxu0 0
        %4009 = vmatpush1.bf16.msra.mxu0 0
        %4010 = vmatprep.subr.bf16.mxu0 0
        %4011 = vmatpush1.bf16.msra.mxu0 0
        %4012 = vmatprep.subr.bf16.mxu0 0
        %4013 = vmatpush1.bf16.msra.mxu0 0
        %4014 = vmatprep.subr.bf16.mxu0 0
        %4015 = vmatpush1.bf16.msra.mxu0 0
        %4016 = vmatprep.subr.bf16.mxu0 0
        %4017 = vmatpush1.bf16.msra.mxu0 0
        %4018 = vmatprep.subr.bf16.mxu0 0
        %4019 = vmatpush1.bf16.msra.mxu0 0
        %4020 = vmatprep.subr.bf16.mxu0 0
        %4021 = vmatpush1.bf16.msra.mxu0 0
        %4022 = vmatprep.subr.bf16.mxu0 0
        %4023 = vmatpush1.bf16.msra.mxu0 0
        %4024 = vmatprep.subr.bf16.mxu0 0
        %4025 = vmatpush1.bf16.msra.mxu0 0
        %4026 = vmatprep.subr.bf16.mxu0 0
        %4027 = vmatpush1.bf16.msra.mxu0 0
        %4028 = vmatprep.subr.bf16.mxu0 0
        %4029 = vmatpush1.bf16.msra.mxu0 0
        %4030 = vmatprep.subr.bf16.mxu0 0
        %4031 = vmatpush1.bf16.msra.mxu0 0
        %4032 = vmatprep.mubr.bf16.mxu0 0
        %4033 = vmatmul.mubr.bf16.gmra.mrb[0].mxu0 %v3998
        %v4034 = vpop.f32.mrb[0].mxu0
        %v4035 = vadd.f32 %v3972, %v4034
        %v4036 = vpop.f32.mrb[0].mxu0
        %v4037 = vpop.f32.mrb[0].mxu0
        %v4038 = vpop.f32.mrb[0].mxu0
        %4039 = vdwg.mxu0
        %v4040 = vadd.f32 %v4035, %v3891
        %v4041 = vsel %vm947, %v4040, 0.0
        %4042 = vadd.xlane.f32.xlu0 %v4041
        %v4043 = vpop.xlane.xlu0 %4042
        %v4044 = vmul.f32 %v4043, %v951
        %v4045 = vsub.f32 %v4040, %v4044
        %v4046 = vmul.f32 %v4045, %v4045
        %v4047 = vsel %vm947, %v4046, 0.0
        %4048 = vadd.xlane.f32.xlu0 %v4047
        %v4049 = vpop.xlane.xlu0 %4048
        %v4050 = vmul.f32 %v4049, %v951
        %v4051 = vadd.f32 %v4050, 1e-06
        %v4052 = vrsqrt.pop %v4051
        %v4053 = vmul.f32 %v4045, %v4052
        %v4054 = vlaneseq
        %v4055 = vshrl.u32 %v4054, 7
        %v4056 = vsub.s32 5, %v4055
        %v4057 = vrot.slane %v2636, %v4056
        %v4058 = vmul.f32 %v4053, %v4057
        %v4059 = vlaneseq
        %v4060 = vshrl.u32 %v4059, 7
        %v4061 = vsub.s32 6, %v4060
        %v4062 = vrot.slane %v2636, %v4061
        %v4063 = vadd.f32 %v4058, %v4062
        %s4064 = scalar_lea.vmem %s26, 8
        %v4065 = vld [vmem:[%s4064] sm:$0x7f]
        %s4066 = scalar_lea.vmem %s18, 16
        %v4067 = vld [vmem:[%s4066] sm:$0xf]
        %v4068 = vld [vmem:[%s4066 + $0x4] sm:$0xf]
        %v4069 = vld [vmem:[%s4066 + $0x8] sm:$0xf]
        %v4070 = vld [vmem:[%s4066 + $0xc] sm:$0xf]
        %s4071 = scalar_lea.vmem %s19, 16
        %v4072 = vld [vmem:[%s4071] sm:$0xf]
        %v4073 = vld [vmem:[%s4071 + $0x4] sm:$0xf]
        %v4074 = vld [vmem:[%s4071 + $0x8] sm:$0xf]
        %v4075 = vld [vmem:[%s4071 + $0xc] sm:$0xf]
        %v4076 = vpack.c.bf16 %v4063, %v4063
        %v4081 = vunpack.c.l.b16 %v4067
        %v4082 = vunpack.c.l.b16 %v4068
        %v4083 = vunpack.c.l.b16 %v4069
        %v4084 = vunpack.c.l.b16 %v4070
        %v4085 = vpack.c.b16 %v4082, %v4081
        %v4086 = vpack.c.b16 %v4084, %v4083
        %v4090 = vsel %vm947, %v4076, 0
        %4092 = vmatprep.subr.bf16.mxu0 0
        %4093 = vmatpush1.bf16.msra.mxu0 %v4085
        %4094 = vmatprep.subr.bf16.mxu0 0
        %4095 = vmatpush1.bf16.msra.mxu0 %v4086
        %4096 = vmatprep.subr.bf16.mxu0 0
        %4097 = vmatpush1.bf16.msra.mxu0 0
        %4098 = vmatprep.subr.bf16.mxu0 0
        %4099 = vmatpush1.bf16.msra.mxu0 0
        %4100 = vmatprep.subr.bf16.mxu0 0
        %4101 = vmatpush1.bf16.msra.mxu0 0
        %4102 = vmatprep.subr.bf16.mxu0 0
        %4103 = vmatpush1.bf16.msra.mxu0 0
        %4104 = vmatprep.subr.bf16.mxu0 0
        %4105 = vmatpush1.bf16.msra.mxu0 0
        %4106 = vmatprep.subr.bf16.mxu0 0
        %4107 = vmatpush1.bf16.msra.mxu0 0
        %4108 = vmatprep.subr.bf16.mxu0 0
        %4109 = vmatpush1.bf16.msra.mxu0 0
        %4110 = vmatprep.subr.bf16.mxu0 0
        %4111 = vmatpush1.bf16.msra.mxu0 0
        %4112 = vmatprep.subr.bf16.mxu0 0
        %4113 = vmatpush1.bf16.msra.mxu0 0
        %4114 = vmatprep.subr.bf16.mxu0 0
        %4115 = vmatpush1.bf16.msra.mxu0 0
        %4116 = vmatprep.subr.bf16.mxu0 0
        %4117 = vmatpush1.bf16.msra.mxu0 0
        %4118 = vmatprep.subr.bf16.mxu0 0
        %4119 = vmatpush1.bf16.msra.mxu0 0
        %4120 = vmatprep.subr.bf16.mxu0 0
        %4121 = vmatpush1.bf16.msra.mxu0 0
        %4122 = vmatprep.subr.bf16.mxu0 0
        %4123 = vmatpush1.bf16.msra.mxu0 0
        %4124 = vmatprep.mubr.bf16.mxu0 0
        %4125 = vmatmul.mubr.bf16.gmra.mrb[0].mxu0 %v4090
        %v4126 = vpop.f32.mrb[0].mxu0
        %v4127 = vadd.f32 0.0, %v4126
        %v4128 = vpop.f32.mrb[0].mxu0
        %v4129 = vpop.f32.mrb[0].mxu0
        %v4130 = vpop.f32.mrb[0].mxu0
        %4131 = vdwg.mxu0
        %v4132 = vpack.c.bf16 %v4127, %v4127
        %4134 = vrot.lane.b32.xlu0 %v4132, 96
        %v4135 = vpop.permute.xlu0 %4134
        %v4137 = vsel %vm1042, %v4132, 0
        %v4140 = vsel %vm1042, %v4135, 0
        %4142 = vmatprep.subr.bf16.mxu0 0
        %4143 = vmatpush1.bf16.xpose.msra.mxu0 %v4140
        %4144 = vmatprep.subr.bf16.mxu0 0
        %4145 = vmatpush1.bf16.xpose.msra.mxu0 0
        %4146 = vmatprep.subr.bf16.mxu0 0
        %4147 = vmatpush1.bf16.xpose.msra.mxu0 0
        %4148 = vmatprep.subr.bf16.mxu0 0
        %4149 = vmatpush1.bf16.xpose.msra.mxu0 0
        %4150 = vmatprep.subr.bf16.mxu0 0
        %4151 = vmatpush1.bf16.xpose.msra.mxu0 0
        %4152 = vmatprep.subr.bf16.mxu0 0
        %4153 = vmatpush1.bf16.xpose.msra.mxu0 0
        %4154 = vmatprep.subr.bf16.mxu0 0
        %4155 = vmatpush1.bf16.xpose.msra.mxu0 0
        %4156 = vmatprep.subr.bf16.mxu0 0
        %4157 = vmatpush1.bf16.xpose.msra.mxu0 0
        %4158 = vmatprep.subr.bf16.mxu0 0
        %4159 = vmatpush1.bf16.xpose.msra.mxu0 0
        %4160 = vmatprep.subr.bf16.mxu0 0
        %4161 = vmatpush1.bf16.xpose.msra.mxu0 0
        %4162 = vmatprep.subr.bf16.mxu0 0
        %4163 = vmatpush1.bf16.xpose.msra.mxu0 0
        %4164 = vmatprep.subr.bf16.mxu0 0
        %4165 = vmatpush1.bf16.xpose.msra.mxu0 0
        %4166 = vmatprep.subr.bf16.mxu0 0
        %4167 = vmatpush1.bf16.xpose.msra.mxu0 0
        %4168 = vmatprep.subr.bf16.mxu0 0
        %4169 = vmatpush1.bf16.xpose.msra.mxu0 0
        %4170 = vmatprep.subr.bf16.mxu0 0
        %4171 = vmatpush1.bf16.xpose.msra.mxu0 0
        %4172 = vmatprep.subr.bf16.mxu0 0
        %4173 = vmatpush1.bf16.xpose.msra.mxu0 0
        %4174 = vmatprep.mubr.bf16.mxu0 0
        %4175 = vmatmul.mubr.bf16.gmra.mrb[0].mxu0 %v4137
        %v4176 = vpop.f32.mrb[0].mxu0
        %v4177 = vadd.f32 %v2634, %v4176
        %v4178 = vpop.f32.mrb[0].mxu0
        %v4179 = vpop.f32.mrb[0].mxu0
        %v4180 = vpop.f32.mrb[0].mxu0
        %4181 = vdwg.mxu0
        %v4182 = vsel %vm1042, %v4177, -inf
        %4183 = vmax.xlane.f32.xlu0 %v4182
        %v4184 = vpop.xlane.xlu0 %4183
        %v4185 = vsub.f32 %v4177, %v4184
        %v4186 = vmul.f32 %v4185, 1.442695
        %v4187 = vpow.pop %v4186
        %v4188 = vsel %vm1042, %v4187, 0.0
        %4189 = vadd.xlane.f32.xlu0 %v4188
        %v4190 = vpop.xlane.xlu0 %4189
        %v4191 = vrcp.pop %v4190
        %v4192 = vmul.f32 %v4187, %v4191
        %v4193 = vpack.c.bf16 %v4192, %v4192
        %4194 = vrot.lane.b32.xlu0 %v4132, 64
        %v4195 = vpop.permute.xlu0 %4194
        %v4197 = vsel %vm1042, %v4193, 0
        %v4200 = vsel %vm1106, %v4195, 0
        %4202 = vmatprep.subr.bf16.mxu0 0
        %4203 = vmatpush1.bf16.msra.mxu0 %v4200
        %4204 = vmatprep.subr.bf16.mxu0 0
        %4205 = vmatpush1.bf16.msra.mxu0 0
        %4206 = vmatprep.subr.bf16.mxu0 0
        %4207 = vmatpush1.bf16.msra.mxu0 0
        %4208 = vmatprep.subr.bf16.mxu0 0
        %4209 = vmatpush1.bf16.msra.mxu0 0
        %4210 = vmatprep.subr.bf16.mxu0 0
        %4211 = vmatpush1.bf16.msra.mxu0 0
        %4212 = vmatprep.subr.bf16.mxu0 0
        %4213 = vmatpush1.bf16.msra.mxu0 0
        %4214 = vmatprep.subr.bf16.mxu0 0
        %4215 = vmatpush1.bf16.msra.mxu0 0
        %4216 = vmatprep.subr.bf16.mxu0 0
        %4217 = vmatpush1.bf16.msra.mxu0 0
        %4218 = vmatprep.subr.bf16.mxu0 0
        %4219 = vmatpush1.bf16.msra.mxu0 0
        %4220 = vmatprep.subr.bf16.mxu0 0
        %4221 = vmatpush1.bf16.msra.mxu0 0
        %4222 = vmatprep.subr.bf16.mxu0 0
        %4223 = vmatpush1.bf16.msra.mxu0 0
        %4224 = vmatprep.subr.bf16.mxu0 0
        %4225 = vmatpush1.bf16.msra.mxu0 0
        %4226 = vmatprep.subr.bf16.mxu0 0
        %4227 = vmatpush1.bf16.msra.mxu0 0
        %4228 = vmatprep.subr.bf16.mxu0 0
        %4229 = vmatpush1.bf16.msra.mxu0 0
        %4230 = vmatprep.subr.bf16.mxu0 0
        %4231 = vmatpush1.bf16.msra.mxu0 0
        %4232 = vmatprep.subr.bf16.mxu0 0
        %4233 = vmatpush1.bf16.msra.mxu0 0
        %4234 = vmatprep.mubr.bf16.mxu0 0
        %4235 = vmatmul.mubr.bf16.gmra.mrb[0].mxu0 %v4197
        %v4236 = vpop.f32.mrb[0].mxu0
        %v4237 = vadd.f32 0.0, %v4236
        %v4238 = vpop.f32.mrb[0].mxu0
        %v4239 = vpop.f32.mrb[0].mxu0
        %v4240 = vpop.f32.mrb[0].mxu0
        %4241 = vdwg.mxu0
        %4242 = vrot.lane.b32.xlu0 %v4132, 120
        %v4243 = vpop.permute.xlu0 %4242
        %4244 = vrot.lane.b32.xlu0 %v4132, 88
        %v4245 = vpop.permute.xlu0 %4244
        %v4247 = vsel %vm1042, %v4243, 0
        %v4250 = vsel %vm1042, %v4245, 0
        %4252 = vmatprep.subr.bf16.mxu0 0
        %4253 = vmatpush1.bf16.xpose.msra.mxu0 %v4250
        %4254 = vmatprep.subr.bf16.mxu0 0
        %4255 = vmatpush1.bf16.xpose.msra.mxu0 0
        %4256 = vmatprep.subr.bf16.mxu0 0
        %4257 = vmatpush1.bf16.xpose.msra.mxu0 0
        %4258 = vmatprep.subr.bf16.mxu0 0
        %4259 = vmatpush1.bf16.xpose.msra.mxu0 0
        %4260 = vmatprep.subr.bf16.mxu0 0
        %4261 = vmatpush1.bf16.xpose.msra.mxu0 0
        %4262 = vmatprep.subr.bf16.mxu0 0
        %4263 = vmatpush1.bf16.xpose.msra.mxu0 0
        %4264 = vmatprep.subr.bf16.mxu0 0
        %4265 = vmatpush1.bf16.xpose.msra.mxu0 0
        %4266 = vmatprep.subr.bf16.mxu0 0
        %4267 = vmatpush1.bf16.xpose.msra.mxu0 0
        %4268 = vmatprep.subr.bf16.mxu0 0
        %4269 = vmatpush1.bf16.xpose.msra.mxu0 0
        %4270 = vmatprep.subr.bf16.mxu0 0
        %4271 = vmatpush1.bf16.xpose.msra.mxu0 0
        %4272 = vmatprep.subr.bf16.mxu0 0
        %4273 = vmatpush1.bf16.xpose.msra.mxu0 0
        %4274 = vmatprep.subr.bf16.mxu0 0
        %4275 = vmatpush1.bf16.xpose.msra.mxu0 0
        %4276 = vmatprep.subr.bf16.mxu0 0
        %4277 = vmatpush1.bf16.xpose.msra.mxu0 0
        %4278 = vmatprep.subr.bf16.mxu0 0
        %4279 = vmatpush1.bf16.xpose.msra.mxu0 0
        %4280 = vmatprep.subr.bf16.mxu0 0
        %4281 = vmatpush1.bf16.xpose.msra.mxu0 0
        %4282 = vmatprep.subr.bf16.mxu0 0
        %4283 = vmatpush1.bf16.xpose.msra.mxu0 0
        %4284 = vmatprep.mubr.bf16.mxu0 0
        %4285 = vmatmul.mubr.bf16.gmra.mrb[0].mxu0 %v4247
        %v4286 = vpop.f32.mrb[0].mxu0
        %v4287 = vadd.f32 %v2634, %v4286
        %v4288 = vpop.f32.mrb[0].mxu0
        %v4289 = vpop.f32.mrb[0].mxu0
        %v4290 = vpop.f32.mrb[0].mxu0
        %4291 = vdwg.mxu0
        %v4292 = vsel %vm1042, %v4287, -inf
        %4293 = vmax.xlane.f32.xlu0 %v4292
        %v4294 = vpop.xlane.xlu0 %4293
        %v4295 = vsub.f32 %v4287, %v4294
        %v4296 = vmul.f32 %v4295, 1.442695
        %v4297 = vpow.pop %v4296
        %v4298 = vsel %vm1042, %v4297, 0.0
        %4299 = vadd.xlane.f32.xlu0 %v4298
        %v4300 = vpop.xlane.xlu0 %4299
        %v4301 = vrcp.pop %v4300
        %v4302 = vmul.f32 %v4297, %v4301
        %v4303 = vpack.c.bf16 %v4302, %v4302
        %4304 = vrot.lane.b32.xlu0 %v4132, 56
        %v4305 = vpop.permute.xlu0 %4304
        %v4307 = vsel %vm1042, %v4303, 0
        %v4310 = vsel %vm1106, %v4305, 0
        %4312 = vmatprep.subr.bf16.mxu0 0
        %4313 = vmatpush1.bf16.msra.mxu0 %v4310
        %4314 = vmatprep.subr.bf16.mxu0 0
        %4315 = vmatpush1.bf16.msra.mxu0 0
        %4316 = vmatprep.subr.bf16.mxu0 0
        %4317 = vmatpush1.bf16.msra.mxu0 0
        %4318 = vmatprep.subr.bf16.mxu0 0
        %4319 = vmatpush1.bf16.msra.mxu0 0
        %4320 = vmatprep.subr.bf16.mxu0 0
        %4321 = vmatpush1.bf16.msra.mxu0 0
        %4322 = vmatprep.subr.bf16.mxu0 0
        %4323 = vmatpush1.bf16.msra.mxu0 0
        %4324 = vmatprep.subr.bf16.mxu0 0
        %4325 = vmatpush1.bf16.msra.mxu0 0
        %4326 = vmatprep.subr.bf16.mxu0 0
        %4327 = vmatpush1.bf16.msra.mxu0 0
        %4328 = vmatprep.subr.bf16.mxu0 0
        %4329 = vmatpush1.bf16.msra.mxu0 0
        %4330 = vmatprep.subr.bf16.mxu0 0
        %4331 = vmatpush1.bf16.msra.mxu0 0
        %4332 = vmatprep.subr.bf16.mxu0 0
        %4333 = vmatpush1.bf16.msra.mxu0 0
        %4334 = vmatprep.subr.bf16.mxu0 0
        %4335 = vmatpush1.bf16.msra.mxu0 0
        %4336 = vmatprep.subr.bf16.mxu0 0
        %4337 = vmatpush1.bf16.msra.mxu0 0
        %4338 = vmatprep.subr.bf16.mxu0 0
        %4339 = vmatpush1.bf16.msra.mxu0 0
        %4340 = vmatprep.subr.bf16.mxu0 0
        %4341 = vmatpush1.bf16.msra.mxu0 0
        %4342 = vmatprep.subr.bf16.mxu0 0
        %4343 = vmatpush1.bf16.msra.mxu0 0
        %4344 = vmatprep.mubr.bf16.mxu0 0
        %4345 = vmatmul.mubr.bf16.gmra.mrb[0].mxu0 %v4307
        %v4346 = vpop.f32.mrb[0].mxu0
        %v4347 = vadd.f32 0.0, %v4346
        %v4348 = vpop.f32.mrb[0].mxu0
        %v4349 = vpop.f32.mrb[0].mxu0
        %v4350 = vpop.f32.mrb[0].mxu0
        %4351 = vdwg.mxu0
        %4352 = vrot.lane.b32.xlu0 %v4132, 112
        %v4353 = vpop.permute.xlu0 %4352
        %4354 = vrot.lane.b32.xlu0 %v4132, 80
        %v4355 = vpop.permute.xlu0 %4354
        %v4357 = vsel %vm1042, %v4353, 0
        %v4360 = vsel %vm1042, %v4355, 0
        %4362 = vmatprep.subr.bf16.mxu0 0
        %4363 = vmatpush1.bf16.xpose.msra.mxu0 %v4360
        %4364 = vmatprep.subr.bf16.mxu0 0
        %4365 = vmatpush1.bf16.xpose.msra.mxu0 0
        %4366 = vmatprep.subr.bf16.mxu0 0
        %4367 = vmatpush1.bf16.xpose.msra.mxu0 0
        %4368 = vmatprep.subr.bf16.mxu0 0
        %4369 = vmatpush1.bf16.xpose.msra.mxu0 0
        %4370 = vmatprep.subr.bf16.mxu0 0
        %4371 = vmatpush1.bf16.xpose.msra.mxu0 0
        %4372 = vmatprep.subr.bf16.mxu0 0
        %4373 = vmatpush1.bf16.xpose.msra.mxu0 0
        %4374 = vmatprep.subr.bf16.mxu0 0
        %4375 = vmatpush1.bf16.xpose.msra.mxu0 0
        %4376 = vmatprep.subr.bf16.mxu0 0
        %4377 = vmatpush1.bf16.xpose.msra.mxu0 0
        %4378 = vmatprep.subr.bf16.mxu0 0
        %4379 = vmatpush1.bf16.xpose.msra.mxu0 0
        %4380 = vmatprep.subr.bf16.mxu0 0
        %4381 = vmatpush1.bf16.xpose.msra.mxu0 0
        %4382 = vmatprep.subr.bf16.mxu0 0
        %4383 = vmatpush1.bf16.xpose.msra.mxu0 0
        %4384 = vmatprep.subr.bf16.mxu0 0
        %4385 = vmatpush1.bf16.xpose.msra.mxu0 0
        %4386 = vmatprep.subr.bf16.mxu0 0
        %4387 = vmatpush1.bf16.xpose.msra.mxu0 0
        %4388 = vmatprep.subr.bf16.mxu0 0
        %4389 = vmatpush1.bf16.xpose.msra.mxu0 0
        %4390 = vmatprep.subr.bf16.mxu0 0
        %4391 = vmatpush1.bf16.xpose.msra.mxu0 0
        %4392 = vmatprep.subr.bf16.mxu0 0
        %4393 = vmatpush1.bf16.xpose.msra.mxu0 0
        %4394 = vmatprep.mubr.bf16.mxu0 0
        %4395 = vmatmul.mubr.bf16.gmra.mrb[0].mxu0 %v4357
        %v4396 = vpop.f32.mrb[0].mxu0
        %v4397 = vadd.f32 %v2634, %v4396
        %v4398 = vpop.f32.mrb[0].mxu0
        %v4399 = vpop.f32.mrb[0].mxu0
        %v4400 = vpop.f32.mrb[0].mxu0
        %4401 = vdwg.mxu0
        %v4402 = vsel %vm1042, %v4397, -inf
        %4403 = vmax.xlane.f32.xlu0 %v4402
        %v4404 = vpop.xlane.xlu0 %4403
        %v4405 = vsub.f32 %v4397, %v4404
        %v4406 = vmul.f32 %v4405, 1.442695
        %v4407 = vpow.pop %v4406
        %v4408 = vsel %vm1042, %v4407, 0.0
        %4409 = vadd.xlane.f32.xlu0 %v4408
        %v4410 = vpop.xlane.xlu0 %4409
        %v4411 = vrcp.pop %v4410
        %v4412 = vmul.f32 %v4407, %v4411
        %v4413 = vpack.c.bf16 %v4412, %v4412
        %4414 = vrot.lane.b32.xlu0 %v4132, 48
        %v4415 = vpop.permute.xlu0 %4414
        %v4417 = vsel %vm1042, %v4413, 0
        %v4420 = vsel %vm1106, %v4415, 0
        %4422 = vmatprep.subr.bf16.mxu0 0
        %4423 = vmatpush1.bf16.msra.mxu0 %v4420
        %4424 = vmatprep.subr.bf16.mxu0 0
        %4425 = vmatpush1.bf16.msra.mxu0 0
        %4426 = vmatprep.subr.bf16.mxu0 0
        %4427 = vmatpush1.bf16.msra.mxu0 0
        %4428 = vmatprep.subr.bf16.mxu0 0
        %4429 = vmatpush1.bf16.msra.mxu0 0
        %4430 = vmatprep.subr.bf16.mxu0 0
        %4431 = vmatpush1.bf16.msra.mxu0 0
        %4432 = vmatprep.subr.bf16.mxu0 0
        %4433 = vmatpush1.bf16.msra.mxu0 0
        %4434 = vmatprep.subr.bf16.mxu0 0
        %4435 = vmatpush1.bf16.msra.mxu0 0
        %4436 = vmatprep.subr.bf16.mxu0 0
        %4437 = vmatpush1.bf16.msra.mxu0 0
        %4438 = vmatprep.subr.bf16.mxu0 0
        %4439 = vmatpush1.bf16.msra.mxu0 0
        %4440 = vmatprep.subr.bf16.mxu0 0
        %4441 = vmatpush1.bf16.msra.mxu0 0
        %4442 = vmatprep.subr.bf16.mxu0 0
        %4443 = vmatpush1.bf16.msra.mxu0 0
        %4444 = vmatprep.subr.bf16.mxu0 0
        %4445 = vmatpush1.bf16.msra.mxu0 0
        %4446 = vmatprep.subr.bf16.mxu0 0
        %4447 = vmatpush1.bf16.msra.mxu0 0
        %4448 = vmatprep.subr.bf16.mxu0 0
        %4449 = vmatpush1.bf16.msra.mxu0 0
        %4450 = vmatprep.subr.bf16.mxu0 0
        %4451 = vmatpush1.bf16.msra.mxu0 0
        %4452 = vmatprep.subr.bf16.mxu0 0
        %4453 = vmatpush1.bf16.msra.mxu0 0
        %4454 = vmatprep.mubr.bf16.mxu0 0
        %4455 = vmatmul.mubr.bf16.gmra.mrb[0].mxu0 %v4417
        %v4456 = vpop.f32.mrb[0].mxu0
        %v4457 = vadd.f32 0.0, %v4456
        %v4458 = vpop.f32.mrb[0].mxu0
        %v4459 = vpop.f32.mrb[0].mxu0
        %v4460 = vpop.f32.mrb[0].mxu0
        %4461 = vdwg.mxu0
        %4462 = vrot.lane.b32.xlu0 %v4132, 104
        %v4463 = vpop.permute.xlu0 %4462
        %4464 = vrot.lane.b32.xlu0 %v4132, 72
        %v4465 = vpop.permute.xlu0 %4464
        %v4467 = vsel %vm1042, %v4463, 0
        %v4470 = vsel %vm1042, %v4465, 0
        %4472 = vmatprep.subr.bf16.mxu0 0
        %4473 = vmatpush1.bf16.xpose.msra.mxu0 %v4470
        %4474 = vmatprep.subr.bf16.mxu0 0
        %4475 = vmatpush1.bf16.xpose.msra.mxu0 0
        %4476 = vmatprep.subr.bf16.mxu0 0
        %4477 = vmatpush1.bf16.xpose.msra.mxu0 0
        %4478 = vmatprep.subr.bf16.mxu0 0
        %4479 = vmatpush1.bf16.xpose.msra.mxu0 0
        %4480 = vmatprep.subr.bf16.mxu0 0
        %4481 = vmatpush1.bf16.xpose.msra.mxu0 0
        %4482 = vmatprep.subr.bf16.mxu0 0
        %4483 = vmatpush1.bf16.xpose.msra.mxu0 0
        %4484 = vmatprep.subr.bf16.mxu0 0
        %4485 = vmatpush1.bf16.xpose.msra.mxu0 0
        %4486 = vmatprep.subr.bf16.mxu0 0
        %4487 = vmatpush1.bf16.xpose.msra.mxu0 0
        %4488 = vmatprep.subr.bf16.mxu0 0
        %4489 = vmatpush1.bf16.xpose.msra.mxu0 0
        %4490 = vmatprep.subr.bf16.mxu0 0
        %4491 = vmatpush1.bf16.xpose.msra.mxu0 0
        %4492 = vmatprep.subr.bf16.mxu0 0
        %4493 = vmatpush1.bf16.xpose.msra.mxu0 0
        %4494 = vmatprep.subr.bf16.mxu0 0
        %4495 = vmatpush1.bf16.xpose.msra.mxu0 0
        %4496 = vmatprep.subr.bf16.mxu0 0
        %4497 = vmatpush1.bf16.xpose.msra.mxu0 0
        %4498 = vmatprep.subr.bf16.mxu0 0
        %4499 = vmatpush1.bf16.xpose.msra.mxu0 0
        %4500 = vmatprep.subr.bf16.mxu0 0
        %4501 = vmatpush1.bf16.xpose.msra.mxu0 0
        %4502 = vmatprep.subr.bf16.mxu0 0
        %4503 = vmatpush1.bf16.xpose.msra.mxu0 0
        %4504 = vmatprep.mubr.bf16.mxu0 0
        %4505 = vmatmul.mubr.bf16.gmra.mrb[0].mxu0 %v4467
        %v4506 = vpop.f32.mrb[0].mxu0
        %v4507 = vadd.f32 %v2634, %v4506
        %v4508 = vpop.f32.mrb[0].mxu0
        %v4509 = vpop.f32.mrb[0].mxu0
        %v4510 = vpop.f32.mrb[0].mxu0
        %4511 = vdwg.mxu0
        %v4512 = vsel %vm1042, %v4507, -inf
        %4513 = vmax.xlane.f32.xlu0 %v4512
        %v4514 = vpop.xlane.xlu0 %4513
        %v4515 = vsub.f32 %v4507, %v4514
        %v4516 = vmul.f32 %v4515, 1.442695
        %v4517 = vpow.pop %v4516
        %v4518 = vsel %vm1042, %v4517, 0.0
        %4519 = vadd.xlane.f32.xlu0 %v4518
        %v4520 = vpop.xlane.xlu0 %4519
        %v4521 = vrcp.pop %v4520
        %v4522 = vmul.f32 %v4517, %v4521
        %v4523 = vpack.c.bf16 %v4522, %v4522
        %4524 = vrot.lane.b32.xlu0 %v4132, 40
        %v4525 = vpop.permute.xlu0 %4524
        %v4527 = vsel %vm1042, %v4523, 0
        %v4530 = vsel %vm1106, %v4525, 0
        %4532 = vmatprep.subr.bf16.mxu0 0
        %4533 = vmatpush1.bf16.msra.mxu0 %v4530
        %4534 = vmatprep.subr.bf16.mxu0 0
        %4535 = vmatpush1.bf16.msra.mxu0 0
        %4536 = vmatprep.subr.bf16.mxu0 0
        %4537 = vmatpush1.bf16.msra.mxu0 0
        %4538 = vmatprep.subr.bf16.mxu0 0
        %4539 = vmatpush1.bf16.msra.mxu0 0
        %4540 = vmatprep.subr.bf16.mxu0 0
        %4541 = vmatpush1.bf16.msra.mxu0 0
        %4542 = vmatprep.subr.bf16.mxu0 0
        %4543 = vmatpush1.bf16.msra.mxu0 0
        %4544 = vmatprep.subr.bf16.mxu0 0
        %4545 = vmatpush1.bf16.msra.mxu0 0
        %4546 = vmatprep.subr.bf16.mxu0 0
        %4547 = vmatpush1.bf16.msra.mxu0 0
        %4548 = vmatprep.subr.bf16.mxu0 0
        %4549 = vmatpush1.bf16.msra.mxu0 0
        %4550 = vmatprep.subr.bf16.mxu0 0
        %4551 = vmatpush1.bf16.msra.mxu0 0
        %4552 = vmatprep.subr.bf16.mxu0 0
        %4553 = vmatpush1.bf16.msra.mxu0 0
        %4554 = vmatprep.subr.bf16.mxu0 0
        %4555 = vmatpush1.bf16.msra.mxu0 0
        %4556 = vmatprep.subr.bf16.mxu0 0
        %4557 = vmatpush1.bf16.msra.mxu0 0
        %4558 = vmatprep.subr.bf16.mxu0 0
        %4559 = vmatpush1.bf16.msra.mxu0 0
        %4560 = vmatprep.subr.bf16.mxu0 0
        %4561 = vmatpush1.bf16.msra.mxu0 0
        %4562 = vmatprep.subr.bf16.mxu0 0
        %4563 = vmatpush1.bf16.msra.mxu0 0
        %4564 = vmatprep.mubr.bf16.mxu0 0
        %4565 = vmatmul.mubr.bf16.gmra.mrb[0].mxu0 %v4527
        %v4566 = vpop.f32.mrb[0].mxu0
        %v4567 = vadd.f32 0.0, %v4566
        %v4568 = vpop.f32.mrb[0].mxu0
        %v4569 = vpop.f32.mrb[0].mxu0
        %v4570 = vpop.f32.mrb[0].mxu0
        %4571 = vdwg.mxu0
        %4573 = vrot.lane.b32.xlu0 %v4347, 8
        %v4574 = vpop.permute.xlu0 %4573
        %4577 = vrot.lane.b32.xlu0 %v4457, 16
        %v4578 = vpop.permute.xlu0 %4577
        %4581 = vrot.lane.b32.xlu0 %v4567, 24
        %v4582 = vpop.permute.xlu0 %4581
        %v4584 = vsel %vm1042, %v4237, %v4574
        %v4585 = vsel %vm1493, %v4584, %v4578
        %v4586 = vsel %vm1495, %v4585, %v4582
        %v4587 = vpack.c.bf16 %v4586, %v4586
        %v4592 = vunpack.c.l.b16 %v4072
        %v4593 = vunpack.c.l.b16 %v4073
        %v4594 = vunpack.c.l.b16 %v4074
        %v4595 = vunpack.c.l.b16 %v4075
        %v4596 = vpack.c.b16 %v4593, %v4592
        %v4597 = vpack.c.b16 %v4595, %v4594
        %v4601 = vsel %vm947, %v4587, 0
        %4603 = vmatprep.subr.bf16.mxu0 0
        %4604 = vmatpush1.bf16.msra.mxu0 %v4596
        %4605 = vmatprep.subr.bf16.mxu0 0
        %4606 = vmatpush1.bf16.msra.mxu0 %v4597
        %4607 = vmatprep.subr.bf16.mxu0 0
        %4608 = vmatpush1.bf16.msra.mxu0 0
        %4609 = vmatprep.subr.bf16.mxu0 0
        %4610 = vmatpush1.bf16.msra.mxu0 0
        %4611 = vmatprep.subr.bf16.mxu0 0
        %4612 = vmatpush1.bf16.msra.mxu0 0
        %4613 = vmatprep.subr.bf16.mxu0 0
        %4614 = vmatpush1.bf16.msra.mxu0 0
        %4615 = vmatprep.subr.bf16.mxu0 0
        %4616 = vmatpush1.bf16.msra.mxu0 0
        %4617 = vmatprep.subr.bf16.mxu0 0
        %4618 = vmatpush1.bf16.msra.mxu0 0
        %4619 = vmatprep.subr.bf16.mxu0 0
        %4620 = vmatpush1.bf16.msra.mxu0 0
        %4621 = vmatprep.subr.bf16.mxu0 0
        %4622 = vmatpush1.bf16.msra.mxu0 0
        %4623 = vmatprep.subr.bf16.mxu0 0
        %4624 = vmatpush1.bf16.msra.mxu0 0
        %4625 = vmatprep.subr.bf16.mxu0 0
        %4626 = vmatpush1.bf16.msra.mxu0 0
        %4627 = vmatprep.subr.bf16.mxu0 0
        %4628 = vmatpush1.bf16.msra.mxu0 0
        %4629 = vmatprep.subr.bf16.mxu0 0
        %4630 = vmatpush1.bf16.msra.mxu0 0
        %4631 = vmatprep.subr.bf16.mxu0 0
        %4632 = vmatpush1.bf16.msra.mxu0 0
        %4633 = vmatprep.subr.bf16.mxu0 0
        %4634 = vmatpush1.bf16.msra.mxu0 0
        %4635 = vmatprep.mubr.bf16.mxu0 0
        %4636 = vmatmul.mubr.bf16.gmra.mrb[0].mxu0 %v4601
        %v4637 = vpop.f32.mrb[0].mxu0
        %v4638 = vadd.f32 %v4063, %v4637
        %v4639 = vpop.f32.mrb[0].mxu0
        %v4640 = vpop.f32.mrb[0].mxu0
        %v4641 = vpop.f32.mrb[0].mxu0
        %4642 = vdwg.mxu0
        %v4643 = vsel %vm947, %v4638, 0.0
        %4644 = vadd.xlane.f32.xlu0 %v4643
        %v4645 = vpop.xlane.xlu0 %4644
        %v4646 = vmul.f32 %v4645, %v951
        %v4647 = vsub.f32 %v4638, %v4646
        %v4648 = vmul.f32 %v4647, %v4647
        %v4649 = vsel %vm947, %v4648, 0.0
        %4650 = vadd.xlane.f32.xlu0 %v4649
        %v4651 = vpop.xlane.xlu0 %4650
        %v4652 = vmul.f32 %v4651, %v951
        %v4653 = vadd.f32 %v4652, 1e-06
        %v4654 = vrsqrt.pop %v4653
        %v4655 = vmul.f32 %v4647, %v4654
        %v4656 = vlaneseq
        %v4657 = vshrl.u32 %v4656, 7
        %v4658 = vsub.s32 0, %v4657
        %v4659 = vrot.slane %v4065, %v4658
        %v4660 = vmul.f32 %v4655, %v4659
        %v4661 = vlaneseq
        %v4662 = vshrl.u32 %v4661, 7
        %v4663 = vsub.s32 1, %v4662
        %v4664 = vrot.slane %v4065, %v4663
        %v4665 = vadd.f32 %v4660, %v4664
        %s4666 = scalar_lea.vmem %s20, 16
        %v4667 = vld [vmem:[%s4666] sm:$0xf]
        %v4668 = vld [vmem:[%s4666 + $0x4] sm:$0xf]
        %v4669 = vld [vmem:[%s4666 + $0x8] sm:$0xf]
        %v4670 = vld [vmem:[%s4666 + $0xc] sm:$0xf]
        %s4671 = scalar_lea.vmem %s21, 16
        %v4672 = vld [vmem:[%s4671] sm:$0xf]
        %v4673 = vld [vmem:[%s4671 + $0x4] sm:$0xf]
        %v4674 = vld [vmem:[%s4671 + $0x8] sm:$0xf]
        %v4675 = vld [vmem:[%s4671 + $0xc] sm:$0xf]
        %s4676 = scalar_lea.vmem %s22, 16
        %v4677 = vld [vmem:[%s4676] sm:$0xf]
        %v4678 = vld [vmem:[%s4676 + $0x4] sm:$0xf]
        %v4679 = vld [vmem:[%s4676 + $0x8] sm:$0xf]
        %v4680 = vld [vmem:[%s4676 + $0xc] sm:$0xf]
        %v4681 = vpack.c.bf16 %v4665, %v4665
        %v4686 = vunpack.c.l.b16 %v4667
        %v4687 = vunpack.c.l.b16 %v4668
        %v4688 = vunpack.c.l.b16 %v4669
        %v4689 = vunpack.c.l.b16 %v4670
        %v4690 = vpack.c.b16 %v4687, %v4686
        %v4691 = vpack.c.b16 %v4689, %v4688
        %v4695 = vsel %vm947, %v4681, 0
        %4697 = vmatprep.subr.bf16.mxu0 0
        %4698 = vmatpush1.bf16.msra.mxu0 %v4690
        %4699 = vmatprep.subr.bf16.mxu0 0
        %4700 = vmatpush1.bf16.msra.mxu0 %v4691
        %4701 = vmatprep.subr.bf16.mxu0 0
        %4702 = vmatpush1.bf16.msra.mxu0 0
        %4703 = vmatprep.subr.bf16.mxu0 0
        %4704 = vmatpush1.bf16.msra.mxu0 0
        %4705 = vmatprep.subr.bf16.mxu0 0
        %4706 = vmatpush1.bf16.msra.mxu0 0
        %4707 = vmatprep.subr.bf16.mxu0 0
        %4708 = vmatpush1.bf16.msra.mxu0 0
        %4709 = vmatprep.subr.bf16.mxu0 0
        %4710 = vmatpush1.bf16.msra.mxu0 0
        %4711 = vmatprep.subr.bf16.mxu0 0
        %4712 = vmatpush1.bf16.msra.mxu0 0
        %4713 = vmatprep.subr.bf16.mxu0 0
        %4714 = vmatpush1.bf16.msra.mxu0 0
        %4715 = vmatprep.subr.bf16.mxu0 0
        %4716 = vmatpush1.bf16.msra.mxu0 0
        %4717 = vmatprep.subr.bf16.mxu0 0
        %4718 = vmatpush1.bf16.msra.mxu0 0
        %4719 = vmatprep.subr.bf16.mxu0 0
        %4720 = vmatpush1.bf16.msra.mxu0 0
        %4721 = vmatprep.subr.bf16.mxu0 0
        %4722 = vmatpush1.bf16.msra.mxu0 0
        %4723 = vmatprep.subr.bf16.mxu0 0
        %4724 = vmatpush1.bf16.msra.mxu0 0
        %4725 = vmatprep.subr.bf16.mxu0 0
        %4726 = vmatpush1.bf16.msra.mxu0 0
        %4727 = vmatprep.subr.bf16.mxu0 0
        %4728 = vmatpush1.bf16.msra.mxu0 0
        %4729 = vmatprep.mubr.bf16.mxu0 0
        %4730 = vmatmul.mubr.bf16.gmra.mrb[0].mxu0 %v4695
        %v4731 = vpop.f32.mrb[0].mxu0
        %v4732 = vadd.f32 0.0, %v4731
        %v4733 = vpop.f32.mrb[0].mxu0
        %v4734 = vpop.f32.mrb[0].mxu0
        %v4735 = vpop.f32.mrb[0].mxu0
        %4736 = vdwg.mxu0
        %v4741 = vunpack.c.l.b16 %v4672
        %v4742 = vunpack.c.l.b16 %v4673
        %v4743 = vunpack.c.l.b16 %v4674
        %v4744 = vunpack.c.l.b16 %v4675
        %v4745 = vpack.c.b16 %v4742, %v4741
        %v4746 = vpack.c.b16 %v4744, %v4743
        %4749 = vmatprep.subr.bf16.mxu0 0
        %4750 = vmatpush1.bf16.msra.mxu0 %v4745
        %4751 = vmatprep.subr.bf16.mxu0 0
        %4752 = vmatpush1.bf16.msra.mxu0 %v4746
        %4753 = vmatprep.subr.bf16.mxu0 0
        %4754 = vmatpush1.bf16.msra.mxu0 0
        %4755 = vmatprep.subr.bf16.mxu0 0
        %4756 = vmatpush1.bf16.msra.mxu0 0
        %4757 = vmatprep.subr.bf16.mxu0 0
        %4758 = vmatpush1.bf16.msra.mxu0 0
        %4759 = vmatprep.subr.bf16.mxu0 0
        %4760 = vmatpush1.bf16.msra.mxu0 0
        %4761 = vmatprep.subr.bf16.mxu0 0
        %4762 = vmatpush1.bf16.msra.mxu0 0
        %4763 = vmatprep.subr.bf16.mxu0 0
        %4764 = vmatpush1.bf16.msra.mxu0 0
        %4765 = vmatprep.subr.bf16.mxu0 0
        %4766 = vmatpush1.bf16.msra.mxu0 0
        %4767 = vmatprep.subr.bf16.mxu0 0
        %4768 = vmatpush1.bf16.msra.mxu0 0
        %4769 = vmatprep.subr.bf16.mxu0 0
        %4770 = vmatpush1.bf16.msra.mxu0 0
        %4771 = vmatprep.subr.bf16.mxu0 0
        %4772 = vmatpush1.bf16.msra.mxu0 0
        %4773 = vmatprep.subr.bf16.mxu0 0
        %4774 = vmatpush1.bf16.msra.mxu0 0
        %4775 = vmatprep.subr.bf16.mxu0 0
        %4776 = vmatpush1.bf16.msra.mxu0 0
        %4777 = vmatprep.subr.bf16.mxu0 0
        %4778 = vmatpush1.bf16.msra.mxu0 0
        %4779 = vmatprep.subr.bf16.mxu0 0
        %4780 = vmatpush1.bf16.msra.mxu0 0
        %4781 = vmatprep.mubr.bf16.mxu0 0
        %4782 = vmatmul.mubr.bf16.gmra.mrb[0].mxu0 %v3316
        %v4783 = vpop.f32.mrb[0].mxu0
        %v4784 = vadd.f32 0.0, %v4783
        %v4785 = vpop.f32.mrb[0].mxu0
        %v4786 = vpop.f32.mrb[0].mxu0
        %v4787 = vpop.f32.mrb[0].mxu0
        %4788 = vdwg.mxu0
        %v4789 = vpack.c.bf16 %v4732, %v4732
        %v4790 = vpack.c.bf16 %v4784, %v4784
        %v4792 = vsel %vm1042, %v4789, 0
        %v4795 = vsel %vm1042, %v4790, 0
        %4797 = vmatprep.subr.bf16.mxu0 0
        %4798 = vmatpush1.bf16.xpose.msra.mxu0 %v4795
        %4799 = vmatprep.subr.bf16.mxu0 0
        %4800 = vmatpush1.bf16.xpose.msra.mxu0 0
        %4801 = vmatprep.subr.bf16.mxu0 0
        %4802 = vmatpush1.bf16.xpose.msra.mxu0 0
        %4803 = vmatprep.subr.bf16.mxu0 0
        %4804 = vmatpush1.bf16.xpose.msra.mxu0 0
        %4805 = vmatprep.subr.bf16.mxu0 0
        %4806 = vmatpush1.bf16.xpose.msra.mxu0 0
        %4807 = vmatprep.subr.bf16.mxu0 0
        %4808 = vmatpush1.bf16.xpose.msra.mxu0 0
        %4809 = vmatprep.subr.bf16.mxu0 0
        %4810 = vmatpush1.bf16.xpose.msra.mxu0 0
        %4811 = vmatprep.subr.bf16.mxu0 0
        %4812 = vmatpush1.bf16.xpose.msra.mxu0 0
        %4813 = vmatprep.subr.bf16.mxu0 0
        %4814 = vmatpush1.bf16.xpose.msra.mxu0 0
        %4815 = vmatprep.subr.bf16.mxu0 0
        %4816 = vmatpush1.bf16.xpose.msra.mxu0 0
        %4817 = vmatprep.subr.bf16.mxu0 0
        %4818 = vmatpush1.bf16.xpose.msra.mxu0 0
        %4819 = vmatprep.subr.bf16.mxu0 0
        %4820 = vmatpush1.bf16.xpose.msra.mxu0 0
        %4821 = vmatprep.subr.bf16.mxu0 0
        %4822 = vmatpush1.bf16.xpose.msra.mxu0 0
        %4823 = vmatprep.subr.bf16.mxu0 0
        %4824 = vmatpush1.bf16.xpose.msra.mxu0 0
        %4825 = vmatprep.subr.bf16.mxu0 0
        %4826 = vmatpush1.bf16.xpose.msra.mxu0 0
        %4827 = vmatprep.subr.bf16.mxu0 0
        %4828 = vmatpush1.bf16.xpose.msra.mxu0 0
        %4829 = vmatprep.mubr.bf16.mxu0 0
        %4830 = vmatmul.mubr.bf16.gmra.mrb[0].mxu0 %v4792
        %v4831 = vpop.f32.mrb[0].mxu0
        %v4832 = vadd.f32 %v2635, %v4831
        %v4833 = vpop.f32.mrb[0].mxu0
        %v4834 = vpop.f32.mrb[0].mxu0
        %v4835 = vpop.f32.mrb[0].mxu0
        %4836 = vdwg.mxu0
        %v4837 = vsel %vm1042, %v4832, -inf
        %4838 = vmax.xlane.f32.xlu0 %v4837
        %v4839 = vpop.xlane.xlu0 %4838
        %v4840 = vsub.f32 %v4832, %v4839
        %v4841 = vmul.f32 %v4840, 1.442695
        %v4842 = vpow.pop %v4841
        %v4843 = vsel %vm1042, %v4842, 0.0
        %4844 = vadd.xlane.f32.xlu0 %v4843
        %v4845 = vpop.xlane.xlu0 %4844
        %v4846 = vrcp.pop %v4845
        %v4847 = vmul.f32 %v4842, %v4846
        %v4848 = vpack.c.bf16 %v4847, %v4847
        %4850 = vrot.lane.b32.xlu0 %v4790, 96
        %v4851 = vpop.permute.xlu0 %4850
        %v4853 = vsel %vm1042, %v4848, 0
        %v4856 = vsel %vm1106, %v4851, 0
        %4858 = vmatprep.subr.bf16.mxu0 0
        %4859 = vmatpush1.bf16.msra.mxu0 %v4856
        %4860 = vmatprep.subr.bf16.mxu0 0
        %4861 = vmatpush1.bf16.msra.mxu0 0
        %4862 = vmatprep.subr.bf16.mxu0 0
        %4863 = vmatpush1.bf16.msra.mxu0 0
        %4864 = vmatprep.subr.bf16.mxu0 0
        %4865 = vmatpush1.bf16.msra.mxu0 0
        %4866 = vmatprep.subr.bf16.mxu0 0
        %4867 = vmatpush1.bf16.msra.mxu0 0
        %4868 = vmatprep.subr.bf16.mxu0 0
        %4869 = vmatpush1.bf16.msra.mxu0 0
        %4870 = vmatprep.subr.bf16.mxu0 0
        %4871 = vmatpush1.bf16.msra.mxu0 0
        %4872 = vmatprep.subr.bf16.mxu0 0
        %4873 = vmatpush1.bf16.msra.mxu0 0
        %4874 = vmatprep.subr.bf16.mxu0 0
        %4875 = vmatpush1.bf16.msra.mxu0 0
        %4876 = vmatprep.subr.bf16.mxu0 0
        %4877 = vmatpush1.bf16.msra.mxu0 0
        %4878 = vmatprep.subr.bf16.mxu0 0
        %4879 = vmatpush1.bf16.msra.mxu0 0
        %4880 = vmatprep.subr.bf16.mxu0 0
        %4881 = vmatpush1.bf16.msra.mxu0 0
        %4882 = vmatprep.subr.bf16.mxu0 0
        %4883 = vmatpush1.bf16.msra.mxu0 0
        %4884 = vmatprep.subr.bf16.mxu0 0
        %4885 = vmatpush1.bf16.msra.mxu0 0
        %4886 = vmatprep.subr.bf16.mxu0 0
        %4887 = vmatpush1.bf16.msra.mxu0 0
        %4888 = vmatprep.subr.bf16.mxu0 0
        %4889 = vmatpush1.bf16.msra.mxu0 0
        %4890 = vmatprep.mubr.bf16.mxu0 0
        %4891 = vmatmul.mubr.bf16.gmra.mrb[0].mxu0 %v4853
        %v4892 = vpop.f32.mrb[0].mxu0
        %v4893 = vadd.f32 0.0, %v4892
        %v4894 = vpop.f32.mrb[0].mxu0
        %v4895 = vpop.f32.mrb[0].mxu0
        %v4896 = vpop.f32.mrb[0].mxu0
        %4897 = vdwg.mxu0
        %4899 = vrot.lane.b32.xlu0 %v4789, 120
        %v4900 = vpop.permute.xlu0 %4899
        %4901 = vrot.lane.b32.xlu0 %v4790, 120
        %v4902 = vpop.permute.xlu0 %4901
        %v4904 = vsel %vm1042, %v4900, 0
        %v4907 = vsel %vm1042, %v4902, 0
        %4909 = vmatprep.subr.bf16.mxu0 0
        %4910 = vmatpush1.bf16.xpose.msra.mxu0 %v4907
        %4911 = vmatprep.subr.bf16.mxu0 0
        %4912 = vmatpush1.bf16.xpose.msra.mxu0 0
        %4913 = vmatprep.subr.bf16.mxu0 0
        %4914 = vmatpush1.bf16.xpose.msra.mxu0 0
        %4915 = vmatprep.subr.bf16.mxu0 0
        %4916 = vmatpush1.bf16.xpose.msra.mxu0 0
        %4917 = vmatprep.subr.bf16.mxu0 0
        %4918 = vmatpush1.bf16.xpose.msra.mxu0 0
        %4919 = vmatprep.subr.bf16.mxu0 0
        %4920 = vmatpush1.bf16.xpose.msra.mxu0 0
        %4921 = vmatprep.subr.bf16.mxu0 0
        %4922 = vmatpush1.bf16.xpose.msra.mxu0 0
        %4923 = vmatprep.subr.bf16.mxu0 0
        %4924 = vmatpush1.bf16.xpose.msra.mxu0 0
        %4925 = vmatprep.subr.bf16.mxu0 0
        %4926 = vmatpush1.bf16.xpose.msra.mxu0 0
        %4927 = vmatprep.subr.bf16.mxu0 0
        %4928 = vmatpush1.bf16.xpose.msra.mxu0 0
        %4929 = vmatprep.subr.bf16.mxu0 0
        %4930 = vmatpush1.bf16.xpose.msra.mxu0 0
        %4931 = vmatprep.subr.bf16.mxu0 0
        %4932 = vmatpush1.bf16.xpose.msra.mxu0 0
        %4933 = vmatprep.subr.bf16.mxu0 0
        %4934 = vmatpush1.bf16.xpose.msra.mxu0 0
        %4935 = vmatprep.subr.bf16.mxu0 0
        %4936 = vmatpush1.bf16.xpose.msra.mxu0 0
        %4937 = vmatprep.subr.bf16.mxu0 0
        %4938 = vmatpush1.bf16.xpose.msra.mxu0 0
        %4939 = vmatprep.subr.bf16.mxu0 0
        %4940 = vmatpush1.bf16.xpose.msra.mxu0 0
        %4941 = vmatprep.mubr.bf16.mxu0 0
        %4942 = vmatmul.mubr.bf16.gmra.mrb[0].mxu0 %v4904
        %v4943 = vpop.f32.mrb[0].mxu0
        %v4944 = vadd.f32 %v2635, %v4943
        %v4945 = vpop.f32.mrb[0].mxu0
        %v4946 = vpop.f32.mrb[0].mxu0
        %v4947 = vpop.f32.mrb[0].mxu0
        %4948 = vdwg.mxu0
        %v4949 = vsel %vm1042, %v4944, -inf
        %4950 = vmax.xlane.f32.xlu0 %v4949
        %v4951 = vpop.xlane.xlu0 %4950
        %v4952 = vsub.f32 %v4944, %v4951
        %v4953 = vmul.f32 %v4952, 1.442695
        %v4954 = vpow.pop %v4953
        %v4955 = vsel %vm1042, %v4954, 0.0
        %4956 = vadd.xlane.f32.xlu0 %v4955
        %v4957 = vpop.xlane.xlu0 %4956
        %v4958 = vrcp.pop %v4957
        %v4959 = vmul.f32 %v4954, %v4958
        %v4960 = vpack.c.bf16 %v4959, %v4959
        %4961 = vrot.lane.b32.xlu0 %v4790, 88
        %v4962 = vpop.permute.xlu0 %4961
        %v4964 = vsel %vm1042, %v4960, 0
        %v4967 = vsel %vm1106, %v4962, 0
        %4969 = vmatprep.subr.bf16.mxu0 0
        %4970 = vmatpush1.bf16.msra.mxu0 %v4967
        %4971 = vmatprep.subr.bf16.mxu0 0
        %4972 = vmatpush1.bf16.msra.mxu0 0
        %4973 = vmatprep.subr.bf16.mxu0 0
        %4974 = vmatpush1.bf16.msra.mxu0 0
        %4975 = vmatprep.subr.bf16.mxu0 0
        %4976 = vmatpush1.bf16.msra.mxu0 0
        %4977 = vmatprep.subr.bf16.mxu0 0
        %4978 = vmatpush1.bf16.msra.mxu0 0
        %4979 = vmatprep.subr.bf16.mxu0 0
        %4980 = vmatpush1.bf16.msra.mxu0 0
        %4981 = vmatprep.subr.bf16.mxu0 0
        %4982 = vmatpush1.bf16.msra.mxu0 0
        %4983 = vmatprep.subr.bf16.mxu0 0
        %4984 = vmatpush1.bf16.msra.mxu0 0
        %4985 = vmatprep.subr.bf16.mxu0 0
        %4986 = vmatpush1.bf16.msra.mxu0 0
        %4987 = vmatprep.subr.bf16.mxu0 0
        %4988 = vmatpush1.bf16.msra.mxu0 0
        %4989 = vmatprep.subr.bf16.mxu0 0
        %4990 = vmatpush1.bf16.msra.mxu0 0
        %4991 = vmatprep.subr.bf16.mxu0 0
        %4992 = vmatpush1.bf16.msra.mxu0 0
        %4993 = vmatprep.subr.bf16.mxu0 0
        %4994 = vmatpush1.bf16.msra.mxu0 0
        %4995 = vmatprep.subr.bf16.mxu0 0
        %4996 = vmatpush1.bf16.msra.mxu0 0
        %4997 = vmatprep.subr.bf16.mxu0 0
        %4998 = vmatpush1.bf16.msra.mxu0 0
        %4999 = vmatprep.subr.bf16.mxu0 0
        %5000 = vmatpush1.bf16.msra.mxu0 0
        %5001 = vmatprep.mubr.bf16.mxu0 0
        %5002 = vmatmul.mubr.bf16.gmra.mrb[0].mxu0 %v4964
        %v5003 = vpop.f32.mrb[0].mxu0
        %v5004 = vadd.f32 0.0, %v5003
        %v5005 = vpop.f32.mrb[0].mxu0
        %v5006 = vpop.f32.mrb[0].mxu0
        %v5007 = vpop.f32.mrb[0].mxu0
        %5008 = vdwg.mxu0
        %5009 = vrot.lane.b32.xlu0 %v4789, 112
        %v5010 = vpop.permute.xlu0 %5009
        %5011 = vrot.lane.b32.xlu0 %v4790, 112
        %v5012 = vpop.permute.xlu0 %5011
        %v5014 = vsel %vm1042, %v5010, 0
        %v5017 = vsel %vm1042, %v5012, 0
        %5019 = vmatprep.subr.bf16.mxu0 0
        %5020 = vmatpush1.bf16.xpose.msra.mxu0 %v5017
        %5021 = vmatprep.subr.bf16.mxu0 0
        %5022 = vmatpush1.bf16.xpose.msra.mxu0 0
        %5023 = vmatprep.subr.bf16.mxu0 0
        %5024 = vmatpush1.bf16.xpose.msra.mxu0 0
        %5025 = vmatprep.subr.bf16.mxu0 0
        %5026 = vmatpush1.bf16.xpose.msra.mxu0 0
        %5027 = vmatprep.subr.bf16.mxu0 0
        %5028 = vmatpush1.bf16.xpose.msra.mxu0 0
        %5029 = vmatprep.subr.bf16.mxu0 0
        %5030 = vmatpush1.bf16.xpose.msra.mxu0 0
        %5031 = vmatprep.subr.bf16.mxu0 0
        %5032 = vmatpush1.bf16.xpose.msra.mxu0 0
        %5033 = vmatprep.subr.bf16.mxu0 0
        %5034 = vmatpush1.bf16.xpose.msra.mxu0 0
        %5035 = vmatprep.subr.bf16.mxu0 0
        %5036 = vmatpush1.bf16.xpose.msra.mxu0 0
        %5037 = vmatprep.subr.bf16.mxu0 0
        %5038 = vmatpush1.bf16.xpose.msra.mxu0 0
        %5039 = vmatprep.subr.bf16.mxu0 0
        %5040 = vmatpush1.bf16.xpose.msra.mxu0 0
        %5041 = vmatprep.subr.bf16.mxu0 0
        %5042 = vmatpush1.bf16.xpose.msra.mxu0 0
        %5043 = vmatprep.subr.bf16.mxu0 0
        %5044 = vmatpush1.bf16.xpose.msra.mxu0 0
        %5045 = vmatprep.subr.bf16.mxu0 0
        %5046 = vmatpush1.bf16.xpose.msra.mxu0 0
        %5047 = vmatprep.subr.bf16.mxu0 0
        %5048 = vmatpush1.bf16.xpose.msra.mxu0 0
        %5049 = vmatprep.subr.bf16.mxu0 0
        %5050 = vmatpush1.bf16.xpose.msra.mxu0 0
        %5051 = vmatprep.mubr.bf16.mxu0 0
        %5052 = vmatmul.mubr.bf16.gmra.mrb[0].mxu0 %v5014
        %v5053 = vpop.f32.mrb[0].mxu0
        %v5054 = vadd.f32 %v2635, %v5053
        %v5055 = vpop.f32.mrb[0].mxu0
        %v5056 = vpop.f32.mrb[0].mxu0
        %v5057 = vpop.f32.mrb[0].mxu0
        %5058 = vdwg.mxu0
        %v5059 = vsel %vm1042, %v5054, -inf
        %5060 = vmax.xlane.f32.xlu0 %v5059
        %v5061 = vpop.xlane.xlu0 %5060
        %v5062 = vsub.f32 %v5054, %v5061
        %v5063 = vmul.f32 %v5062, 1.442695
        %v5064 = vpow.pop %v5063
        %v5065 = vsel %vm1042, %v5064, 0.0
        %5066 = vadd.xlane.f32.xlu0 %v5065
        %v5067 = vpop.xlane.xlu0 %5066
        %v5068 = vrcp.pop %v5067
        %v5069 = vmul.f32 %v5064, %v5068
        %v5070 = vpack.c.bf16 %v5069, %v5069
        %5071 = vrot.lane.b32.xlu0 %v4790, 80
        %v5072 = vpop.permute.xlu0 %5071
        %v5074 = vsel %vm1042, %v5070, 0
        %v5077 = vsel %vm1106, %v5072, 0
        %5079 = vmatprep.subr.bf16.mxu0 0
        %5080 = vmatpush1.bf16.msra.mxu0 %v5077
        %5081 = vmatprep.subr.bf16.mxu0 0
        %5082 = vmatpush1.bf16.msra.mxu0 0
        %5083 = vmatprep.subr.bf16.mxu0 0
        %5084 = vmatpush1.bf16.msra.mxu0 0
        %5085 = vmatprep.subr.bf16.mxu0 0
        %5086 = vmatpush1.bf16.msra.mxu0 0
        %5087 = vmatprep.subr.bf16.mxu0 0
        %5088 = vmatpush1.bf16.msra.mxu0 0
        %5089 = vmatprep.subr.bf16.mxu0 0
        %5090 = vmatpush1.bf16.msra.mxu0 0
        %5091 = vmatprep.subr.bf16.mxu0 0
        %5092 = vmatpush1.bf16.msra.mxu0 0
        %5093 = vmatprep.subr.bf16.mxu0 0
        %5094 = vmatpush1.bf16.msra.mxu0 0
        %5095 = vmatprep.subr.bf16.mxu0 0
        %5096 = vmatpush1.bf16.msra.mxu0 0
        %5097 = vmatprep.subr.bf16.mxu0 0
        %5098 = vmatpush1.bf16.msra.mxu0 0
        %5099 = vmatprep.subr.bf16.mxu0 0
        %5100 = vmatpush1.bf16.msra.mxu0 0
        %5101 = vmatprep.subr.bf16.mxu0 0
        %5102 = vmatpush1.bf16.msra.mxu0 0
        %5103 = vmatprep.subr.bf16.mxu0 0
        %5104 = vmatpush1.bf16.msra.mxu0 0
        %5105 = vmatprep.subr.bf16.mxu0 0
        %5106 = vmatpush1.bf16.msra.mxu0 0
        %5107 = vmatprep.subr.bf16.mxu0 0
        %5108 = vmatpush1.bf16.msra.mxu0 0
        %5109 = vmatprep.subr.bf16.mxu0 0
        %5110 = vmatpush1.bf16.msra.mxu0 0
        %5111 = vmatprep.mubr.bf16.mxu0 0
        %5112 = vmatmul.mubr.bf16.gmra.mrb[0].mxu0 %v5074
        %v5113 = vpop.f32.mrb[0].mxu0
        %v5114 = vadd.f32 0.0, %v5113
        %v5115 = vpop.f32.mrb[0].mxu0
        %v5116 = vpop.f32.mrb[0].mxu0
        %v5117 = vpop.f32.mrb[0].mxu0
        %5118 = vdwg.mxu0
        %5119 = vrot.lane.b32.xlu0 %v4789, 104
        %v5120 = vpop.permute.xlu0 %5119
        %5121 = vrot.lane.b32.xlu0 %v4790, 104
        %v5122 = vpop.permute.xlu0 %5121
        %v5124 = vsel %vm1042, %v5120, 0
        %v5127 = vsel %vm1042, %v5122, 0
        %5129 = vmatprep.subr.bf16.mxu0 0
        %5130 = vmatpush1.bf16.xpose.msra.mxu0 %v5127
        %5131 = vmatprep.subr.bf16.mxu0 0
        %5132 = vmatpush1.bf16.xpose.msra.mxu0 0
        %5133 = vmatprep.subr.bf16.mxu0 0
        %5134 = vmatpush1.bf16.xpose.msra.mxu0 0
        %5135 = vmatprep.subr.bf16.mxu0 0
        %5136 = vmatpush1.bf16.xpose.msra.mxu0 0
        %5137 = vmatprep.subr.bf16.mxu0 0
        %5138 = vmatpush1.bf16.xpose.msra.mxu0 0
        %5139 = vmatprep.subr.bf16.mxu0 0
        %5140 = vmatpush1.bf16.xpose.msra.mxu0 0
        %5141 = vmatprep.subr.bf16.mxu0 0
        %5142 = vmatpush1.bf16.xpose.msra.mxu0 0
        %5143 = vmatprep.subr.bf16.mxu0 0
        %5144 = vmatpush1.bf16.xpose.msra.mxu0 0
        %5145 = vmatprep.subr.bf16.mxu0 0
        %5146 = vmatpush1.bf16.xpose.msra.mxu0 0
        %5147 = vmatprep.subr.bf16.mxu0 0
        %5148 = vmatpush1.bf16.xpose.msra.mxu0 0
        %5149 = vmatprep.subr.bf16.mxu0 0
        %5150 = vmatpush1.bf16.xpose.msra.mxu0 0
        %5151 = vmatprep.subr.bf16.mxu0 0
        %5152 = vmatpush1.bf16.xpose.msra.mxu0 0
        %5153 = vmatprep.subr.bf16.mxu0 0
        %5154 = vmatpush1.bf16.xpose.msra.mxu0 0
        %5155 = vmatprep.subr.bf16.mxu0 0
        %5156 = vmatpush1.bf16.xpose.msra.mxu0 0
        %5157 = vmatprep.subr.bf16.mxu0 0
        %5158 = vmatpush1.bf16.xpose.msra.mxu0 0
        %5159 = vmatprep.subr.bf16.mxu0 0
        %5160 = vmatpush1.bf16.xpose.msra.mxu0 0
        %5161 = vmatprep.mubr.bf16.mxu0 0
        %5162 = vmatmul.mubr.bf16.gmra.mrb[0].mxu0 %v5124
        %v5163 = vpop.f32.mrb[0].mxu0
        %v5164 = vadd.f32 %v2635, %v5163
        %v5165 = vpop.f32.mrb[0].mxu0
        %v5166 = vpop.f32.mrb[0].mxu0
        %v5167 = vpop.f32.mrb[0].mxu0
        %5168 = vdwg.mxu0
        %v5169 = vsel %vm1042, %v5164, -inf
        %5170 = vmax.xlane.f32.xlu0 %v5169
        %v5171 = vpop.xlane.xlu0 %5170
        %v5172 = vsub.f32 %v5164, %v5171
        %v5173 = vmul.f32 %v5172, 1.442695
        %v5174 = vpow.pop %v5173
        %v5175 = vsel %vm1042, %v5174, 0.0
        %5176 = vadd.xlane.f32.xlu0 %v5175
        %v5177 = vpop.xlane.xlu0 %5176
        %v5178 = vrcp.pop %v5177
        %v5179 = vmul.f32 %v5174, %v5178
        %v5180 = vpack.c.bf16 %v5179, %v5179
        %5181 = vrot.lane.b32.xlu0 %v4790, 72
        %v5182 = vpop.permute.xlu0 %5181
        %v5184 = vsel %vm1042, %v5180, 0
        %v5187 = vsel %vm1106, %v5182, 0
        %5189 = vmatprep.subr.bf16.mxu0 0
        %5190 = vmatpush1.bf16.msra.mxu0 %v5187
        %5191 = vmatprep.subr.bf16.mxu0 0
        %5192 = vmatpush1.bf16.msra.mxu0 0
        %5193 = vmatprep.subr.bf16.mxu0 0
        %5194 = vmatpush1.bf16.msra.mxu0 0
        %5195 = vmatprep.subr.bf16.mxu0 0
        %5196 = vmatpush1.bf16.msra.mxu0 0
        %5197 = vmatprep.subr.bf16.mxu0 0
        %5198 = vmatpush1.bf16.msra.mxu0 0
        %5199 = vmatprep.subr.bf16.mxu0 0
        %5200 = vmatpush1.bf16.msra.mxu0 0
        %5201 = vmatprep.subr.bf16.mxu0 0
        %5202 = vmatpush1.bf16.msra.mxu0 0
        %5203 = vmatprep.subr.bf16.mxu0 0
        %5204 = vmatpush1.bf16.msra.mxu0 0
        %5205 = vmatprep.subr.bf16.mxu0 0
        %5206 = vmatpush1.bf16.msra.mxu0 0
        %5207 = vmatprep.subr.bf16.mxu0 0
        %5208 = vmatpush1.bf16.msra.mxu0 0
        %5209 = vmatprep.subr.bf16.mxu0 0
        %5210 = vmatpush1.bf16.msra.mxu0 0
        %5211 = vmatprep.subr.bf16.mxu0 0
        %5212 = vmatpush1.bf16.msra.mxu0 0
        %5213 = vmatprep.subr.bf16.mxu0 0
        %5214 = vmatpush1.bf16.msra.mxu0 0
        %5215 = vmatprep.subr.bf16.mxu0 0
        %5216 = vmatpush1.bf16.msra.mxu0 0
        %5217 = vmatprep.subr.bf16.mxu0 0
        %5218 = vmatpush1.bf16.msra.mxu0 0
        %5219 = vmatprep.subr.bf16.mxu0 0
        %5220 = vmatpush1.bf16.msra.mxu0 0
        %5221 = vmatprep.mubr.bf16.mxu0 0
        %5222 = vmatmul.mubr.bf16.gmra.mrb[0].mxu0 %v5184
        %v5223 = vpop.f32.mrb[0].mxu0
        %v5224 = vadd.f32 0.0, %v5223
        %v5225 = vpop.f32.mrb[0].mxu0
        %v5226 = vpop.f32.mrb[0].mxu0
        %v5227 = vpop.f32.mrb[0].mxu0
        %5228 = vdwg.mxu0
        %5230 = vrot.lane.b32.xlu0 %v5004, 8
        %v5231 = vpop.permute.xlu0 %5230
        %5234 = vrot.lane.b32.xlu0 %v5114, 16
        %v5235 = vpop.permute.xlu0 %5234
        %5238 = vrot.lane.b32.xlu0 %v5224, 24
        %v5239 = vpop.permute.xlu0 %5238
        %v5241 = vsel %vm1042, %v4893, %v5231
        %v5242 = vsel %vm1493, %v5241, %v5235
        %v5243 = vsel %vm1495, %v5242, %v5239
        %v5244 = vpack.c.bf16 %v5243, %v5243
        %v5249 = vunpack.c.l.b16 %v4677
        %v5250 = vunpack.c.l.b16 %v4678
        %v5251 = vunpack.c.l.b16 %v4679
        %v5252 = vunpack.c.l.b16 %v4680
        %v5253 = vpack.c.b16 %v5250, %v5249
        %v5254 = vpack.c.b16 %v5252, %v5251
        %v5258 = vsel %vm947, %v5244, 0
        %5260 = vmatprep.subr.bf16.mxu0 0
        %5261 = vmatpush1.bf16.msra.mxu0 %v5253
        %5262 = vmatprep.subr.bf16.mxu0 0
        %5263 = vmatpush1.bf16.msra.mxu0 %v5254
        %5264 = vmatprep.subr.bf16.mxu0 0
        %5265 = vmatpush1.bf16.msra.mxu0 0
        %5266 = vmatprep.subr.bf16.mxu0 0
        %5267 = vmatpush1.bf16.msra.mxu0 0
        %5268 = vmatprep.subr.bf16.mxu0 0
        %5269 = vmatpush1.bf16.msra.mxu0 0
        %5270 = vmatprep.subr.bf16.mxu0 0
        %5271 = vmatpush1.bf16.msra.mxu0 0
        %5272 = vmatprep.subr.bf16.mxu0 0
        %5273 = vmatpush1.bf16.msra.mxu0 0
        %5274 = vmatprep.subr.bf16.mxu0 0
        %5275 = vmatpush1.bf16.msra.mxu0 0
        %5276 = vmatprep.subr.bf16.mxu0 0
        %5277 = vmatpush1.bf16.msra.mxu0 0
        %5278 = vmatprep.subr.bf16.mxu0 0
        %5279 = vmatpush1.bf16.msra.mxu0 0
        %5280 = vmatprep.subr.bf16.mxu0 0
        %5281 = vmatpush1.bf16.msra.mxu0 0
        %5282 = vmatprep.subr.bf16.mxu0 0
        %5283 = vmatpush1.bf16.msra.mxu0 0
        %5284 = vmatprep.subr.bf16.mxu0 0
        %5285 = vmatpush1.bf16.msra.mxu0 0
        %5286 = vmatprep.subr.bf16.mxu0 0
        %5287 = vmatpush1.bf16.msra.mxu0 0
        %5288 = vmatprep.subr.bf16.mxu0 0
        %5289 = vmatpush1.bf16.msra.mxu0 0
        %5290 = vmatprep.subr.bf16.mxu0 0
        %5291 = vmatpush1.bf16.msra.mxu0 0
        %5292 = vmatprep.mubr.bf16.mxu0 0
        %5293 = vmatmul.mubr.bf16.gmra.mrb[0].mxu0 %v5258
        %v5294 = vpop.f32.mrb[0].mxu0
        %v5295 = vadd.f32 %v4665, %v5294
        %v5296 = vpop.f32.mrb[0].mxu0
        %v5297 = vpop.f32.mrb[0].mxu0
        %v5298 = vpop.f32.mrb[0].mxu0
        %5299 = vdwg.mxu0
        %v5300 = vsel %vm947, %v5295, 0.0
        %5301 = vadd.xlane.f32.xlu0 %v5300
        %v5302 = vpop.xlane.xlu0 %5301
        %v5303 = vmul.f32 %v5302, %v951
        %v5304 = vsub.f32 %v5295, %v5303
        %v5305 = vmul.f32 %v5304, %v5304
        %v5306 = vsel %vm947, %v5305, 0.0
        %5307 = vadd.xlane.f32.xlu0 %v5306
        %v5308 = vpop.xlane.xlu0 %5307
        %v5309 = vmul.f32 %v5308, %v951
        %v5310 = vadd.f32 %v5309, 1e-06
        %v5311 = vrsqrt.pop %v5310
        %v5312 = vmul.f32 %v5304, %v5311
        %v5313 = vlaneseq
        %v5314 = vshrl.u32 %v5313, 7
        %v5315 = vsub.s32 2, %v5314
        %v5316 = vrot.slane %v4065, %v5315
        %v5317 = vmul.f32 %v5312, %v5316
        %v5318 = vlaneseq
        %v5319 = vshrl.u32 %v5318, 7
        %v5320 = vsub.s32 3, %v5319
        %v5321 = vrot.slane %v4065, %v5320
        %v5322 = vadd.f32 %v5317, %v5321
        %s5323 = scalar_lea.vmem %s23, 16
        %v5324 = vld [vmem:[%s5323] sm:$0xf]
        %v5325 = vld [vmem:[%s5323 + $0x4] sm:$0xf]
        %v5326 = vld [vmem:[%s5323 + $0x8] sm:$0xf]
        %v5327 = vld [vmem:[%s5323 + $0xc] sm:$0xf]
        %s5328 = scalar_lea.vmem %s24, 1
        %v5329 = vld [vmem:[%s5328] sm:$0x1]
        %s5330 = scalar_lea.vmem %s25, 32
        %v5331 = vld [vmem:[%s5330] sm:$0xf]
        %v5332 = vld [vmem:[%s5330 + $0x4] sm:$0xf]
        %v5333 = vld [vmem:[%s5330 + $0x8] sm:$0xf]
        %v5334 = vld [vmem:[%s5330 + $0xc] sm:$0xf]
        %v5335 = vld [vmem:[%s5330 + $0x10] sm:$0xf]
        %v5336 = vld [vmem:[%s5330 + $0x14] sm:$0xf]
        %v5337 = vld [vmem:[%s5330 + $0x18] sm:$0xf]
        %v5338 = vld [vmem:[%s5330 + $0x1c] sm:$0xf]
        %v5339 = vpack.c.bf16 %v5322, %v5322
        %v5341 = vlaneseq
        %v5342 = vshrl.u32 %v5341, 7
        %v5343 = vsub.s32 0, %v5342
        %v5344 = vrot.slane %v5329, %v5343
        %v5350 = vunpack.c.l.b16 %v5324
        %v5351 = vunpack.c.l.b16 %v5325
        %v5352 = vunpack.c.l.b16 %v5326
        %v5353 = vunpack.c.l.b16 %v5327
        %v5354 = vpack.c.b16 %v5351, %v5350
        %v5355 = vpack.c.b16 %v5353, %v5352
        %v5359 = vsel %vm947, %v5339, 0
        %5361 = vmatprep.subr.bf16.mxu0 0
        %5362 = vmatpush1.bf16.msra.mxu0 %v5354
        %5363 = vmatprep.subr.bf16.mxu0 0
        %5364 = vmatpush1.bf16.msra.mxu0 %v5355
        %5365 = vmatprep.subr.bf16.mxu0 0
        %5366 = vmatpush1.bf16.msra.mxu0 0
        %5367 = vmatprep.subr.bf16.mxu0 0
        %5368 = vmatpush1.bf16.msra.mxu0 0
        %5369 = vmatprep.subr.bf16.mxu0 0
        %5370 = vmatpush1.bf16.msra.mxu0 0
        %5371 = vmatprep.subr.bf16.mxu0 0
        %5372 = vmatpush1.bf16.msra.mxu0 0
        %5373 = vmatprep.subr.bf16.mxu0 0
        %5374 = vmatpush1.bf16.msra.mxu0 0
        %5375 = vmatprep.subr.bf16.mxu0 0
        %5376 = vmatpush1.bf16.msra.mxu0 0
        %5377 = vmatprep.subr.bf16.mxu0 0
        %5378 = vmatpush1.bf16.msra.mxu0 0
        %5379 = vmatprep.subr.bf16.mxu0 0
        %5380 = vmatpush1.bf16.msra.mxu0 0
        %5381 = vmatprep.subr.bf16.mxu0 0
        %5382 = vmatpush1.bf16.msra.mxu0 0
        %5383 = vmatprep.subr.bf16.mxu0 0
        %5384 = vmatpush1.bf16.msra.mxu0 0
        %5385 = vmatprep.subr.bf16.mxu0 0
        %5386 = vmatpush1.bf16.msra.mxu0 0
        %5387 = vmatprep.subr.bf16.mxu0 0
        %5388 = vmatpush1.bf16.msra.mxu0 0
        %5389 = vmatprep.subr.bf16.mxu0 0
        %5390 = vmatpush1.bf16.msra.mxu0 0
        %5391 = vmatprep.subr.bf16.mxu0 0
        %5392 = vmatpush1.bf16.msra.mxu0 0
        %5393 = vmatprep.mubr.bf16.mxu0 0
        %5394 = vmatmul.mubr.bf16.gmra.mrb[0].mxu0 %v5359
        %v5395 = vpop.f32.mrb[0].mxu0
        %v5396 = vadd.f32 %v5344, %v5395
        %v5397 = vpop.f32.mrb[0].mxu0
        %v5398 = vpop.f32.mrb[0].mxu0
        %v5399 = vpop.f32.mrb[0].mxu0
        %5400 = vdwg.mxu0
        %v5401 = vmax.f32 %v5396, 0.0
        %v5402 = vpack.c.bf16 %v5401, %v5401
        %v5403 = vlaneseq
        %v5404 = vshrl.u32 %v5403, 7
        %v5405 = vsub.s32 4, %v5404
        %v5406 = vrot.slane %v4065, %v5405
        %v5415 = vunpack.c.l.b16 %v5331
        %v5416 = vunpack.c.l.b16 %v5332
        %v5417 = vunpack.c.l.b16 %v5333
        %v5418 = vunpack.c.l.b16 %v5334
        %v5419 = vunpack.c.l.b16 %v5335
        %v5420 = vunpack.c.l.b16 %v5336
        %v5421 = vunpack.c.l.b16 %v5337
        %v5422 = vunpack.c.l.b16 %v5338
        %v5423 = vpack.c.b16 %v5416, %v5415
        %v5424 = vpack.c.b16 %v5418, %v5417
        %v5425 = vpack.c.b16 %v5420, %v5419
        %v5426 = vpack.c.b16 %v5422, %v5421
        %v5432 = vsel %vm1681, %v5402, 0
        %5434 = vmatprep.subr.bf16.mxu0 0
        %5435 = vmatpush1.bf16.msra.mxu0 %v5423
        %5436 = vmatprep.subr.bf16.mxu0 0
        %5437 = vmatpush1.bf16.msra.mxu0 %v5424
        %5438 = vmatprep.subr.bf16.mxu0 0
        %5439 = vmatpush1.bf16.msra.mxu0 %v5425
        %5440 = vmatprep.subr.bf16.mxu0 0
        %5441 = vmatpush1.bf16.msra.mxu0 %v5426
        %5442 = vmatprep.subr.bf16.mxu0 0
        %5443 = vmatpush1.bf16.msra.mxu0 0
        %5444 = vmatprep.subr.bf16.mxu0 0
        %5445 = vmatpush1.bf16.msra.mxu0 0
        %5446 = vmatprep.subr.bf16.mxu0 0
        %5447 = vmatpush1.bf16.msra.mxu0 0
        %5448 = vmatprep.subr.bf16.mxu0 0
        %5449 = vmatpush1.bf16.msra.mxu0 0
        %5450 = vmatprep.subr.bf16.mxu0 0
        %5451 = vmatpush1.bf16.msra.mxu0 0
        %5452 = vmatprep.subr.bf16.mxu0 0
        %5453 = vmatpush1.bf16.msra.mxu0 0
        %5454 = vmatprep.subr.bf16.mxu0 0
        %5455 = vmatpush1.bf16.msra.mxu0 0
        %5456 = vmatprep.subr.bf16.mxu0 0
        %5457 = vmatpush1.bf16.msra.mxu0 0
        %5458 = vmatprep.subr.bf16.mxu0 0
        %5459 = vmatpush1.bf16.msra.mxu0 0
        %5460 = vmatprep.subr.bf16.mxu0 0
        %5461 = vmatpush1.bf16.msra.mxu0 0
        %5462 = vmatprep.subr.bf16.mxu0 0
        %5463 = vmatpush1.bf16.msra.mxu0 0
        %5464 = vmatprep.subr.bf16.mxu0 0
        %5465 = vmatpush1.bf16.msra.mxu0 0
        %5466 = vmatprep.mubr.bf16.mxu0 0
        %5467 = vmatmul.mubr.bf16.gmra.mrb[0].mxu0 %v5432
        %v5468 = vpop.f32.mrb[0].mxu0
        %v5469 = vadd.f32 %v5406, %v5468
        %v5470 = vpop.f32.mrb[0].mxu0
        %v5471 = vpop.f32.mrb[0].mxu0
        %v5472 = vpop.f32.mrb[0].mxu0
        %5473 = vdwg.mxu0
        %v5474 = vadd.f32 %v5469, %v5322
        %v5475 = vsel %vm947, %v5474, 0.0
        %5476 = vadd.xlane.f32.xlu0 %v5475
        %v5477 = vpop.xlane.xlu0 %5476
        %v5478 = vmul.f32 %v5477, %v951
        %v5479 = vsub.f32 %v5474, %v5478
        %v5480 = vmul.f32 %v5479, %v5479
        %v5481 = vsel %vm947, %v5480, 0.0
        %5482 = vadd.xlane.f32.xlu0 %v5481
        %v5483 = vpop.xlane.xlu0 %5482
        %v5484 = vmul.f32 %v5483, %v951
        %v5485 = vadd.f32 %v5484, 1e-06
        %v5486 = vrsqrt.pop %v5485
        %v5487 = vmul.f32 %v5479, %v5486
        %v5488 = vlaneseq
        %v5489 = vshrl.u32 %v5488, 7
        %v5490 = vsub.s32 5, %v5489
        %v5491 = vrot.slane %v4065, %v5490
        %v5492 = vmul.f32 %v5487, %v5491
        %v5493 = vlaneseq
        %v5494 = vshrl.u32 %v5493, 7
        %v5495 = vsub.s32 6, %v5494
        %v5496 = vrot.slane %v4065, %v5495
        %v5497 = vadd.f32 %v5492, %v5496
        %v5498 = vpack.c.bf16 %v5497, %v5497
        %v5499 = vld [vmem:[%s27] sm:$0xf]
        %v5500 = vld [vmem:[%s27 + $0x4] sm:$0xf]
        %v5501 = vld [vmem:[%s27 + $0x8] sm:$0xf]
        %v5502 = vld [vmem:[%s27 + $0xc] sm:$0xf]
        %v5507 = vunpack.c.l.b16 %v5499
        %v5508 = vunpack.c.l.b16 %v5500
        %v5509 = vunpack.c.l.b16 %v5501
        %v5510 = vunpack.c.l.b16 %v5502
        %v5511 = vpack.c.b16 %v5508, %v5507
        %v5512 = vpack.c.b16 %v5510, %v5509
        %v5516 = vsel %vm947, %v5498, 0
        %5518 = vmatprep.subr.bf16.mxu0 0
        %5519 = vmatpush1.bf16.msra.mxu0 %v5511
        %5520 = vmatprep.subr.bf16.mxu0 0
        %5521 = vmatpush1.bf16.msra.mxu0 %v5512
        %5522 = vmatprep.subr.bf16.mxu0 0
        %5523 = vmatpush1.bf16.msra.mxu0 0
        %5524 = vmatprep.subr.bf16.mxu0 0
        %5525 = vmatpush1.bf16.msra.mxu0 0
        %5526 = vmatprep.subr.bf16.mxu0 0
        %5527 = vmatpush1.bf16.msra.mxu0 0
        %5528 = vmatprep.subr.bf16.mxu0 0
        %5529 = vmatpush1.bf16.msra.mxu0 0
        %5530 = vmatprep.subr.bf16.mxu0 0
        %5531 = vmatpush1.bf16.msra.mxu0 0
        %5532 = vmatprep.subr.bf16.mxu0 0
        %5533 = vmatpush1.bf16.msra.mxu0 0
        %5534 = vmatprep.subr.bf16.mxu0 0
        %5535 = vmatpush1.bf16.msra.mxu0 0
        %5536 = vmatprep.subr.bf16.mxu0 0
        %5537 = vmatpush1.bf16.msra.mxu0 0
        %5538 = vmatprep.subr.bf16.mxu0 0
        %5539 = vmatpush1.bf16.msra.mxu0 0
        %5540 = vmatprep.subr.bf16.mxu0 0
        %5541 = vmatpush1.bf16.msra.mxu0 0
        %5542 = vmatprep.subr.bf16.mxu0 0
        %5543 = vmatpush1.bf16.msra.mxu0 0
        %5544 = vmatprep.subr.bf16.mxu0 0
        %5545 = vmatpush1.bf16.msra.mxu0 0
        %5546 = vmatprep.subr.bf16.mxu0 0
        %5547 = vmatpush1.bf16.msra.mxu0 0
        %5548 = vmatprep.subr.bf16.mxu0 0
        %5549 = vmatpush1.bf16.msra.mxu0 0
        %5550 = vmatprep.mubr.bf16.mxu0 0
        %5551 = vmatmul.mubr.bf16.gmra.mrb[0].mxu0 %v5516
        %v5552 = vpop.f32.mrb[0].mxu0
        %v5553 = vadd.f32 0.0, %v5552
        %v5554 = vpop.f32.mrb[0].mxu0
        %v5555 = vpop.f32.mrb[0].mxu0
        %v5556 = vpop.f32.mrb[0].mxu0
        %5557 = vdwg.mxu0
        %5558 = vst.msk [vmem:[%s914] sm:$0xff] %vm2544, %v5553
        %s5559 = sand.u32 %s673, 1
        %s5560 = scalar_lea.sflag [#allocation3], %s5559
        %s5561 = sand.u32 %s673, 1
        %s5562 = smul.addr %s5561, 8
        %s5563 = scalar_lea.vmem [#allocation2], %s5562
        // Predicated region
        $region133: #{transformer_forward.1} parent=131 // pred_check
          %p5564 = pneg %p683
        $region134: #{transformer_forward.1} parent=131 // pred_check_branch
          %5566 = sbr.rel (%p5564) target = $region136
        $region135: #{transformer_forward.1} parent=131 // pred_region
          %s5568 = ssub.s32 128, 128
          %5569 = vsyncadd %s5560, %s5568
          %s5570 = smul.addr %s42, 128
          %s5571 = scalar_lea.hbm %s28, %s5570
          %s5573 = sshll.u32 %s5563, 4
          %s5574 = int_to_ptr.vmem [resolvable:$true] %s5573
          %5576 = dma.vmem_to_hbm [thread:$0]  %s5574, 128, %s5571, %s5560
        $region136: #{transformer_forward.1} parent=131 // pred_fallthru
          _
      $region132: #{transformer_forward.1} parent=5 // pred_fallthru
        _
      %p5577 = scmp.le.s32.totalorder 2, %s37
      // Predicated region
      $region137: #{transformer_forward.1} parent=5 // pred_check
        %p5578 = pneg %p5577
      $region138: #{transformer_forward.1} parent=5 // pred_check_branch
        %5580 = sbr.rel (%p5578) target = $region140
      $region139: #{transformer_forward.1} parent=5 // pred_region
        %s5581 = ssub.s32 %s37, 2
        // Predicated region
        $region141: #{transformer_forward.1} parent=139 // pred_check
          %p5582 = pneg %p689
        $region142: #{transformer_forward.1} parent=139 // pred_check_branch
          %5584 = sbr.rel (%p5582) target = $region144
        $region143: #{transformer_forward.1} parent=139 // pred_region
          %s5585 = sand.u32 %s674, 1
          %s5586 = scalar_lea.sflag [#allocation3], %s5585
          %s5587 = sand.u32 %s674, 1
          %s5588 = smul.addr %s5587, 8
          %s5589 = scalar_lea.vmem [#allocation2], %s5588
          %5590 = dma.done %s5586, 128
        $region144: #{transformer_forward.1} parent=139 // pred_fallthru
          _
      $region140: #{transformer_forward.1} parent=5 // pred_fallthru
        _
    $region6: #{transformer_forward.1} parent=1 // loop_footer
      %s41 = sadd.s32 1, %s37
    $region7: #{transformer_forward.1} parent=1 // loop_footer_branch
      %36 = sbr.rel target = $region3
    $region8: #{transformer_forward.1} parent=1 // loop_exit
      _
    %5591 = vsyncpa [#allocation3], 1
    %s5592 = scalar_lea.sflag [#allocation3], 1
    %5593 = vsyncpa %s5592, 1

</llo_original>
